<compile_context>
chip_gen: v6e
topology: v6e:2x2x1
jax: 0.10.0
libtpu: 0.0.40
codegen_flags: <defaults>
</compile_context>

<pallas_src>
import jax
import jax.numpy as jnp
from jax.experimental import pallas as pl
from jax.experimental.pallas import tpu as pltpu

# ----------------------------- configuration ------------------------------
FEATURE_DIM = 1024        # config['feature_dim']
ONE_HOT_POS_DIM = 16      # config['one_hot_pos_dim']
SCALER_DIM = 8            # config['scaler_dim']
STEP_EMB_DIM = 32         # config['step_embedding_dim']
NUM_UNITS = 16            # config['num_units']
NUM_MLP_UNITS = 64        # config['num_mlp_units']
SCALER_PROJ_DIM = 16      # nn.Linear(scaler_dim, 16)


# --------------------------- fused Critic kernel ---------------------------
def _critic_kernel(
    x_ref, ohp_ref, sc_ref, te_ref,
    w1f_ref, w1oT_ref, b1_ref,
    w2T_ref, b2T_ref,
    wt_ref, bt_ref,
    ws_ref, bs_ref,
    whzT_ref, wht_ref, whs_ref, bh1_ref,
    wh2T_ref, bh2_ref,
    o_ref,
):
    f32 = jnp.float32

    def silu(y):
        return y * jax.nn.sigmoid(y)          # exp/logistic lands on the EUP slot

    # ---------------- per-batch-row work (done ONCE per tile, not 16x) ----------------
    # feature half of fc1 layer-1 (bf16 inputs, f32 accumulation), bias folded in
    feat = jnp.dot(x_ref[...], w1f_ref[...], preferred_element_type=f32) + b1_ref[...]   # (BM, H)

    # time_layer / scaler_layer
    t = silu(jnp.dot(te_ref[...], wt_ref[...], preferred_element_type=f32) + bt_ref[...])  # (BM, T)
    s = silu(jnp.dot(sc_ref[...], ws_ref[...], preferred_element_type=f32) + bs_ref[...])  # (BM, 16)

    # head layer-1 contribution from time/scaler (+ its bias), per batch row
    ts = (jnp.dot(t, wht_ref[...], preferred_element_type=f32)
          + jnp.dot(s, whs_ref[...], preferred_element_type=f32)
          + bh1_ref[...])                                                                   # (BM, H)

    # One small transpose: (BM, 2H) -> (2H, BM). Batch now lives on lanes, so every
    # per-unit matmul below is lane-dense and the output is written densely.
    fts_t = jnp.concatenate([feat, ts], axis=1).T                                           # (2H, BM)
    feat_t = fts_t[:NUM_MLP_UNITS]                                                          # (H, BM)
    ts_t = fts_t[NUM_MLP_UNITS:]                                                            # (H, BM)

    ohp_t = ohp_ref[...].astype(f32)            # (U, P, BM)
    w1o_t = w1oT_ref[...]                       # (H, P)
    w2_t = w2T_ref[...]                         # (H, H)
    b2_t = b2T_ref[...]                         # (H, 1)
    whz_t = whzT_ref[...]                       # (H, H)
    wh2_t = wh2T_ref[...]                       # (1, H)
    bh2 = bh2_ref[...]                          # (1, 1)

    # ---------------- per-unit path (transposed orientation, batch on lanes) ----------
    rows = []
    for i in range(NUM_UNITS):
        # fc1 layer-1: split dot replaces cat([x, one_hot_pos[:, i]], 1) @ W1
        z1 = jnp.tanh(feat_t + jnp.dot(w1o_t, ohp_t[i], preferred_element_type=f32))       # (H, BM)
        # fc1 layer-2
        z2 = jnp.tanh(jnp.dot(w2_t, z1, preferred_element_type=f32) + b2_t)                # (H, BM)
        # head layer-1: split dot replaces cat([z, time, scaler], 1) @ Wh1
        h = jnp.tanh(jnp.dot(whz_t, z2, preferred_element_type=f32) + ts_t)                # (H, BM)
        # head layer-2: value row for unit i over all batch lanes
        rows.append(jnp.dot(wh2_t, h, preferred_element_type=f32) + bh2)                   # (1, BM)

    # Dense (U, BM) store: i-major flat order, matching torch.stack(dim=0).
    o_ref[...] = jnp.concatenate(rows, axis=0).astype(o_ref.dtype)


# ------------------------------ wrapper ------------------------------------
def prepare_params(p):
    """One-time layout prep (transposes / bf16 casts) — call outside the hot path."""
    f32 = jnp.float32
    return {
        "w1f": p["w1_feat"].astype(jnp.bfloat16),          # (F, H) bf16 (MXU native)
        "w1oT": p["w1_ohp"].T.astype(f32),                 # (H, P)
        "b1": p["b1"].astype(f32),                         # (1, H)
        "w2T": p["w2"].T.astype(f32),                      # (H, H)
        "b2T": p["b2"].T.astype(f32),                      # (H, 1)
        "wt": p["wt"].astype(f32),                         # (T, T)
        "bt": p["bt"].astype(f32),                         # (1, T)
        "ws": p["ws"].astype(f32),                         # (S, 16)
        "bs": p["bs"].astype(f32),                         # (1, 16)
        "whzT": p["wh_z"].T.astype(f32),                   # (H, H)
        "wht": p["wh_t"].astype(f32),                      # (T, H)
        "whs": p["wh_s"].astype(f32),                      # (16, H)
        "bh1": p["bh1"].astype(f32),                       # (1, H)
        "wh2T": p["wh2"].T.astype(f32),                    # (1, H)
        "bh2": p["bh2"].astype(f32),                       # (1, 1)
    }


def critic_forward(kparams, x, one_hot_pos, scalars, step_embedding):
    """values = Critic(x, one_hot_pos, scalars, step_embedding) -> (B, 16, 1)."""
    B = x.shape[0]
    # Batch tile: multiple of 128 (lane-dense output), capped at 512 rows so
    # double-buffered x tiles stay far below v5e's 16 MiB / v7x's 64 MiB VMEM.
    BM = 512 if B >= 512 else ((B + 127) // 128) * 128
    B_pad = ((B + BM - 1) // BM) * BM
    grid = (B_pad // BM,)

    def pad_b(a):
        if a.shape[0] == B_pad:
            return a
        return jnp.pad(a, ((0, B_pad - a.shape[0]),) + ((0, 0),) * (a.ndim - 1))

    x_p = pad_b(x.astype(jnp.bfloat16))                       # halves dominant HBM stream
    sc_p = pad_b(scalars.astype(jnp.float32))
    te_p = pad_b(step_embedding.astype(jnp.float32))
    # (B, U, P) -> (U, P, B_pad): per-unit slices come out as (P, BM) with batch on lanes
    ohp_t = jnp.transpose(one_hot_pos, (1, 2, 0)).astype(jnp.bfloat16)
    ohp_t = jnp.pad(ohp_t, ((0, 0), (0, 0), (0, B_pad - B)))

    batch2 = lambda i: (i, 0)
    const2 = lambda i: (0, 0)

    weight_args = (
        kparams["w1f"], kparams["w1oT"], kparams["b1"],
        kparams["w2T"], kparams["b2T"],
        kparams["wt"], kparams["bt"],
        kparams["ws"], kparams["bs"],
        kparams["whzT"], kparams["wht"], kparams["whs"], kparams["bh1"],
        kparams["wh2T"], kparams["bh2"],
    )

    in_specs = [
        pl.BlockSpec((BM, FEATURE_DIM), batch2),
        pl.BlockSpec((NUM_UNITS, ONE_HOT_POS_DIM, BM), lambda i: (0, 0, i)),
        pl.BlockSpec((BM, SCALER_DIM), batch2),
        pl.BlockSpec((BM, STEP_EMB_DIM), batch2),
    ] + [pl.BlockSpec(w.shape, const2) for w in weight_args]   # weights stay VMEM-resident

    out = pl.pallas_call(
        _critic_kernel,
        out_shape=jax.ShapeDtypeStruct((NUM_UNITS, B_pad), jnp.float32),
        grid=grid,
        in_specs=in_specs,
        out_specs=pl.BlockSpec((NUM_UNITS, BM), lambda i: (0, i)),
        compiler_params=pltpu.CompilerParams(
            dimension_semantics=("parallel",),
        ),
    )(x_p, ohp_t, sc_p, te_p, *weight_args)

    # torch: stack(values, 0) -> (16, B, 1); .view(B, 16, 1) is a raw reinterpretation
    # of the i-major buffer, reproduced here by reshaping the (16, B) slab.
    return out[:, :B].reshape(B, NUM_UNITS, 1)


# ----------------------------- parameter init ------------------------------
def _uniform(key, shape, bound):
    return jax.random.uniform(key, shape, jnp.float32, -bound, bound)


def init_params(key):
    ks = jax.random.split(key, 14)
    p = {}
    # fc1 layer-1: Linear(feature_dim + one_hot_pos_dim, H), split into feat / ohp halves
    b_fc1 = 1.0 / float(FEATURE_DIM + ONE_HOT_POS_DIM) ** 0.5
    p["w1_feat"] = _uniform(ks[0], (FEATURE_DIM, NUM_MLP_UNITS), b_fc1)
    p["w1_ohp"] = _uniform(ks[1], (ONE_HOT_POS_DIM, NUM_MLP_UNITS), b_fc1)
    p["b1"] = _uniform(ks[2], (1, NUM_MLP_UNITS), b_fc1)
    # fc1 layer-2: Linear(H, H)
    b_fc2 = 1.0 / float(NUM_MLP_UNITS) ** 0.5
    p["w2"] = _uniform(ks[3], (NUM_MLP_UNITS, NUM_MLP_UNITS), b_fc2)
    p["b2"] = _uniform(ks[4], (1, NUM_MLP_UNITS), b_fc2)
    # time_layer: Linear(T, T)
    b_t = 1.0 / float(STEP_EMB_DIM) ** 0.5
    p["wt"] = _uniform(ks[5], (STEP_EMB_DIM, STEP_EMB_DIM), b_t)
    p["bt"] = _uniform(ks[6], (1, STEP_EMB_DIM), b_t)
    # scaler_layer: Linear(S, 16)
    b_s = 1.0 / float(SCALER_DIM) ** 0.5
    p["ws"] = _uniform(ks[7], (SCALER_DIM, SCALER_PROJ_DIM), b_s)
    p["bs"] = _uniform(ks[8], (1, SCALER_PROJ_DIM), b_s)
    # head layer-1: Linear(H + T + 16, H), split into z / t / s parts
    b_h1 = 1.0 / float(NUM_MLP_UNITS + STEP_EMB_DIM + SCALER_PROJ_DIM) ** 0.5
    p["wh_z"] = _uniform(ks[9], (NUM_MLP_UNITS, NUM_MLP_UNITS), b_h1)
    p["wh_t"] = _uniform(ks[10], (STEP_EMB_DIM, NUM_MLP_UNITS), b_h1)
    p["wh_s"] = _uniform(ks[11], (SCALER_PROJ_DIM, NUM_MLP_UNITS), b_h1)
    p["bh1"] = _uniform(ks[12], (1, NUM_MLP_UNITS), b_h1)
    # head layer-2: Linear(H, 1)
    b_h2 = 1.0 / float(NUM_MLP_UNITS) ** 0.5
    k13a, k13b = jax.random.split(ks[13])
    p["wh2"] = _uniform(k13a, (NUM_MLP_UNITS, 1), b_h2)
    p["bh2"] = _uniform(k13b, (1, 1), b_h2)
    return p


# ------------------------- pure-JAX reference (torch loop) ------------------
def critic_reference(params, x, one_hot_pos, scalars, step_embedding):
    def silu(y):
        return y * (1.0 / (1.0 + jnp.exp(-y)))

    B = x.shape[0]
    w1 = jnp.concatenate([params["w1_feat"], params["w1_ohp"]], axis=0)
    wh1 = jnp.concatenate([params["wh_z"], params["wh_t"], params["wh_s"]], axis=0)
    values = []
    for i in range(NUM_UNITS):
        state = jnp.concatenate([x, one_hot_pos[:, i]], axis=1)
        z = jnp.tanh(state @ w1 + params["b1"])
        z = jnp.tanh(z @ params["w2"] + params["b2"])
        t = silu(step_embedding @ params["wt"] + params["bt"])
        s = silu(scalars @ params["ws"] + params["bs"])
        st = jnp.concatenate([z, t, s], axis=1)
        h = jnp.tanh(st @ wh1 + params["bh1"])
        values.append(h @ params["wh2"] + params["bh2"])
    stacked = jnp.stack(values, axis=0)                     # (16, B, 1)
    return stacked.reshape(B, NUM_UNITS, 1)                 # == torch .view(B, 16, 1)


# --------------------------------- main -------------------------------------
if __name__ == "__main__":
    key = jax.random.PRNGKey(0)
    kp, k1, k2, k3, k4 = jax.random.split(key, 5)

    params = init_params(kp)
    kparams = prepare_params(params)       # one-time layout prep, outside jit

    B = 2
    x = jax.random.normal(k1, (B, FEATURE_DIM), jnp.float32)
    one_hot_pos = jax.random.normal(k2, (B, NUM_UNITS, ONE_HOT_POS_DIM), jnp.float32)
    scalars = jax.random.normal(k3, (B, SCALER_DIM), jnp.float32)
    step_embedding = jax.random.normal(k4, (B, STEP_EMB_DIM), jnp.float32)

    fwd = jax.jit(critic_forward)
    values = fwd(kparams, x, one_hot_pos, scalars, step_embedding)
    jax.block_until_ready(values)

    assert values.shape == (B, NUM_UNITS, 1)

    ref = critic_reference(params, x, one_hot_pos, scalars, step_embedding)
    max_err = float(jnp.max(jnp.abs(values - ref)))
    # bf16 inputs on the 1024-deep feature matmul (f32 accumulation) -> ~1e-3 abs error
    assert jnp.allclose(values, ref, atol=5e-3, rtol=5e-3), max_err

    print("KERNEL_OK")
</pallas_src>

<mosaic_0001>
module attributes {stable_mosaic.version = 11 : i64} {
  func.func @_critic_kernel(%arg0: i32, %arg1: memref<128x1024xbf16, #tpu.memory_space<vmem>>, %arg2: memref<16x16x128xbf16, #tpu.memory_space<vmem>>, %arg3: memref<128x8xf32, #tpu.memory_space<vmem>>, %arg4: memref<128x32xf32, #tpu.memory_space<vmem>>, %arg5: memref<1024x64xbf16, #tpu.memory_space<vmem>>, %arg6: memref<64x16xf32, #tpu.memory_space<vmem>>, %arg7: memref<1x64xf32, #tpu.memory_space<vmem>>, %arg8: memref<64x64xf32, #tpu.memory_space<vmem>>, %arg9: memref<64x1xf32, #tpu.memory_space<vmem>>, %arg10: memref<32x32xf32, #tpu.memory_space<vmem>>, %arg11: memref<1x32xf32, #tpu.memory_space<vmem>>, %arg12: memref<8x16xf32, #tpu.memory_space<vmem>>, %arg13: memref<1x16xf32, #tpu.memory_space<vmem>>, %arg14: memref<64x64xf32, #tpu.memory_space<vmem>>, %arg15: memref<32x64xf32, #tpu.memory_space<vmem>>, %arg16: memref<16x64xf32, #tpu.memory_space<vmem>>, %arg17: memref<1x64xf32, #tpu.memory_space<vmem>>, %arg18: memref<1x64xf32, #tpu.memory_space<vmem>>, %arg19: memref<1x1xf32, #tpu.memory_space<vmem>>, %arg20: memref<16x128xf32, #tpu.memory_space<vmem>>) attributes {dimension_semantics = [#tpu.dimension_semantics<parallel>], iteration_bounds = array<i64: 1>, scalar_prefetch = 0 : i64, scratch_operands = 0 : i64, tpu.core_type = #tpu.core_type<tc>, window_params = [{transform_indices = @transform_0, window_bounds = array<i64: 128, 1024>}, {transform_indices = @transform_1, window_bounds = array<i64: 16, 16, 128>}, {transform_indices = @transform_2, window_bounds = array<i64: 128, 8>}, {transform_indices = @transform_3, window_bounds = array<i64: 128, 32>}, {pipeline_mode = #tpu.pipeline_mode<synchronous>, transform_indices = @transform_4, window_bounds = array<i64: 1024, 64>}, {pipeline_mode = #tpu.pipeline_mode<synchronous>, transform_indices = @transform_5, window_bounds = array<i64: 64, 16>}, {pipeline_mode = #tpu.pipeline_mode<synchronous>, transform_indices = @transform_6, window_bounds = array<i64: 1, 64>}, {pipeline_mode = #tpu.pipeline_mode<synchronous>, transform_indices = @transform_7, window_bounds = array<i64: 64, 64>}, {pipeline_mode = #tpu.pipeline_mode<synchronous>, transform_indices = @transform_8, window_bounds = array<i64: 64, 1>}, {pipeline_mode = #tpu.pipeline_mode<synchronous>, transform_indices = @transform_9, window_bounds = array<i64: 32, 32>}, {pipeline_mode = #tpu.pipeline_mode<synchronous>, transform_indices = @transform_10, window_bounds = array<i64: 1, 32>}, {pipeline_mode = #tpu.pipeline_mode<synchronous>, transform_indices = @transform_11, window_bounds = array<i64: 8, 16>}, {pipeline_mode = #tpu.pipeline_mode<synchronous>, transform_indices = @transform_12, window_bounds = array<i64: 1, 16>}, {pipeline_mode = #tpu.pipeline_mode<synchronous>, transform_indices = @transform_13, window_bounds = array<i64: 64, 64>}, {pipeline_mode = #tpu.pipeline_mode<synchronous>, transform_indices = @transform_14, window_bounds = array<i64: 32, 64>}, {pipeline_mode = #tpu.pipeline_mode<synchronous>, transform_indices = @transform_15, window_bounds = array<i64: 16, 64>}, {pipeline_mode = #tpu.pipeline_mode<synchronous>, transform_indices = @transform_16, window_bounds = array<i64: 1, 64>}, {pipeline_mode = #tpu.pipeline_mode<synchronous>, transform_indices = @transform_17, window_bounds = array<i64: 1, 64>}, {pipeline_mode = #tpu.pipeline_mode<synchronous>, transform_indices = @transform_18, window_bounds = array<i64: 1, 1>}, {transform_indices = @transform_19, window_bounds = array<i64: 16, 128>}]} {
    %c0 = arith.constant 0 : index
    %c0_0 = arith.constant 0 : index
    %0 = vector.load %arg1[%c0, %c0_0] : memref<128x1024xbf16, #tpu.memory_space<vmem>>, vector<128x1024xbf16>
    %c0_1 = arith.constant 0 : index
    %c0_2 = arith.constant 0 : index
    %1 = vector.load %arg5[%c0_1, %c0_2] : memref<1024x64xbf16, #tpu.memory_space<vmem>>, vector<1024x64xbf16>
    %cst = arith.constant dense<0.000000e+00> : vector<128x64xf32>
    %2 = tpu.matmul %0, %1, %cst {dimension_numbers = #tpu.dot_dimension_numbers<[1], [0], [0], [1], [0, 0, 1, 1], [], []>} : vector<128x1024xbf16>, vector<1024x64xbf16>, vector<128x64xf32> -> vector<128x64xf32>
    %c0_3 = arith.constant 0 : index
    %c0_4 = arith.constant 0 : index
    %3 = vector.load %arg7[%c0_3, %c0_4] : memref<1x64xf32, #tpu.memory_space<vmem>>, vector<1x64xf32>
    %4 = vector.broadcast %3 : vector<1x64xf32> to vector<128x64xf32>
    %5 = arith.addf %2, %4 : vector<128x64xf32>
    %c0_5 = arith.constant 0 : index
    %c0_6 = arith.constant 0 : index
    %6 = vector.load %arg4[%c0_5, %c0_6] : memref<128x32xf32, #tpu.memory_space<vmem>>, vector<128x32xf32>
    %c0_7 = arith.constant 0 : index
    %c0_8 = arith.constant 0 : index
    %7 = vector.load %arg10[%c0_7, %c0_8] : memref<32x32xf32, #tpu.memory_space<vmem>>, vector<32x32xf32>
    %cst_9 = arith.constant dense<0.000000e+00> : vector<128x32xf32>
    %8 = tpu.matmul %6, %7, %cst_9 {dimension_numbers = #tpu.dot_dimension_numbers<[1], [0], [0], [1], [0, 0, 1, 1], [], []>} : vector<128x32xf32>, vector<32x32xf32>, vector<128x32xf32> -> vector<128x32xf32>
    %c0_10 = arith.constant 0 : index
    %c0_11 = arith.constant 0 : index
    %9 = vector.load %arg11[%c0_10, %c0_11] : memref<1x32xf32, #tpu.memory_space<vmem>>, vector<1x32xf32>
    %10 = vector.broadcast %9 : vector<1x32xf32> to vector<128x32xf32>
    %11 = arith.addf %8, %10 : vector<128x32xf32>
    %12 = arith.negf %11 : vector<128x32xf32>
    %13 = math.exp %12 : vector<128x32xf32>
    %cst_12 = arith.constant 1.000000e+00 : f32
    %14 = vector.broadcast %cst_12 : f32 to vector<128x32xf32>
    %15 = arith.addf %14, %13 : vector<128x32xf32>
    %16 = arith.divf %14, %15 : vector<128x32xf32>
    %17 = arith.mulf %11, %16 : vector<128x32xf32>
    %c0_13 = arith.constant 0 : index
    %c0_14 = arith.constant 0 : index
    %18 = vector.load %arg3[%c0_13, %c0_14] : memref<128x8xf32, #tpu.memory_space<vmem>>, vector<128x8xf32>
    %c0_15 = arith.constant 0 : index
    %c0_16 = arith.constant 0 : index
    %19 = vector.load %arg12[%c0_15, %c0_16] : memref<8x16xf32, #tpu.memory_space<vmem>>, vector<8x16xf32>
    %cst_17 = arith.constant dense<0.000000e+00> : vector<128x16xf32>
    %20 = tpu.matmul %18, %19, %cst_17 {dimension_numbers = #tpu.dot_dimension_numbers<[1], [0], [0], [1], [0, 0, 1, 1], [], []>} : vector<128x8xf32>, vector<8x16xf32>, vector<128x16xf32> -> vector<128x16xf32>
    %c0_18 = arith.constant 0 : index
    %c0_19 = arith.constant 0 : index
    %21 = vector.load %arg13[%c0_18, %c0_19] : memref<1x16xf32, #tpu.memory_space<vmem>>, vector<1x16xf32>
    %22 = vector.broadcast %21 : vector<1x16xf32> to vector<128x16xf32>
    %23 = arith.addf %20, %22 : vector<128x16xf32>
    %24 = arith.negf %23 : vector<128x16xf32>
    %25 = math.exp %24 : vector<128x16xf32>
    %cst_20 = arith.constant 1.000000e+00 : f32
    %26 = vector.broadcast %cst_20 : f32 to vector<128x16xf32>
    %27 = arith.addf %26, %25 : vector<128x16xf32>
    %28 = arith.divf %26, %27 : vector<128x16xf32>
    %29 = arith.mulf %23, %28 : vector<128x16xf32>
    %c0_21 = arith.constant 0 : index
    %c0_22 = arith.constant 0 : index
    %30 = vector.load %arg15[%c0_21, %c0_22] : memref<32x64xf32, #tpu.memory_space<vmem>>, vector<32x64xf32>
    %cst_23 = arith.constant dense<0.000000e+00> : vector<128x64xf32>
    %31 = tpu.matmul %17, %30, %cst_23 {dimension_numbers = #tpu.dot_dimension_numbers<[1], [0], [0], [1], [0, 0, 1, 1], [], []>} : vector<128x32xf32>, vector<32x64xf32>, vector<128x64xf32> -> vector<128x64xf32>
    %c0_24 = arith.constant 0 : index
    %c0_25 = arith.constant 0 : index
    %32 = vector.load %arg16[%c0_24, %c0_25] : memref<16x64xf32, #tpu.memory_space<vmem>>, vector<16x64xf32>
    %cst_26 = arith.constant dense<0.000000e+00> : vector<128x64xf32>
    %33 = tpu.matmul %29, %32, %cst_26 {dimension_numbers = #tpu.dot_dimension_numbers<[1], [0], [0], [1], [0, 0, 1, 1], [], []>} : vector<128x16xf32>, vector<16x64xf32>, vector<128x64xf32> -> vector<128x64xf32>
    %34 = arith.addf %31, %33 : vector<128x64xf32>
    %c0_27 = arith.constant 0 : index
    %c0_28 = arith.constant 0 : index
    %35 = vector.load %arg17[%c0_27, %c0_28] : memref<1x64xf32, #tpu.memory_space<vmem>>, vector<1x64xf32>
    %36 = vector.broadcast %35 : vector<1x64xf32> to vector<128x64xf32>
    %37 = arith.addf %34, %36 : vector<128x64xf32>
    %38 = tpu.concatenate %5, %37 in 1 : vector<128x64xf32>, vector<128x64xf32> -> vector<128x128xf32>
    %39 = tpu.transpose %38, [1, 0] : vector<128x128xf32> -> vector<128x128xf32>
    %40 = vector.extract_strided_slice %39 {offsets = [0, 0], sizes = [64, 128], strides = [1, 1]} : vector<128x128xf32> to vector<64x128xf32>
    %41 = vector.extract_strided_slice %39 {offsets = [64, 0], sizes = [64, 128], strides = [1, 1]} : vector<128x128xf32> to vector<64x128xf32>
    %c0_29 = arith.constant 0 : index
    %c0_30 = arith.constant 0 : index
    %c0_31 = arith.constant 0 : index
    %42 = vector.load %arg2[%c0_29, %c0_30, %c0_31] : memref<16x16x128xbf16, #tpu.memory_space<vmem>>, vector<16x16x128xbf16>
    %43 = arith.extf %42 : vector<16x16x128xbf16> to vector<16x16x128xf32>
    %c0_32 = arith.constant 0 : index
    %c0_33 = arith.constant 0 : index
    %44 = vector.load %arg6[%c0_32, %c0_33] : memref<64x16xf32, #tpu.memory_space<vmem>>, vector<64x16xf32>
    %c0_34 = arith.constant 0 : index
    %c0_35 = arith.constant 0 : index
    %45 = vector.load %arg8[%c0_34, %c0_35] : memref<64x64xf32, #tpu.memory_space<vmem>>, vector<64x64xf32>
    %c0_36 = arith.constant 0 : index
    %c0_37 = arith.constant 0 : index
    %46 = vector.load %arg9[%c0_36, %c0_37] : memref<64x1xf32, #tpu.memory_space<vmem>>, vector<64x1xf32>
    %c0_38 = arith.constant 0 : index
    %c0_39 = arith.constant 0 : index
    %47 = vector.load %arg14[%c0_38, %c0_39] : memref<64x64xf32, #tpu.memory_space<vmem>>, vector<64x64xf32>
    %c0_40 = arith.constant 0 : index
    %c0_41 = arith.constant 0 : index
    %48 = vector.load %arg18[%c0_40, %c0_41] : memref<1x64xf32, #tpu.memory_space<vmem>>, vector<1x64xf32>
    %c0_42 = arith.constant 0 : index
    %c0_43 = arith.constant 0 : index
    %49 = vector.load %arg19[%c0_42, %c0_43] : memref<1x1xf32, #tpu.memory_space<vmem>>, vector<1x1xf32>
    %50 = vector.extract_strided_slice %43 {offsets = [0, 0, 0], sizes = [1, 16, 128], strides = [1, 1, 1]} : vector<16x16x128xf32> to vector<1x16x128xf32>
    %51 = vector.shape_cast %50 : vector<1x16x128xf32> to vector<16x128xf32>
    %cst_44 = arith.constant dense<0.000000e+00> : vector<64x128xf32>
    %52 = tpu.matmul %44, %51, %cst_44 {dimension_numbers = #tpu.dot_dimension_numbers<[1], [0], [0], [1], [0, 0, 1, 1], [], []>} : vector<64x16xf32>, vector<16x128xf32>, vector<64x128xf32> -> vector<64x128xf32>
    %53 = arith.addf %40, %52 : vector<64x128xf32>
    %54 = math.tanh %53 : vector<64x128xf32>
    %cst_45 = arith.constant dense<0.000000e+00> : vector<64x128xf32>
    %55 = tpu.matmul %45, %54, %cst_45 {dimension_numbers = #tpu.dot_dimension_numbers<[1], [0], [0], [1], [0, 0, 1, 1], [], []>} : vector<64x64xf32>, vector<64x128xf32>, vector<64x128xf32> -> vector<64x128xf32>
    %56 = vector.broadcast %46 : vector<64x1xf32> to vector<64x128xf32>
    %57 = arith.addf %55, %56 : vector<64x128xf32>
    %58 = math.tanh %57 : vector<64x128xf32>
    %cst_46 = arith.constant dense<0.000000e+00> : vector<64x128xf32>
    %59 = tpu.matmul %47, %58, %cst_46 {dimension_numbers = #tpu.dot_dimension_numbers<[1], [0], [0], [1], [0, 0, 1, 1], [], []>} : vector<64x64xf32>, vector<64x128xf32>, vector<64x128xf32> -> vector<64x128xf32>
    %60 = arith.addf %59, %41 : vector<64x128xf32>
    %61 = math.tanh %60 : vector<64x128xf32>
    %cst_47 = arith.constant dense<0.000000e+00> : vector<1x128xf32>
    %62 = tpu.matmul %48, %61, %cst_47 {dimension_numbers = #tpu.dot_dimension_numbers<[1], [0], [0], [1], [0, 0, 1, 1], [], []>} : vector<1x64xf32>, vector<64x128xf32>, vector<1x128xf32> -> vector<1x128xf32>
    %63 = vector.broadcast %49 : vector<1x1xf32> to vector<1x128xf32>
    %64 = arith.addf %62, %63 : vector<1x128xf32>
    %65 = vector.extract_strided_slice %43 {offsets = [1, 0, 0], sizes = [1, 16, 128], strides = [1, 1, 1]} : vector<16x16x128xf32> to vector<1x16x128xf32>
    %66 = vector.shape_cast %65 : vector<1x16x128xf32> to vector<16x128xf32>
    %cst_48 = arith.constant dense<0.000000e+00> : vector<64x128xf32>
    %67 = tpu.matmul %44, %66, %cst_48 {dimension_numbers = #tpu.dot_dimension_numbers<[1], [0], [0], [1], [0, 0, 1, 1], [], []>} : vector<64x16xf32>, vector<16x128xf32>, vector<64x128xf32> -> vector<64x128xf32>
    %68 = arith.addf %40, %67 : vector<64x128xf32>
    %69 = math.tanh %68 : vector<64x128xf32>
    %cst_49 = arith.constant dense<0.000000e+00> : vector<64x128xf32>
    %70 = tpu.matmul %45, %69, %cst_49 {dimension_numbers = #tpu.dot_dimension_numbers<[1], [0], [0], [1], [0, 0, 1, 1], [], []>} : vector<64x64xf32>, vector<64x128xf32>, vector<64x128xf32> -> vector<64x128xf32>
    %71 = vector.broadcast %46 : vector<64x1xf32> to vector<64x128xf32>
    %72 = arith.addf %70, %71 : vector<64x128xf32>
    %73 = math.tanh %72 : vector<64x128xf32>
    %cst_50 = arith.constant dense<0.000000e+00> : vector<64x128xf32>
    %74 = tpu.matmul %47, %73, %cst_50 {dimension_numbers = #tpu.dot_dimension_numbers<[1], [0], [0], [1], [0, 0, 1, 1], [], []>} : vector<64x64xf32>, vector<64x128xf32>, vector<64x128xf32> -> vector<64x128xf32>
    %75 = arith.addf %74, %41 : vector<64x128xf32>
    %76 = math.tanh %75 : vector<64x128xf32>
    %cst_51 = arith.constant dense<0.000000e+00> : vector<1x128xf32>
    %77 = tpu.matmul %48, %76, %cst_51 {dimension_numbers = #tpu.dot_dimension_numbers<[1], [0], [0], [1], [0, 0, 1, 1], [], []>} : vector<1x64xf32>, vector<64x128xf32>, vector<1x128xf32> -> vector<1x128xf32>
    %78 = vector.broadcast %49 : vector<1x1xf32> to vector<1x128xf32>
    %79 = arith.addf %77, %78 : vector<1x128xf32>
    %80 = vector.extract_strided_slice %43 {offsets = [2, 0, 0], sizes = [1, 16, 128], strides = [1, 1, 1]} : vector<16x16x128xf32> to vector<1x16x128xf32>
    %81 = vector.shape_cast %80 : vector<1x16x128xf32> to vector<16x128xf32>
    %cst_52 = arith.constant dense<0.000000e+00> : vector<64x128xf32>
    %82 = tpu.matmul %44, %81, %cst_52 {dimension_numbers = #tpu.dot_dimension_numbers<[1], [0], [0], [1], [0, 0, 1, 1], [], []>} : vector<64x16xf32>, vector<16x128xf32>, vector<64x128xf32> -> vector<64x128xf32>
    %83 = arith.addf %40, %82 : vector<64x128xf32>
    %84 = math.tanh %83 : vector<64x128xf32>
    %cst_53 = arith.constant dense<0.000000e+00> : vector<64x128xf32>
    %85 = tpu.matmul %45, %84, %cst_53 {dimension_numbers = #tpu.dot_dimension_numbers<[1], [0], [0], [1], [0, 0, 1, 1], [], []>} : vector<64x64xf32>, vector<64x128xf32>, vector<64x128xf32> -> vector<64x128xf32>
    %86 = vector.broadcast %46 : vector<64x1xf32> to vector<64x128xf32>
    %87 = arith.addf %85, %86 : vector<64x128xf32>
    %88 = math.tanh %87 : vector<64x128xf32>
    %cst_54 = arith.constant dense<0.000000e+00> : vector<64x128xf32>
    %89 = tpu.matmul %47, %88, %cst_54 {dimension_numbers = #tpu.dot_dimension_numbers<[1], [0], [0], [1], [0, 0, 1, 1], [], []>} : vector<64x64xf32>, vector<64x128xf32>, vector<64x128xf32> -> vector<64x128xf32>
    %90 = arith.addf %89, %41 : vector<64x128xf32>
    %91 = math.tanh %90 : vector<64x128xf32>
    %cst_55 = arith.constant dense<0.000000e+00> : vector<1x128xf32>
    %92 = tpu.matmul %48, %91, %cst_55 {dimension_numbers = #tpu.dot_dimension_numbers<[1], [0], [0], [1], [0, 0, 1, 1], [], []>} : vector<1x64xf32>, vector<64x128xf32>, vector<1x128xf32> -> vector<1x128xf32>
    %93 = vector.broadcast %49 : vector<1x1xf32> to vector<1x128xf32>
    %94 = arith.addf %92, %93 : vector<1x128xf32>
    %95 = vector.extract_strided_slice %43 {offsets = [3, 0, 0], sizes = [1, 16, 128], strides = [1, 1, 1]} : vector<16x16x128xf32> to vector<1x16x128xf32>
    %96 = vector.shape_cast %95 : vector<1x16x128xf32> to vector<16x128xf32>
    %cst_56 = arith.constant dense<0.000000e+00> : vector<64x128xf32>
    %97 = tpu.matmul %44, %96, %cst_56 {dimension_numbers = #tpu.dot_dimension_numbers<[1], [0], [0], [1], [0, 0, 1, 1], [], []>} : vector<64x16xf32>, vector<16x128xf32>, vector<64x128xf32> -> vector<64x128xf32>
    %98 = arith.addf %40, %97 : vector<64x128xf32>
    %99 = math.tanh %98 : vector<64x128xf32>
    %cst_57 = arith.constant dense<0.000000e+00> : vector<64x128xf32>
    %100 = tpu.matmul %45, %99, %cst_57 {dimension_numbers = #tpu.dot_dimension_numbers<[1], [0], [0], [1], [0, 0, 1, 1], [], []>} : vector<64x64xf32>, vector<64x128xf32>, vector<64x128xf32> -> vector<64x128xf32>
    %101 = vector.broadcast %46 : vector<64x1xf32> to vector<64x128xf32>
    %102 = arith.addf %100, %101 : vector<64x128xf32>
    %103 = math.tanh %102 : vector<64x128xf32>
    %cst_58 = arith.constant dense<0.000000e+00> : vector<64x128xf32>
    %104 = tpu.matmul %47, %103, %cst_58 {dimension_numbers = #tpu.dot_dimension_numbers<[1], [0], [0], [1], [0, 0, 1, 1], [], []>} : vector<64x64xf32>, vector<64x128xf32>, vector<64x128xf32> -> vector<64x128xf32>
    %105 = arith.addf %104, %41 : vector<64x128xf32>
    %106 = math.tanh %105 : vector<64x128xf32>
    %cst_59 = arith.constant dense<0.000000e+00> : vector<1x128xf32>
    %107 = tpu.matmul %48, %106, %cst_59 {dimension_numbers = #tpu.dot_dimension_numbers<[1], [0], [0], [1], [0, 0, 1, 1], [], []>} : vector<1x64xf32>, vector<64x128xf32>, vector<1x128xf32> -> vector<1x128xf32>
    %108 = vector.broadcast %49 : vector<1x1xf32> to vector<1x128xf32>
    %109 = arith.addf %107, %108 : vector<1x128xf32>
    %110 = vector.extract_strided_slice %43 {offsets = [4, 0, 0], sizes = [1, 16, 128], strides = [1, 1, 1]} : vector<16x16x128xf32> to vector<1x16x128xf32>
    %111 = vector.shape_cast %110 : vector<1x16x128xf32> to vector<16x128xf32>
    %cst_60 = arith.constant dense<0.000000e+00> : vector<64x128xf32>
    %112 = tpu.matmul %44, %111, %cst_60 {dimension_numbers = #tpu.dot_dimension_numbers<[1], [0], [0], [1], [0, 0, 1, 1], [], []>} : vector<64x16xf32>, vector<16x128xf32>, vector<64x128xf32> -> vector<64x128xf32>
    %113 = arith.addf %40, %112 : vector<64x128xf32>
    %114 = math.tanh %113 : vector<64x128xf32>
    %cst_61 = arith.constant dense<0.000000e+00> : vector<64x128xf32>
    %115 = tpu.matmul %45, %114, %cst_61 {dimension_numbers = #tpu.dot_dimension_numbers<[1], [0], [0], [1], [0, 0, 1, 1], [], []>} : vector<64x64xf32>, vector<64x128xf32>, vector<64x128xf32> -> vector<64x128xf32>
    %116 = vector.broadcast %46 : vector<64x1xf32> to vector<64x128xf32>
    %117 = arith.addf %115, %116 : vector<64x128xf32>
    %118 = math.tanh %117 : vector<64x128xf32>
    %cst_62 = arith.constant dense<0.000000e+00> : vector<64x128xf32>
    %119 = tpu.matmul %47, %118, %cst_62 {dimension_numbers = #tpu.dot_dimension_numbers<[1], [0], [0], [1], [0, 0, 1, 1], [], []>} : vector<64x64xf32>, vector<64x128xf32>, vector<64x128xf32> -> vector<64x128xf32>
    %120 = arith.addf %119, %41 : vector<64x128xf32>
    %121 = math.tanh %120 : vector<64x128xf32>
    %cst_63 = arith.constant dense<0.000000e+00> : vector<1x128xf32>
    %122 = tpu.matmul %48, %121, %cst_63 {dimension_numbers = #tpu.dot_dimension_numbers<[1], [0], [0], [1], [0, 0, 1, 1], [], []>} : vector<1x64xf32>, vector<64x128xf32>, vector<1x128xf32> -> vector<1x128xf32>
    %123 = vector.broadcast %49 : vector<1x1xf32> to vector<1x128xf32>
    %124 = arith.addf %122, %123 : vector<1x128xf32>
    %125 = vector.extract_strided_slice %43 {offsets = [5, 0, 0], sizes = [1, 16, 128], strides = [1, 1, 1]} : vector<16x16x128xf32> to vector<1x16x128xf32>
    %126 = vector.shape_cast %125 : vector<1x16x128xf32> to vector<16x128xf32>
    %cst_64 = arith.constant dense<0.000000e+00> : vector<64x128xf32>
    %127 = tpu.matmul %44, %126, %cst_64 {dimension_numbers = #tpu.dot_dimension_numbers<[1], [0], [0], [1], [0, 0, 1, 1], [], []>} : vector<64x16xf32>, vector<16x128xf32>, vector<64x128xf32> -> vector<64x128xf32>
    %128 = arith.addf %40, %127 : vector<64x128xf32>
    %129 = math.tanh %128 : vector<64x128xf32>
    %cst_65 = arith.constant dense<0.000000e+00> : vector<64x128xf32>
    %130 = tpu.matmul %45, %129, %cst_65 {dimension_numbers = #tpu.dot_dimension_numbers<[1], [0], [0], [1], [0, 0, 1, 1], [], []>} : vector<64x64xf32>, vector<64x128xf32>, vector<64x128xf32> -> vector<64x128xf32>
    %131 = vector.broadcast %46 : vector<64x1xf32> to vector<64x128xf32>
    %132 = arith.addf %130, %131 : vector<64x128xf32>
    %133 = math.tanh %132 : vector<64x128xf32>
    %cst_66 = arith.constant dense<0.000000e+00> : vector<64x128xf32>
    %134 = tpu.matmul %47, %133, %cst_66 {dimension_numbers = #tpu.dot_dimension_numbers<[1], [0], [0], [1], [0, 0, 1, 1], [], []>} : vector<64x64xf32>, vector<64x128xf32>, vector<64x128xf32> -> vector<64x128xf32>
    %135 = arith.addf %134, %41 : vector<64x128xf32>
    %136 = math.tanh %135 : vector<64x128xf32>
    %cst_67 = arith.constant dense<0.000000e+00> : vector<1x128xf32>
    %137 = tpu.matmul %48, %136, %cst_67 {dimension_numbers = #tpu.dot_dimension_numbers<[1], [0], [0], [1], [0, 0, 1, 1], [], []>} : vector<1x64xf32>, vector<64x128xf32>, vector<1x128xf32> -> vector<1x128xf32>
    %138 = vector.broadcast %49 : vector<1x1xf32> to vector<1x128xf32>
    %139 = arith.addf %137, %138 : vector<1x128xf32>
    %140 = vector.extract_strided_slice %43 {offsets = [6, 0, 0], sizes = [1, 16, 128], strides = [1, 1, 1]} : vector<16x16x128xf32> to vector<1x16x128xf32>
    %141 = vector.shape_cast %140 : vector<1x16x128xf32> to vector<16x128xf32>
    %cst_68 = arith.constant dense<0.000000e+00> : vector<64x128xf32>
    %142 = tpu.matmul %44, %141, %cst_68 {dimension_numbers = #tpu.dot_dimension_numbers<[1], [0], [0], [1], [0, 0, 1, 1], [], []>} : vector<64x16xf32>, vector<16x128xf32>, vector<64x128xf32> -> vector<64x128xf32>
    %143 = arith.addf %40, %142 : vector<64x128xf32>
    %144 = math.tanh %143 : vector<64x128xf32>
    %cst_69 = arith.constant dense<0.000000e+00> : vector<64x128xf32>
    %145 = tpu.matmul %45, %144, %cst_69 {dimension_numbers = #tpu.dot_dimension_numbers<[1], [0], [0], [1], [0, 0, 1, 1], [], []>} : vector<64x64xf32>, vector<64x128xf32>, vector<64x128xf32> -> vector<64x128xf32>
    %146 = vector.broadcast %46 : vector<64x1xf32> to vector<64x128xf32>
    %147 = arith.addf %145, %146 : vector<64x128xf32>
    %148 = math.tanh %147 : vector<64x128xf32>
    %cst_70 = arith.constant dense<0.000000e+00> : vector<64x128xf32>
    %149 = tpu.matmul %47, %148, %cst_70 {dimension_numbers = #tpu.dot_dimension_numbers<[1], [0], [0], [1], [0, 0, 1, 1], [], []>} : vector<64x64xf32>, vector<64x128xf32>, vector<64x128xf32> -> vector<64x128xf32>
    %150 = arith.addf %149, %41 : vector<64x128xf32>
    %151 = math.tanh %150 : vector<64x128xf32>
    %cst_71 = arith.constant dense<0.000000e+00> : vector<1x128xf32>
    %152 = tpu.matmul %48, %151, %cst_71 {dimension_numbers = #tpu.dot_dimension_numbers<[1], [0], [0], [1], [0, 0, 1, 1], [], []>} : vector<1x64xf32>, vector<64x128xf32>, vector<1x128xf32> -> vector<1x128xf32>
    %153 = vector.broadcast %49 : vector<1x1xf32> to vector<1x128xf32>
    %154 = arith.addf %152, %153 : vector<1x128xf32>
    %155 = vector.extract_strided_slice %43 {offsets = [7, 0, 0], sizes = [1, 16, 128], strides = [1, 1, 1]} : vector<16x16x128xf32> to vector<1x16x128xf32>
    %156 = vector.shape_cast %155 : vector<1x16x128xf32> to vector<16x128xf32>
    %cst_72 = arith.constant dense<0.000000e+00> : vector<64x128xf32>
    %157 = tpu.matmul %44, %156, %cst_72 {dimension_numbers = #tpu.dot_dimension_numbers<[1], [0], [0], [1], [0, 0, 1, 1], [], []>} : vector<64x16xf32>, vector<16x128xf32>, vector<64x128xf32> -> vector<64x128xf32>
    %158 = arith.addf %40, %157 : vector<64x128xf32>
    %159 = math.tanh %158 : vector<64x128xf32>
    %cst_73 = arith.constant dense<0.000000e+00> : vector<64x128xf32>
    %160 = tpu.matmul %45, %159, %cst_73 {dimension_numbers = #tpu.dot_dimension_numbers<[1], [0], [0], [1], [0, 0, 1, 1], [], []>} : vector<64x64xf32>, vector<64x128xf32>, vector<64x128xf32> -> vector<64x128xf32>
    %161 = vector.broadcast %46 : vector<64x1xf32> to vector<64x128xf32>
    %162 = arith.addf %160, %161 : vector<64x128xf32>
    %163 = math.tanh %162 : vector<64x128xf32>
    %cst_74 = arith.constant dense<0.000000e+00> : vector<64x128xf32>
    %164 = tpu.matmul %47, %163, %cst_74 {dimension_numbers = #tpu.dot_dimension_numbers<[1], [0], [0], [1], [0, 0, 1, 1], [], []>} : vector<64x64xf32>, vector<64x128xf32>, vector<64x128xf32> -> vector<64x128xf32>
    %165 = arith.addf %164, %41 : vector<64x128xf32>
    %166 = math.tanh %165 : vector<64x128xf32>
    %cst_75 = arith.constant dense<0.000000e+00> : vector<1x128xf32>
    %167 = tpu.matmul %48, %166, %cst_75 {dimension_numbers = #tpu.dot_dimension_numbers<[1], [0], [0], [1], [0, 0, 1, 1], [], []>} : vector<1x64xf32>, vector<64x128xf32>, vector<1x128xf32> -> vector<1x128xf32>
    %168 = vector.broadcast %49 : vector<1x1xf32> to vector<1x128xf32>
    %169 = arith.addf %167, %168 : vector<1x128xf32>
    %170 = vector.extract_strided_slice %43 {offsets = [8, 0, 0], sizes = [1, 16, 128], strides = [1, 1, 1]} : vector<16x16x128xf32> to vector<1x16x128xf32>
    %171 = vector.shape_cast %170 : vector<1x16x128xf32> to vector<16x128xf32>
    %cst_76 = arith.constant dense<0.000000e+00> : vector<64x128xf32>
    %172 = tpu.matmul %44, %171, %cst_76 {dimension_numbers = #tpu.dot_dimension_numbers<[1], [0], [0], [1], [0, 0, 1, 1], [], []>} : vector<64x16xf32>, vector<16x128xf32>, vector<64x128xf32> -> vector<64x128xf32>
    %173 = arith.addf %40, %172 : vector<64x128xf32>
    %174 = math.tanh %173 : vector<64x128xf32>
    %cst_77 = arith.constant dense<0.000000e+00> : vector<64x128xf32>
    %175 = tpu.matmul %45, %174, %cst_77 {dimension_numbers = #tpu.dot_dimension_numbers<[1], [0], [0], [1], [0, 0, 1, 1], [], []>} : vector<64x64xf32>, vector<64x128xf32>, vector<64x128xf32> -> vector<64x128xf32>
    %176 = vector.broadcast %46 : vector<64x1xf32> to vector<64x128xf32>
    %177 = arith.addf %175, %176 : vector<64x128xf32>
    %178 = math.tanh %177 : vector<64x128xf32>
    %cst_78 = arith.constant dense<0.000000e+00> : vector<64x128xf32>
    %179 = tpu.matmul %47, %178, %cst_78 {dimension_numbers = #tpu.dot_dimension_numbers<[1], [0], [0], [1], [0, 0, 1, 1], [], []>} : vector<64x64xf32>, vector<64x128xf32>, vector<64x128xf32> -> vector<64x128xf32>
    %180 = arith.addf %179, %41 : vector<64x128xf32>
    %181 = math.tanh %180 : vector<64x128xf32>
    %cst_79 = arith.constant dense<0.000000e+00> : vector<1x128xf32>
    %182 = tpu.matmul %48, %181, %cst_79 {dimension_numbers = #tpu.dot_dimension_numbers<[1], [0], [0], [1], [0, 0, 1, 1], [], []>} : vector<1x64xf32>, vector<64x128xf32>, vector<1x128xf32> -> vector<1x128xf32>
    %183 = vector.broadcast %49 : vector<1x1xf32> to vector<1x128xf32>
    %184 = arith.addf %182, %183 : vector<1x128xf32>
    %185 = vector.extract_strided_slice %43 {offsets = [9, 0, 0], sizes = [1, 16, 128], strides = [1, 1, 1]} : vector<16x16x128xf32> to vector<1x16x128xf32>
    %186 = vector.shape_cast %185 : vector<1x16x128xf32> to vector<16x128xf32>
    %cst_80 = arith.constant dense<0.000000e+00> : vector<64x128xf32>
    %187 = tpu.matmul %44, %186, %cst_80 {dimension_numbers = #tpu.dot_dimension_numbers<[1], [0], [0], [1], [0, 0, 1, 1], [], []>} : vector<64x16xf32>, vector<16x128xf32>, vector<64x128xf32> -> vector<64x128xf32>
    %188 = arith.addf %40, %187 : vector<64x128xf32>
    %189 = math.tanh %188 : vector<64x128xf32>
    %cst_81 = arith.constant dense<0.000000e+00> : vector<64x128xf32>
    %190 = tpu.matmul %45, %189, %cst_81 {dimension_numbers = #tpu.dot_dimension_numbers<[1], [0], [0], [1], [0, 0, 1, 1], [], []>} : vector<64x64xf32>, vector<64x128xf32>, vector<64x128xf32> -> vector<64x128xf32>
    %191 = vector.broadcast %46 : vector<64x1xf32> to vector<64x128xf32>
    %192 = arith.addf %190, %191 : vector<64x128xf32>
    %193 = math.tanh %192 : vector<64x128xf32>
    %cst_82 = arith.constant dense<0.000000e+00> : vector<64x128xf32>
    %194 = tpu.matmul %47, %193, %cst_82 {dimension_numbers = #tpu.dot_dimension_numbers<[1], [0], [0], [1], [0, 0, 1, 1], [], []>} : vector<64x64xf32>, vector<64x128xf32>, vector<64x128xf32> -> vector<64x128xf32>
    %195 = arith.addf %194, %41 : vector<64x128xf32>
    %196 = math.tanh %195 : vector<64x128xf32>
    %cst_83 = arith.constant dense<0.000000e+00> : vector<1x128xf32>
    %197 = tpu.matmul %48, %196, %cst_83 {dimension_numbers = #tpu.dot_dimension_numbers<[1], [0], [0], [1], [0, 0, 1, 1], [], []>} : vector<1x64xf32>, vector<64x128xf32>, vector<1x128xf32> -> vector<1x128xf32>
    %198 = vector.broadcast %49 : vector<1x1xf32> to vector<1x128xf32>
    %199 = arith.addf %197, %198 : vector<1x128xf32>
    %200 = vector.extract_strided_slice %43 {offsets = [10, 0, 0], sizes = [1, 16, 128], strides = [1, 1, 1]} : vector<16x16x128xf32> to vector<1x16x128xf32>
    %201 = vector.shape_cast %200 : vector<1x16x128xf32> to vector<16x128xf32>
    %cst_84 = arith.constant dense<0.000000e+00> : vector<64x128xf32>
    %202 = tpu.matmul %44, %201, %cst_84 {dimension_numbers = #tpu.dot_dimension_numbers<[1], [0], [0], [1], [0, 0, 1, 1], [], []>} : vector<64x16xf32>, vector<16x128xf32>, vector<64x128xf32> -> vector<64x128xf32>
    %203 = arith.addf %40, %202 : vector<64x128xf32>
    %204 = math.tanh %203 : vector<64x128xf32>
    %cst_85 = arith.constant dense<0.000000e+00> : vector<64x128xf32>
    %205 = tpu.matmul %45, %204, %cst_85 {dimension_numbers = #tpu.dot_dimension_numbers<[1], [0], [0], [1], [0, 0, 1, 1], [], []>} : vector<64x64xf32>, vector<64x128xf32>, vector<64x128xf32> -> vector<64x128xf32>
    %206 = vector.broadcast %46 : vector<64x1xf32> to vector<64x128xf32>
    %207 = arith.addf %205, %206 : vector<64x128xf32>
    %208 = math.tanh %207 : vector<64x128xf32>
    %cst_86 = arith.constant dense<0.000000e+00> : vector<64x128xf32>
    %209 = tpu.matmul %47, %208, %cst_86 {dimension_numbers = #tpu.dot_dimension_numbers<[1], [0], [0], [1], [0, 0, 1, 1], [], []>} : vector<64x64xf32>, vector<64x128xf32>, vector<64x128xf32> -> vector<64x128xf32>
    %210 = arith.addf %209, %41 : vector<64x128xf32>
    %211 = math.tanh %210 : vector<64x128xf32>
    %cst_87 = arith.constant dense<0.000000e+00> : vector<1x128xf32>
    %212 = tpu.matmul %48, %211, %cst_87 {dimension_numbers = #tpu.dot_dimension_numbers<[1], [0], [0], [1], [0, 0, 1, 1], [], []>} : vector<1x64xf32>, vector<64x128xf32>, vector<1x128xf32> -> vector<1x128xf32>
    %213 = vector.broadcast %49 : vector<1x1xf32> to vector<1x128xf32>
    %214 = arith.addf %212, %213 : vector<1x128xf32>
    %215 = vector.extract_strided_slice %43 {offsets = [11, 0, 0], sizes = [1, 16, 128], strides = [1, 1, 1]} : vector<16x16x128xf32> to vector<1x16x128xf32>
    %216 = vector.shape_cast %215 : vector<1x16x128xf32> to vector<16x128xf32>
    %cst_88 = arith.constant dense<0.000000e+00> : vector<64x128xf32>
    %217 = tpu.matmul %44, %216, %cst_88 {dimension_numbers = #tpu.dot_dimension_numbers<[1], [0], [0], [1], [0, 0, 1, 1], [], []>} : vector<64x16xf32>, vector<16x128xf32>, vector<64x128xf32> -> vector<64x128xf32>
    %218 = arith.addf %40, %217 : vector<64x128xf32>
    %219 = math.tanh %218 : vector<64x128xf32>
    %cst_89 = arith.constant dense<0.000000e+00> : vector<64x128xf32>
    %220 = tpu.matmul %45, %219, %cst_89 {dimension_numbers = #tpu.dot_dimension_numbers<[1], [0], [0], [1], [0, 0, 1, 1], [], []>} : vector<64x64xf32>, vector<64x128xf32>, vector<64x128xf32> -> vector<64x128xf32>
    %221 = vector.broadcast %46 : vector<64x1xf32> to vector<64x128xf32>
    %222 = arith.addf %220, %221 : vector<64x128xf32>
    %223 = math.tanh %222 : vector<64x128xf32>
    %cst_90 = arith.constant dense<0.000000e+00> : vector<64x128xf32>
    %224 = tpu.matmul %47, %223, %cst_90 {dimension_numbers = #tpu.dot_dimension_numbers<[1], [0], [0], [1], [0, 0, 1, 1], [], []>} : vector<64x64xf32>, vector<64x128xf32>, vector<64x128xf32> -> vector<64x128xf32>
    %225 = arith.addf %224, %41 : vector<64x128xf32>
    %226 = math.tanh %225 : vector<64x128xf32>
    %cst_91 = arith.constant dense<0.000000e+00> : vector<1x128xf32>
    %227 = tpu.matmul %48, %226, %cst_91 {dimension_numbers = #tpu.dot_dimension_numbers<[1], [0], [0], [1], [0, 0, 1, 1], [], []>} : vector<1x64xf32>, vector<64x128xf32>, vector<1x128xf32> -> vector<1x128xf32>
    %228 = vector.broadcast %49 : vector<1x1xf32> to vector<1x128xf32>
    %229 = arith.addf %227, %228 : vector<1x128xf32>
    %230 = vector.extract_strided_slice %43 {offsets = [12, 0, 0], sizes = [1, 16, 128], strides = [1, 1, 1]} : vector<16x16x128xf32> to vector<1x16x128xf32>
    %231 = vector.shape_cast %230 : vector<1x16x128xf32> to vector<16x128xf32>
    %cst_92 = arith.constant dense<0.000000e+00> : vector<64x128xf32>
    %232 = tpu.matmul %44, %231, %cst_92 {dimension_numbers = #tpu.dot_dimension_numbers<[1], [0], [0], [1], [0, 0, 1, 1], [], []>} : vector<64x16xf32>, vector<16x128xf32>, vector<64x128xf32> -> vector<64x128xf32>
    %233 = arith.addf %40, %232 : vector<64x128xf32>
    %234 = math.tanh %233 : vector<64x128xf32>
    %cst_93 = arith.constant dense<0.000000e+00> : vector<64x128xf32>
    %235 = tpu.matmul %45, %234, %cst_93 {dimension_numbers = #tpu.dot_dimension_numbers<[1], [0], [0], [1], [0, 0, 1, 1], [], []>} : vector<64x64xf32>, vector<64x128xf32>, vector<64x128xf32> -> vector<64x128xf32>
    %236 = vector.broadcast %46 : vector<64x1xf32> to vector<64x128xf32>
    %237 = arith.addf %235, %236 : vector<64x128xf32>
    %238 = math.tanh %237 : vector<64x128xf32>
    %cst_94 = arith.constant dense<0.000000e+00> : vector<64x128xf32>
    %239 = tpu.matmul %47, %238, %cst_94 {dimension_numbers = #tpu.dot_dimension_numbers<[1], [0], [0], [1], [0, 0, 1, 1], [], []>} : vector<64x64xf32>, vector<64x128xf32>, vector<64x128xf32> -> vector<64x128xf32>
    %240 = arith.addf %239, %41 : vector<64x128xf32>
    %241 = math.tanh %240 : vector<64x128xf32>
    %cst_95 = arith.constant dense<0.000000e+00> : vector<1x128xf32>
    %242 = tpu.matmul %48, %241, %cst_95 {dimension_numbers = #tpu.dot_dimension_numbers<[1], [0], [0], [1], [0, 0, 1, 1], [], []>} : vector<1x64xf32>, vector<64x128xf32>, vector<1x128xf32> -> vector<1x128xf32>
    %243 = vector.broadcast %49 : vector<1x1xf32> to vector<1x128xf32>
    %244 = arith.addf %242, %243 : vector<1x128xf32>
    %245 = vector.extract_strided_slice %43 {offsets = [13, 0, 0], sizes = [1, 16, 128], strides = [1, 1, 1]} : vector<16x16x128xf32> to vector<1x16x128xf32>
    %246 = vector.shape_cast %245 : vector<1x16x128xf32> to vector<16x128xf32>
    %cst_96 = arith.constant dense<0.000000e+00> : vector<64x128xf32>
    %247 = tpu.matmul %44, %246, %cst_96 {dimension_numbers = #tpu.dot_dimension_numbers<[1], [0], [0], [1], [0, 0, 1, 1], [], []>} : vector<64x16xf32>, vector<16x128xf32>, vector<64x128xf32> -> vector<64x128xf32>
    %248 = arith.addf %40, %247 : vector<64x128xf32>
    %249 = math.tanh %248 : vector<64x128xf32>
    %cst_97 = arith.constant dense<0.000000e+00> : vector<64x128xf32>
    %250 = tpu.matmul %45, %249, %cst_97 {dimension_numbers = #tpu.dot_dimension_numbers<[1], [0], [0], [1], [0, 0, 1, 1], [], []>} : vector<64x64xf32>, vector<64x128xf32>, vector<64x128xf32> -> vector<64x128xf32>
    %251 = vector.broadcast %46 : vector<64x1xf32> to vector<64x128xf32>
    %252 = arith.addf %250, %251 : vector<64x128xf32>
    %253 = math.tanh %252 : vector<64x128xf32>
    %cst_98 = arith.constant dense<0.000000e+00> : vector<64x128xf32>
    %254 = tpu.matmul %47, %253, %cst_98 {dimension_numbers = #tpu.dot_dimension_numbers<[1], [0], [0], [1], [0, 0, 1, 1], [], []>} : vector<64x64xf32>, vector<64x128xf32>, vector<64x128xf32> -> vector<64x128xf32>
    %255 = arith.addf %254, %41 : vector<64x128xf32>
    %256 = math.tanh %255 : vector<64x128xf32>
    %cst_99 = arith.constant dense<0.000000e+00> : vector<1x128xf32>
    %257 = tpu.matmul %48, %256, %cst_99 {dimension_numbers = #tpu.dot_dimension_numbers<[1], [0], [0], [1], [0, 0, 1, 1], [], []>} : vector<1x64xf32>, vector<64x128xf32>, vector<1x128xf32> -> vector<1x128xf32>
    %258 = vector.broadcast %49 : vector<1x1xf32> to vector<1x128xf32>
    %259 = arith.addf %257, %258 : vector<1x128xf32>
    %260 = vector.extract_strided_slice %43 {offsets = [14, 0, 0], sizes = [1, 16, 128], strides = [1, 1, 1]} : vector<16x16x128xf32> to vector<1x16x128xf32>
    %261 = vector.shape_cast %260 : vector<1x16x128xf32> to vector<16x128xf32>
    %cst_100 = arith.constant dense<0.000000e+00> : vector<64x128xf32>
    %262 = tpu.matmul %44, %261, %cst_100 {dimension_numbers = #tpu.dot_dimension_numbers<[1], [0], [0], [1], [0, 0, 1, 1], [], []>} : vector<64x16xf32>, vector<16x128xf32>, vector<64x128xf32> -> vector<64x128xf32>
    %263 = arith.addf %40, %262 : vector<64x128xf32>
    %264 = math.tanh %263 : vector<64x128xf32>
    %cst_101 = arith.constant dense<0.000000e+00> : vector<64x128xf32>
    %265 = tpu.matmul %45, %264, %cst_101 {dimension_numbers = #tpu.dot_dimension_numbers<[1], [0], [0], [1], [0, 0, 1, 1], [], []>} : vector<64x64xf32>, vector<64x128xf32>, vector<64x128xf32> -> vector<64x128xf32>
    %266 = vector.broadcast %46 : vector<64x1xf32> to vector<64x128xf32>
    %267 = arith.addf %265, %266 : vector<64x128xf32>
    %268 = math.tanh %267 : vector<64x128xf32>
    %cst_102 = arith.constant dense<0.000000e+00> : vector<64x128xf32>
    %269 = tpu.matmul %47, %268, %cst_102 {dimension_numbers = #tpu.dot_dimension_numbers<[1], [0], [0], [1], [0, 0, 1, 1], [], []>} : vector<64x64xf32>, vector<64x128xf32>, vector<64x128xf32> -> vector<64x128xf32>
    %270 = arith.addf %269, %41 : vector<64x128xf32>
    %271 = math.tanh %270 : vector<64x128xf32>
    %cst_103 = arith.constant dense<0.000000e+00> : vector<1x128xf32>
    %272 = tpu.matmul %48, %271, %cst_103 {dimension_numbers = #tpu.dot_dimension_numbers<[1], [0], [0], [1], [0, 0, 1, 1], [], []>} : vector<1x64xf32>, vector<64x128xf32>, vector<1x128xf32> -> vector<1x128xf32>
    %273 = vector.broadcast %49 : vector<1x1xf32> to vector<1x128xf32>
    %274 = arith.addf %272, %273 : vector<1x128xf32>
    %275 = vector.extract_strided_slice %43 {offsets = [15, 0, 0], sizes = [1, 16, 128], strides = [1, 1, 1]} : vector<16x16x128xf32> to vector<1x16x128xf32>
    %276 = vector.shape_cast %275 : vector<1x16x128xf32> to vector<16x128xf32>
    %cst_104 = arith.constant dense<0.000000e+00> : vector<64x128xf32>
    %277 = tpu.matmul %44, %276, %cst_104 {dimension_numbers = #tpu.dot_dimension_numbers<[1], [0], [0], [1], [0, 0, 1, 1], [], []>} : vector<64x16xf32>, vector<16x128xf32>, vector<64x128xf32> -> vector<64x128xf32>
    %278 = arith.addf %40, %277 : vector<64x128xf32>
    %279 = math.tanh %278 : vector<64x128xf32>
    %cst_105 = arith.constant dense<0.000000e+00> : vector<64x128xf32>
    %280 = tpu.matmul %45, %279, %cst_105 {dimension_numbers = #tpu.dot_dimension_numbers<[1], [0], [0], [1], [0, 0, 1, 1], [], []>} : vector<64x64xf32>, vector<64x128xf32>, vector<64x128xf32> -> vector<64x128xf32>
    %281 = vector.broadcast %46 : vector<64x1xf32> to vector<64x128xf32>
    %282 = arith.addf %280, %281 : vector<64x128xf32>
    %283 = math.tanh %282 : vector<64x128xf32>
    %cst_106 = arith.constant dense<0.000000e+00> : vector<64x128xf32>
    %284 = tpu.matmul %47, %283, %cst_106 {dimension_numbers = #tpu.dot_dimension_numbers<[1], [0], [0], [1], [0, 0, 1, 1], [], []>} : vector<64x64xf32>, vector<64x128xf32>, vector<64x128xf32> -> vector<64x128xf32>
    %285 = arith.addf %284, %41 : vector<64x128xf32>
    %286 = math.tanh %285 : vector<64x128xf32>
    %cst_107 = arith.constant dense<0.000000e+00> : vector<1x128xf32>
    %287 = tpu.matmul %48, %286, %cst_107 {dimension_numbers = #tpu.dot_dimension_numbers<[1], [0], [0], [1], [0, 0, 1, 1], [], []>} : vector<1x64xf32>, vector<64x128xf32>, vector<1x128xf32> -> vector<1x128xf32>
    %288 = vector.broadcast %49 : vector<1x1xf32> to vector<1x128xf32>
    %289 = arith.addf %287, %288 : vector<1x128xf32>
    %290 = tpu.concatenate %64, %79, %94, %109, %124, %139, %154, %169, %184, %199, %214, %229, %244, %259, %274, %289 in 0 : vector<1x128xf32>, vector<1x128xf32>, vector<1x128xf32>, vector<1x128xf32>, vector<1x128xf32>, vector<1x128xf32>, vector<1x128xf32>, vector<1x128xf32>, vector<1x128xf32>, vector<1x128xf32>, vector<1x128xf32>, vector<1x128xf32>, vector<1x128xf32>, vector<1x128xf32>, vector<1x128xf32>, vector<1x128xf32> -> vector<16x128xf32>
    %c0_108 = arith.constant 0 : index
    %c0_109 = arith.constant 0 : index
    %291 = vector.load %arg20[%c0_108, %c0_109] : memref<16x128xf32, #tpu.memory_space<vmem>>, vector<16x128xf32>
    tpu.vector_store %arg20[%c0_108, %c0_109], %290 {strides = array<i32>} : memref<16x128xf32, #tpu.memory_space<vmem>>, vector<16x128xf32>,
    return
  }
  func.func @transform_0(%arg0: i32) -> (i32, i32) {
    %c0_i32 = arith.constant 0 : i32
    %c0_i32_0 = arith.constant 0 : i32
    return %arg0, %c0_i32 : i32, i32
  }
  func.func @transform_1(%arg0: i32) -> (i32, i32, i32) {
    %c0_i32 = arith.constant 0 : i32
    %c0_i32_0 = arith.constant 0 : i32
    %c0_i32_1 = arith.constant 0 : i32
    return %c0_i32, %c0_i32_0, %arg0 : i32, i32, i32
  }
  func.func @transform_2(%arg0: i32) -> (i32, i32) {
    %c0_i32 = arith.constant 0 : i32
    %c0_i32_0 = arith.constant 0 : i32
    return %arg0, %c0_i32 : i32, i32
  }
  func.func @transform_3(%arg0: i32) -> (i32, i32) {
    %c0_i32 = arith.constant 0 : i32
    %c0_i32_0 = arith.constant 0 : i32
    return %arg0, %c0_i32 : i32, i32
  }
  func.func @transform_4(%arg0: i32) -> (i32, i32) {
    %c0_i32 = arith.constant 0 : i32
    %c0_i32_0 = arith.constant 0 : i32
    %c0_i32_1 = arith.constant 0 : i32
    return %c0_i32, %c0_i32_0 : i32, i32
  }
  func.func @transform_5(%arg0: i32) -> (i32, i32) {
    %c0_i32 = arith.constant 0 : i32
    %c0_i32_0 = arith.constant 0 : i32
    %c0_i32_1 = arith.constant 0 : i32
    return %c0_i32, %c0_i32_0 : i32, i32
  }
  func.func @transform_6(%arg0: i32) -> (i32, i32) {
    %c0_i32 = arith.constant 0 : i32
    %c0_i32_0 = arith.constant 0 : i32
    %c0_i32_1 = arith.constant 0 : i32
    return %c0_i32, %c0_i32_0 : i32, i32
  }
  func.func @transform_7(%arg0: i32) -> (i32, i32) {
    %c0_i32 = arith.constant 0 : i32
    %c0_i32_0 = arith.constant 0 : i32
    %c0_i32_1 = arith.constant 0 : i32
    return %c0_i32, %c0_i32_0 : i32, i32
  }
  func.func @transform_8(%arg0: i32) -> (i32, i32) {
    %c0_i32 = arith.constant 0 : i32
    %c0_i32_0 = arith.constant 0 : i32
    %c0_i32_1 = arith.constant 0 : i32
    return %c0_i32, %c0_i32_0 : i32, i32
  }
  func.func @transform_9(%arg0: i32) -> (i32, i32) {
    %c0_i32 = arith.constant 0 : i32
    %c0_i32_0 = arith.constant 0 : i32
    %c0_i32_1 = arith.constant 0 : i32
    return %c0_i32, %c0_i32_0 : i32, i32
  }
  func.func @transform_10(%arg0: i32) -> (i32, i32) {
    %c0_i32 = arith.constant 0 : i32
    %c0_i32_0 = arith.constant 0 : i32
    %c0_i32_1 = arith.constant 0 : i32
    return %c0_i32, %c0_i32_0 : i32, i32
  }
  func.func @transform_11(%arg0: i32) -> (i32, i32) {
    %c0_i32 = arith.constant 0 : i32
    %c0_i32_0 = arith.constant 0 : i32
    %c0_i32_1 = arith.constant 0 : i32
    return %c0_i32, %c0_i32_0 : i32, i32
  }
  func.func @transform_12(%arg0: i32) -> (i32, i32) {
    %c0_i32 = arith.constant 0 : i32
    %c0_i32_0 = arith.constant 0 : i32
    %c0_i32_1 = arith.constant 0 : i32
    return %c0_i32, %c0_i32_0 : i32, i32
  }
  func.func @transform_13(%arg0: i32) -> (i32, i32) {
    %c0_i32 = arith.constant 0 : i32
    %c0_i32_0 = arith.constant 0 : i32
    %c0_i32_1 = arith.constant 0 : i32
    return %c0_i32, %c0_i32_0 : i32, i32
  }
  func.func @transform_14(%arg0: i32) -> (i32, i32) {
    %c0_i32 = arith.constant 0 : i32
    %c0_i32_0 = arith.constant 0 : i32
    %c0_i32_1 = arith.constant 0 : i32
    return %c0_i32, %c0_i32_0 : i32, i32
  }
  func.func @transform_15(%arg0: i32) -> (i32, i32) {
    %c0_i32 = arith.constant 0 : i32
    %c0_i32_0 = arith.constant 0 : i32
    %c0_i32_1 = arith.constant 0 : i32
    return %c0_i32, %c0_i32_0 : i32, i32
  }
  func.func @transform_16(%arg0: i32) -> (i32, i32) {
    %c0_i32 = arith.constant 0 : i32
    %c0_i32_0 = arith.constant 0 : i32
    %c0_i32_1 = arith.constant 0 : i32
    return %c0_i32, %c0_i32_0 : i32, i32
  }
  func.func @transform_17(%arg0: i32) -> (i32, i32) {
    %c0_i32 = arith.constant 0 : i32
    %c0_i32_0 = arith.constant 0 : i32
    %c0_i32_1 = arith.constant 0 : i32
    return %c0_i32, %c0_i32_0 : i32, i32
  }
  func.func @transform_18(%arg0: i32) -> (i32, i32) {
    %c0_i32 = arith.constant 0 : i32
    %c0_i32_0 = arith.constant 0 : i32
    %c0_i32_1 = arith.constant 0 : i32
    return %c0_i32, %c0_i32_0 : i32, i32
  }
  func.func @transform_19(%arg0: i32) -> (i32, i32) {
    %c0_i32 = arith.constant 0 : i32
    %c0_i32_0 = arith.constant 0 : i32
    return %c0_i32, %arg0 : i32, i32
  }
}

</mosaic_0001>

<llo_original>
// kernel: critic_forward.1
$region0: #{critic_forward.1}
  #allocation0 [shape = 'u32[]', space=smem, size = 0x4, offset = 0x4, fixed_abs, tag = 'smem constant byte address 0x4 - core index']
  #allocation1 [shape = 'u32[144,128]{1,0:T(1,128)}', space=vmem, size = 0x12000, scoped, tag = 'internal scratch']
  #allocation2 [shape = 'f32[1,1]{1,0:T(1,128)S(1)}', space=vmem, size = 0x200, scoped, tag = 'scoped memory for critic_forward.1']
  %s0 = inlined_call_operand.vmem [shape: bf16[128,1024], index: 0, kind: input, shape index: {}]
  %s1 = inlined_call_operand.vmem [shape: bf16[16,16,128], index: 1, kind: input, shape index: {}]
  %s2 = inlined_call_operand.vmem [shape: f32[128,8], index: 2, kind: input, shape index: {}]
  %s3 = inlined_call_operand.vmem [shape: f32[128,32], index: 3, kind: input, shape index: {}]
  %s4 = inlined_call_operand.vmem [shape: bf16[1024,64], index: 4, kind: input, shape index: {}]
  %s5 = inlined_call_operand.vmem [shape: f32[64,16], index: 5, kind: input, shape index: {}]
  %s6 = inlined_call_operand.vmem [shape: f32[1,64], index: 6, kind: input, shape index: {}]
  %s7 = inlined_call_operand.vmem [shape: f32[64,64], index: 7, kind: input, shape index: {}]
  %s8 = inlined_call_operand.vmem [shape: f32[64,1], index: 8, kind: input, shape index: {}]
  %s9 = inlined_call_operand.vmem [shape: f32[32,32], index: 9, kind: input, shape index: {}]
  %s10 = inlined_call_operand.vmem [shape: f32[1,32], index: 10, kind: input, shape index: {}]
  %s11 = inlined_call_operand.vmem [shape: f32[8,16], index: 11, kind: input, shape index: {}]
  %s12 = inlined_call_operand.vmem [shape: f32[1,16], index: 12, kind: input, shape index: {}]
  %s13 = inlined_call_operand.vmem [shape: f32[64,64], index: 13, kind: input, shape index: {}]
  %s14 = inlined_call_operand.vmem [shape: f32[32,64], index: 14, kind: input, shape index: {}]
  %s15 = inlined_call_operand.vmem [shape: f32[16,64], index: 15, kind: input, shape index: {}]
  %s16 = inlined_call_operand.vmem [shape: f32[1,64], index: 16, kind: input, shape index: {}]
  %s17 = inlined_call_operand.vmem [shape: f32[1,64], index: 17, kind: input, shape index: {}]
  %s18 = inlined_call_operand.<no memory space> [shape: f32[1,1], index: 18, kind: input, shape index: {}]
  %s19 = inlined_call_operand.vmem [shape: f32[16,128], index: 19, kind: output, shape index: {}]
  %s20 = sld [smem:[#allocation0]]
  $region86: #{critic_forward.1} parent=0
    _
  %s22 = ssub.s32 1, %s20
  %s23 = scalar_select 0, %s22, %s20
  %v24 = vstv %s18
  %25 = vst [vmem:[#allocation2] sm:$0x1] %v24
  // Predicated region
  $region2: #{critic_forward.1} parent=0 // pred_check
    _
  $region3: #{critic_forward.1} parent=0 // pred_check_branch
    %27 = sbr.rel (0) target = $region5
  $region4: #{critic_forward.1} parent=0 // pred_region
    _
  $region5: #{critic_forward.1} parent=0 // pred_fallthru
    _
  // Predicated region
  $region6: #{critic_forward.1} parent=0 // pred_check
    _
  $region7: #{critic_forward.1} parent=0 // pred_check_branch
    %29 = sbr.rel (0) target = $region9
  $region8: #{critic_forward.1} parent=0 // pred_region
    _
  $region9: #{critic_forward.1} parent=0 // pred_fallthru
    _
  // Predicated region
  $region10: #{critic_forward.1} parent=0 // pred_check
    _
  $region11: #{critic_forward.1} parent=0 // pred_check_branch
    %31 = sbr.rel (0) target = $region13
  $region12: #{critic_forward.1} parent=0 // pred_region
    _
  $region13: #{critic_forward.1} parent=0 // pred_fallthru
    _
  // Predicated region
  $region14: #{critic_forward.1} parent=0 // pred_check
    _
  $region15: #{critic_forward.1} parent=0 // pred_check_branch
    %33 = sbr.rel (0) target = $region17
  $region16: #{critic_forward.1} parent=0 // pred_region
    _
  $region17: #{critic_forward.1} parent=0 // pred_fallthru
    _
  // Predicated region
  $region18: #{critic_forward.1} parent=0 // pred_check
    _
  $region19: #{critic_forward.1} parent=0 // pred_check_branch
    %35 = sbr.rel (0) target = $region21
  $region20: #{critic_forward.1} parent=0 // pred_region
    _
  $region21: #{critic_forward.1} parent=0 // pred_fallthru
    _
  // Predicated region
  $region22: #{critic_forward.1} parent=0 // pred_check
    _
  $region23: #{critic_forward.1} parent=0 // pred_check_branch
    %37 = sbr.rel (0) target = $region25
  $region24: #{critic_forward.1} parent=0 // pred_region
    _
  $region25: #{critic_forward.1} parent=0 // pred_fallthru
    _
  // Predicated region
  $region26: #{critic_forward.1} parent=0 // pred_check
    _
  $region27: #{critic_forward.1} parent=0 // pred_check_branch
    %39 = sbr.rel (0) target = $region29
  $region28: #{critic_forward.1} parent=0 // pred_region
    _
  $region29: #{critic_forward.1} parent=0 // pred_fallthru
    _
  // Predicated region
  $region30: #{critic_forward.1} parent=0 // pred_check
    _
  $region31: #{critic_forward.1} parent=0 // pred_check_branch
    %41 = sbr.rel (0) target = $region33
  $region32: #{critic_forward.1} parent=0 // pred_region
    _
  $region33: #{critic_forward.1} parent=0 // pred_fallthru
    _
  // Predicated region
  $region34: #{critic_forward.1} parent=0 // pred_check
    _
  $region35: #{critic_forward.1} parent=0 // pred_check_branch
    %43 = sbr.rel (0) target = $region37
  $region36: #{critic_forward.1} parent=0 // pred_region
    _
  $region37: #{critic_forward.1} parent=0 // pred_fallthru
    _
  // Predicated region
  $region38: #{critic_forward.1} parent=0 // pred_check
    _
  $region39: #{critic_forward.1} parent=0 // pred_check_branch
    %45 = sbr.rel (0) target = $region41
  $region40: #{critic_forward.1} parent=0 // pred_region
    _
  $region41: #{critic_forward.1} parent=0 // pred_fallthru
    _
  // Predicated region
  $region42: #{critic_forward.1} parent=0 // pred_check
    _
  $region43: #{critic_forward.1} parent=0 // pred_check_branch
    %47 = sbr.rel (0) target = $region45
  $region44: #{critic_forward.1} parent=0 // pred_region
    _
  $region45: #{critic_forward.1} parent=0 // pred_fallthru
    _
  // Predicated region
  $region46: #{critic_forward.1} parent=0 // pred_check
    _
  $region47: #{critic_forward.1} parent=0 // pred_check_branch
    %49 = sbr.rel (0) target = $region49
  $region48: #{critic_forward.1} parent=0 // pred_region
    _
  $region49: #{critic_forward.1} parent=0 // pred_fallthru
    _
  // Predicated region
  $region50: #{critic_forward.1} parent=0 // pred_check
    _
  $region51: #{critic_forward.1} parent=0 // pred_check_branch
    %51 = sbr.rel (0) target = $region53
  $region52: #{critic_forward.1} parent=0 // pred_region
    _
  $region53: #{critic_forward.1} parent=0 // pred_fallthru
    _
  // Predicated region
  $region54: #{critic_forward.1} parent=0 // pred_check
    _
  $region55: #{critic_forward.1} parent=0 // pred_check_branch
    %53 = sbr.rel (0) target = $region57
  $region56: #{critic_forward.1} parent=0 // pred_region
    _
  $region57: #{critic_forward.1} parent=0 // pred_fallthru
    _
  // Predicated region
  $region58: #{critic_forward.1} parent=0 // pred_check
    _
  $region59: #{critic_forward.1} parent=0 // pred_check_branch
    %55 = sbr.rel (0) target = $region61
  $region60: #{critic_forward.1} parent=0 // pred_region
    _
  $region61: #{critic_forward.1} parent=0 // pred_fallthru
    _
  // Predicated region
  $region62: #{critic_forward.1} parent=0 // pred_check
    _
  $region63: #{critic_forward.1} parent=0 // pred_check_branch
    %57 = sbr.rel (0) target = $region65
  $region64: #{critic_forward.1} parent=0 // pred_region
    _
  $region65: #{critic_forward.1} parent=0 // pred_fallthru
    _
  // Predicated region
  $region66: #{critic_forward.1} parent=0 // pred_check
    _
  $region67: #{critic_forward.1} parent=0 // pred_check_branch
    %59 = sbr.rel (0) target = $region69
  $region68: #{critic_forward.1} parent=0 // pred_region
    _
  $region69: #{critic_forward.1} parent=0 // pred_fallthru
    _
  // Predicated region
  $region70: #{critic_forward.1} parent=0 // pred_check
    _
  $region71: #{critic_forward.1} parent=0 // pred_check_branch
    %61 = sbr.rel (0) target = $region73
  $region72: #{critic_forward.1} parent=0 // pred_region
    _
  $region73: #{critic_forward.1} parent=0 // pred_fallthru
    _
  // Predicated region
  $region74: #{critic_forward.1} parent=0 // pred_check
    _
  $region75: #{critic_forward.1} parent=0 // pred_check_branch
    %63 = sbr.rel (0) target = $region77
  $region76: #{critic_forward.1} parent=0 // pred_region
    _
  $region77: #{critic_forward.1} parent=0 // pred_fallthru
    _
  %v65 = vld [vmem:[%s0] sm:$0xff]
  %v66 = vld [vmem:[%s0 + $0x8] sm:$0xff]
  %v67 = vld [vmem:[%s0 + $0x10] sm:$0xff]
  %v68 = vld [vmem:[%s0 + $0x18] sm:$0xff]
  %v69 = vld [vmem:[%s0 + $0x20] sm:$0xff]
  %v70 = vld [vmem:[%s0 + $0x28] sm:$0xff]
  %v71 = vld [vmem:[%s0 + $0x30] sm:$0xff]
  %v72 = vld [vmem:[%s0 + $0x38] sm:$0xff]
  %v73 = vld [vmem:[%s0 + $0x40] sm:$0xff]
  %v74 = vld [vmem:[%s0 + $0x48] sm:$0xff]
  %v75 = vld [vmem:[%s0 + $0x50] sm:$0xff]
  %v76 = vld [vmem:[%s0 + $0x58] sm:$0xff]
  %v77 = vld [vmem:[%s0 + $0x60] sm:$0xff]
  %v78 = vld [vmem:[%s0 + $0x68] sm:$0xff]
  %v79 = vld [vmem:[%s0 + $0x70] sm:$0xff]
  %v80 = vld [vmem:[%s0 + $0x78] sm:$0xff]
  %v81 = vld [vmem:[%s0 + $0x80] sm:$0xff]
  %v82 = vld [vmem:[%s0 + $0x88] sm:$0xff]
  %v83 = vld [vmem:[%s0 + $0x90] sm:$0xff]
  %v84 = vld [vmem:[%s0 + $0x98] sm:$0xff]
  %v85 = vld [vmem:[%s0 + $0xa0] sm:$0xff]
  %v86 = vld [vmem:[%s0 + $0xa8] sm:$0xff]
  %v87 = vld [vmem:[%s0 + $0xb0] sm:$0xff]
  %v88 = vld [vmem:[%s0 + $0xb8] sm:$0xff]
  %v89 = vld [vmem:[%s0 + $0xc0] sm:$0xff]
  %v90 = vld [vmem:[%s0 + $0xc8] sm:$0xff]
  %v91 = vld [vmem:[%s0 + $0xd0] sm:$0xff]
  %v92 = vld [vmem:[%s0 + $0xd8] sm:$0xff]
  %v93 = vld [vmem:[%s0 + $0xe0] sm:$0xff]
  %v94 = vld [vmem:[%s0 + $0xe8] sm:$0xff]
  %v95 = vld [vmem:[%s0 + $0xf0] sm:$0xff]
  %v96 = vld [vmem:[%s0 + $0xf8] sm:$0xff]
  %v97 = vld [vmem:[%s0 + $0x100] sm:$0xff]
  %v98 = vld [vmem:[%s0 + $0x108] sm:$0xff]
  %v99 = vld [vmem:[%s0 + $0x110] sm:$0xff]
  %v100 = vld [vmem:[%s0 + $0x118] sm:$0xff]
  %v101 = vld [vmem:[%s0 + $0x120] sm:$0xff]
  %v102 = vld [vmem:[%s0 + $0x128] sm:$0xff]
  %v103 = vld [vmem:[%s0 + $0x130] sm:$0xff]
  %v104 = vld [vmem:[%s0 + $0x138] sm:$0xff]
  %v105 = vld [vmem:[%s0 + $0x140] sm:$0xff]
  %v106 = vld [vmem:[%s0 + $0x148] sm:$0xff]
  %v107 = vld [vmem:[%s0 + $0x150] sm:$0xff]
  %v108 = vld [vmem:[%s0 + $0x158] sm:$0xff]
  %v109 = vld [vmem:[%s0 + $0x160] sm:$0xff]
  %v110 = vld [vmem:[%s0 + $0x168] sm:$0xff]
  %v111 = vld [vmem:[%s0 + $0x170] sm:$0xff]
  %v112 = vld [vmem:[%s0 + $0x178] sm:$0xff]
  %v113 = vld [vmem:[%s0 + $0x180] sm:$0xff]
  %v114 = vld [vmem:[%s0 + $0x188] sm:$0xff]
  %v115 = vld [vmem:[%s0 + $0x190] sm:$0xff]
  %v116 = vld [vmem:[%s0 + $0x198] sm:$0xff]
  %v117 = vld [vmem:[%s0 + $0x1a0] sm:$0xff]
  %v118 = vld [vmem:[%s0 + $0x1a8] sm:$0xff]
  %v119 = vld [vmem:[%s0 + $0x1b0] sm:$0xff]
  %v120 = vld [vmem:[%s0 + $0x1b8] sm:$0xff]
  %v121 = vld [vmem:[%s0 + $0x1c0] sm:$0xff]
  %v122 = vld [vmem:[%s0 + $0x1c8] sm:$0xff]
  %v123 = vld [vmem:[%s0 + $0x1d0] sm:$0xff]
  %v124 = vld [vmem:[%s0 + $0x1d8] sm:$0xff]
  %v125 = vld [vmem:[%s0 + $0x1e0] sm:$0xff]
  %v126 = vld [vmem:[%s0 + $0x1e8] sm:$0xff]
  %v127 = vld [vmem:[%s0 + $0x1f0] sm:$0xff]
  %v128 = vld [vmem:[%s0 + $0x1f8] sm:$0xff]
  %v129 = vld [vmem:[%s4] sm:$0xf]
  %v130 = vld [vmem:[%s4 + $0x4] sm:$0xf]
  %v131 = vld [vmem:[%s4 + $0x8] sm:$0xf]
  %v132 = vld [vmem:[%s4 + $0xc] sm:$0xf]
  %v133 = vld [vmem:[%s4 + $0x10] sm:$0xf]
  %v134 = vld [vmem:[%s4 + $0x14] sm:$0xf]
  %v135 = vld [vmem:[%s4 + $0x18] sm:$0xf]
  %v136 = vld [vmem:[%s4 + $0x1c] sm:$0xf]
  %v137 = vld [vmem:[%s4 + $0x20] sm:$0xf]
  %v138 = vld [vmem:[%s4 + $0x24] sm:$0xf]
  %v139 = vld [vmem:[%s4 + $0x28] sm:$0xf]
  %v140 = vld [vmem:[%s4 + $0x2c] sm:$0xf]
  %v141 = vld [vmem:[%s4 + $0x30] sm:$0xf]
  %v142 = vld [vmem:[%s4 + $0x34] sm:$0xf]
  %v143 = vld [vmem:[%s4 + $0x38] sm:$0xf]
  %v144 = vld [vmem:[%s4 + $0x3c] sm:$0xf]
  %v145 = vld [vmem:[%s4 + $0x40] sm:$0xf]
  %v146 = vld [vmem:[%s4 + $0x44] sm:$0xf]
  %v147 = vld [vmem:[%s4 + $0x48] sm:$0xf]
  %v148 = vld [vmem:[%s4 + $0x4c] sm:$0xf]
  %v149 = vld [vmem:[%s4 + $0x50] sm:$0xf]
  %v150 = vld [vmem:[%s4 + $0x54] sm:$0xf]
  %v151 = vld [vmem:[%s4 + $0x58] sm:$0xf]
  %v152 = vld [vmem:[%s4 + $0x5c] sm:$0xf]
  %v153 = vld [vmem:[%s4 + $0x60] sm:$0xf]
  %v154 = vld [vmem:[%s4 + $0x64] sm:$0xf]
  %v155 = vld [vmem:[%s4 + $0x68] sm:$0xf]
  %v156 = vld [vmem:[%s4 + $0x6c] sm:$0xf]
  %v157 = vld [vmem:[%s4 + $0x70] sm:$0xf]
  %v158 = vld [vmem:[%s4 + $0x74] sm:$0xf]
  %v159 = vld [vmem:[%s4 + $0x78] sm:$0xf]
  %v160 = vld [vmem:[%s4 + $0x7c] sm:$0xf]
  %v161 = vld [vmem:[%s4 + $0x80] sm:$0xf]
  %v162 = vld [vmem:[%s4 + $0x84] sm:$0xf]
  %v163 = vld [vmem:[%s4 + $0x88] sm:$0xf]
  %v164 = vld [vmem:[%s4 + $0x8c] sm:$0xf]
  %v165 = vld [vmem:[%s4 + $0x90] sm:$0xf]
  %v166 = vld [vmem:[%s4 + $0x94] sm:$0xf]
  %v167 = vld [vmem:[%s4 + $0x98] sm:$0xf]
  %v168 = vld [vmem:[%s4 + $0x9c] sm:$0xf]
  %v169 = vld [vmem:[%s4 + $0xa0] sm:$0xf]
  %v170 = vld [vmem:[%s4 + $0xa4] sm:$0xf]
  %v171 = vld [vmem:[%s4 + $0xa8] sm:$0xf]
  %v172 = vld [vmem:[%s4 + $0xac] sm:$0xf]
  %v173 = vld [vmem:[%s4 + $0xb0] sm:$0xf]
  %v174 = vld [vmem:[%s4 + $0xb4] sm:$0xf]
  %v175 = vld [vmem:[%s4 + $0xb8] sm:$0xf]
  %v176 = vld [vmem:[%s4 + $0xbc] sm:$0xf]
  %v177 = vld [vmem:[%s4 + $0xc0] sm:$0xf]
  %v178 = vld [vmem:[%s4 + $0xc4] sm:$0xf]
  %v179 = vld [vmem:[%s4 + $0xc8] sm:$0xf]
  %v180 = vld [vmem:[%s4 + $0xcc] sm:$0xf]
  %v181 = vld [vmem:[%s4 + $0xd0] sm:$0xf]
  %v182 = vld [vmem:[%s4 + $0xd4] sm:$0xf]
  %v183 = vld [vmem:[%s4 + $0xd8] sm:$0xf]
  %v184 = vld [vmem:[%s4 + $0xdc] sm:$0xf]
  %v185 = vld [vmem:[%s4 + $0xe0] sm:$0xf]
  %v186 = vld [vmem:[%s4 + $0xe4] sm:$0xf]
  %v187 = vld [vmem:[%s4 + $0xe8] sm:$0xf]
  %v188 = vld [vmem:[%s4 + $0xec] sm:$0xf]
  %v189 = vld [vmem:[%s4 + $0xf0] sm:$0xf]
  %v190 = vld [vmem:[%s4 + $0xf4] sm:$0xf]
  %v191 = vld [vmem:[%s4 + $0xf8] sm:$0xf]
  %v192 = vld [vmem:[%s4 + $0xfc] sm:$0xf]
  %v193 = vld [vmem:[%s4 + $0x100] sm:$0xf]
  %v194 = vld [vmem:[%s4 + $0x104] sm:$0xf]
  %v195 = vld [vmem:[%s4 + $0x108] sm:$0xf]
  %v196 = vld [vmem:[%s4 + $0x10c] sm:$0xf]
  %v197 = vld [vmem:[%s4 + $0x110] sm:$0xf]
  %v198 = vld [vmem:[%s4 + $0x114] sm:$0xf]
  %v199 = vld [vmem:[%s4 + $0x118] sm:$0xf]
  %v200 = vld [vmem:[%s4 + $0x11c] sm:$0xf]
  %v201 = vld [vmem:[%s4 + $0x120] sm:$0xf]
  %v202 = vld [vmem:[%s4 + $0x124] sm:$0xf]
  %v203 = vld [vmem:[%s4 + $0x128] sm:$0xf]
  %v204 = vld [vmem:[%s4 + $0x12c] sm:$0xf]
  %v205 = vld [vmem:[%s4 + $0x130] sm:$0xf]
  %v206 = vld [vmem:[%s4 + $0x134] sm:$0xf]
  %v207 = vld [vmem:[%s4 + $0x138] sm:$0xf]
  %v208 = vld [vmem:[%s4 + $0x13c] sm:$0xf]
  %v209 = vld [vmem:[%s4 + $0x140] sm:$0xf]
  %v210 = vld [vmem:[%s4 + $0x144] sm:$0xf]
  %v211 = vld [vmem:[%s4 + $0x148] sm:$0xf]
  %v212 = vld [vmem:[%s4 + $0x14c] sm:$0xf]
  %v213 = vld [vmem:[%s4 + $0x150] sm:$0xf]
  %v214 = vld [vmem:[%s4 + $0x154] sm:$0xf]
  %v215 = vld [vmem:[%s4 + $0x158] sm:$0xf]
  %v216 = vld [vmem:[%s4 + $0x15c] sm:$0xf]
  %v217 = vld [vmem:[%s4 + $0x160] sm:$0xf]
  %v218 = vld [vmem:[%s4 + $0x164] sm:$0xf]
  %v219 = vld [vmem:[%s4 + $0x168] sm:$0xf]
  %v220 = vld [vmem:[%s4 + $0x16c] sm:$0xf]
  %v221 = vld [vmem:[%s4 + $0x170] sm:$0xf]
  %v222 = vld [vmem:[%s4 + $0x174] sm:$0xf]
  %v223 = vld [vmem:[%s4 + $0x178] sm:$0xf]
  %v224 = vld [vmem:[%s4 + $0x17c] sm:$0xf]
  %v225 = vld [vmem:[%s4 + $0x180] sm:$0xf]
  %v226 = vld [vmem:[%s4 + $0x184] sm:$0xf]
  %v227 = vld [vmem:[%s4 + $0x188] sm:$0xf]
  %v228 = vld [vmem:[%s4 + $0x18c] sm:$0xf]
  %v229 = vld [vmem:[%s4 + $0x190] sm:$0xf]
  %v230 = vld [vmem:[%s4 + $0x194] sm:$0xf]
  %v231 = vld [vmem:[%s4 + $0x198] sm:$0xf]
  %v232 = vld [vmem:[%s4 + $0x19c] sm:$0xf]
  %v233 = vld [vmem:[%s4 + $0x1a0] sm:$0xf]
  %v234 = vld [vmem:[%s4 + $0x1a4] sm:$0xf]
  %v235 = vld [vmem:[%s4 + $0x1a8] sm:$0xf]
  %v236 = vld [vmem:[%s4 + $0x1ac] sm:$0xf]
  %v237 = vld [vmem:[%s4 + $0x1b0] sm:$0xf]
  %v238 = vld [vmem:[%s4 + $0x1b4] sm:$0xf]
  %v239 = vld [vmem:[%s4 + $0x1b8] sm:$0xf]
  %v240 = vld [vmem:[%s4 + $0x1bc] sm:$0xf]
  %v241 = vld [vmem:[%s4 + $0x1c0] sm:$0xf]
  %v242 = vld [vmem:[%s4 + $0x1c4] sm:$0xf]
  %v243 = vld [vmem:[%s4 + $0x1c8] sm:$0xf]
  %v244 = vld [vmem:[%s4 + $0x1cc] sm:$0xf]
  %v245 = vld [vmem:[%s4 + $0x1d0] sm:$0xf]
  %v246 = vld [vmem:[%s4 + $0x1d4] sm:$0xf]
  %v247 = vld [vmem:[%s4 + $0x1d8] sm:$0xf]
  %v248 = vld [vmem:[%s4 + $0x1dc] sm:$0xf]
  %v249 = vld [vmem:[%s4 + $0x1e0] sm:$0xf]
  %v250 = vld [vmem:[%s4 + $0x1e4] sm:$0xf]
  %v251 = vld [vmem:[%s4 + $0x1e8] sm:$0xf]
  %v252 = vld [vmem:[%s4 + $0x1ec] sm:$0xf]
  %v253 = vld [vmem:[%s4 + $0x1f0] sm:$0xf]
  %v254 = vld [vmem:[%s4 + $0x1f4] sm:$0xf]
  %v255 = vld [vmem:[%s4 + $0x1f8] sm:$0xf]
  %v256 = vld [vmem:[%s4 + $0x1fc] sm:$0xf]
  %v257 = vld [vmem:[%s6] sm:$0x1]
  %v259 = vlaneseq
  %v260 = vshrl.u32 %v259, 7
  %v261 = vsub.s32 0, %v260
  %v262 = vrot.slane %v257, %v261
  %v328 = vunpack.c.l.b16 %v65
  %v329 = vunpack.c.h.b16 %v65
  %v330 = vunpack.c.l.b16 %v66
  %v331 = vunpack.c.h.b16 %v66
  %v332 = vunpack.c.l.b16 %v67
  %v333 = vunpack.c.h.b16 %v67
  %v334 = vunpack.c.l.b16 %v68
  %v335 = vunpack.c.h.b16 %v68
  %v336 = vunpack.c.l.b16 %v69
  %v337 = vunpack.c.h.b16 %v69
  %v338 = vunpack.c.l.b16 %v70
  %v339 = vunpack.c.h.b16 %v70
  %v340 = vunpack.c.l.b16 %v71
  %v341 = vunpack.c.h.b16 %v71
  %v342 = vunpack.c.l.b16 %v72
  %v343 = vunpack.c.h.b16 %v72
  %v344 = vunpack.c.l.b16 %v73
  %v345 = vunpack.c.h.b16 %v73
  %v346 = vunpack.c.l.b16 %v74
  %v347 = vunpack.c.h.b16 %v74
  %v348 = vunpack.c.l.b16 %v75
  %v349 = vunpack.c.h.b16 %v75
  %v350 = vunpack.c.l.b16 %v76
  %v351 = vunpack.c.h.b16 %v76
  %v352 = vunpack.c.l.b16 %v77
  %v353 = vunpack.c.h.b16 %v77
  %v354 = vunpack.c.l.b16 %v78
  %v355 = vunpack.c.h.b16 %v78
  %v356 = vunpack.c.l.b16 %v79
  %v357 = vunpack.c.h.b16 %v79
  %v358 = vunpack.c.l.b16 %v80
  %v359 = vunpack.c.h.b16 %v80
  %v360 = vunpack.c.l.b16 %v81
  %v361 = vunpack.c.h.b16 %v81
  %v362 = vunpack.c.l.b16 %v82
  %v363 = vunpack.c.h.b16 %v82
  %v364 = vunpack.c.l.b16 %v83
  %v365 = vunpack.c.h.b16 %v83
  %v366 = vunpack.c.l.b16 %v84
  %v367 = vunpack.c.h.b16 %v84
  %v368 = vunpack.c.l.b16 %v85
  %v369 = vunpack.c.h.b16 %v85
  %v370 = vunpack.c.l.b16 %v86
  %v371 = vunpack.c.h.b16 %v86
  %v372 = vunpack.c.l.b16 %v87
  %v373 = vunpack.c.h.b16 %v87
  %v374 = vunpack.c.l.b16 %v88
  %v375 = vunpack.c.h.b16 %v88
  %v376 = vunpack.c.l.b16 %v89
  %v377 = vunpack.c.h.b16 %v89
  %v378 = vunpack.c.l.b16 %v90
  %v379 = vunpack.c.h.b16 %v90
  %v380 = vunpack.c.l.b16 %v91
  %v381 = vunpack.c.h.b16 %v91
  %v382 = vunpack.c.l.b16 %v92
  %v383 = vunpack.c.h.b16 %v92
  %v384 = vunpack.c.l.b16 %v93
  %v385 = vunpack.c.h.b16 %v93
  %v386 = vunpack.c.l.b16 %v94
  %v387 = vunpack.c.h.b16 %v94
  %v388 = vunpack.c.l.b16 %v95
  %v389 = vunpack.c.h.b16 %v95
  %v390 = vunpack.c.l.b16 %v96
  %v391 = vunpack.c.h.b16 %v96
  %v392 = vunpack.c.l.b16 %v97
  %v393 = vunpack.c.h.b16 %v97
  %v394 = vunpack.c.l.b16 %v98
  %v395 = vunpack.c.h.b16 %v98
  %v396 = vunpack.c.l.b16 %v99
  %v397 = vunpack.c.h.b16 %v99
  %v398 = vunpack.c.l.b16 %v100
  %v399 = vunpack.c.h.b16 %v100
  %v400 = vunpack.c.l.b16 %v101
  %v401 = vunpack.c.h.b16 %v101
  %v402 = vunpack.c.l.b16 %v102
  %v403 = vunpack.c.h.b16 %v102
  %v404 = vunpack.c.l.b16 %v103
  %v405 = vunpack.c.h.b16 %v103
  %v406 = vunpack.c.l.b16 %v104
  %v407 = vunpack.c.h.b16 %v104
  %v408 = vunpack.c.l.b16 %v105
  %v409 = vunpack.c.h.b16 %v105
  %v410 = vunpack.c.l.b16 %v106
  %v411 = vunpack.c.h.b16 %v106
  %v412 = vunpack.c.l.b16 %v107
  %v413 = vunpack.c.h.b16 %v107
  %v414 = vunpack.c.l.b16 %v108
  %v415 = vunpack.c.h.b16 %v108
  %v416 = vunpack.c.l.b16 %v109
  %v417 = vunpack.c.h.b16 %v109
  %v418 = vunpack.c.l.b16 %v110
  %v419 = vunpack.c.h.b16 %v110
  %v420 = vunpack.c.l.b16 %v111
  %v421 = vunpack.c.h.b16 %v111
  %v422 = vunpack.c.l.b16 %v112
  %v423 = vunpack.c.h.b16 %v112
  %v424 = vunpack.c.l.b16 %v113
  %v425 = vunpack.c.h.b16 %v113
  %v426 = vunpack.c.l.b16 %v114
  %v427 = vunpack.c.h.b16 %v114
  %v428 = vunpack.c.l.b16 %v115
  %v429 = vunpack.c.h.b16 %v115
  %v430 = vunpack.c.l.b16 %v116
  %v431 = vunpack.c.h.b16 %v116
  %v432 = vunpack.c.l.b16 %v117
  %v433 = vunpack.c.h.b16 %v117
  %v434 = vunpack.c.l.b16 %v118
  %v435 = vunpack.c.h.b16 %v118
  %v436 = vunpack.c.l.b16 %v119
  %v437 = vunpack.c.h.b16 %v119
  %v438 = vunpack.c.l.b16 %v120
  %v439 = vunpack.c.h.b16 %v120
  %v440 = vunpack.c.l.b16 %v121
  %v441 = vunpack.c.h.b16 %v121
  %v442 = vunpack.c.l.b16 %v122
  %v443 = vunpack.c.h.b16 %v122
  %v444 = vunpack.c.l.b16 %v123
  %v445 = vunpack.c.h.b16 %v123
  %v446 = vunpack.c.l.b16 %v124
  %v447 = vunpack.c.h.b16 %v124
  %v448 = vunpack.c.l.b16 %v125
  %v449 = vunpack.c.h.b16 %v125
  %v450 = vunpack.c.l.b16 %v126
  %v451 = vunpack.c.h.b16 %v126
  %v452 = vunpack.c.l.b16 %v127
  %v453 = vunpack.c.h.b16 %v127
  %v454 = vunpack.c.l.b16 %v128
  %v455 = vunpack.c.h.b16 %v128
  %v456 = vpack.c.b16 %v336, %v328
  %v457 = vpack.c.b16 %v337, %v329
  %v458 = vpack.c.b16 %v338, %v330
  %v459 = vpack.c.b16 %v339, %v331
  %v460 = vpack.c.b16 %v340, %v332
  %v461 = vpack.c.b16 %v341, %v333
  %v462 = vpack.c.b16 %v342, %v334
  %v463 = vpack.c.b16 %v343, %v335
  %v464 = vpack.c.b16 %v352, %v344
  %v465 = vpack.c.b16 %v353, %v345
  %v466 = vpack.c.b16 %v354, %v346
  %v467 = vpack.c.b16 %v355, %v347
  %v468 = vpack.c.b16 %v356, %v348
  %v469 = vpack.c.b16 %v357, %v349
  %v470 = vpack.c.b16 %v358, %v350
  %v471 = vpack.c.b16 %v359, %v351
  %v472 = vpack.c.b16 %v368, %v360
  %v473 = vpack.c.b16 %v369, %v361
  %v474 = vpack.c.b16 %v370, %v362
  %v475 = vpack.c.b16 %v371, %v363
  %v476 = vpack.c.b16 %v372, %v364
  %v477 = vpack.c.b16 %v373, %v365
  %v478 = vpack.c.b16 %v374, %v366
  %v479 = vpack.c.b16 %v375, %v367
  %v480 = vpack.c.b16 %v384, %v376
  %v481 = vpack.c.b16 %v385, %v377
  %v482 = vpack.c.b16 %v386, %v378
  %v483 = vpack.c.b16 %v387, %v379
  %v484 = vpack.c.b16 %v388, %v380
  %v485 = vpack.c.b16 %v389, %v381
  %v486 = vpack.c.b16 %v390, %v382
  %v487 = vpack.c.b16 %v391, %v383
  %v488 = vpack.c.b16 %v400, %v392
  %v489 = vpack.c.b16 %v401, %v393
  %v490 = vpack.c.b16 %v402, %v394
  %v491 = vpack.c.b16 %v403, %v395
  %v492 = vpack.c.b16 %v404, %v396
  %v493 = vpack.c.b16 %v405, %v397
  %v494 = vpack.c.b16 %v406, %v398
  %v495 = vpack.c.b16 %v407, %v399
  %v496 = vpack.c.b16 %v416, %v408
  %v497 = vpack.c.b16 %v417, %v409
  %v498 = vpack.c.b16 %v418, %v410
  %v499 = vpack.c.b16 %v419, %v411
  %v500 = vpack.c.b16 %v420, %v412
  %v501 = vpack.c.b16 %v421, %v413
  %v502 = vpack.c.b16 %v422, %v414
  %v503 = vpack.c.b16 %v423, %v415
  %v504 = vpack.c.b16 %v432, %v424
  %v505 = vpack.c.b16 %v433, %v425
  %v506 = vpack.c.b16 %v434, %v426
  %v507 = vpack.c.b16 %v435, %v427
  %v508 = vpack.c.b16 %v436, %v428
  %v509 = vpack.c.b16 %v437, %v429
  %v510 = vpack.c.b16 %v438, %v430
  %v511 = vpack.c.b16 %v439, %v431
  %v512 = vpack.c.b16 %v448, %v440
  %v513 = vpack.c.b16 %v449, %v441
  %v514 = vpack.c.b16 %v450, %v442
  %v515 = vpack.c.b16 %v451, %v443
  %v516 = vpack.c.b16 %v452, %v444
  %v517 = vpack.c.b16 %v453, %v445
  %v518 = vpack.c.b16 %v454, %v446
  %v519 = vpack.c.b16 %v455, %v447
  %v712 = vunpack.c.l.b16 %v129
  %v713 = vunpack.c.l.b16 %v130
  %v714 = vunpack.c.l.b16 %v131
  %v715 = vunpack.c.l.b16 %v132
  %v716 = vunpack.c.l.b16 %v133
  %v717 = vunpack.c.l.b16 %v134
  %v718 = vunpack.c.l.b16 %v135
  %v719 = vunpack.c.l.b16 %v136
  %v720 = vunpack.c.l.b16 %v137
  %v721 = vunpack.c.l.b16 %v138
  %v722 = vunpack.c.l.b16 %v139
  %v723 = vunpack.c.l.b16 %v140
  %v724 = vunpack.c.l.b16 %v141
  %v725 = vunpack.c.l.b16 %v142
  %v726 = vunpack.c.l.b16 %v143
  %v727 = vunpack.c.l.b16 %v144
  %v728 = vunpack.c.l.b16 %v145
  %v729 = vunpack.c.l.b16 %v146
  %v730 = vunpack.c.l.b16 %v147
  %v731 = vunpack.c.l.b16 %v148
  %v732 = vunpack.c.l.b16 %v149
  %v733 = vunpack.c.l.b16 %v150
  %v734 = vunpack.c.l.b16 %v151
  %v735 = vunpack.c.l.b16 %v152
  %v736 = vunpack.c.l.b16 %v153
  %v737 = vunpack.c.l.b16 %v154
  %v738 = vunpack.c.l.b16 %v155
  %v739 = vunpack.c.l.b16 %v156
  %v740 = vunpack.c.l.b16 %v157
  %v741 = vunpack.c.l.b16 %v158
  %v742 = vunpack.c.l.b16 %v159
  %v743 = vunpack.c.l.b16 %v160
  %v744 = vunpack.c.l.b16 %v161
  %v745 = vunpack.c.l.b16 %v162
  %v746 = vunpack.c.l.b16 %v163
  %v747 = vunpack.c.l.b16 %v164
  %v748 = vunpack.c.l.b16 %v165
  %v749 = vunpack.c.l.b16 %v166
  %v750 = vunpack.c.l.b16 %v167
  %v751 = vunpack.c.l.b16 %v168
  %v752 = vunpack.c.l.b16 %v169
  %v753 = vunpack.c.l.b16 %v170
  %v754 = vunpack.c.l.b16 %v171
  %v755 = vunpack.c.l.b16 %v172
  %v756 = vunpack.c.l.b16 %v173
  %v757 = vunpack.c.l.b16 %v174
  %v758 = vunpack.c.l.b16 %v175
  %v759 = vunpack.c.l.b16 %v176
  %v760 = vunpack.c.l.b16 %v177
  %v761 = vunpack.c.l.b16 %v178
  %v762 = vunpack.c.l.b16 %v179
  %v763 = vunpack.c.l.b16 %v180
  %v764 = vunpack.c.l.b16 %v181
  %v765 = vunpack.c.l.b16 %v182
  %v766 = vunpack.c.l.b16 %v183
  %v767 = vunpack.c.l.b16 %v184
  %v768 = vunpack.c.l.b16 %v185
  %v769 = vunpack.c.l.b16 %v186
  %v770 = vunpack.c.l.b16 %v187
  %v771 = vunpack.c.l.b16 %v188
  %v772 = vunpack.c.l.b16 %v189
  %v773 = vunpack.c.l.b16 %v190
  %v774 = vunpack.c.l.b16 %v191
  %v775 = vunpack.c.l.b16 %v192
  %v776 = vunpack.c.l.b16 %v193
  %v777 = vunpack.c.l.b16 %v194
  %v778 = vunpack.c.l.b16 %v195
  %v779 = vunpack.c.l.b16 %v196
  %v780 = vunpack.c.l.b16 %v197
  %v781 = vunpack.c.l.b16 %v198
  %v782 = vunpack.c.l.b16 %v199
  %v783 = vunpack.c.l.b16 %v200
  %v784 = vunpack.c.l.b16 %v201
  %v785 = vunpack.c.l.b16 %v202
  %v786 = vunpack.c.l.b16 %v203
  %v787 = vunpack.c.l.b16 %v204
  %v788 = vunpack.c.l.b16 %v205
  %v789 = vunpack.c.l.b16 %v206
  %v790 = vunpack.c.l.b16 %v207
  %v791 = vunpack.c.l.b16 %v208
  %v792 = vunpack.c.l.b16 %v209
  %v793 = vunpack.c.l.b16 %v210
  %v794 = vunpack.c.l.b16 %v211
  %v795 = vunpack.c.l.b16 %v212
  %v796 = vunpack.c.l.b16 %v213
  %v797 = vunpack.c.l.b16 %v214
  %v798 = vunpack.c.l.b16 %v215
  %v799 = vunpack.c.l.b16 %v216
  %v800 = vunpack.c.l.b16 %v217
  %v801 = vunpack.c.l.b16 %v218
  %v802 = vunpack.c.l.b16 %v219
  %v803 = vunpack.c.l.b16 %v220
  %v804 = vunpack.c.l.b16 %v221
  %v805 = vunpack.c.l.b16 %v222
  %v806 = vunpack.c.l.b16 %v223
  %v807 = vunpack.c.l.b16 %v224
  %v808 = vunpack.c.l.b16 %v225
  %v809 = vunpack.c.l.b16 %v226
  %v810 = vunpack.c.l.b16 %v227
  %v811 = vunpack.c.l.b16 %v228
  %v812 = vunpack.c.l.b16 %v229
  %v813 = vunpack.c.l.b16 %v230
  %v814 = vunpack.c.l.b16 %v231
  %v815 = vunpack.c.l.b16 %v232
  %v816 = vunpack.c.l.b16 %v233
  %v817 = vunpack.c.l.b16 %v234
  %v818 = vunpack.c.l.b16 %v235
  %v819 = vunpack.c.l.b16 %v236
  %v820 = vunpack.c.l.b16 %v237
  %v821 = vunpack.c.l.b16 %v238
  %v822 = vunpack.c.l.b16 %v239
  %v823 = vunpack.c.l.b16 %v240
  %v824 = vunpack.c.l.b16 %v241
  %v825 = vunpack.c.l.b16 %v242
  %v826 = vunpack.c.l.b16 %v243
  %v827 = vunpack.c.l.b16 %v244
  %v828 = vunpack.c.l.b16 %v245
  %v829 = vunpack.c.l.b16 %v246
  %v830 = vunpack.c.l.b16 %v247
  %v831 = vunpack.c.l.b16 %v248
  %v832 = vunpack.c.l.b16 %v249
  %v833 = vunpack.c.l.b16 %v250
  %v834 = vunpack.c.l.b16 %v251
  %v835 = vunpack.c.l.b16 %v252
  %v836 = vunpack.c.l.b16 %v253
  %v837 = vunpack.c.l.b16 %v254
  %v838 = vunpack.c.l.b16 %v255
  %v839 = vunpack.c.l.b16 %v256
  %v840 = vpack.c.b16 %v713, %v712
  %v841 = vpack.c.b16 %v715, %v714
  %v842 = vpack.c.b16 %v717, %v716
  %v843 = vpack.c.b16 %v719, %v718
  %v844 = vpack.c.b16 %v721, %v720
  %v845 = vpack.c.b16 %v723, %v722
  %v846 = vpack.c.b16 %v725, %v724
  %v847 = vpack.c.b16 %v727, %v726
  %v848 = vpack.c.b16 %v729, %v728
  %v849 = vpack.c.b16 %v731, %v730
  %v850 = vpack.c.b16 %v733, %v732
  %v851 = vpack.c.b16 %v735, %v734
  %v852 = vpack.c.b16 %v737, %v736
  %v853 = vpack.c.b16 %v739, %v738
  %v854 = vpack.c.b16 %v741, %v740
  %v855 = vpack.c.b16 %v743, %v742
  %v856 = vpack.c.b16 %v745, %v744
  %v857 = vpack.c.b16 %v747, %v746
  %v858 = vpack.c.b16 %v749, %v748
  %v859 = vpack.c.b16 %v751, %v750
  %v860 = vpack.c.b16 %v753, %v752
  %v861 = vpack.c.b16 %v755, %v754
  %v862 = vpack.c.b16 %v757, %v756
  %v863 = vpack.c.b16 %v759, %v758
  %v864 = vpack.c.b16 %v761, %v760
  %v865 = vpack.c.b16 %v763, %v762
  %v866 = vpack.c.b16 %v765, %v764
  %v867 = vpack.c.b16 %v767, %v766
  %v868 = vpack.c.b16 %v769, %v768
  %v869 = vpack.c.b16 %v771, %v770
  %v870 = vpack.c.b16 %v773, %v772
  %v871 = vpack.c.b16 %v775, %v774
  %v872 = vpack.c.b16 %v777, %v776
  %v873 = vpack.c.b16 %v779, %v778
  %v874 = vpack.c.b16 %v781, %v780
  %v875 = vpack.c.b16 %v783, %v782
  %v876 = vpack.c.b16 %v785, %v784
  %v877 = vpack.c.b16 %v787, %v786
  %v878 = vpack.c.b16 %v789, %v788
  %v879 = vpack.c.b16 %v791, %v790
  %v880 = vpack.c.b16 %v793, %v792
  %v881 = vpack.c.b16 %v795, %v794
  %v882 = vpack.c.b16 %v797, %v796
  %v883 = vpack.c.b16 %v799, %v798
  %v884 = vpack.c.b16 %v801, %v800
  %v885 = vpack.c.b16 %v803, %v802
  %v886 = vpack.c.b16 %v805, %v804
  %v887 = vpack.c.b16 %v807, %v806
  %v888 = vpack.c.b16 %v809, %v808
  %v889 = vpack.c.b16 %v811, %v810
  %v890 = vpack.c.b16 %v813, %v812
  %v891 = vpack.c.b16 %v815, %v814
  %v892 = vpack.c.b16 %v817, %v816
  %v893 = vpack.c.b16 %v819, %v818
  %v894 = vpack.c.b16 %v821, %v820
  %v895 = vpack.c.b16 %v823, %v822
  %v896 = vpack.c.b16 %v825, %v824
  %v897 = vpack.c.b16 %v827, %v826
  %v898 = vpack.c.b16 %v829, %v828
  %v899 = vpack.c.b16 %v831, %v830
  %v900 = vpack.c.b16 %v833, %v832
  %v901 = vpack.c.b16 %v835, %v834
  %v902 = vpack.c.b16 %v837, %v836
  %v903 = vpack.c.b16 %v839, %v838
  %968 = vmatprep.subr.bf16.mxu0 0
  %969 = vmatpush1.bf16.msra.mxu0 %v847
  %970 = vmatprep.subr.bf16.mxu0 0
  %971 = vmatpush1.bf16.msra.mxu0 %v846
  %972 = vmatprep.subr.bf16.mxu0 0
  %973 = vmatpush1.bf16.msra.mxu0 %v845
  %974 = vmatprep.subr.bf16.mxu0 0
  %975 = vmatpush1.bf16.msra.mxu0 %v844
  %976 = vmatprep.subr.bf16.mxu0 0
  %977 = vmatpush1.bf16.msra.mxu0 %v843
  %978 = vmatprep.subr.bf16.mxu0 0
  %979 = vmatpush1.bf16.msra.mxu0 %v842
  %980 = vmatprep.subr.bf16.mxu0 0
  %981 = vmatpush1.bf16.msra.mxu0 %v841
  %982 = vmatprep.subr.bf16.mxu0 0
  %983 = vmatpush1.bf16.msra.mxu0 %v840
  %984 = vmatprep.subr.bf16.mxu0 0
  %985 = vmatpush2.bf16.msra.mxu0 %v855
  %986 = vmatprep.subr.bf16.mxu0 0
  %987 = vmatpush2.bf16.msra.mxu0 %v854
  %988 = vmatprep.subr.bf16.mxu0 0
  %989 = vmatpush2.bf16.msra.mxu0 %v853
  %990 = vmatprep.subr.bf16.mxu0 0
  %991 = vmatpush2.bf16.msra.mxu0 %v852
  %992 = vmatprep.subr.bf16.mxu0 0
  %993 = vmatpush2.bf16.msra.mxu0 %v851
  %994 = vmatprep.subr.bf16.mxu0 0
  %995 = vmatpush2.bf16.msra.mxu0 %v850
  %996 = vmatprep.subr.bf16.mxu0 0
  %997 = vmatpush2.bf16.msra.mxu0 %v849
  %998 = vmatprep.subr.bf16.mxu0 0
  %999 = vmatpush2.bf16.msra.mxu0 %v848
  %1000 = vmatprep.mubr.bf16.mxu0 %v457
  %1001 = vmatmul.mubr.bf16.gmra.mxu0 %v456
  %v1002 = vpop.f32.mrf.mxu0
  %v1003 = vadd.f32 %v262, %v1002
  %v1004 = vpop.f32.mrf.mxu0
  %v1005 = vpop.f32.mrf.mxu0
  %v1006 = vadd.f32 %v262, %v1005
  %v1007 = vpop.f32.mrf.mxu0
  %1008 = vmatprep.mubr.bf16.mxu0 %v465
  %1009 = vmatmul.mubr.bf16.gmra.mxu0 %v464
  %v1010 = vpop.f32.mrf.mxu0
  %v1011 = vadd.f32 %v262, %v1010
  %v1012 = vpop.f32.mrf.mxu0
  %v1013 = vpop.f32.mrf.mxu0
  %v1014 = vadd.f32 %v262, %v1013
  %v1015 = vpop.f32.mrf.mxu0
  %1016 = vmatprep.mubr.bf16.mxu0 %v473
  %1017 = vmatmul.mubr.bf16.gmra.mxu0 %v472
  %v1018 = vpop.f32.mrf.mxu0
  %v1019 = vadd.f32 %v262, %v1018
  %v1020 = vpop.f32.mrf.mxu0
  %v1021 = vpop.f32.mrf.mxu0
  %v1022 = vadd.f32 %v262, %v1021
  %v1023 = vpop.f32.mrf.mxu0
  %1024 = vmatprep.mubr.bf16.mxu0 %v481
  %1025 = vmatmul.mubr.bf16.gmra.mxu0 %v480
  %v1026 = vpop.f32.mrf.mxu0
  %v1027 = vadd.f32 %v262, %v1026
  %v1028 = vpop.f32.mrf.mxu0
  %v1029 = vpop.f32.mrf.mxu0
  %v1030 = vadd.f32 %v262, %v1029
  %v1031 = vpop.f32.mrf.mxu0
  %1032 = vmatprep.mubr.bf16.mxu0 %v489
  %1033 = vmatmul.mubr.bf16.gmra.mxu0 %v488
  %v1034 = vpop.f32.mrf.mxu0
  %v1035 = vadd.f32 %v262, %v1034
  %v1036 = vpop.f32.mrf.mxu0
  %v1037 = vpop.f32.mrf.mxu0
  %v1038 = vadd.f32 %v262, %v1037
  %v1039 = vpop.f32.mrf.mxu0
  %1040 = vmatprep.mubr.bf16.mxu0 %v497
  %1041 = vmatmul.mubr.bf16.gmra.mxu0 %v496
  %v1042 = vpop.f32.mrf.mxu0
  %v1043 = vadd.f32 %v262, %v1042
  %v1044 = vpop.f32.mrf.mxu0
  %v1045 = vpop.f32.mrf.mxu0
  %v1046 = vadd.f32 %v262, %v1045
  %v1047 = vpop.f32.mrf.mxu0
  %1048 = vmatprep.mubr.bf16.mxu0 %v505
  %1049 = vmatmul.mubr.bf16.gmra.mxu0 %v504
  %v1050 = vpop.f32.mrf.mxu0
  %v1051 = vadd.f32 %v262, %v1050
  %v1052 = vpop.f32.mrf.mxu0
  %v1053 = vpop.f32.mrf.mxu0
  %v1054 = vadd.f32 %v262, %v1053
  %v1055 = vpop.f32.mrf.mxu0
  %1056 = vmatprep.mubr.bf16.mxu0 %v513
  %1057 = vmatmul.mubr.bf16.gmra.mxu0 %v512
  %v1058 = vpop.f32.mrf.mxu0
  %v1059 = vadd.f32 %v262, %v1058
  %v1060 = vpop.f32.mrf.mxu0
  %v1061 = vpop.f32.mrf.mxu0
  %v1062 = vadd.f32 %v262, %v1061
  %v1063 = vpop.f32.mrf.mxu0
  %1064 = vdwg.mxu0
  %1065 = vmatprep.subr.bf16.mxu0 0
  %1066 = vmatpush1.bf16.msra.mxu0 %v863
  %1067 = vmatprep.subr.bf16.mxu0 0
  %1068 = vmatpush1.bf16.msra.mxu0 %v862
  %1069 = vmatprep.subr.bf16.mxu0 0
  %1070 = vmatpush1.bf16.msra.mxu0 %v861
  %1071 = vmatprep.subr.bf16.mxu0 0
  %1072 = vmatpush1.bf16.msra.mxu0 %v860
  %1073 = vmatprep.subr.bf16.mxu0 0
  %1074 = vmatpush1.bf16.msra.mxu0 %v859
  %1075 = vmatprep.subr.bf16.mxu0 0
  %1076 = vmatpush1.bf16.msra.mxu0 %v858
  %1077 = vmatprep.subr.bf16.mxu0 0
  %1078 = vmatpush1.bf16.msra.mxu0 %v857
  %1079 = vmatprep.subr.bf16.mxu0 0
  %1080 = vmatpush1.bf16.msra.mxu0 %v856
  %1081 = vmatprep.subr.bf16.mxu0 0
  %1082 = vmatpush2.bf16.msra.mxu0 %v871
  %1083 = vmatprep.subr.bf16.mxu0 0
  %1084 = vmatpush2.bf16.msra.mxu0 %v870
  %1085 = vmatprep.subr.bf16.mxu0 0
  %1086 = vmatpush2.bf16.msra.mxu0 %v869
  %1087 = vmatprep.subr.bf16.mxu0 0
  %1088 = vmatpush2.bf16.msra.mxu0 %v868
  %1089 = vmatprep.subr.bf16.mxu0 0
  %1090 = vmatpush2.bf16.msra.mxu0 %v867
  %1091 = vmatprep.subr.bf16.mxu0 0
  %1092 = vmatpush2.bf16.msra.mxu0 %v866
  %1093 = vmatprep.subr.bf16.mxu0 0
  %1094 = vmatpush2.bf16.msra.mxu0 %v865
  %1095 = vmatprep.subr.bf16.mxu0 0
  %1096 = vmatpush2.bf16.msra.mxu0 %v864
  %1097 = vmatprep.mubr.bf16.mxu0 %v459
  %1098 = vmatmul.mubr.bf16.gmra.mxu0 %v458
  %v1099 = vpop.f32.mrf.mxu0
  %v1100 = vadd.f32 %v1003, %v1099
  %v1101 = vpop.f32.mrf.mxu0
  %v1102 = vpop.f32.mrf.mxu0
  %v1103 = vadd.f32 %v1006, %v1102
  %v1104 = vpop.f32.mrf.mxu0
  %1105 = vmatprep.mubr.bf16.mxu0 %v467
  %1106 = vmatmul.mubr.bf16.gmra.mxu0 %v466
  %v1107 = vpop.f32.mrf.mxu0
  %v1108 = vadd.f32 %v1011, %v1107
  %v1109 = vpop.f32.mrf.mxu0
  %v1110 = vpop.f32.mrf.mxu0
  %v1111 = vadd.f32 %v1014, %v1110
  %v1112 = vpop.f32.mrf.mxu0
  %1113 = vmatprep.mubr.bf16.mxu0 %v475
  %1114 = vmatmul.mubr.bf16.gmra.mxu0 %v474
  %v1115 = vpop.f32.mrf.mxu0
  %v1116 = vadd.f32 %v1019, %v1115
  %v1117 = vpop.f32.mrf.mxu0
  %v1118 = vpop.f32.mrf.mxu0
  %v1119 = vadd.f32 %v1022, %v1118
  %v1120 = vpop.f32.mrf.mxu0
  %1121 = vmatprep.mubr.bf16.mxu0 %v483
  %1122 = vmatmul.mubr.bf16.gmra.mxu0 %v482
  %v1123 = vpop.f32.mrf.mxu0
  %v1124 = vadd.f32 %v1027, %v1123
  %v1125 = vpop.f32.mrf.mxu0
  %v1126 = vpop.f32.mrf.mxu0
  %v1127 = vadd.f32 %v1030, %v1126
  %v1128 = vpop.f32.mrf.mxu0
  %1129 = vmatprep.mubr.bf16.mxu0 %v491
  %1130 = vmatmul.mubr.bf16.gmra.mxu0 %v490
  %v1131 = vpop.f32.mrf.mxu0
  %v1132 = vadd.f32 %v1035, %v1131
  %v1133 = vpop.f32.mrf.mxu0
  %v1134 = vpop.f32.mrf.mxu0
  %v1135 = vadd.f32 %v1038, %v1134
  %v1136 = vpop.f32.mrf.mxu0
  %1137 = vmatprep.mubr.bf16.mxu0 %v499
  %1138 = vmatmul.mubr.bf16.gmra.mxu0 %v498
  %v1139 = vpop.f32.mrf.mxu0
  %v1140 = vadd.f32 %v1043, %v1139
  %v1141 = vpop.f32.mrf.mxu0
  %v1142 = vpop.f32.mrf.mxu0
  %v1143 = vadd.f32 %v1046, %v1142
  %v1144 = vpop.f32.mrf.mxu0
  %1145 = vmatprep.mubr.bf16.mxu0 %v507
  %1146 = vmatmul.mubr.bf16.gmra.mxu0 %v506
  %v1147 = vpop.f32.mrf.mxu0
  %v1148 = vadd.f32 %v1051, %v1147
  %v1149 = vpop.f32.mrf.mxu0
  %v1150 = vpop.f32.mrf.mxu0
  %v1151 = vadd.f32 %v1054, %v1150
  %v1152 = vpop.f32.mrf.mxu0
  %1153 = vmatprep.mubr.bf16.mxu0 %v515
  %1154 = vmatmul.mubr.bf16.gmra.mxu0 %v514
  %v1155 = vpop.f32.mrf.mxu0
  %v1156 = vadd.f32 %v1059, %v1155
  %v1157 = vpop.f32.mrf.mxu0
  %v1158 = vpop.f32.mrf.mxu0
  %v1159 = vadd.f32 %v1062, %v1158
  %v1160 = vpop.f32.mrf.mxu0
  %1161 = vdwg.mxu0
  %1162 = vmatprep.subr.bf16.mxu0 0
  %1163 = vmatpush1.bf16.msra.mxu0 %v879
  %1164 = vmatprep.subr.bf16.mxu0 0
  %1165 = vmatpush1.bf16.msra.mxu0 %v878
  %1166 = vmatprep.subr.bf16.mxu0 0
  %1167 = vmatpush1.bf16.msra.mxu0 %v877
  %1168 = vmatprep.subr.bf16.mxu0 0
  %1169 = vmatpush1.bf16.msra.mxu0 %v876
  %1170 = vmatprep.subr.bf16.mxu0 0
  %1171 = vmatpush1.bf16.msra.mxu0 %v875
  %1172 = vmatprep.subr.bf16.mxu0 0
  %1173 = vmatpush1.bf16.msra.mxu0 %v874
  %1174 = vmatprep.subr.bf16.mxu0 0
  %1175 = vmatpush1.bf16.msra.mxu0 %v873
  %1176 = vmatprep.subr.bf16.mxu0 0
  %1177 = vmatpush1.bf16.msra.mxu0 %v872
  %1178 = vmatprep.subr.bf16.mxu0 0
  %1179 = vmatpush2.bf16.msra.mxu0 %v887
  %1180 = vmatprep.subr.bf16.mxu0 0
  %1181 = vmatpush2.bf16.msra.mxu0 %v886
  %1182 = vmatprep.subr.bf16.mxu0 0
  %1183 = vmatpush2.bf16.msra.mxu0 %v885
  %1184 = vmatprep.subr.bf16.mxu0 0
  %1185 = vmatpush2.bf16.msra.mxu0 %v884
  %1186 = vmatprep.subr.bf16.mxu0 0
  %1187 = vmatpush2.bf16.msra.mxu0 %v883
  %1188 = vmatprep.subr.bf16.mxu0 0
  %1189 = vmatpush2.bf16.msra.mxu0 %v882
  %1190 = vmatprep.subr.bf16.mxu0 0
  %1191 = vmatpush2.bf16.msra.mxu0 %v881
  %1192 = vmatprep.subr.bf16.mxu0 0
  %1193 = vmatpush2.bf16.msra.mxu0 %v880
  %1194 = vmatprep.mubr.bf16.mxu0 %v461
  %1195 = vmatmul.mubr.bf16.gmra.mxu0 %v460
  %v1196 = vpop.f32.mrf.mxu0
  %v1197 = vadd.f32 %v1100, %v1196
  %v1198 = vpop.f32.mrf.mxu0
  %v1199 = vpop.f32.mrf.mxu0
  %v1200 = vadd.f32 %v1103, %v1199
  %v1201 = vpop.f32.mrf.mxu0
  %1202 = vmatprep.mubr.bf16.mxu0 %v469
  %1203 = vmatmul.mubr.bf16.gmra.mxu0 %v468
  %v1204 = vpop.f32.mrf.mxu0
  %v1205 = vadd.f32 %v1108, %v1204
  %v1206 = vpop.f32.mrf.mxu0
  %v1207 = vpop.f32.mrf.mxu0
  %v1208 = vadd.f32 %v1111, %v1207
  %v1209 = vpop.f32.mrf.mxu0
  %1210 = vmatprep.mubr.bf16.mxu0 %v477
  %1211 = vmatmul.mubr.bf16.gmra.mxu0 %v476
  %v1212 = vpop.f32.mrf.mxu0
  %v1213 = vadd.f32 %v1116, %v1212
  %v1214 = vpop.f32.mrf.mxu0
  %v1215 = vpop.f32.mrf.mxu0
  %v1216 = vadd.f32 %v1119, %v1215
  %v1217 = vpop.f32.mrf.mxu0
  %1218 = vmatprep.mubr.bf16.mxu0 %v485
  %1219 = vmatmul.mubr.bf16.gmra.mxu0 %v484
  %v1220 = vpop.f32.mrf.mxu0
  %v1221 = vadd.f32 %v1124, %v1220
  %v1222 = vpop.f32.mrf.mxu0
  %v1223 = vpop.f32.mrf.mxu0
  %v1224 = vadd.f32 %v1127, %v1223
  %v1225 = vpop.f32.mrf.mxu0
  %1226 = vmatprep.mubr.bf16.mxu0 %v493
  %1227 = vmatmul.mubr.bf16.gmra.mxu0 %v492
  %v1228 = vpop.f32.mrf.mxu0
  %v1229 = vadd.f32 %v1132, %v1228
  %v1230 = vpop.f32.mrf.mxu0
  %v1231 = vpop.f32.mrf.mxu0
  %v1232 = vadd.f32 %v1135, %v1231
  %v1233 = vpop.f32.mrf.mxu0
  %1234 = vmatprep.mubr.bf16.mxu0 %v501
  %1235 = vmatmul.mubr.bf16.gmra.mxu0 %v500
  %v1236 = vpop.f32.mrf.mxu0
  %v1237 = vadd.f32 %v1140, %v1236
  %v1238 = vpop.f32.mrf.mxu0
  %v1239 = vpop.f32.mrf.mxu0
  %v1240 = vadd.f32 %v1143, %v1239
  %v1241 = vpop.f32.mrf.mxu0
  %1242 = vmatprep.mubr.bf16.mxu0 %v509
  %1243 = vmatmul.mubr.bf16.gmra.mxu0 %v508
  %v1244 = vpop.f32.mrf.mxu0
  %v1245 = vadd.f32 %v1148, %v1244
  %v1246 = vpop.f32.mrf.mxu0
  %v1247 = vpop.f32.mrf.mxu0
  %v1248 = vadd.f32 %v1151, %v1247
  %v1249 = vpop.f32.mrf.mxu0
  %1250 = vmatprep.mubr.bf16.mxu0 %v517
  %1251 = vmatmul.mubr.bf16.gmra.mxu0 %v516
  %v1252 = vpop.f32.mrf.mxu0
  %v1253 = vadd.f32 %v1156, %v1252
  %v1254 = vpop.f32.mrf.mxu0
  %v1255 = vpop.f32.mrf.mxu0
  %v1256 = vadd.f32 %v1159, %v1255
  %v1257 = vpop.f32.mrf.mxu0
  %1258 = vdwg.mxu0
  %1259 = vmatprep.subr.bf16.mxu0 0
  %1260 = vmatpush1.bf16.msra.mxu0 %v895
  %1261 = vmatprep.subr.bf16.mxu0 0
  %1262 = vmatpush1.bf16.msra.mxu0 %v894
  %1263 = vmatprep.subr.bf16.mxu0 0
  %1264 = vmatpush1.bf16.msra.mxu0 %v893
  %1265 = vmatprep.subr.bf16.mxu0 0
  %1266 = vmatpush1.bf16.msra.mxu0 %v892
  %1267 = vmatprep.subr.bf16.mxu0 0
  %1268 = vmatpush1.bf16.msra.mxu0 %v891
  %1269 = vmatprep.subr.bf16.mxu0 0
  %1270 = vmatpush1.bf16.msra.mxu0 %v890
  %1271 = vmatprep.subr.bf16.mxu0 0
  %1272 = vmatpush1.bf16.msra.mxu0 %v889
  %1273 = vmatprep.subr.bf16.mxu0 0
  %1274 = vmatpush1.bf16.msra.mxu0 %v888
  %1275 = vmatprep.subr.bf16.mxu0 0
  %1276 = vmatpush2.bf16.msra.mxu0 %v903
  %1277 = vmatprep.subr.bf16.mxu0 0
  %1278 = vmatpush2.bf16.msra.mxu0 %v902
  %1279 = vmatprep.subr.bf16.mxu0 0
  %1280 = vmatpush2.bf16.msra.mxu0 %v901
  %1281 = vmatprep.subr.bf16.mxu0 0
  %1282 = vmatpush2.bf16.msra.mxu0 %v900
  %1283 = vmatprep.subr.bf16.mxu0 0
  %1284 = vmatpush2.bf16.msra.mxu0 %v899
  %1285 = vmatprep.subr.bf16.mxu0 0
  %1286 = vmatpush2.bf16.msra.mxu0 %v898
  %1287 = vmatprep.subr.bf16.mxu0 0
  %1288 = vmatpush2.bf16.msra.mxu0 %v897
  %1289 = vmatprep.subr.bf16.mxu0 0
  %1290 = vmatpush2.bf16.msra.mxu0 %v896
  %1291 = vmatprep.mubr.bf16.mxu0 %v463
  %1292 = vmatmul.mubr.bf16.gmra.mxu0 %v462
  %v1293 = vpop.f32.mrf.mxu0
  %v1294 = vadd.f32 %v1197, %v1293
  %v1295 = vpop.f32.mrf.mxu0
  %v1296 = vpop.f32.mrf.mxu0
  %v1297 = vadd.f32 %v1200, %v1296
  %v1298 = vpop.f32.mrf.mxu0
  %1299 = vmatprep.mubr.bf16.mxu0 %v471
  %1300 = vmatmul.mubr.bf16.gmra.mxu0 %v470
  %v1301 = vpop.f32.mrf.mxu0
  %v1302 = vadd.f32 %v1205, %v1301
  %v1303 = vpop.f32.mrf.mxu0
  %v1304 = vpop.f32.mrf.mxu0
  %v1305 = vadd.f32 %v1208, %v1304
  %v1306 = vpop.f32.mrf.mxu0
  %1307 = vmatprep.mubr.bf16.mxu0 %v479
  %1308 = vmatmul.mubr.bf16.gmra.mxu0 %v478
  %v1309 = vpop.f32.mrf.mxu0
  %v1310 = vadd.f32 %v1213, %v1309
  %v1311 = vpop.f32.mrf.mxu0
  %v1312 = vpop.f32.mrf.mxu0
  %v1313 = vadd.f32 %v1216, %v1312
  %v1314 = vpop.f32.mrf.mxu0
  %1315 = vmatprep.mubr.bf16.mxu0 %v487
  %1316 = vmatmul.mubr.bf16.gmra.mxu0 %v486
  %v1317 = vpop.f32.mrf.mxu0
  %v1318 = vadd.f32 %v1221, %v1317
  %v1319 = vpop.f32.mrf.mxu0
  %v1320 = vpop.f32.mrf.mxu0
  %v1321 = vadd.f32 %v1224, %v1320
  %v1322 = vpop.f32.mrf.mxu0
  %1323 = vmatprep.mubr.bf16.mxu0 %v495
  %1324 = vmatmul.mubr.bf16.gmra.mxu0 %v494
  %v1325 = vpop.f32.mrf.mxu0
  %v1326 = vadd.f32 %v1229, %v1325
  %v1327 = vpop.f32.mrf.mxu0
  %v1328 = vpop.f32.mrf.mxu0
  %v1329 = vadd.f32 %v1232, %v1328
  %v1330 = vpop.f32.mrf.mxu0
  %1331 = vmatprep.mubr.bf16.mxu0 %v503
  %1332 = vmatmul.mubr.bf16.gmra.mxu0 %v502
  %v1333 = vpop.f32.mrf.mxu0
  %v1334 = vadd.f32 %v1237, %v1333
  %v1335 = vpop.f32.mrf.mxu0
  %v1336 = vpop.f32.mrf.mxu0
  %v1337 = vadd.f32 %v1240, %v1336
  %v1338 = vpop.f32.mrf.mxu0
  %1339 = vmatprep.mubr.bf16.mxu0 %v511
  %1340 = vmatmul.mubr.bf16.gmra.mxu0 %v510
  %v1341 = vpop.f32.mrf.mxu0
  %v1342 = vadd.f32 %v1245, %v1341
  %v1343 = vpop.f32.mrf.mxu0
  %v1344 = vpop.f32.mrf.mxu0
  %v1345 = vadd.f32 %v1248, %v1344
  %v1346 = vpop.f32.mrf.mxu0
  %1347 = vmatprep.mubr.bf16.mxu0 %v519
  %1348 = vmatmul.mubr.bf16.gmra.mxu0 %v518
  %v1349 = vpop.f32.mrf.mxu0
  %v1350 = vadd.f32 %v1253, %v1349
  %v1351 = vpop.f32.mrf.mxu0
  %v1352 = vpop.f32.mrf.mxu0
  %v1353 = vadd.f32 %v1256, %v1352
  %v1354 = vpop.f32.mrf.mxu0
  %1355 = vdwg.mxu0
  %v1356 = vld [vmem:[%s3] sm:$0xff]
  %v1357 = vld [vmem:[%s3 + $0x8] sm:$0xff]
  %v1358 = vld [vmem:[%s3 + $0x10] sm:$0xff]
  %v1359 = vld [vmem:[%s3 + $0x18] sm:$0xff]
  %v1360 = vld [vmem:[%s3 + $0x20] sm:$0xff]
  %v1361 = vld [vmem:[%s3 + $0x28] sm:$0xff]
  %v1362 = vld [vmem:[%s3 + $0x30] sm:$0xff]
  %v1363 = vld [vmem:[%s3 + $0x38] sm:$0xff]
  %v1364 = vld [vmem:[%s3 + $0x40] sm:$0xff]
  %v1365 = vld [vmem:[%s3 + $0x48] sm:$0xff]
  %v1366 = vld [vmem:[%s3 + $0x50] sm:$0xff]
  %v1367 = vld [vmem:[%s3 + $0x58] sm:$0xff]
  %v1368 = vld [vmem:[%s3 + $0x60] sm:$0xff]
  %v1369 = vld [vmem:[%s3 + $0x68] sm:$0xff]
  %v1370 = vld [vmem:[%s3 + $0x70] sm:$0xff]
  %v1371 = vld [vmem:[%s3 + $0x78] sm:$0xff]
  %v1372 = vld [vmem:[%s9] sm:$0xff]
  %v1373 = vld [vmem:[%s9 + $0x8] sm:$0xff]
  %v1374 = vld [vmem:[%s9 + $0x10] sm:$0xff]
  %v1375 = vld [vmem:[%s9 + $0x18] sm:$0xff]
  %v1376 = vld [vmem:[%s10] sm:$0x1]
  %v1378 = vlaneseq
  %v1379 = vshrl.u32 %v1378, 7
  %v1380 = vsub.s32 0, %v1379
  %v1381 = vrot.slane %v1376, %v1380
  %vm1383 = vcmask 261120
  %v1385 = vsel %vm1383, %v1356, 0
  %v1388 = vsel %vm1383, %v1357, 0
  %v1391 = vsel %vm1383, %v1358, 0
  %v1394 = vsel %vm1383, %v1359, 0
  %v1397 = vsel %vm1383, %v1360, 0
  %v1400 = vsel %vm1383, %v1361, 0
  %v1403 = vsel %vm1383, %v1362, 0
  %v1406 = vsel %vm1383, %v1363, 0
  %v1409 = vsel %vm1383, %v1364, 0
  %v1412 = vsel %vm1383, %v1365, 0
  %v1415 = vsel %vm1383, %v1366, 0
  %v1418 = vsel %vm1383, %v1367, 0
  %v1421 = vsel %vm1383, %v1368, 0
  %v1424 = vsel %vm1383, %v1369, 0
  %v1427 = vsel %vm1383, %v1370, 0
  %v1430 = vsel %vm1383, %v1371, 0
  %1432 = vmatprep.subr.mxu0 0.0
  %1433 = vmatpush1.msra.mxu0 0.0
  %1434 = vmatprep.subr.mxu0 0.0
  %1435 = vmatpush1.msra.mxu0 0.0
  %1436 = vmatprep.subr.mxu0 0.0
  %1437 = vmatpush1.msra.mxu0 0.0
  %1438 = vmatprep.subr.mxu0 0.0
  %1439 = vmatpush1.msra.mxu0 0.0
  %1440 = vmatprep.subr.mxu0 0.0
  %1441 = vmatpush1.msra.mxu0 0.0
  %1442 = vmatprep.subr.mxu0 0.0
  %1443 = vmatpush1.msra.mxu0 0.0
  %1444 = vmatprep.subr.mxu0 0.0
  %1445 = vmatpush1.msra.mxu0 0.0
  %1446 = vmatprep.subr.mxu0 0.0
  %1447 = vmatpush1.msra.mxu0 0.0
  %1448 = vmatprep.subr.mxu0 0.0
  %1449 = vmatpush1.msra.mxu0 0.0
  %1450 = vmatprep.subr.mxu0 0.0
  %1451 = vmatpush1.msra.mxu0 0.0
  %1452 = vmatprep.subr.mxu0 0.0
  %1453 = vmatpush1.msra.mxu0 0.0
  %1454 = vmatprep.subr.mxu0 0.0
  %1455 = vmatpush1.msra.mxu0 0.0
  %1456 = vmatprep.subr.mxu0 0.0
  %1457 = vmatpush1.msra.mxu0 %v1375
  %1458 = vmatprep.subr.mxu0 0.0
  %1459 = vmatpush1.msra.mxu0 %v1374
  %1460 = vmatprep.subr.mxu0 0.0
  %1461 = vmatpush1.msra.mxu0 %v1373
  %1462 = vmatprep.subr.mxu0 0.0
  %1463 = vmatpush1.msra.mxu0 %v1372
  %1464 = vmatprep.subr.mxu0 0.0
  %1465 = vmatpush2.msra.mxu0 0.0
  %1466 = vmatprep.subr.mxu0 0.0
  %1467 = vmatpush2.msra.mxu0 0.0
  %1468 = vmatprep.subr.mxu0 0.0
  %1469 = vmatpush2.msra.mxu0 0.0
  %1470 = vmatprep.subr.mxu0 0.0
  %1471 = vmatpush2.msra.mxu0 0.0
  %1472 = vmatprep.subr.mxu0 0.0
  %1473 = vmatpush2.msra.mxu0 0.0
  %1474 = vmatprep.subr.mxu0 0.0
  %1475 = vmatpush2.msra.mxu0 0.0
  %1476 = vmatprep.subr.mxu0 0.0
  %1477 = vmatpush2.msra.mxu0 0.0
  %1478 = vmatprep.subr.mxu0 0.0
  %1479 = vmatpush2.msra.mxu0 0.0
  %1480 = vmatprep.subr.mxu0 0.0
  %1481 = vmatpush2.msra.mxu0 0.0
  %1482 = vmatprep.subr.mxu0 0.0
  %1483 = vmatpush2.msra.mxu0 0.0
  %1484 = vmatprep.subr.mxu0 0.0
  %1485 = vmatpush2.msra.mxu0 0.0
  %1486 = vmatprep.subr.mxu0 0.0
  %1487 = vmatpush2.msra.mxu0 0.0
  %1488 = vmatprep.subr.mxu0 0.0
  %1489 = vmatpush2.msra.mxu0 0.0
  %1490 = vmatprep.subr.mxu0 0.0
  %1491 = vmatpush2.msra.mxu0 0.0
  %1492 = vmatprep.subr.mxu0 0.0
  %1493 = vmatpush2.msra.mxu0 0.0
  %1494 = vmatprep.subr.mxu0 0.0
  %1495 = vmatpush2.msra.mxu0 0.0
  %1496 = vmatprep.mubr.f32.mxu0 0.0
  %1497 = vmatmul.mubr.f32.gmra.mxu0 %v1385
  %v1498 = vpop.f32.mrf.mxu0
  %v1499 = vadd.f32 %v1381, %v1498
  %v1500 = vpop.f32.mrf.mxu0
  %1501 = vmatprep.mubr.f32.mxu0 0.0
  %1502 = vmatmul.mubr.f32.gmra.mxu0 %v1388
  %v1503 = vpop.f32.mrf.mxu0
  %v1504 = vadd.f32 %v1381, %v1503
  %v1505 = vpop.f32.mrf.mxu0
  %1506 = vmatprep.mubr.f32.mxu0 0.0
  %1507 = vmatmul.mubr.f32.gmra.mxu0 %v1391
  %v1508 = vpop.f32.mrf.mxu0
  %v1509 = vadd.f32 %v1381, %v1508
  %v1510 = vpop.f32.mrf.mxu0
  %1511 = vmatprep.mubr.f32.mxu0 0.0
  %1512 = vmatmul.mubr.f32.gmra.mxu0 %v1394
  %v1513 = vpop.f32.mrf.mxu0
  %v1514 = vadd.f32 %v1381, %v1513
  %v1515 = vpop.f32.mrf.mxu0
  %1516 = vmatprep.mubr.f32.mxu0 0.0
  %1517 = vmatmul.mubr.f32.gmra.mxu0 %v1397
  %v1518 = vpop.f32.mrf.mxu0
  %v1519 = vadd.f32 %v1381, %v1518
  %v1520 = vpop.f32.mrf.mxu0
  %1521 = vmatprep.mubr.f32.mxu0 0.0
  %1522 = vmatmul.mubr.f32.gmra.mxu0 %v1400
  %v1523 = vpop.f32.mrf.mxu0
  %v1524 = vadd.f32 %v1381, %v1523
  %v1525 = vpop.f32.mrf.mxu0
  %1526 = vmatprep.mubr.f32.mxu0 0.0
  %1527 = vmatmul.mubr.f32.gmra.mxu0 %v1403
  %v1528 = vpop.f32.mrf.mxu0
  %v1529 = vadd.f32 %v1381, %v1528
  %v1530 = vpop.f32.mrf.mxu0
  %1531 = vmatprep.mubr.f32.mxu0 0.0
  %1532 = vmatmul.mubr.f32.gmra.mxu0 %v1406
  %v1533 = vpop.f32.mrf.mxu0
  %v1534 = vadd.f32 %v1381, %v1533
  %v1535 = vpop.f32.mrf.mxu0
  %1536 = vmatprep.mubr.f32.mxu0 0.0
  %1537 = vmatmul.mubr.f32.gmra.mxu0 %v1409
  %v1538 = vpop.f32.mrf.mxu0
  %v1539 = vadd.f32 %v1381, %v1538
  %v1540 = vpop.f32.mrf.mxu0
  %1541 = vmatprep.mubr.f32.mxu0 0.0
  %1542 = vmatmul.mubr.f32.gmra.mxu0 %v1412
  %v1543 = vpop.f32.mrf.mxu0
  %v1544 = vadd.f32 %v1381, %v1543
  %v1545 = vpop.f32.mrf.mxu0
  %1546 = vmatprep.mubr.f32.mxu0 0.0
  %1547 = vmatmul.mubr.f32.gmra.mxu0 %v1415
  %v1548 = vpop.f32.mrf.mxu0
  %v1549 = vadd.f32 %v1381, %v1548
  %v1550 = vpop.f32.mrf.mxu0
  %1551 = vmatprep.mubr.f32.mxu0 0.0
  %1552 = vmatmul.mubr.f32.gmra.mxu0 %v1418
  %v1553 = vpop.f32.mrf.mxu0
  %v1554 = vadd.f32 %v1381, %v1553
  %v1555 = vpop.f32.mrf.mxu0
  %1556 = vmatprep.mubr.f32.mxu0 0.0
  %1557 = vmatmul.mubr.f32.gmra.mxu0 %v1421
  %v1558 = vpop.f32.mrf.mxu0
  %v1559 = vadd.f32 %v1381, %v1558
  %v1560 = vpop.f32.mrf.mxu0
  %1561 = vmatprep.mubr.f32.mxu0 0.0
  %1562 = vmatmul.mubr.f32.gmra.mxu0 %v1424
  %v1563 = vpop.f32.mrf.mxu0
  %v1564 = vadd.f32 %v1381, %v1563
  %v1565 = vpop.f32.mrf.mxu0
  %1566 = vmatprep.mubr.f32.mxu0 0.0
  %1567 = vmatmul.mubr.f32.gmra.mxu0 %v1427
  %v1568 = vpop.f32.mrf.mxu0
  %v1569 = vadd.f32 %v1381, %v1568
  %v1570 = vpop.f32.mrf.mxu0
  %1571 = vmatprep.mubr.f32.mxu0 0.0
  %1572 = vmatmul.mubr.f32.gmra.mxu0 %v1430
  %v1573 = vpop.f32.mrf.mxu0
  %v1574 = vadd.f32 %v1381, %v1573
  %v1575 = vpop.f32.mrf.mxu0
  %1576 = vdwg.mxu0
  %v1577 = vxor.u32 %v1499, 2147483648
  %v1578 = vxor.u32 %v1504, 2147483648
  %v1579 = vxor.u32 %v1509, 2147483648
  %v1580 = vxor.u32 %v1514, 2147483648
  %v1581 = vxor.u32 %v1519, 2147483648
  %v1582 = vxor.u32 %v1524, 2147483648
  %v1583 = vxor.u32 %v1529, 2147483648
  %v1584 = vxor.u32 %v1534, 2147483648
  %v1585 = vxor.u32 %v1539, 2147483648
  %v1586 = vxor.u32 %v1544, 2147483648
  %v1587 = vxor.u32 %v1549, 2147483648
  %v1588 = vxor.u32 %v1554, 2147483648
  %v1589 = vxor.u32 %v1559, 2147483648
  %v1590 = vxor.u32 %v1564, 2147483648
  %v1591 = vxor.u32 %v1569, 2147483648
  %v1592 = vxor.u32 %v1574, 2147483648
  %v1593 = vmul.f32 %v1577, 1.442695
  %v1594 = vpow.pop %v1593
  %v1595 = vmul.f32 %v1578, 1.442695
  %v1596 = vpow.pop %v1595
  %v1597 = vmul.f32 %v1579, 1.442695
  %v1598 = vpow.pop %v1597
  %v1599 = vmul.f32 %v1580, 1.442695
  %v1600 = vpow.pop %v1599
  %v1601 = vmul.f32 %v1581, 1.442695
  %v1602 = vpow.pop %v1601
  %v1603 = vmul.f32 %v1582, 1.442695
  %v1604 = vpow.pop %v1603
  %v1605 = vmul.f32 %v1583, 1.442695
  %v1606 = vpow.pop %v1605
  %v1607 = vmul.f32 %v1584, 1.442695
  %v1608 = vpow.pop %v1607
  %v1609 = vmul.f32 %v1585, 1.442695
  %v1610 = vpow.pop %v1609
  %v1611 = vmul.f32 %v1586, 1.442695
  %v1612 = vpow.pop %v1611
  %v1613 = vmul.f32 %v1587, 1.442695
  %v1614 = vpow.pop %v1613
  %v1615 = vmul.f32 %v1588, 1.442695
  %v1616 = vpow.pop %v1615
  %v1617 = vmul.f32 %v1589, 1.442695
  %v1618 = vpow.pop %v1617
  %v1619 = vmul.f32 %v1590, 1.442695
  %v1620 = vpow.pop %v1619
  %v1621 = vmul.f32 %v1591, 1.442695
  %v1622 = vpow.pop %v1621
  %v1623 = vmul.f32 %v1592, 1.442695
  %v1624 = vpow.pop %v1623
  %v1625 = vadd.f32 %v1594, 1.0
  %v1626 = vadd.f32 %v1596, 1.0
  %v1627 = vadd.f32 %v1598, 1.0
  %v1628 = vadd.f32 %v1600, 1.0
  %v1629 = vadd.f32 %v1602, 1.0
  %v1630 = vadd.f32 %v1604, 1.0
  %v1631 = vadd.f32 %v1606, 1.0
  %v1632 = vadd.f32 %v1608, 1.0
  %v1633 = vadd.f32 %v1610, 1.0
  %v1634 = vadd.f32 %v1612, 1.0
  %v1635 = vadd.f32 %v1614, 1.0
  %v1636 = vadd.f32 %v1616, 1.0
  %v1637 = vadd.f32 %v1618, 1.0
  %v1638 = vadd.f32 %v1620, 1.0
  %v1639 = vadd.f32 %v1622, 1.0
  %v1640 = vadd.f32 %v1624, 1.0
  %v1641 = vrcp.pop %v1625
  %v1642 = vmul.f32 1.0, %v1641
  %v1643 = vrcp.pop %v1626
  %v1644 = vmul.f32 1.0, %v1643
  %v1645 = vrcp.pop %v1627
  %v1646 = vmul.f32 1.0, %v1645
  %v1647 = vrcp.pop %v1628
  %v1648 = vmul.f32 1.0, %v1647
  %v1649 = vrcp.pop %v1629
  %v1650 = vmul.f32 1.0, %v1649
  %v1651 = vrcp.pop %v1630
  %v1652 = vmul.f32 1.0, %v1651
  %v1653 = vrcp.pop %v1631
  %v1654 = vmul.f32 1.0, %v1653
  %v1655 = vrcp.pop %v1632
  %v1656 = vmul.f32 1.0, %v1655
  %v1657 = vrcp.pop %v1633
  %v1658 = vmul.f32 1.0, %v1657
  %v1659 = vrcp.pop %v1634
  %v1660 = vmul.f32 1.0, %v1659
  %v1661 = vrcp.pop %v1635
  %v1662 = vmul.f32 1.0, %v1661
  %v1663 = vrcp.pop %v1636
  %v1664 = vmul.f32 1.0, %v1663
  %v1665 = vrcp.pop %v1637
  %v1666 = vmul.f32 1.0, %v1665
  %v1667 = vrcp.pop %v1638
  %v1668 = vmul.f32 1.0, %v1667
  %v1669 = vrcp.pop %v1639
  %v1670 = vmul.f32 1.0, %v1669
  %v1671 = vrcp.pop %v1640
  %v1672 = vmul.f32 1.0, %v1671
  %v1673 = vmul.f32 %v1499, %v1642
  %v1674 = vmul.f32 %v1504, %v1644
  %v1675 = vmul.f32 %v1509, %v1646
  %v1676 = vmul.f32 %v1514, %v1648
  %v1677 = vmul.f32 %v1519, %v1650
  %v1678 = vmul.f32 %v1524, %v1652
  %v1679 = vmul.f32 %v1529, %v1654
  %v1680 = vmul.f32 %v1534, %v1656
  %v1681 = vmul.f32 %v1539, %v1658
  %v1682 = vmul.f32 %v1544, %v1660
  %v1683 = vmul.f32 %v1549, %v1662
  %v1684 = vmul.f32 %v1554, %v1664
  %v1685 = vmul.f32 %v1559, %v1666
  %v1686 = vmul.f32 %v1564, %v1668
  %v1687 = vmul.f32 %v1569, %v1670
  %v1688 = vmul.f32 %v1574, %v1672
  %v1689 = vld [vmem:[%s2] sm:$0xff]
  %v1690 = vld [vmem:[%s2 + $0x8] sm:$0xff]
  %v1691 = vld [vmem:[%s2 + $0x10] sm:$0xff]
  %v1692 = vld [vmem:[%s2 + $0x18] sm:$0xff]
  %v1693 = vld [vmem:[%s2 + $0x20] sm:$0xff]
  %v1694 = vld [vmem:[%s2 + $0x28] sm:$0xff]
  %v1695 = vld [vmem:[%s2 + $0x30] sm:$0xff]
  %v1696 = vld [vmem:[%s2 + $0x38] sm:$0xff]
  %v1697 = vld [vmem:[%s2 + $0x40] sm:$0xff]
  %v1698 = vld [vmem:[%s2 + $0x48] sm:$0xff]
  %v1699 = vld [vmem:[%s2 + $0x50] sm:$0xff]
  %v1700 = vld [vmem:[%s2 + $0x58] sm:$0xff]
  %v1701 = vld [vmem:[%s2 + $0x60] sm:$0xff]
  %v1702 = vld [vmem:[%s2 + $0x68] sm:$0xff]
  %v1703 = vld [vmem:[%s2 + $0x70] sm:$0xff]
  %v1704 = vld [vmem:[%s2 + $0x78] sm:$0xff]
  %v1705 = vld [vmem:[%s11] sm:$0xff]
  %v1706 = vld [vmem:[%s12] sm:$0x1]
  %v1708 = vlaneseq
  %v1709 = vshrl.u32 %v1708, 7
  %v1710 = vsub.s32 0, %v1709
  %v1711 = vrot.slane %v1706, %v1710
  %vm1713 = vcmask 64512
  %v1715 = vsel %vm1713, %v1689, 0
  %v1718 = vsel %vm1713, %v1690, 0
  %v1721 = vsel %vm1713, %v1691, 0
  %v1724 = vsel %vm1713, %v1692, 0
  %v1727 = vsel %vm1713, %v1693, 0
  %v1730 = vsel %vm1713, %v1694, 0
  %v1733 = vsel %vm1713, %v1695, 0
  %v1736 = vsel %vm1713, %v1696, 0
  %v1739 = vsel %vm1713, %v1697, 0
  %v1742 = vsel %vm1713, %v1698, 0
  %v1745 = vsel %vm1713, %v1699, 0
  %v1748 = vsel %vm1713, %v1700, 0
  %v1751 = vsel %vm1713, %v1701, 0
  %v1754 = vsel %vm1713, %v1702, 0
  %v1757 = vsel %vm1713, %v1703, 0
  %v1760 = vsel %vm1713, %v1704, 0
  %1762 = vmatprep.subr.mxu0 0.0
  %1763 = vmatpush1.msra.mxu0 0.0
  %1764 = vmatprep.subr.mxu0 0.0
  %1765 = vmatpush1.msra.mxu0 0.0
  %1766 = vmatprep.subr.mxu0 0.0
  %1767 = vmatpush1.msra.mxu0 0.0
  %1768 = vmatprep.subr.mxu0 0.0
  %1769 = vmatpush1.msra.mxu0 0.0
  %1770 = vmatprep.subr.mxu0 0.0
  %1771 = vmatpush1.msra.mxu0 0.0
  %1772 = vmatprep.subr.mxu0 0.0
  %1773 = vmatpush1.msra.mxu0 0.0
  %1774 = vmatprep.subr.mxu0 0.0
  %1775 = vmatpush1.msra.mxu0 0.0
  %1776 = vmatprep.subr.mxu0 0.0
  %1777 = vmatpush1.msra.mxu0 0.0
  %1778 = vmatprep.subr.mxu0 0.0
  %1779 = vmatpush1.msra.mxu0 0.0
  %1780 = vmatprep.subr.mxu0 0.0
  %1781 = vmatpush1.msra.mxu0 0.0
  %1782 = vmatprep.subr.mxu0 0.0
  %1783 = vmatpush1.msra.mxu0 0.0
  %1784 = vmatprep.subr.mxu0 0.0
  %1785 = vmatpush1.msra.mxu0 0.0
  %1786 = vmatprep.subr.mxu0 0.0
  %1787 = vmatpush1.msra.mxu0 0.0
  %1788 = vmatprep.subr.mxu0 0.0
  %1789 = vmatpush1.msra.mxu0 0.0
  %1790 = vmatprep.subr.mxu0 0.0
  %1791 = vmatpush1.msra.mxu0 0.0
  %1792 = vmatprep.subr.mxu0 0.0
  %1793 = vmatpush1.msra.mxu0 %v1705
  %1794 = vmatprep.subr.mxu0 0.0
  %1795 = vmatpush2.msra.mxu0 0.0
  %1796 = vmatprep.subr.mxu0 0.0
  %1797 = vmatpush2.msra.mxu0 0.0
  %1798 = vmatprep.subr.mxu0 0.0
  %1799 = vmatpush2.msra.mxu0 0.0
  %1800 = vmatprep.subr.mxu0 0.0
  %1801 = vmatpush2.msra.mxu0 0.0
  %1802 = vmatprep.subr.mxu0 0.0
  %1803 = vmatpush2.msra.mxu0 0.0
  %1804 = vmatprep.subr.mxu0 0.0
  %1805 = vmatpush2.msra.mxu0 0.0
  %1806 = vmatprep.subr.mxu0 0.0
  %1807 = vmatpush2.msra.mxu0 0.0
  %1808 = vmatprep.subr.mxu0 0.0
  %1809 = vmatpush2.msra.mxu0 0.0
  %1810 = vmatprep.subr.mxu0 0.0
  %1811 = vmatpush2.msra.mxu0 0.0
  %1812 = vmatprep.subr.mxu0 0.0
  %1813 = vmatpush2.msra.mxu0 0.0
  %1814 = vmatprep.subr.mxu0 0.0
  %1815 = vmatpush2.msra.mxu0 0.0
  %1816 = vmatprep.subr.mxu0 0.0
  %1817 = vmatpush2.msra.mxu0 0.0
  %1818 = vmatprep.subr.mxu0 0.0
  %1819 = vmatpush2.msra.mxu0 0.0
  %1820 = vmatprep.subr.mxu0 0.0
  %1821 = vmatpush2.msra.mxu0 0.0
  %1822 = vmatprep.subr.mxu0 0.0
  %1823 = vmatpush2.msra.mxu0 0.0
  %1824 = vmatprep.subr.mxu0 0.0
  %1825 = vmatpush2.msra.mxu0 0.0
  %1826 = vmatprep.mubr.f32.mxu0 0.0
  %1827 = vmatmul.mubr.f32.gmra.mxu0 %v1715
  %v1828 = vpop.f32.mrf.mxu0
  %v1829 = vadd.f32 %v1711, %v1828
  %v1830 = vpop.f32.mrf.mxu0
  %1831 = vmatprep.mubr.f32.mxu0 0.0
  %1832 = vmatmul.mubr.f32.gmra.mxu0 %v1718
  %v1833 = vpop.f32.mrf.mxu0
  %v1834 = vadd.f32 %v1711, %v1833
  %v1835 = vpop.f32.mrf.mxu0
  %1836 = vmatprep.mubr.f32.mxu0 0.0
  %1837 = vmatmul.mubr.f32.gmra.mxu0 %v1721
  %v1838 = vpop.f32.mrf.mxu0
  %v1839 = vadd.f32 %v1711, %v1838
  %v1840 = vpop.f32.mrf.mxu0
  %1841 = vmatprep.mubr.f32.mxu0 0.0
  %1842 = vmatmul.mubr.f32.gmra.mxu0 %v1724
  %v1843 = vpop.f32.mrf.mxu0
  %v1844 = vadd.f32 %v1711, %v1843
  %v1845 = vpop.f32.mrf.mxu0
  %1846 = vmatprep.mubr.f32.mxu0 0.0
  %1847 = vmatmul.mubr.f32.gmra.mxu0 %v1727
  %v1848 = vpop.f32.mrf.mxu0
  %v1849 = vadd.f32 %v1711, %v1848
  %v1850 = vpop.f32.mrf.mxu0
  %1851 = vmatprep.mubr.f32.mxu0 0.0
  %1852 = vmatmul.mubr.f32.gmra.mxu0 %v1730
  %v1853 = vpop.f32.mrf.mxu0
  %v1854 = vadd.f32 %v1711, %v1853
  %v1855 = vpop.f32.mrf.mxu0
  %1856 = vmatprep.mubr.f32.mxu0 0.0
  %1857 = vmatmul.mubr.f32.gmra.mxu0 %v1733
  %v1858 = vpop.f32.mrf.mxu0
  %v1859 = vadd.f32 %v1711, %v1858
  %v1860 = vpop.f32.mrf.mxu0
  %1861 = vmatprep.mubr.f32.mxu0 0.0
  %1862 = vmatmul.mubr.f32.gmra.mxu0 %v1736
  %v1863 = vpop.f32.mrf.mxu0
  %v1864 = vadd.f32 %v1711, %v1863
  %v1865 = vpop.f32.mrf.mxu0
  %1866 = vmatprep.mubr.f32.mxu0 0.0
  %1867 = vmatmul.mubr.f32.gmra.mxu0 %v1739
  %v1868 = vpop.f32.mrf.mxu0
  %v1869 = vadd.f32 %v1711, %v1868
  %v1870 = vpop.f32.mrf.mxu0
  %1871 = vmatprep.mubr.f32.mxu0 0.0
  %1872 = vmatmul.mubr.f32.gmra.mxu0 %v1742
  %v1873 = vpop.f32.mrf.mxu0
  %v1874 = vadd.f32 %v1711, %v1873
  %v1875 = vpop.f32.mrf.mxu0
  %1876 = vmatprep.mubr.f32.mxu0 0.0
  %1877 = vmatmul.mubr.f32.gmra.mxu0 %v1745
  %v1878 = vpop.f32.mrf.mxu0
  %v1879 = vadd.f32 %v1711, %v1878
  %v1880 = vpop.f32.mrf.mxu0
  %1881 = vmatprep.mubr.f32.mxu0 0.0
  %1882 = vmatmul.mubr.f32.gmra.mxu0 %v1748
  %v1883 = vpop.f32.mrf.mxu0
  %v1884 = vadd.f32 %v1711, %v1883
  %v1885 = vpop.f32.mrf.mxu0
  %1886 = vmatprep.mubr.f32.mxu0 0.0
  %1887 = vmatmul.mubr.f32.gmra.mxu0 %v1751
  %v1888 = vpop.f32.mrf.mxu0
  %v1889 = vadd.f32 %v1711, %v1888
  %v1890 = vpop.f32.mrf.mxu0
  %1891 = vmatprep.mubr.f32.mxu0 0.0
  %1892 = vmatmul.mubr.f32.gmra.mxu0 %v1754
  %v1893 = vpop.f32.mrf.mxu0
  %v1894 = vadd.f32 %v1711, %v1893
  %v1895 = vpop.f32.mrf.mxu0
  %1896 = vmatprep.mubr.f32.mxu0 0.0
  %1897 = vmatmul.mubr.f32.gmra.mxu0 %v1757
  %v1898 = vpop.f32.mrf.mxu0
  %v1899 = vadd.f32 %v1711, %v1898
  %v1900 = vpop.f32.mrf.mxu0
  %1901 = vmatprep.mubr.f32.mxu0 0.0
  %1902 = vmatmul.mubr.f32.gmra.mxu0 %v1760
  %v1903 = vpop.f32.mrf.mxu0
  %v1904 = vadd.f32 %v1711, %v1903
  %v1905 = vpop.f32.mrf.mxu0
  %1906 = vdwg.mxu0
  %v1907 = vxor.u32 %v1829, 2147483648
  %v1908 = vxor.u32 %v1834, 2147483648
  %v1909 = vxor.u32 %v1839, 2147483648
  %v1910 = vxor.u32 %v1844, 2147483648
  %v1911 = vxor.u32 %v1849, 2147483648
  %v1912 = vxor.u32 %v1854, 2147483648
  %v1913 = vxor.u32 %v1859, 2147483648
  %v1914 = vxor.u32 %v1864, 2147483648
  %v1915 = vxor.u32 %v1869, 2147483648
  %v1916 = vxor.u32 %v1874, 2147483648
  %v1917 = vxor.u32 %v1879, 2147483648
  %v1918 = vxor.u32 %v1884, 2147483648
  %v1919 = vxor.u32 %v1889, 2147483648
  %v1920 = vxor.u32 %v1894, 2147483648
  %v1921 = vxor.u32 %v1899, 2147483648
  %v1922 = vxor.u32 %v1904, 2147483648
  %v1923 = vmul.f32 %v1907, 1.442695
  %v1924 = vpow.pop %v1923
  %v1925 = vmul.f32 %v1908, 1.442695
  %v1926 = vpow.pop %v1925
  %v1927 = vmul.f32 %v1909, 1.442695
  %v1928 = vpow.pop %v1927
  %v1929 = vmul.f32 %v1910, 1.442695
  %v1930 = vpow.pop %v1929
  %v1931 = vmul.f32 %v1911, 1.442695
  %v1932 = vpow.pop %v1931
  %v1933 = vmul.f32 %v1912, 1.442695
  %v1934 = vpow.pop %v1933
  %v1935 = vmul.f32 %v1913, 1.442695
  %v1936 = vpow.pop %v1935
  %v1937 = vmul.f32 %v1914, 1.442695
  %v1938 = vpow.pop %v1937
  %v1939 = vmul.f32 %v1915, 1.442695
  %v1940 = vpow.pop %v1939
  %v1941 = vmul.f32 %v1916, 1.442695
  %v1942 = vpow.pop %v1941
  %v1943 = vmul.f32 %v1917, 1.442695
  %v1944 = vpow.pop %v1943
  %v1945 = vmul.f32 %v1918, 1.442695
  %v1946 = vpow.pop %v1945
  %v1947 = vmul.f32 %v1919, 1.442695
  %v1948 = vpow.pop %v1947
  %v1949 = vmul.f32 %v1920, 1.442695
  %v1950 = vpow.pop %v1949
  %v1951 = vmul.f32 %v1921, 1.442695
  %v1952 = vpow.pop %v1951
  %v1953 = vmul.f32 %v1922, 1.442695
  %v1954 = vpow.pop %v1953
  %v1955 = vadd.f32 %v1924, 1.0
  %v1956 = vadd.f32 %v1926, 1.0
  %v1957 = vadd.f32 %v1928, 1.0
  %v1958 = vadd.f32 %v1930, 1.0
  %v1959 = vadd.f32 %v1932, 1.0
  %v1960 = vadd.f32 %v1934, 1.0
  %v1961 = vadd.f32 %v1936, 1.0
  %v1962 = vadd.f32 %v1938, 1.0
  %v1963 = vadd.f32 %v1940, 1.0
  %v1964 = vadd.f32 %v1942, 1.0
  %v1965 = vadd.f32 %v1944, 1.0
  %v1966 = vadd.f32 %v1946, 1.0
  %v1967 = vadd.f32 %v1948, 1.0
  %v1968 = vadd.f32 %v1950, 1.0
  %v1969 = vadd.f32 %v1952, 1.0
  %v1970 = vadd.f32 %v1954, 1.0
  %v1971 = vrcp.pop %v1955
  %v1972 = vmul.f32 1.0, %v1971
  %v1973 = vrcp.pop %v1956
  %v1974 = vmul.f32 1.0, %v1973
  %v1975 = vrcp.pop %v1957
  %v1976 = vmul.f32 1.0, %v1975
  %v1977 = vrcp.pop %v1958
  %v1978 = vmul.f32 1.0, %v1977
  %v1979 = vrcp.pop %v1959
  %v1980 = vmul.f32 1.0, %v1979
  %v1981 = vrcp.pop %v1960
  %v1982 = vmul.f32 1.0, %v1981
  %v1983 = vrcp.pop %v1961
  %v1984 = vmul.f32 1.0, %v1983
  %v1985 = vrcp.pop %v1962
  %v1986 = vmul.f32 1.0, %v1985
  %v1987 = vrcp.pop %v1963
  %v1988 = vmul.f32 1.0, %v1987
  %v1989 = vrcp.pop %v1964
  %v1990 = vmul.f32 1.0, %v1989
  %v1991 = vrcp.pop %v1965
  %v1992 = vmul.f32 1.0, %v1991
  %v1993 = vrcp.pop %v1966
  %v1994 = vmul.f32 1.0, %v1993
  %v1995 = vrcp.pop %v1967
  %v1996 = vmul.f32 1.0, %v1995
  %v1997 = vrcp.pop %v1968
  %v1998 = vmul.f32 1.0, %v1997
  %v1999 = vrcp.pop %v1969
  %v2000 = vmul.f32 1.0, %v1999
  %v2001 = vrcp.pop %v1970
  %v2002 = vmul.f32 1.0, %v2001
  %v2003 = vmul.f32 %v1829, %v1972
  %v2004 = vmul.f32 %v1834, %v1974
  %v2005 = vmul.f32 %v1839, %v1976
  %v2006 = vmul.f32 %v1844, %v1978
  %v2007 = vmul.f32 %v1849, %v1980
  %v2008 = vmul.f32 %v1854, %v1982
  %v2009 = vmul.f32 %v1859, %v1984
  %v2010 = vmul.f32 %v1864, %v1986
  %v2011 = vmul.f32 %v1869, %v1988
  %v2012 = vmul.f32 %v1874, %v1990
  %v2013 = vmul.f32 %v1879, %v1992
  %v2014 = vmul.f32 %v1884, %v1994
  %v2015 = vmul.f32 %v1889, %v1996
  %v2016 = vmul.f32 %v1894, %v1998
  %v2017 = vmul.f32 %v1899, %v2000
  %v2018 = vmul.f32 %v1904, %v2002
  %v2019 = vld [vmem:[%s14] sm:$0xff]
  %v2020 = vld [vmem:[%s14 + $0x8] sm:$0xff]
  %v2021 = vld [vmem:[%s14 + $0x10] sm:$0xff]
  %v2022 = vld [vmem:[%s14 + $0x18] sm:$0xff]
  %v2023 = vld [vmem:[%s15] sm:$0xff]
  %v2024 = vld [vmem:[%s15 + $0x8] sm:$0xff]
  %vm2025 = vcmask 130048
  %v2027 = vsel %vm2025, %v2003, 0
  %v2030 = vsel %vm2025, %v2004, 0
  %v2033 = vsel %vm2025, %v2005, 0
  %v2036 = vsel %vm2025, %v2006, 0
  %v2039 = vsel %vm2025, %v2007, 0
  %v2042 = vsel %vm2025, %v2008, 0
  %v2045 = vsel %vm2025, %v2009, 0
  %v2048 = vsel %vm2025, %v2010, 0
  %v2051 = vsel %vm2025, %v2011, 0
  %v2054 = vsel %vm2025, %v2012, 0
  %v2057 = vsel %vm2025, %v2013, 0
  %v2060 = vsel %vm2025, %v2014, 0
  %v2063 = vsel %vm2025, %v2015, 0
  %v2066 = vsel %vm2025, %v2016, 0
  %v2069 = vsel %vm2025, %v2017, 0
  %v2072 = vsel %vm2025, %v2018, 0
  %2074 = vmatprep.subr.mxu0 0.0
  %2075 = vmatpush1.msra.mxu0 0.0
  %2076 = vmatprep.subr.mxu0 0.0
  %2077 = vmatpush1.msra.mxu0 0.0
  %2078 = vmatprep.subr.mxu0 0.0
  %2079 = vmatpush1.msra.mxu0 0.0
  %2080 = vmatprep.subr.mxu0 0.0
  %2081 = vmatpush1.msra.mxu0 0.0
  %2082 = vmatprep.subr.mxu0 0.0
  %2083 = vmatpush1.msra.mxu0 0.0
  %2084 = vmatprep.subr.mxu0 0.0
  %2085 = vmatpush1.msra.mxu0 0.0
  %2086 = vmatprep.subr.mxu0 0.0
  %2087 = vmatpush1.msra.mxu0 0.0
  %2088 = vmatprep.subr.mxu0 0.0
  %2089 = vmatpush1.msra.mxu0 0.0
  %2090 = vmatprep.subr.mxu0 0.0
  %2091 = vmatpush1.msra.mxu0 0.0
  %2092 = vmatprep.subr.mxu0 0.0
  %2093 = vmatpush1.msra.mxu0 0.0
  %2094 = vmatprep.subr.mxu0 0.0
  %2095 = vmatpush1.msra.mxu0 0.0
  %2096 = vmatprep.subr.mxu0 0.0
  %2097 = vmatpush1.msra.mxu0 0.0
  %2098 = vmatprep.subr.mxu0 0.0
  %2099 = vmatpush1.msra.mxu0 0.0
  %2100 = vmatprep.subr.mxu0 0.0
  %2101 = vmatpush1.msra.mxu0 0.0
  %2102 = vmatprep.subr.mxu0 0.0
  %2103 = vmatpush1.msra.mxu0 %v2024
  %2104 = vmatprep.subr.mxu0 0.0
  %2105 = vmatpush1.msra.mxu0 %v2023
  %2106 = vmatprep.subr.mxu0 0.0
  %2107 = vmatpush2.msra.mxu0 0.0
  %2108 = vmatprep.subr.mxu0 0.0
  %2109 = vmatpush2.msra.mxu0 0.0
  %2110 = vmatprep.subr.mxu0 0.0
  %2111 = vmatpush2.msra.mxu0 0.0
  %2112 = vmatprep.subr.mxu0 0.0
  %2113 = vmatpush2.msra.mxu0 0.0
  %2114 = vmatprep.subr.mxu0 0.0
  %2115 = vmatpush2.msra.mxu0 0.0
  %2116 = vmatprep.subr.mxu0 0.0
  %2117 = vmatpush2.msra.mxu0 0.0
  %2118 = vmatprep.subr.mxu0 0.0
  %2119 = vmatpush2.msra.mxu0 0.0
  %2120 = vmatprep.subr.mxu0 0.0
  %2121 = vmatpush2.msra.mxu0 0.0
  %2122 = vmatprep.subr.mxu0 0.0
  %2123 = vmatpush2.msra.mxu0 0.0
  %2124 = vmatprep.subr.mxu0 0.0
  %2125 = vmatpush2.msra.mxu0 0.0
  %2126 = vmatprep.subr.mxu0 0.0
  %2127 = vmatpush2.msra.mxu0 0.0
  %2128 = vmatprep.subr.mxu0 0.0
  %2129 = vmatpush2.msra.mxu0 0.0
  %2130 = vmatprep.subr.mxu0 0.0
  %2131 = vmatpush2.msra.mxu0 0.0
  %2132 = vmatprep.subr.mxu0 0.0
  %2133 = vmatpush2.msra.mxu0 0.0
  %2134 = vmatprep.subr.mxu0 0.0
  %2135 = vmatpush2.msra.mxu0 0.0
  %2136 = vmatprep.subr.mxu0 0.0
  %2137 = vmatpush2.msra.mxu0 0.0
  %2138 = vmatprep.mubr.f32.mxu0 0.0
  %2139 = vmatmul.mubr.f32.gmra.mxu0 %v2027
  %v2140 = vpop.f32.mrf.mxu0
  %v2141 = vadd.f32 0.0, %v2140
  %v2142 = vpop.f32.mrf.mxu0
  %2143 = vmatprep.mubr.f32.mxu0 0.0
  %2144 = vmatmul.mubr.f32.gmra.mxu0 %v2030
  %v2145 = vpop.f32.mrf.mxu0
  %v2146 = vadd.f32 0.0, %v2145
  %v2147 = vpop.f32.mrf.mxu0
  %2148 = vmatprep.mubr.f32.mxu0 0.0
  %2149 = vmatmul.mubr.f32.gmra.mxu0 %v2033
  %v2150 = vpop.f32.mrf.mxu0
  %v2151 = vadd.f32 0.0, %v2150
  %v2152 = vpop.f32.mrf.mxu0
  %2153 = vmatprep.mubr.f32.mxu0 0.0
  %2154 = vmatmul.mubr.f32.gmra.mxu0 %v2036
  %v2155 = vpop.f32.mrf.mxu0
  %v2156 = vadd.f32 0.0, %v2155
  %v2157 = vpop.f32.mrf.mxu0
  %2158 = vmatprep.mubr.f32.mxu0 0.0
  %2159 = vmatmul.mubr.f32.gmra.mxu0 %v2039
  %v2160 = vpop.f32.mrf.mxu0
  %v2161 = vadd.f32 0.0, %v2160
  %v2162 = vpop.f32.mrf.mxu0
  %2163 = vmatprep.mubr.f32.mxu0 0.0
  %2164 = vmatmul.mubr.f32.gmra.mxu0 %v2042
  %v2165 = vpop.f32.mrf.mxu0
  %v2166 = vadd.f32 0.0, %v2165
  %v2167 = vpop.f32.mrf.mxu0
  %2168 = vmatprep.mubr.f32.mxu0 0.0
  %2169 = vmatmul.mubr.f32.gmra.mxu0 %v2045
  %v2170 = vpop.f32.mrf.mxu0
  %v2171 = vadd.f32 0.0, %v2170
  %v2172 = vpop.f32.mrf.mxu0
  %2173 = vmatprep.mubr.f32.mxu0 0.0
  %2174 = vmatmul.mubr.f32.gmra.mxu0 %v2048
  %v2175 = vpop.f32.mrf.mxu0
  %v2176 = vadd.f32 0.0, %v2175
  %v2177 = vpop.f32.mrf.mxu0
  %2178 = vmatprep.mubr.f32.mxu0 0.0
  %2179 = vmatmul.mubr.f32.gmra.mxu0 %v2051
  %v2180 = vpop.f32.mrf.mxu0
  %v2181 = vadd.f32 0.0, %v2180
  %v2182 = vpop.f32.mrf.mxu0
  %2183 = vmatprep.mubr.f32.mxu0 0.0
  %2184 = vmatmul.mubr.f32.gmra.mxu0 %v2054
  %v2185 = vpop.f32.mrf.mxu0
  %v2186 = vadd.f32 0.0, %v2185
  %v2187 = vpop.f32.mrf.mxu0
  %2188 = vmatprep.mubr.f32.mxu0 0.0
  %2189 = vmatmul.mubr.f32.gmra.mxu0 %v2057
  %v2190 = vpop.f32.mrf.mxu0
  %v2191 = vadd.f32 0.0, %v2190
  %v2192 = vpop.f32.mrf.mxu0
  %2193 = vmatprep.mubr.f32.mxu0 0.0
  %2194 = vmatmul.mubr.f32.gmra.mxu0 %v2060
  %v2195 = vpop.f32.mrf.mxu0
  %v2196 = vadd.f32 0.0, %v2195
  %v2197 = vpop.f32.mrf.mxu0
  %2198 = vmatprep.mubr.f32.mxu0 0.0
  %2199 = vmatmul.mubr.f32.gmra.mxu0 %v2063
  %v2200 = vpop.f32.mrf.mxu0
  %v2201 = vadd.f32 0.0, %v2200
  %v2202 = vpop.f32.mrf.mxu0
  %2203 = vmatprep.mubr.f32.mxu0 0.0
  %2204 = vmatmul.mubr.f32.gmra.mxu0 %v2066
  %v2205 = vpop.f32.mrf.mxu0
  %v2206 = vadd.f32 0.0, %v2205
  %v2207 = vpop.f32.mrf.mxu0
  %2208 = vmatprep.mubr.f32.mxu0 0.0
  %2209 = vmatmul.mubr.f32.gmra.mxu0 %v2069
  %v2210 = vpop.f32.mrf.mxu0
  %v2211 = vadd.f32 0.0, %v2210
  %v2212 = vpop.f32.mrf.mxu0
  %2213 = vmatprep.mubr.f32.mxu0 0.0
  %2214 = vmatmul.mubr.f32.gmra.mxu0 %v2072
  %v2215 = vpop.f32.mrf.mxu0
  %v2216 = vadd.f32 0.0, %v2215
  %v2217 = vpop.f32.mrf.mxu0
  %2218 = vdwg.mxu0
  %v2220 = vsel %vm1383, %v1673, 0
  %v2223 = vsel %vm1383, %v1674, 0
  %v2226 = vsel %vm1383, %v1675, 0
  %v2229 = vsel %vm1383, %v1676, 0
  %v2232 = vsel %vm1383, %v1677, 0
  %v2235 = vsel %vm1383, %v1678, 0
  %v2238 = vsel %vm1383, %v1679, 0
  %v2241 = vsel %vm1383, %v1680, 0
  %v2244 = vsel %vm1383, %v1681, 0
  %v2247 = vsel %vm1383, %v1682, 0
  %v2250 = vsel %vm1383, %v1683, 0
  %v2253 = vsel %vm1383, %v1684, 0
  %v2256 = vsel %vm1383, %v1685, 0
  %v2259 = vsel %vm1383, %v1686, 0
  %v2262 = vsel %vm1383, %v1687, 0
  %v2265 = vsel %vm1383, %v1688, 0
  %2267 = vmatprep.subr.mxu0 0.0
  %2268 = vmatpush1.msra.mxu0 0.0
  %2269 = vmatprep.subr.mxu0 0.0
  %2270 = vmatpush1.msra.mxu0 0.0
  %2271 = vmatprep.subr.mxu0 0.0
  %2272 = vmatpush1.msra.mxu0 0.0
  %2273 = vmatprep.subr.mxu0 0.0
  %2274 = vmatpush1.msra.mxu0 0.0
  %2275 = vmatprep.subr.mxu0 0.0
  %2276 = vmatpush1.msra.mxu0 0.0
  %2277 = vmatprep.subr.mxu0 0.0
  %2278 = vmatpush1.msra.mxu0 0.0
  %2279 = vmatprep.subr.mxu0 0.0
  %2280 = vmatpush1.msra.mxu0 0.0
  %2281 = vmatprep.subr.mxu0 0.0
  %2282 = vmatpush1.msra.mxu0 0.0
  %2283 = vmatprep.subr.mxu0 0.0
  %2284 = vmatpush1.msra.mxu0 0.0
  %2285 = vmatprep.subr.mxu0 0.0
  %2286 = vmatpush1.msra.mxu0 0.0
  %2287 = vmatprep.subr.mxu0 0.0
  %2288 = vmatpush1.msra.mxu0 0.0
  %2289 = vmatprep.subr.mxu0 0.0
  %2290 = vmatpush1.msra.mxu0 0.0
  %2291 = vmatprep.subr.mxu0 0.0
  %2292 = vmatpush1.msra.mxu0 %v2022
  %2293 = vmatprep.subr.mxu0 0.0
  %2294 = vmatpush1.msra.mxu0 %v2021
  %2295 = vmatprep.subr.mxu0 0.0
  %2296 = vmatpush1.msra.mxu0 %v2020
  %2297 = vmatprep.subr.mxu0 0.0
  %2298 = vmatpush1.msra.mxu0 %v2019
  %2299 = vmatprep.subr.mxu0 0.0
  %2300 = vmatpush2.msra.mxu0 0.0
  %2301 = vmatprep.subr.mxu0 0.0
  %2302 = vmatpush2.msra.mxu0 0.0
  %2303 = vmatprep.subr.mxu0 0.0
  %2304 = vmatpush2.msra.mxu0 0.0
  %2305 = vmatprep.subr.mxu0 0.0
  %2306 = vmatpush2.msra.mxu0 0.0
  %2307 = vmatprep.subr.mxu0 0.0
  %2308 = vmatpush2.msra.mxu0 0.0
  %2309 = vmatprep.subr.mxu0 0.0
  %2310 = vmatpush2.msra.mxu0 0.0
  %2311 = vmatprep.subr.mxu0 0.0
  %2312 = vmatpush2.msra.mxu0 0.0
  %2313 = vmatprep.subr.mxu0 0.0
  %2314 = vmatpush2.msra.mxu0 0.0
  %2315 = vmatprep.subr.mxu0 0.0
  %2316 = vmatpush2.msra.mxu0 0.0
  %2317 = vmatprep.subr.mxu0 0.0
  %2318 = vmatpush2.msra.mxu0 0.0
  %2319 = vmatprep.subr.mxu0 0.0
  %2320 = vmatpush2.msra.mxu0 0.0
  %2321 = vmatprep.subr.mxu0 0.0
  %2322 = vmatpush2.msra.mxu0 0.0
  %2323 = vmatprep.subr.mxu0 0.0
  %2324 = vmatpush2.msra.mxu0 0.0
  %2325 = vmatprep.subr.mxu0 0.0
  %2326 = vmatpush2.msra.mxu0 0.0
  %2327 = vmatprep.subr.mxu0 0.0
  %2328 = vmatpush2.msra.mxu0 0.0
  %2329 = vmatprep.subr.mxu0 0.0
  %2330 = vmatpush2.msra.mxu0 0.0
  %2331 = vmatprep.mubr.f32.mxu0 0.0
  %2332 = vmatmul.mubr.f32.gmra.mxu0 %v2220
  %v2333 = vpop.f32.mrf.mxu0
  %v2334 = vadd.f32 %v2141, %v2333
  %v2335 = vpop.f32.mrf.mxu0
  %2336 = vmatprep.mubr.f32.mxu0 0.0
  %2337 = vmatmul.mubr.f32.gmra.mxu0 %v2223
  %v2338 = vpop.f32.mrf.mxu0
  %v2339 = vadd.f32 %v2146, %v2338
  %v2340 = vpop.f32.mrf.mxu0
  %2341 = vmatprep.mubr.f32.mxu0 0.0
  %2342 = vmatmul.mubr.f32.gmra.mxu0 %v2226
  %v2343 = vpop.f32.mrf.mxu0
  %v2344 = vadd.f32 %v2151, %v2343
  %v2345 = vpop.f32.mrf.mxu0
  %2346 = vmatprep.mubr.f32.mxu0 0.0
  %2347 = vmatmul.mubr.f32.gmra.mxu0 %v2229
  %v2348 = vpop.f32.mrf.mxu0
  %v2349 = vadd.f32 %v2156, %v2348
  %v2350 = vpop.f32.mrf.mxu0
  %2351 = vmatprep.mubr.f32.mxu0 0.0
  %2352 = vmatmul.mubr.f32.gmra.mxu0 %v2232
  %v2353 = vpop.f32.mrf.mxu0
  %v2354 = vadd.f32 %v2161, %v2353
  %v2355 = vpop.f32.mrf.mxu0
  %2356 = vmatprep.mubr.f32.mxu0 0.0
  %2357 = vmatmul.mubr.f32.gmra.mxu0 %v2235
  %v2358 = vpop.f32.mrf.mxu0
  %v2359 = vadd.f32 %v2166, %v2358
  %v2360 = vpop.f32.mrf.mxu0
  %2361 = vmatprep.mubr.f32.mxu0 0.0
  %2362 = vmatmul.mubr.f32.gmra.mxu0 %v2238
  %v2363 = vpop.f32.mrf.mxu0
  %v2364 = vadd.f32 %v2171, %v2363
  %v2365 = vpop.f32.mrf.mxu0
  %2366 = vmatprep.mubr.f32.mxu0 0.0
  %2367 = vmatmul.mubr.f32.gmra.mxu0 %v2241
  %v2368 = vpop.f32.mrf.mxu0
  %v2369 = vadd.f32 %v2176, %v2368
  %v2370 = vpop.f32.mrf.mxu0
  %2371 = vmatprep.mubr.f32.mxu0 0.0
  %2372 = vmatmul.mubr.f32.gmra.mxu0 %v2244
  %v2373 = vpop.f32.mrf.mxu0
  %v2374 = vadd.f32 %v2181, %v2373
  %v2375 = vpop.f32.mrf.mxu0
  %2376 = vmatprep.mubr.f32.mxu0 0.0
  %2377 = vmatmul.mubr.f32.gmra.mxu0 %v2247
  %v2378 = vpop.f32.mrf.mxu0
  %v2379 = vadd.f32 %v2186, %v2378
  %v2380 = vpop.f32.mrf.mxu0
  %2381 = vmatprep.mubr.f32.mxu0 0.0
  %2382 = vmatmul.mubr.f32.gmra.mxu0 %v2250
  %v2383 = vpop.f32.mrf.mxu0
  %v2384 = vadd.f32 %v2191, %v2383
  %v2385 = vpop.f32.mrf.mxu0
  %2386 = vmatprep.mubr.f32.mxu0 0.0
  %2387 = vmatmul.mubr.f32.gmra.mxu0 %v2253
  %v2388 = vpop.f32.mrf.mxu0
  %v2389 = vadd.f32 %v2196, %v2388
  %v2390 = vpop.f32.mrf.mxu0
  %2391 = vmatprep.mubr.f32.mxu0 0.0
  %2392 = vmatmul.mubr.f32.gmra.mxu0 %v2256
  %v2393 = vpop.f32.mrf.mxu0
  %v2394 = vadd.f32 %v2201, %v2393
  %v2395 = vpop.f32.mrf.mxu0
  %2396 = vmatprep.mubr.f32.mxu0 0.0
  %2397 = vmatmul.mubr.f32.gmra.mxu0 %v2259
  %v2398 = vpop.f32.mrf.mxu0
  %v2399 = vadd.f32 %v2206, %v2398
  %v2400 = vpop.f32.mrf.mxu0
  %2401 = vmatprep.mubr.f32.mxu0 0.0
  %2402 = vmatmul.mubr.f32.gmra.mxu0 %v2262
  %v2403 = vpop.f32.mrf.mxu0
  %v2404 = vadd.f32 %v2211, %v2403
  %v2405 = vpop.f32.mrf.mxu0
  %2406 = vmatprep.mubr.f32.mxu0 0.0
  %2407 = vmatmul.mubr.f32.gmra.mxu0 %v2265
  %v2408 = vpop.f32.mrf.mxu0
  %v2409 = vadd.f32 %v2216, %v2408
  %v2410 = vpop.f32.mrf.mxu0
  %2411 = vdwg.mxu0
  %v2412 = vld [vmem:[%s16] sm:$0x1]
  %v2414 = vlaneseq
  %v2415 = vshrl.u32 %v2414, 7
  %v2416 = vsub.s32 0, %v2415
  %v2417 = vrot.slane %v2412, %v2416
  %v2419 = vadd.f32 %v2334, %v2417
  %v2420 = vadd.f32 %v2339, %v2417
  %v2421 = vadd.f32 %v2344, %v2417
  %v2422 = vadd.f32 %v2349, %v2417
  %v2423 = vadd.f32 %v2354, %v2417
  %v2424 = vadd.f32 %v2359, %v2417
  %v2425 = vadd.f32 %v2364, %v2417
  %v2426 = vadd.f32 %v2369, %v2417
  %v2427 = vadd.f32 %v2374, %v2417
  %v2428 = vadd.f32 %v2379, %v2417
  %v2429 = vadd.f32 %v2384, %v2417
  %v2430 = vadd.f32 %v2389, %v2417
  %v2431 = vadd.f32 %v2394, %v2417
  %v2432 = vadd.f32 %v2399, %v2417
  %v2433 = vadd.f32 %v2404, %v2417
  %v2434 = vadd.f32 %v2409, %v2417
  %2451 = vrot.lane.b32.xlu0 %v2419, 64
  %v2452 = vpop.permute.xlu0 %2451
  %2453 = vrot.lane.b32.xlu0 %v2420, 64
  %v2454 = vpop.permute.xlu0 %2453
  %2455 = vrot.lane.b32.xlu0 %v2421, 64
  %v2456 = vpop.permute.xlu0 %2455
  %2457 = vrot.lane.b32.xlu0 %v2422, 64
  %v2458 = vpop.permute.xlu0 %2457
  %2459 = vrot.lane.b32.xlu0 %v2423, 64
  %v2460 = vpop.permute.xlu0 %2459
  %2461 = vrot.lane.b32.xlu0 %v2424, 64
  %v2462 = vpop.permute.xlu0 %2461
  %2463 = vrot.lane.b32.xlu0 %v2425, 64
  %v2464 = vpop.permute.xlu0 %2463
  %2465 = vrot.lane.b32.xlu0 %v2426, 64
  %v2466 = vpop.permute.xlu0 %2465
  %2467 = vrot.lane.b32.xlu0 %v2427, 64
  %v2468 = vpop.permute.xlu0 %2467
  %2469 = vrot.lane.b32.xlu0 %v2428, 64
  %v2470 = vpop.permute.xlu0 %2469
  %2471 = vrot.lane.b32.xlu0 %v2429, 64
  %v2472 = vpop.permute.xlu0 %2471
  %2473 = vrot.lane.b32.xlu0 %v2430, 64
  %v2474 = vpop.permute.xlu0 %2473
  %2475 = vrot.lane.b32.xlu0 %v2431, 64
  %v2476 = vpop.permute.xlu0 %2475
  %2477 = vrot.lane.b32.xlu0 %v2432, 64
  %v2478 = vpop.permute.xlu0 %2477
  %2479 = vrot.lane.b32.xlu0 %v2433, 64
  %v2480 = vpop.permute.xlu0 %2479
  %2481 = vrot.lane.b32.xlu0 %v2434, 64
  %v2482 = vpop.permute.xlu0 %2481
  %vm2499 = vcmask 523264
  %v2500 = vsel %vm2499, %v1294, %v2452
  %v2501 = vsel %vm2499, %v1297, %v2454
  %v2502 = vsel %vm2499, %v1302, %v2456
  %v2503 = vsel %vm2499, %v1305, %v2458
  %v2504 = vsel %vm2499, %v1310, %v2460
  %v2505 = vsel %vm2499, %v1313, %v2462
  %v2506 = vsel %vm2499, %v1318, %v2464
  %v2507 = vsel %vm2499, %v1321, %v2466
  %v2508 = vsel %vm2499, %v1326, %v2468
  %v2509 = vsel %vm2499, %v1329, %v2470
  %v2510 = vsel %vm2499, %v1334, %v2472
  %v2511 = vsel %vm2499, %v1337, %v2474
  %v2512 = vsel %vm2499, %v1342, %v2476
  %v2513 = vsel %vm2499, %v1345, %v2478
  %v2514 = vsel %vm2499, %v1350, %v2480
  %v2515 = vsel %vm2499, %v1353, %v2482
  %2516 = vxpose.xlu0.b32.start [1/16] %v2500, 128
  %2517 = vxpose.xlu0.b32.cont [2/16] %v2501, 128
  %2518 = vxpose.xlu0.b32.cont [3/16] %v2502, 128
  %2519 = vxpose.xlu0.b32.cont [4/16] %v2503, 128
  %2520 = vxpose.xlu0.b32.cont [5/16] %v2504, 128
  %2521 = vxpose.xlu0.b32.cont [6/16] %v2505, 128
  %2522 = vxpose.xlu0.b32.cont [7/16] %v2506, 128
  %2523 = vxpose.xlu0.b32.cont [8/16] %v2507, 128
  %2524 = vxpose.xlu0.b32.cont [9/16] %v2508, 128
  %2525 = vxpose.xlu0.b32.cont [10/16] %v2509, 128
  %2526 = vxpose.xlu0.b32.cont [11/16] %v2510, 128
  %2527 = vxpose.xlu0.b32.cont [12/16] %v2511, 128
  %2528 = vxpose.xlu0.b32.cont [13/16] %v2512, 128
  %2529 = vxpose.xlu0.b32.cont [14/16] %v2513, 128
  %2530 = vxpose.xlu0.b32.cont [15/16] %v2514, 128
  %2531 = vxpose.xlu0.b32.end [16/16] %v2515, 128
  %v2532 = vpop.trf.xlu0
  %v2533 = vpop.trf.xlu0
  %v2534 = vpop.trf.xlu0
  %v2535 = vpop.trf.xlu0
  %v2536 = vpop.trf.xlu0
  %v2537 = vpop.trf.xlu0
  %v2538 = vpop.trf.xlu0
  %v2539 = vpop.trf.xlu0
  %v2540 = vpop.trf.xlu0
  %v2541 = vpop.trf.xlu0
  %v2542 = vpop.trf.xlu0
  %v2543 = vpop.trf.xlu0
  %v2544 = vpop.trf.xlu0
  %v2545 = vpop.trf.xlu0
  %v2546 = vpop.trf.xlu0
  %v2547 = vpop.trf.xlu0
  %v2548 = vld [vmem:[%s1] sm:$0xf]
  %v2549 = vld [vmem:[%s1 + $0x4] sm:$0xf]
  %v2550 = vld [vmem:[%s1 + $0x8] sm:$0xf]
  %v2551 = vld [vmem:[%s1 + $0xc] sm:$0xf]
  %v2552 = vld [vmem:[%s1 + $0x10] sm:$0xf]
  %v2553 = vld [vmem:[%s1 + $0x14] sm:$0xf]
  %v2554 = vld [vmem:[%s1 + $0x18] sm:$0xf]
  %v2555 = vld [vmem:[%s1 + $0x1c] sm:$0xf]
  %v2556 = vld [vmem:[%s1 + $0x20] sm:$0xf]
  %v2557 = vld [vmem:[%s1 + $0x24] sm:$0xf]
  %v2558 = vld [vmem:[%s1 + $0x28] sm:$0xf]
  %v2559 = vld [vmem:[%s1 + $0x2c] sm:$0xf]
  %v2560 = vld [vmem:[%s1 + $0x30] sm:$0xf]
  %v2561 = vld [vmem:[%s1 + $0x34] sm:$0xf]
  %v2562 = vld [vmem:[%s1 + $0x38] sm:$0xf]
  %v2563 = vld [vmem:[%s1 + $0x3c] sm:$0xf]
  %v2564 = vld [vmem:[%s1 + $0x40] sm:$0xf]
  %v2565 = vld [vmem:[%s1 + $0x44] sm:$0xf]
  %v2566 = vld [vmem:[%s1 + $0x48] sm:$0xf]
  %v2567 = vld [vmem:[%s1 + $0x4c] sm:$0xf]
  %v2568 = vld [vmem:[%s1 + $0x50] sm:$0xf]
  %v2569 = vld [vmem:[%s1 + $0x54] sm:$0xf]
  %v2570 = vld [vmem:[%s1 + $0x58] sm:$0xf]
  %v2571 = vld [vmem:[%s1 + $0x5c] sm:$0xf]
  %v2572 = vld [vmem:[%s1 + $0x60] sm:$0xf]
  %v2573 = vld [vmem:[%s1 + $0x64] sm:$0xf]
  %v2574 = vld [vmem:[%s1 + $0x68] sm:$0xf]
  %v2575 = vld [vmem:[%s1 + $0x6c] sm:$0xf]
  %v2576 = vld [vmem:[%s1 + $0x70] sm:$0xf]
  %v2577 = vld [vmem:[%s1 + $0x74] sm:$0xf]
  %v2578 = vld [vmem:[%s1 + $0x78] sm:$0xf]
  %v2579 = vld [vmem:[%s1 + $0x7c] sm:$0xf]
  %v2580 = vunpack.c.l.bf16 %v2548
  %v2581 = vunpack.c.l.bf16 %v2549
  %v2582 = vunpack.c.l.bf16 %v2550
  %v2583 = vunpack.c.l.bf16 %v2551
  %v2584 = vunpack.c.l.bf16 %v2552
  %v2585 = vunpack.c.l.bf16 %v2553
  %v2586 = vunpack.c.l.bf16 %v2554
  %v2587 = vunpack.c.l.bf16 %v2555
  %v2588 = vunpack.c.l.bf16 %v2556
  %v2589 = vunpack.c.l.bf16 %v2557
  %v2590 = vunpack.c.l.bf16 %v2558
  %v2591 = vunpack.c.l.bf16 %v2559
  %v2592 = vunpack.c.l.bf16 %v2560
  %v2593 = vunpack.c.l.bf16 %v2561
  %v2594 = vunpack.c.l.bf16 %v2562
  %v2595 = vunpack.c.l.bf16 %v2563
  %v2596 = vunpack.c.l.bf16 %v2564
  %v2597 = vunpack.c.l.bf16 %v2565
  %v2598 = vunpack.c.l.bf16 %v2566
  %v2599 = vunpack.c.l.bf16 %v2567
  %v2600 = vunpack.c.l.bf16 %v2568
  %v2601 = vunpack.c.l.bf16 %v2569
  %v2602 = vunpack.c.l.bf16 %v2570
  %v2603 = vunpack.c.l.bf16 %v2571
  %v2604 = vunpack.c.l.bf16 %v2572
  %v2605 = vunpack.c.l.bf16 %v2573
  %v2606 = vunpack.c.l.bf16 %v2574
  %v2607 = vunpack.c.l.bf16 %v2575
  %v2608 = vunpack.c.l.bf16 %v2576
  %v2609 = vunpack.c.l.bf16 %v2577
  %v2610 = vunpack.c.l.bf16 %v2578
  %v2611 = vunpack.c.l.bf16 %v2579
  %v2612 = vld [vmem:[%s5] sm:$0xff]
  %v2613 = vld [vmem:[%s5 + $0x8] sm:$0xff]
  %v2614 = vld [vmem:[%s5 + $0x10] sm:$0xff]
  %v2615 = vld [vmem:[%s5 + $0x18] sm:$0xff]
  %v2616 = vld [vmem:[%s5 + $0x20] sm:$0xff]
  %v2617 = vld [vmem:[%s5 + $0x28] sm:$0xff]
  %v2618 = vld [vmem:[%s5 + $0x30] sm:$0xff]
  %v2619 = vld [vmem:[%s5 + $0x38] sm:$0xff]
  %v2620 = vld [vmem:[%s7] sm:$0xff]
  %v2621 = vld [vmem:[%s7 + $0x8] sm:$0xff]
  %v2622 = vld [vmem:[%s7 + $0x10] sm:$0xff]
  %v2623 = vld [vmem:[%s7 + $0x18] sm:$0xff]
  %v2624 = vld [vmem:[%s7 + $0x20] sm:$0xff]
  %v2625 = vld [vmem:[%s7 + $0x28] sm:$0xff]
  %v2626 = vld [vmem:[%s7 + $0x30] sm:$0xff]
  %v2627 = vld [vmem:[%s7 + $0x38] sm:$0xff]
  %v2628 = vld [vmem:[%s8] sm:$0xff]
  %v2629 = vld [vmem:[%s8 + $0x8] sm:$0xff]
  %v2630 = vld [vmem:[%s8 + $0x10] sm:$0xff]
  %v2631 = vld [vmem:[%s8 + $0x18] sm:$0xff]
  %v2632 = vld [vmem:[%s8 + $0x20] sm:$0xff]
  %v2633 = vld [vmem:[%s8 + $0x28] sm:$0xff]
  %v2634 = vld [vmem:[%s8 + $0x30] sm:$0xff]
  %v2635 = vld [vmem:[%s8 + $0x38] sm:$0xff]
  %v2636 = vld [vmem:[%s13] sm:$0xff]
  %v2637 = vld [vmem:[%s13 + $0x8] sm:$0xff]
  %v2638 = vld [vmem:[%s13 + $0x10] sm:$0xff]
  %v2639 = vld [vmem:[%s13 + $0x18] sm:$0xff]
  %v2640 = vld [vmem:[%s13 + $0x20] sm:$0xff]
  %v2641 = vld [vmem:[%s13 + $0x28] sm:$0xff]
  %v2642 = vld [vmem:[%s13 + $0x30] sm:$0xff]
  %v2643 = vld [vmem:[%s13 + $0x38] sm:$0xff]
  %v2644 = vld [vmem:[%s17] sm:$0x1]
  %v2645 = vld [vmem:[#allocation2] sm:$0x1]
  %v2647 = vsel %vm2025, %v2612, 0
  %v2650 = vsel %vm2025, %v2613, 0
  %v2653 = vsel %vm2025, %v2614, 0
  %v2656 = vsel %vm2025, %v2615, 0
  %v2659 = vsel %vm2025, %v2616, 0
  %v2662 = vsel %vm2025, %v2617, 0
  %v2665 = vsel %vm2025, %v2618, 0
  %v2668 = vsel %vm2025, %v2619, 0
  %2670 = vmatprep.subr.mxu0 0.0
  %2671 = vmatpush1.msra.mxu0 0.0
  %2672 = vmatprep.subr.mxu0 0.0
  %2673 = vmatpush1.msra.mxu0 0.0
  %2674 = vmatprep.subr.mxu0 0.0
  %2675 = vmatpush1.msra.mxu0 0.0
  %2676 = vmatprep.subr.mxu0 0.0
  %2677 = vmatpush1.msra.mxu0 0.0
  %2678 = vmatprep.subr.mxu0 0.0
  %2679 = vmatpush1.msra.mxu0 0.0
  %2680 = vmatprep.subr.mxu0 0.0
  %2681 = vmatpush1.msra.mxu0 0.0
  %2682 = vmatprep.subr.mxu0 0.0
  %2683 = vmatpush1.msra.mxu0 0.0
  %2684 = vmatprep.subr.mxu0 0.0
  %2685 = vmatpush1.msra.mxu0 0.0
  %2686 = vmatprep.subr.mxu0 0.0
  %2687 = vmatpush1.msra.mxu0 0.0
  %2688 = vmatprep.subr.mxu0 0.0
  %2689 = vmatpush1.msra.mxu0 0.0
  %2690 = vmatprep.subr.mxu0 0.0
  %2691 = vmatpush1.msra.mxu0 0.0
  %2692 = vmatprep.subr.mxu0 0.0
  %2693 = vmatpush1.msra.mxu0 0.0
  %2694 = vmatprep.subr.mxu0 0.0
  %2695 = vmatpush1.msra.mxu0 0.0
  %2696 = vmatprep.subr.mxu0 0.0
  %2697 = vmatpush1.msra.mxu0 0.0
  %2698 = vmatprep.subr.mxu0 0.0
  %2699 = vmatpush1.msra.mxu0 %v2581
  %2700 = vmatprep.subr.mxu0 0.0
  %2701 = vmatpush1.msra.mxu0 %v2580
  %2702 = vmatprep.subr.mxu0 0.0
  %2703 = vmatpush2.msra.mxu0 0.0
  %2704 = vmatprep.subr.mxu0 0.0
  %2705 = vmatpush2.msra.mxu0 0.0
  %2706 = vmatprep.subr.mxu0 0.0
  %2707 = vmatpush2.msra.mxu0 0.0
  %2708 = vmatprep.subr.mxu0 0.0
  %2709 = vmatpush2.msra.mxu0 0.0
  %2710 = vmatprep.subr.mxu0 0.0
  %2711 = vmatpush2.msra.mxu0 0.0
  %2712 = vmatprep.subr.mxu0 0.0
  %2713 = vmatpush2.msra.mxu0 0.0
  %2714 = vmatprep.subr.mxu0 0.0
  %2715 = vmatpush2.msra.mxu0 0.0
  %2716 = vmatprep.subr.mxu0 0.0
  %2717 = vmatpush2.msra.mxu0 0.0
  %2718 = vmatprep.subr.mxu0 0.0
  %2719 = vmatpush2.msra.mxu0 0.0
  %2720 = vmatprep.subr.mxu0 0.0
  %2721 = vmatpush2.msra.mxu0 0.0
  %2722 = vmatprep.subr.mxu0 0.0
  %2723 = vmatpush2.msra.mxu0 0.0
  %2724 = vmatprep.subr.mxu0 0.0
  %2725 = vmatpush2.msra.mxu0 0.0
  %2726 = vmatprep.subr.mxu0 0.0
  %2727 = vmatpush2.msra.mxu0 0.0
  %2728 = vmatprep.subr.mxu0 0.0
  %2729 = vmatpush2.msra.mxu0 0.0
  %2730 = vmatprep.subr.mxu0 0.0
  %2731 = vmatpush2.msra.mxu0 0.0
  %2732 = vmatprep.subr.mxu0 0.0
  %2733 = vmatpush2.msra.mxu0 0.0
  %2734 = vmatprep.mubr.f32.mxu0 0.0
  %2735 = vmatmul.mubr.f32.gmra.mxu0 %v2647
  %v2736 = vpop.f32.mrf.mxu0
  %v2737 = vadd.f32 0.0, %v2736
  %v2738 = vpop.f32.mrf.mxu0
  %2739 = vmatprep.mubr.f32.mxu0 0.0
  %2740 = vmatmul.mubr.f32.gmra.mxu0 %v2650
  %v2741 = vpop.f32.mrf.mxu0
  %v2742 = vadd.f32 0.0, %v2741
  %v2743 = vpop.f32.mrf.mxu0
  %2744 = vmatprep.mubr.f32.mxu0 0.0
  %2745 = vmatmul.mubr.f32.gmra.mxu0 %v2653
  %v2746 = vpop.f32.mrf.mxu0
  %v2747 = vadd.f32 0.0, %v2746
  %v2748 = vpop.f32.mrf.mxu0
  %2749 = vmatprep.mubr.f32.mxu0 0.0
  %2750 = vmatmul.mubr.f32.gmra.mxu0 %v2656
  %v2751 = vpop.f32.mrf.mxu0
  %v2752 = vadd.f32 0.0, %v2751
  %v2753 = vpop.f32.mrf.mxu0
  %2754 = vmatprep.mubr.f32.mxu0 0.0
  %2755 = vmatmul.mubr.f32.gmra.mxu0 %v2659
  %v2756 = vpop.f32.mrf.mxu0
  %v2757 = vadd.f32 0.0, %v2756
  %v2758 = vpop.f32.mrf.mxu0
  %2759 = vmatprep.mubr.f32.mxu0 0.0
  %2760 = vmatmul.mubr.f32.gmra.mxu0 %v2662
  %v2761 = vpop.f32.mrf.mxu0
  %v2762 = vadd.f32 0.0, %v2761
  %v2763 = vpop.f32.mrf.mxu0
  %2764 = vmatprep.mubr.f32.mxu0 0.0
  %2765 = vmatmul.mubr.f32.gmra.mxu0 %v2665
  %v2766 = vpop.f32.mrf.mxu0
  %v2767 = vadd.f32 0.0, %v2766
  %v2768 = vpop.f32.mrf.mxu0
  %2769 = vmatprep.mubr.f32.mxu0 0.0
  %2770 = vmatmul.mubr.f32.gmra.mxu0 %v2668
  %v2771 = vpop.f32.mrf.mxu0
  %v2772 = vadd.f32 0.0, %v2771
  %v2773 = vpop.f32.mrf.mxu0
  %2774 = vdwg.mxu0
  %v2775 = vadd.f32 %v2532, %v2737
  %v2776 = vadd.f32 %v2533, %v2742
  %v2777 = vadd.f32 %v2534, %v2747
  %v2778 = vadd.f32 %v2535, %v2752
  %v2779 = vadd.f32 %v2536, %v2757
  %v2780 = vadd.f32 %v2537, %v2762
  %v2781 = vadd.f32 %v2538, %v2767
  %v2782 = vadd.f32 %v2539, %v2772
  %v2783 = vtanh.pop %v2775
  %v2784 = vtanh.pop %v2776
  %v2785 = vtanh.pop %v2777
  %v2786 = vtanh.pop %v2778
  %v2787 = vtanh.pop %v2779
  %v2788 = vtanh.pop %v2780
  %v2789 = vtanh.pop %v2781
  %v2790 = vtanh.pop %v2782
  %2792 = vset.pattern.permute.xlu0 0
  %2793 = vperm.xlu0 %2792, %v2628
  %v2794 = vpop.permute.xlu0 %2793
  %2797 = vset.pattern.permute.xlu0 0
  %2798 = vperm.xlu0 %2797, %v2629
  %v2799 = vpop.permute.xlu0 %2798
  %2802 = vset.pattern.permute.xlu0 0
  %2803 = vperm.xlu0 %2802, %v2630
  %v2804 = vpop.permute.xlu0 %2803
  %2807 = vset.pattern.permute.xlu0 0
  %2808 = vperm.xlu0 %2807, %v2631
  %v2809 = vpop.permute.xlu0 %2808
  %2812 = vset.pattern.permute.xlu0 0
  %2813 = vperm.xlu0 %2812, %v2632
  %v2814 = vpop.permute.xlu0 %2813
  %2817 = vset.pattern.permute.xlu0 0
  %2818 = vperm.xlu0 %2817, %v2633
  %v2819 = vpop.permute.xlu0 %2818
  %2822 = vset.pattern.permute.xlu0 0
  %2823 = vperm.xlu0 %2822, %v2634
  %v2824 = vpop.permute.xlu0 %2823
  %2827 = vset.pattern.permute.xlu0 0
  %2828 = vperm.xlu0 %2827, %v2635
  %v2829 = vpop.permute.xlu0 %2828
  %v2832 = vsel %vm2499, %v2620, 0
  %v2835 = vsel %vm2499, %v2621, 0
  %v2838 = vsel %vm2499, %v2622, 0
  %v2841 = vsel %vm2499, %v2623, 0
  %v2844 = vsel %vm2499, %v2624, 0
  %v2847 = vsel %vm2499, %v2625, 0
  %v2850 = vsel %vm2499, %v2626, 0
  %v2853 = vsel %vm2499, %v2627, 0
  %2855 = vmatprep.subr.mxu0 0.0
  %2856 = vmatpush1.msra.mxu0 0.0
  %2857 = vmatprep.subr.mxu0 0.0
  %2858 = vmatpush1.msra.mxu0 0.0
  %2859 = vmatprep.subr.mxu0 0.0
  %2860 = vmatpush1.msra.mxu0 0.0
  %2861 = vmatprep.subr.mxu0 0.0
  %2862 = vmatpush1.msra.mxu0 0.0
  %2863 = vmatprep.subr.mxu0 0.0
  %2864 = vmatpush1.msra.mxu0 0.0
  %2865 = vmatprep.subr.mxu0 0.0
  %2866 = vmatpush1.msra.mxu0 0.0
  %2867 = vmatprep.subr.mxu0 0.0
  %2868 = vmatpush1.msra.mxu0 0.0
  %2869 = vmatprep.subr.mxu0 0.0
  %2870 = vmatpush1.msra.mxu0 0.0
  %2871 = vmatprep.subr.mxu0 0.0
  %2872 = vmatpush1.msra.mxu0 %v2790
  %2873 = vmatprep.subr.mxu0 0.0
  %2874 = vmatpush1.msra.mxu0 %v2789
  %2875 = vmatprep.subr.mxu0 0.0
  %2876 = vmatpush1.msra.mxu0 %v2788
  %2877 = vmatprep.subr.mxu0 0.0
  %2878 = vmatpush1.msra.mxu0 %v2787
  %2879 = vmatprep.subr.mxu0 0.0
  %2880 = vmatpush1.msra.mxu0 %v2786
  %2881 = vmatprep.subr.mxu0 0.0
  %2882 = vmatpush1.msra.mxu0 %v2785
  %2883 = vmatprep.subr.mxu0 0.0
  %2884 = vmatpush1.msra.mxu0 %v2784
  %2885 = vmatprep.subr.mxu0 0.0
  %2886 = vmatpush1.msra.mxu0 %v2783
  %2887 = vmatprep.subr.mxu0 0.0
  %2888 = vmatpush2.msra.mxu0 0.0
  %2889 = vmatprep.subr.mxu0 0.0
  %2890 = vmatpush2.msra.mxu0 0.0
  %2891 = vmatprep.subr.mxu0 0.0
  %2892 = vmatpush2.msra.mxu0 0.0
  %2893 = vmatprep.subr.mxu0 0.0
  %2894 = vmatpush2.msra.mxu0 0.0
  %2895 = vmatprep.subr.mxu0 0.0
  %2896 = vmatpush2.msra.mxu0 0.0
  %2897 = vmatprep.subr.mxu0 0.0
  %2898 = vmatpush2.msra.mxu0 0.0
  %2899 = vmatprep.subr.mxu0 0.0
  %2900 = vmatpush2.msra.mxu0 0.0
  %2901 = vmatprep.subr.mxu0 0.0
  %2902 = vmatpush2.msra.mxu0 0.0
  %2903 = vmatprep.subr.mxu0 0.0
  %2904 = vmatpush2.msra.mxu0 0.0
  %2905 = vmatprep.subr.mxu0 0.0
  %2906 = vmatpush2.msra.mxu0 0.0
  %2907 = vmatprep.subr.mxu0 0.0
  %2908 = vmatpush2.msra.mxu0 0.0
  %2909 = vmatprep.subr.mxu0 0.0
  %2910 = vmatpush2.msra.mxu0 0.0
  %2911 = vmatprep.subr.mxu0 0.0
  %2912 = vmatpush2.msra.mxu0 0.0
  %2913 = vmatprep.subr.mxu0 0.0
  %2914 = vmatpush2.msra.mxu0 0.0
  %2915 = vmatprep.subr.mxu0 0.0
  %2916 = vmatpush2.msra.mxu0 0.0
  %2917 = vmatprep.subr.mxu0 0.0
  %2918 = vmatpush2.msra.mxu0 0.0
  %2919 = vmatprep.mubr.f32.mxu0 0.0
  %2920 = vmatmul.mubr.f32.gmra.mxu0 %v2832
  %v2921 = vpop.f32.mrf.mxu0
  %v2922 = vadd.f32 %v2794, %v2921
  %v2923 = vpop.f32.mrf.mxu0
  %2924 = vmatprep.mubr.f32.mxu0 0.0
  %2925 = vmatmul.mubr.f32.gmra.mxu0 %v2835
  %v2926 = vpop.f32.mrf.mxu0
  %v2927 = vadd.f32 %v2799, %v2926
  %v2928 = vpop.f32.mrf.mxu0
  %2929 = vmatprep.mubr.f32.mxu0 0.0
  %2930 = vmatmul.mubr.f32.gmra.mxu0 %v2838
  %v2931 = vpop.f32.mrf.mxu0
  %v2932 = vadd.f32 %v2804, %v2931
  %v2933 = vpop.f32.mrf.mxu0
  %2934 = vmatprep.mubr.f32.mxu0 0.0
  %2935 = vmatmul.mubr.f32.gmra.mxu0 %v2841
  %v2936 = vpop.f32.mrf.mxu0
  %v2937 = vadd.f32 %v2809, %v2936
  %v2938 = vpop.f32.mrf.mxu0
  %2939 = vmatprep.mubr.f32.mxu0 0.0
  %2940 = vmatmul.mubr.f32.gmra.mxu0 %v2844
  %v2941 = vpop.f32.mrf.mxu0
  %v2942 = vadd.f32 %v2814, %v2941
  %v2943 = vpop.f32.mrf.mxu0
  %2944 = vmatprep.mubr.f32.mxu0 0.0
  %2945 = vmatmul.mubr.f32.gmra.mxu0 %v2847
  %v2946 = vpop.f32.mrf.mxu0
  %v2947 = vadd.f32 %v2819, %v2946
  %v2948 = vpop.f32.mrf.mxu0
  %2949 = vmatprep.mubr.f32.mxu0 0.0
  %2950 = vmatmul.mubr.f32.gmra.mxu0 %v2850
  %v2951 = vpop.f32.mrf.mxu0
  %v2952 = vadd.f32 %v2824, %v2951
  %v2953 = vpop.f32.mrf.mxu0
  %2954 = vmatprep.mubr.f32.mxu0 0.0
  %2955 = vmatmul.mubr.f32.gmra.mxu0 %v2853
  %v2956 = vpop.f32.mrf.mxu0
  %v2957 = vadd.f32 %v2829, %v2956
  %v2958 = vpop.f32.mrf.mxu0
  %2959 = vdwg.mxu0
  %v2960 = vtanh.pop %v2922
  %v2961 = vtanh.pop %v2927
  %v2962 = vtanh.pop %v2932
  %v2963 = vtanh.pop %v2937
  %v2964 = vtanh.pop %v2942
  %v2965 = vtanh.pop %v2947
  %v2966 = vtanh.pop %v2952
  %v2967 = vtanh.pop %v2957
  %v2969 = vsel %vm2499, %v2636, 0
  %v2972 = vsel %vm2499, %v2637, 0
  %v2975 = vsel %vm2499, %v2638, 0
  %v2978 = vsel %vm2499, %v2639, 0
  %v2981 = vsel %vm2499, %v2640, 0
  %v2984 = vsel %vm2499, %v2641, 0
  %v2987 = vsel %vm2499, %v2642, 0
  %v2990 = vsel %vm2499, %v2643, 0
  %2992 = vmatprep.subr.mxu0 0.0
  %2993 = vmatpush1.msra.mxu0 0.0
  %2994 = vmatprep.subr.mxu0 0.0
  %2995 = vmatpush1.msra.mxu0 0.0
  %2996 = vmatprep.subr.mxu0 0.0
  %2997 = vmatpush1.msra.mxu0 0.0
  %2998 = vmatprep.subr.mxu0 0.0
  %2999 = vmatpush1.msra.mxu0 0.0
  %3000 = vmatprep.subr.mxu0 0.0
  %3001 = vmatpush1.msra.mxu0 0.0
  %3002 = vmatprep.subr.mxu0 0.0
  %3003 = vmatpush1.msra.mxu0 0.0
  %3004 = vmatprep.subr.mxu0 0.0
  %3005 = vmatpush1.msra.mxu0 0.0
  %3006 = vmatprep.subr.mxu0 0.0
  %3007 = vmatpush1.msra.mxu0 0.0
  %3008 = vmatprep.subr.mxu0 0.0
  %3009 = vmatpush1.msra.mxu0 %v2967
  %3010 = vmatprep.subr.mxu0 0.0
  %3011 = vmatpush1.msra.mxu0 %v2966
  %3012 = vmatprep.subr.mxu0 0.0
  %3013 = vmatpush1.msra.mxu0 %v2965
  %3014 = vmatprep.subr.mxu0 0.0
  %3015 = vmatpush1.msra.mxu0 %v2964
  %3016 = vmatprep.subr.mxu0 0.0
  %3017 = vmatpush1.msra.mxu0 %v2963
  %3018 = vmatprep.subr.mxu0 0.0
  %3019 = vmatpush1.msra.mxu0 %v2962
  %3020 = vmatprep.subr.mxu0 0.0
  %3021 = vmatpush1.msra.mxu0 %v2961
  %3022 = vmatprep.subr.mxu0 0.0
  %3023 = vmatpush1.msra.mxu0 %v2960
  %3024 = vmatprep.subr.mxu0 0.0
  %3025 = vmatpush2.msra.mxu0 0.0
  %3026 = vmatprep.subr.mxu0 0.0
  %3027 = vmatpush2.msra.mxu0 0.0
  %3028 = vmatprep.subr.mxu0 0.0
  %3029 = vmatpush2.msra.mxu0 0.0
  %3030 = vmatprep.subr.mxu0 0.0
  %3031 = vmatpush2.msra.mxu0 0.0
  %3032 = vmatprep.subr.mxu0 0.0
  %3033 = vmatpush2.msra.mxu0 0.0
  %3034 = vmatprep.subr.mxu0 0.0
  %3035 = vmatpush2.msra.mxu0 0.0
  %3036 = vmatprep.subr.mxu0 0.0
  %3037 = vmatpush2.msra.mxu0 0.0
  %3038 = vmatprep.subr.mxu0 0.0
  %3039 = vmatpush2.msra.mxu0 0.0
  %3040 = vmatprep.subr.mxu0 0.0
  %3041 = vmatpush2.msra.mxu0 0.0
  %3042 = vmatprep.subr.mxu0 0.0
  %3043 = vmatpush2.msra.mxu0 0.0
  %3044 = vmatprep.subr.mxu0 0.0
  %3045 = vmatpush2.msra.mxu0 0.0
  %3046 = vmatprep.subr.mxu0 0.0
  %3047 = vmatpush2.msra.mxu0 0.0
  %3048 = vmatprep.subr.mxu0 0.0
  %3049 = vmatpush2.msra.mxu0 0.0
  %3050 = vmatprep.subr.mxu0 0.0
  %3051 = vmatpush2.msra.mxu0 0.0
  %3052 = vmatprep.subr.mxu0 0.0
  %3053 = vmatpush2.msra.mxu0 0.0
  %3054 = vmatprep.subr.mxu0 0.0
  %3055 = vmatpush2.msra.mxu0 0.0
  %3056 = vmatprep.mubr.f32.mxu0 0.0
  %3057 = vmatmul.mubr.f32.gmra.mxu0 %v2969
  %v3058 = vpop.f32.mrf.mxu0
  %v3059 = vadd.f32 %v2540, %v3058
  %v3060 = vpop.f32.mrf.mxu0
  %3061 = vmatprep.mubr.f32.mxu0 0.0
  %3062 = vmatmul.mubr.f32.gmra.mxu0 %v2972
  %v3063 = vpop.f32.mrf.mxu0
  %v3064 = vadd.f32 %v2541, %v3063
  %v3065 = vpop.f32.mrf.mxu0
  %3066 = vmatprep.mubr.f32.mxu0 0.0
  %3067 = vmatmul.mubr.f32.gmra.mxu0 %v2975
  %v3068 = vpop.f32.mrf.mxu0
  %v3069 = vadd.f32 %v2542, %v3068
  %v3070 = vpop.f32.mrf.mxu0
  %3071 = vmatprep.mubr.f32.mxu0 0.0
  %3072 = vmatmul.mubr.f32.gmra.mxu0 %v2978
  %v3073 = vpop.f32.mrf.mxu0
  %v3074 = vadd.f32 %v2543, %v3073
  %v3075 = vpop.f32.mrf.mxu0
  %3076 = vmatprep.mubr.f32.mxu0 0.0
  %3077 = vmatmul.mubr.f32.gmra.mxu0 %v2981
  %v3078 = vpop.f32.mrf.mxu0
  %v3079 = vadd.f32 %v2544, %v3078
  %v3080 = vpop.f32.mrf.mxu0
  %3081 = vmatprep.mubr.f32.mxu0 0.0
  %3082 = vmatmul.mubr.f32.gmra.mxu0 %v2984
  %v3083 = vpop.f32.mrf.mxu0
  %v3084 = vadd.f32 %v2545, %v3083
  %v3085 = vpop.f32.mrf.mxu0
  %3086 = vmatprep.mubr.f32.mxu0 0.0
  %3087 = vmatmul.mubr.f32.gmra.mxu0 %v2987
  %v3088 = vpop.f32.mrf.mxu0
  %v3089 = vadd.f32 %v2546, %v3088
  %v3090 = vpop.f32.mrf.mxu0
  %3091 = vmatprep.mubr.f32.mxu0 0.0
  %3092 = vmatmul.mubr.f32.gmra.mxu0 %v2990
  %v3093 = vpop.f32.mrf.mxu0
  %v3094 = vadd.f32 %v2547, %v3093
  %v3095 = vpop.f32.mrf.mxu0
  %3096 = vdwg.mxu0
  %v3097 = vtanh.pop %v3059
  %v3098 = vtanh.pop %v3064
  %v3099 = vtanh.pop %v3069
  %v3100 = vtanh.pop %v3074
  %v3101 = vtanh.pop %v3079
  %v3102 = vtanh.pop %v3084
  %v3103 = vtanh.pop %v3089
  %v3104 = vtanh.pop %v3094
  %3106 = vset.pattern.permute.xlu0 0
  %3107 = vperm.xlu0 %3106, %v2645
  %v3108 = vpop.permute.xlu0 %3107
  %v3110 = vlaneseq
  %v3111 = vshrl.u32 %v3110, 7
  %v3112 = vsub.s32 0, %v3111
  %v3113 = vrot.slane %v3108, %v3112
  %v3115 = vsel %vm2499, %v2644, 0
  %3117 = vmatprep.subr.mxu0 0.0
  %3118 = vmatpush1.msra.mxu0 0.0
  %3119 = vmatprep.subr.mxu0 0.0
  %3120 = vmatpush1.msra.mxu0 0.0
  %3121 = vmatprep.subr.mxu0 0.0
  %3122 = vmatpush1.msra.mxu0 0.0
  %3123 = vmatprep.subr.mxu0 0.0
  %3124 = vmatpush1.msra.mxu0 0.0
  %3125 = vmatprep.subr.mxu0 0.0
  %3126 = vmatpush1.msra.mxu0 0.0
  %3127 = vmatprep.subr.mxu0 0.0
  %3128 = vmatpush1.msra.mxu0 0.0
  %3129 = vmatprep.subr.mxu0 0.0
  %3130 = vmatpush1.msra.mxu0 0.0
  %3131 = vmatprep.subr.mxu0 0.0
  %3132 = vmatpush1.msra.mxu0 0.0
  %3133 = vmatprep.subr.mxu0 0.0
  %3134 = vmatpush1.msra.mxu0 %v3104
  %3135 = vmatprep.subr.mxu0 0.0
  %3136 = vmatpush1.msra.mxu0 %v3103
  %3137 = vmatprep.subr.mxu0 0.0
  %3138 = vmatpush1.msra.mxu0 %v3102
  %3139 = vmatprep.subr.mxu0 0.0
  %3140 = vmatpush1.msra.mxu0 %v3101
  %3141 = vmatprep.subr.mxu0 0.0
  %3142 = vmatpush1.msra.mxu0 %v3100
  %3143 = vmatprep.subr.mxu0 0.0
  %3144 = vmatpush1.msra.mxu0 %v3099
  %3145 = vmatprep.subr.mxu0 0.0
  %3146 = vmatpush1.msra.mxu0 %v3098
  %3147 = vmatprep.subr.mxu0 0.0
  %3148 = vmatpush1.msra.mxu0 %v3097
  %3149 = vmatprep.subr.mxu0 0.0
  %3150 = vmatpush2.msra.mxu0 0.0
  %3151 = vmatprep.subr.mxu0 0.0
  %3152 = vmatpush2.msra.mxu0 0.0
  %3153 = vmatprep.subr.mxu0 0.0
  %3154 = vmatpush2.msra.mxu0 0.0
  %3155 = vmatprep.subr.mxu0 0.0
  %3156 = vmatpush2.msra.mxu0 0.0
  %3157 = vmatprep.subr.mxu0 0.0
  %3158 = vmatpush2.msra.mxu0 0.0
  %3159 = vmatprep.subr.mxu0 0.0
  %3160 = vmatpush2.msra.mxu0 0.0
  %3161 = vmatprep.subr.mxu0 0.0
  %3162 = vmatpush2.msra.mxu0 0.0
  %3163 = vmatprep.subr.mxu0 0.0
  %3164 = vmatpush2.msra.mxu0 0.0
  %3165 = vmatprep.subr.mxu0 0.0
  %3166 = vmatpush2.msra.mxu0 0.0
  %3167 = vmatprep.subr.mxu0 0.0
  %3168 = vmatpush2.msra.mxu0 0.0
  %3169 = vmatprep.subr.mxu0 0.0
  %3170 = vmatpush2.msra.mxu0 0.0
  %3171 = vmatprep.subr.mxu0 0.0
  %3172 = vmatpush2.msra.mxu0 0.0
  %3173 = vmatprep.subr.mxu0 0.0
  %3174 = vmatpush2.msra.mxu0 0.0
  %3175 = vmatprep.subr.mxu0 0.0
  %3176 = vmatpush2.msra.mxu0 0.0
  %3177 = vmatprep.subr.mxu0 0.0
  %3178 = vmatpush2.msra.mxu0 0.0
  %3179 = vmatprep.subr.mxu0 0.0
  %3180 = vmatpush2.msra.mxu0 0.0
  %3181 = vmatprep.mubr.f32.mxu0 0.0
  %3182 = vmatmul.mubr.f32.gmra.mxu0 %v3115
  %v3183 = vpop.f32.mrf.mxu0
  %v3184 = vadd.f32 %v3113, %v3183
  %v3185 = vpop.f32.mrf.mxu0
  %3186 = vdwg.mxu0
  %3187 = vmatprep.subr.mxu0 0.0
  %3188 = vmatpush1.msra.mxu0 0.0
  %3189 = vmatprep.subr.mxu0 0.0
  %3190 = vmatpush1.msra.mxu0 0.0
  %3191 = vmatprep.subr.mxu0 0.0
  %3192 = vmatpush1.msra.mxu0 0.0
  %3193 = vmatprep.subr.mxu0 0.0
  %3194 = vmatpush1.msra.mxu0 0.0
  %3195 = vmatprep.subr.mxu0 0.0
  %3196 = vmatpush1.msra.mxu0 0.0
  %3197 = vmatprep.subr.mxu0 0.0
  %3198 = vmatpush1.msra.mxu0 0.0
  %3199 = vmatprep.subr.mxu0 0.0
  %3200 = vmatpush1.msra.mxu0 0.0
  %3201 = vmatprep.subr.mxu0 0.0
  %3202 = vmatpush1.msra.mxu0 0.0
  %3203 = vmatprep.subr.mxu0 0.0
  %3204 = vmatpush1.msra.mxu0 0.0
  %3205 = vmatprep.subr.mxu0 0.0
  %3206 = vmatpush1.msra.mxu0 0.0
  %3207 = vmatprep.subr.mxu0 0.0
  %3208 = vmatpush1.msra.mxu0 0.0
  %3209 = vmatprep.subr.mxu0 0.0
  %3210 = vmatpush1.msra.mxu0 0.0
  %3211 = vmatprep.subr.mxu0 0.0
  %3212 = vmatpush1.msra.mxu0 0.0
  %3213 = vmatprep.subr.mxu0 0.0
  %3214 = vmatpush1.msra.mxu0 0.0
  %3215 = vmatprep.subr.mxu0 0.0
  %3216 = vmatpush1.msra.mxu0 %v2583
  %3217 = vmatprep.subr.mxu0 0.0
  %3218 = vmatpush1.msra.mxu0 %v2582
  %3219 = vmatprep.subr.mxu0 0.0
  %3220 = vmatpush2.msra.mxu0 0.0
  %3221 = vmatprep.subr.mxu0 0.0
  %3222 = vmatpush2.msra.mxu0 0.0
  %3223 = vmatprep.subr.mxu0 0.0
  %3224 = vmatpush2.msra.mxu0 0.0
  %3225 = vmatprep.subr.mxu0 0.0
  %3226 = vmatpush2.msra.mxu0 0.0
  %3227 = vmatprep.subr.mxu0 0.0
  %3228 = vmatpush2.msra.mxu0 0.0
  %3229 = vmatprep.subr.mxu0 0.0
  %3230 = vmatpush2.msra.mxu0 0.0
  %3231 = vmatprep.subr.mxu0 0.0
  %3232 = vmatpush2.msra.mxu0 0.0
  %3233 = vmatprep.subr.mxu0 0.0
  %3234 = vmatpush2.msra.mxu0 0.0
  %3235 = vmatprep.subr.mxu0 0.0
  %3236 = vmatpush2.msra.mxu0 0.0
  %3237 = vmatprep.subr.mxu0 0.0
  %3238 = vmatpush2.msra.mxu0 0.0
  %3239 = vmatprep.subr.mxu0 0.0
  %3240 = vmatpush2.msra.mxu0 0.0
  %3241 = vmatprep.subr.mxu0 0.0
  %3242 = vmatpush2.msra.mxu0 0.0
  %3243 = vmatprep.subr.mxu0 0.0
  %3244 = vmatpush2.msra.mxu0 0.0
  %3245 = vmatprep.subr.mxu0 0.0
  %3246 = vmatpush2.msra.mxu0 0.0
  %3247 = vmatprep.subr.mxu0 0.0
  %3248 = vmatpush2.msra.mxu0 0.0
  %3249 = vmatprep.subr.mxu0 0.0
  %3250 = vmatpush2.msra.mxu0 0.0
  %3251 = vmatprep.mubr.f32.mxu0 0.0
  %3252 = vmatmul.mubr.f32.gmra.mxu0 %v2647
  %v3253 = vpop.f32.mrf.mxu0
  %v3254 = vadd.f32 0.0, %v3253
  %v3255 = vpop.f32.mrf.mxu0
  %3256 = vmatprep.mubr.f32.mxu0 0.0
  %3257 = vmatmul.mubr.f32.gmra.mxu0 %v2650
  %v3258 = vpop.f32.mrf.mxu0
  %v3259 = vadd.f32 0.0, %v3258
  %v3260 = vpop.f32.mrf.mxu0
  %3261 = vmatprep.mubr.f32.mxu0 0.0
  %3262 = vmatmul.mubr.f32.gmra.mxu0 %v2653
  %v3263 = vpop.f32.mrf.mxu0
  %v3264 = vadd.f32 0.0, %v3263
  %v3265 = vpop.f32.mrf.mxu0
  %3266 = vmatprep.mubr.f32.mxu0 0.0
  %3267 = vmatmul.mubr.f32.gmra.mxu0 %v2656
  %v3268 = vpop.f32.mrf.mxu0
  %v3269 = vadd.f32 0.0, %v3268
  %v3270 = vpop.f32.mrf.mxu0
  %3271 = vmatprep.mubr.f32.mxu0 0.0
  %3272 = vmatmul.mubr.f32.gmra.mxu0 %v2659
  %v3273 = vpop.f32.mrf.mxu0
  %v3274 = vadd.f32 0.0, %v3273
  %v3275 = vpop.f32.mrf.mxu0
  %3276 = vmatprep.mubr.f32.mxu0 0.0
  %3277 = vmatmul.mubr.f32.gmra.mxu0 %v2662
  %v3278 = vpop.f32.mrf.mxu0
  %v3279 = vadd.f32 0.0, %v3278
  %v3280 = vpop.f32.mrf.mxu0
  %3281 = vmatprep.mubr.f32.mxu0 0.0
  %3282 = vmatmul.mubr.f32.gmra.mxu0 %v2665
  %v3283 = vpop.f32.mrf.mxu0
  %v3284 = vadd.f32 0.0, %v3283
  %v3285 = vpop.f32.mrf.mxu0
  %3286 = vmatprep.mubr.f32.mxu0 0.0
  %3287 = vmatmul.mubr.f32.gmra.mxu0 %v2668
  %v3288 = vpop.f32.mrf.mxu0
  %v3289 = vadd.f32 0.0, %v3288
  %v3290 = vpop.f32.mrf.mxu0
  %3291 = vdwg.mxu0
  %v3292 = vadd.f32 %v2532, %v3254
  %v3293 = vadd.f32 %v2533, %v3259
  %v3294 = vadd.f32 %v2534, %v3264
  %v3295 = vadd.f32 %v2535, %v3269
  %v3296 = vadd.f32 %v2536, %v3274
  %v3297 = vadd.f32 %v2537, %v3279
  %v3298 = vadd.f32 %v2538, %v3284
  %v3299 = vadd.f32 %v2539, %v3289
  %v3300 = vtanh.pop %v3292
  %v3301 = vtanh.pop %v3293
  %v3302 = vtanh.pop %v3294
  %v3303 = vtanh.pop %v3295
  %v3304 = vtanh.pop %v3296
  %v3305 = vtanh.pop %v3297
  %v3306 = vtanh.pop %v3298
  %v3307 = vtanh.pop %v3299
  %3308 = vmatprep.subr.mxu0 0.0
  %3309 = vmatpush1.msra.mxu0 0.0
  %3310 = vmatprep.subr.mxu0 0.0
  %3311 = vmatpush1.msra.mxu0 0.0
  %3312 = vmatprep.subr.mxu0 0.0
  %3313 = vmatpush1.msra.mxu0 0.0
  %3314 = vmatprep.subr.mxu0 0.0
  %3315 = vmatpush1.msra.mxu0 0.0
  %3316 = vmatprep.subr.mxu0 0.0
  %3317 = vmatpush1.msra.mxu0 0.0
  %3318 = vmatprep.subr.mxu0 0.0
  %3319 = vmatpush1.msra.mxu0 0.0
  %3320 = vmatprep.subr.mxu0 0.0
  %3321 = vmatpush1.msra.mxu0 0.0
  %3322 = vmatprep.subr.mxu0 0.0
  %3323 = vmatpush1.msra.mxu0 0.0
  %3324 = vmatprep.subr.mxu0 0.0
  %3325 = vmatpush1.msra.mxu0 %v3307
  %3326 = vmatprep.subr.mxu0 0.0
  %3327 = vmatpush1.msra.mxu0 %v3306
  %3328 = vmatprep.subr.mxu0 0.0
  %3329 = vmatpush1.msra.mxu0 %v3305
  %3330 = vmatprep.subr.mxu0 0.0
  %3331 = vmatpush1.msra.mxu0 %v3304
  %3332 = vmatprep.subr.mxu0 0.0
  %3333 = vmatpush1.msra.mxu0 %v3303
  %3334 = vmatprep.subr.mxu0 0.0
  %3335 = vmatpush1.msra.mxu0 %v3302
  %3336 = vmatprep.subr.mxu0 0.0
  %3337 = vmatpush1.msra.mxu0 %v3301
  %3338 = vmatprep.subr.mxu0 0.0
  %3339 = vmatpush1.msra.mxu0 %v3300
  %3340 = vmatprep.subr.mxu0 0.0
  %3341 = vmatpush2.msra.mxu0 0.0
  %3342 = vmatprep.subr.mxu0 0.0
  %3343 = vmatpush2.msra.mxu0 0.0
  %3344 = vmatprep.subr.mxu0 0.0
  %3345 = vmatpush2.msra.mxu0 0.0
  %3346 = vmatprep.subr.mxu0 0.0
  %3347 = vmatpush2.msra.mxu0 0.0
  %3348 = vmatprep.subr.mxu0 0.0
  %3349 = vmatpush2.msra.mxu0 0.0
  %3350 = vmatprep.subr.mxu0 0.0
  %3351 = vmatpush2.msra.mxu0 0.0
  %3352 = vmatprep.subr.mxu0 0.0
  %3353 = vmatpush2.msra.mxu0 0.0
  %3354 = vmatprep.subr.mxu0 0.0
  %3355 = vmatpush2.msra.mxu0 0.0
  %3356 = vmatprep.subr.mxu0 0.0
  %3357 = vmatpush2.msra.mxu0 0.0
  %3358 = vmatprep.subr.mxu0 0.0
  %3359 = vmatpush2.msra.mxu0 0.0
  %3360 = vmatprep.subr.mxu0 0.0
  %3361 = vmatpush2.msra.mxu0 0.0
  %3362 = vmatprep.subr.mxu0 0.0
  %3363 = vmatpush2.msra.mxu0 0.0
  %3364 = vmatprep.subr.mxu0 0.0
  %3365 = vmatpush2.msra.mxu0 0.0
  %3366 = vmatprep.subr.mxu0 0.0
  %3367 = vmatpush2.msra.mxu0 0.0
  %3368 = vmatprep.subr.mxu0 0.0
  %3369 = vmatpush2.msra.mxu0 0.0
  %3370 = vmatprep.subr.mxu0 0.0
  %3371 = vmatpush2.msra.mxu0 0.0
  %3372 = vmatprep.mubr.f32.mxu0 0.0
  %3373 = vmatmul.mubr.f32.gmra.mxu0 %v2832
  %v3374 = vpop.f32.mrf.mxu0
  %v3375 = vadd.f32 %v2794, %v3374
  %v3376 = vpop.f32.mrf.mxu0
  %3377 = vmatprep.mubr.f32.mxu0 0.0
  %3378 = vmatmul.mubr.f32.gmra.mxu0 %v2835
  %v3379 = vpop.f32.mrf.mxu0
  %v3380 = vadd.f32 %v2799, %v3379
  %v3381 = vpop.f32.mrf.mxu0
  %3382 = vmatprep.mubr.f32.mxu0 0.0
  %3383 = vmatmul.mubr.f32.gmra.mxu0 %v2838
  %v3384 = vpop.f32.mrf.mxu0
  %v3385 = vadd.f32 %v2804, %v3384
  %v3386 = vpop.f32.mrf.mxu0
  %3387 = vmatprep.mubr.f32.mxu0 0.0
  %3388 = vmatmul.mubr.f32.gmra.mxu0 %v2841
  %v3389 = vpop.f32.mrf.mxu0
  %v3390 = vadd.f32 %v2809, %v3389
  %v3391 = vpop.f32.mrf.mxu0
  %3392 = vmatprep.mubr.f32.mxu0 0.0
  %3393 = vmatmul.mubr.f32.gmra.mxu0 %v2844
  %v3394 = vpop.f32.mrf.mxu0
  %v3395 = vadd.f32 %v2814, %v3394
  %v3396 = vpop.f32.mrf.mxu0
  %3397 = vmatprep.mubr.f32.mxu0 0.0
  %3398 = vmatmul.mubr.f32.gmra.mxu0 %v2847
  %v3399 = vpop.f32.mrf.mxu0
  %v3400 = vadd.f32 %v2819, %v3399
  %v3401 = vpop.f32.mrf.mxu0
  %3402 = vmatprep.mubr.f32.mxu0 0.0
  %3403 = vmatmul.mubr.f32.gmra.mxu0 %v2850
  %v3404 = vpop.f32.mrf.mxu0
  %v3405 = vadd.f32 %v2824, %v3404
  %v3406 = vpop.f32.mrf.mxu0
  %3407 = vmatprep.mubr.f32.mxu0 0.0
  %3408 = vmatmul.mubr.f32.gmra.mxu0 %v2853
  %v3409 = vpop.f32.mrf.mxu0
  %v3410 = vadd.f32 %v2829, %v3409
  %v3411 = vpop.f32.mrf.mxu0
  %3412 = vdwg.mxu0
  %v3413 = vtanh.pop %v3375
  %v3414 = vtanh.pop %v3380
  %v3415 = vtanh.pop %v3385
  %v3416 = vtanh.pop %v3390
  %v3417 = vtanh.pop %v3395
  %v3418 = vtanh.pop %v3400
  %v3419 = vtanh.pop %v3405
  %v3420 = vtanh.pop %v3410
  %3421 = vmatprep.subr.mxu0 0.0
  %3422 = vmatpush1.msra.mxu0 0.0
  %3423 = vmatprep.subr.mxu0 0.0
  %3424 = vmatpush1.msra.mxu0 0.0
  %3425 = vmatprep.subr.mxu0 0.0
  %3426 = vmatpush1.msra.mxu0 0.0
  %3427 = vmatprep.subr.mxu0 0.0
  %3428 = vmatpush1.msra.mxu0 0.0
  %3429 = vmatprep.subr.mxu0 0.0
  %3430 = vmatpush1.msra.mxu0 0.0
  %3431 = vmatprep.subr.mxu0 0.0
  %3432 = vmatpush1.msra.mxu0 0.0
  %3433 = vmatprep.subr.mxu0 0.0
  %3434 = vmatpush1.msra.mxu0 0.0
  %3435 = vmatprep.subr.mxu0 0.0
  %3436 = vmatpush1.msra.mxu0 0.0
  %3437 = vmatprep.subr.mxu0 0.0
  %3438 = vmatpush1.msra.mxu0 %v3420
  %3439 = vmatprep.subr.mxu0 0.0
  %3440 = vmatpush1.msra.mxu0 %v3419
  %3441 = vmatprep.subr.mxu0 0.0
  %3442 = vmatpush1.msra.mxu0 %v3418
  %3443 = vmatprep.subr.mxu0 0.0
  %3444 = vmatpush1.msra.mxu0 %v3417
  %3445 = vmatprep.subr.mxu0 0.0
  %3446 = vmatpush1.msra.mxu0 %v3416
  %3447 = vmatprep.subr.mxu0 0.0
  %3448 = vmatpush1.msra.mxu0 %v3415
  %3449 = vmatprep.subr.mxu0 0.0
  %3450 = vmatpush1.msra.mxu0 %v3414
  %3451 = vmatprep.subr.mxu0 0.0
  %3452 = vmatpush1.msra.mxu0 %v3413
  %3453 = vmatprep.subr.mxu0 0.0
  %3454 = vmatpush2.msra.mxu0 0.0
  %3455 = vmatprep.subr.mxu0 0.0
  %3456 = vmatpush2.msra.mxu0 0.0
  %3457 = vmatprep.subr.mxu0 0.0
  %3458 = vmatpush2.msra.mxu0 0.0
  %3459 = vmatprep.subr.mxu0 0.0
  %3460 = vmatpush2.msra.mxu0 0.0
  %3461 = vmatprep.subr.mxu0 0.0
  %3462 = vmatpush2.msra.mxu0 0.0
  %3463 = vmatprep.subr.mxu0 0.0
  %3464 = vmatpush2.msra.mxu0 0.0
  %3465 = vmatprep.subr.mxu0 0.0
  %3466 = vmatpush2.msra.mxu0 0.0
  %3467 = vmatprep.subr.mxu0 0.0
  %3468 = vmatpush2.msra.mxu0 0.0
  %3469 = vmatprep.subr.mxu0 0.0
  %3470 = vmatpush2.msra.mxu0 0.0
  %3471 = vmatprep.subr.mxu0 0.0
  %3472 = vmatpush2.msra.mxu0 0.0
  %3473 = vmatprep.subr.mxu0 0.0
  %3474 = vmatpush2.msra.mxu0 0.0
  %3475 = vmatprep.subr.mxu0 0.0
  %3476 = vmatpush2.msra.mxu0 0.0
  %3477 = vmatprep.subr.mxu0 0.0
  %3478 = vmatpush2.msra.mxu0 0.0
  %3479 = vmatprep.subr.mxu0 0.0
  %3480 = vmatpush2.msra.mxu0 0.0
  %3481 = vmatprep.subr.mxu0 0.0
  %3482 = vmatpush2.msra.mxu0 0.0
  %3483 = vmatprep.subr.mxu0 0.0
  %3484 = vmatpush2.msra.mxu0 0.0
  %3485 = vmatprep.mubr.f32.mxu0 0.0
  %3486 = vmatmul.mubr.f32.gmra.mxu0 %v2969
  %v3487 = vpop.f32.mrf.mxu0
  %v3488 = vadd.f32 %v2540, %v3487
  %v3489 = vpop.f32.mrf.mxu0
  %3490 = vmatprep.mubr.f32.mxu0 0.0
  %3491 = vmatmul.mubr.f32.gmra.mxu0 %v2972
  %v3492 = vpop.f32.mrf.mxu0
  %v3493 = vadd.f32 %v2541, %v3492
  %v3494 = vpop.f32.mrf.mxu0
  %3495 = vmatprep.mubr.f32.mxu0 0.0
  %3496 = vmatmul.mubr.f32.gmra.mxu0 %v2975
  %v3497 = vpop.f32.mrf.mxu0
  %v3498 = vadd.f32 %v2542, %v3497
  %v3499 = vpop.f32.mrf.mxu0
  %3500 = vmatprep.mubr.f32.mxu0 0.0
  %3501 = vmatmul.mubr.f32.gmra.mxu0 %v2978
  %v3502 = vpop.f32.mrf.mxu0
  %v3503 = vadd.f32 %v2543, %v3502
  %v3504 = vpop.f32.mrf.mxu0
  %3505 = vmatprep.mubr.f32.mxu0 0.0
  %3506 = vmatmul.mubr.f32.gmra.mxu0 %v2981
  %v3507 = vpop.f32.mrf.mxu0
  %v3508 = vadd.f32 %v2544, %v3507
  %v3509 = vpop.f32.mrf.mxu0
  %3510 = vmatprep.mubr.f32.mxu0 0.0
  %3511 = vmatmul.mubr.f32.gmra.mxu0 %v2984
  %v3512 = vpop.f32.mrf.mxu0
  %v3513 = vadd.f32 %v2545, %v3512
  %v3514 = vpop.f32.mrf.mxu0
  %3515 = vmatprep.mubr.f32.mxu0 0.0
  %3516 = vmatmul.mubr.f32.gmra.mxu0 %v2987
  %v3517 = vpop.f32.mrf.mxu0
  %v3518 = vadd.f32 %v2546, %v3517
  %v3519 = vpop.f32.mrf.mxu0
  %3520 = vmatprep.mubr.f32.mxu0 0.0
  %3521 = vmatmul.mubr.f32.gmra.mxu0 %v2990
  %v3522 = vpop.f32.mrf.mxu0
  %v3523 = vadd.f32 %v2547, %v3522
  %v3524 = vpop.f32.mrf.mxu0
  %3525 = vdwg.mxu0
  %v3526 = vtanh.pop %v3488
  %v3527 = vtanh.pop %v3493
  %v3528 = vtanh.pop %v3498
  %v3529 = vtanh.pop %v3503
  %v3530 = vtanh.pop %v3508
  %v3531 = vtanh.pop %v3513
  %v3532 = vtanh.pop %v3518
  %v3533 = vtanh.pop %v3523
  %3534 = vmatprep.subr.mxu0 0.0
  %3535 = vmatpush1.msra.mxu0 0.0
  %3536 = vmatprep.subr.mxu0 0.0
  %3537 = vmatpush1.msra.mxu0 0.0
  %3538 = vmatprep.subr.mxu0 0.0
  %3539 = vmatpush1.msra.mxu0 0.0
  %3540 = vmatprep.subr.mxu0 0.0
  %3541 = vmatpush1.msra.mxu0 0.0
  %3542 = vmatprep.subr.mxu0 0.0
  %3543 = vmatpush1.msra.mxu0 0.0
  %3544 = vmatprep.subr.mxu0 0.0
  %3545 = vmatpush1.msra.mxu0 0.0
  %3546 = vmatprep.subr.mxu0 0.0
  %3547 = vmatpush1.msra.mxu0 0.0
  %3548 = vmatprep.subr.mxu0 0.0
  %3549 = vmatpush1.msra.mxu0 0.0
  %3550 = vmatprep.subr.mxu0 0.0
  %3551 = vmatpush1.msra.mxu0 %v3533
  %3552 = vmatprep.subr.mxu0 0.0
  %3553 = vmatpush1.msra.mxu0 %v3532
  %3554 = vmatprep.subr.mxu0 0.0
  %3555 = vmatpush1.msra.mxu0 %v3531
  %3556 = vmatprep.subr.mxu0 0.0
  %3557 = vmatpush1.msra.mxu0 %v3530
  %3558 = vmatprep.subr.mxu0 0.0
  %3559 = vmatpush1.msra.mxu0 %v3529
  %3560 = vmatprep.subr.mxu0 0.0
  %3561 = vmatpush1.msra.mxu0 %v3528
  %3562 = vmatprep.subr.mxu0 0.0
  %3563 = vmatpush1.msra.mxu0 %v3527
  %3564 = vmatprep.subr.mxu0 0.0
  %3565 = vmatpush1.msra.mxu0 %v3526
  %3566 = vmatprep.subr.mxu0 0.0
  %3567 = vmatpush2.msra.mxu0 0.0
  %3568 = vmatprep.subr.mxu0 0.0
  %3569 = vmatpush2.msra.mxu0 0.0
  %3570 = vmatprep.subr.mxu0 0.0
  %3571 = vmatpush2.msra.mxu0 0.0
  %3572 = vmatprep.subr.mxu0 0.0
  %3573 = vmatpush2.msra.mxu0 0.0
  %3574 = vmatprep.subr.mxu0 0.0
  %3575 = vmatpush2.msra.mxu0 0.0
  %3576 = vmatprep.subr.mxu0 0.0
  %3577 = vmatpush2.msra.mxu0 0.0
  %3578 = vmatprep.subr.mxu0 0.0
  %3579 = vmatpush2.msra.mxu0 0.0
  %3580 = vmatprep.subr.mxu0 0.0
  %3581 = vmatpush2.msra.mxu0 0.0
  %3582 = vmatprep.subr.mxu0 0.0
  %3583 = vmatpush2.msra.mxu0 0.0
  %3584 = vmatprep.subr.mxu0 0.0
  %3585 = vmatpush2.msra.mxu0 0.0
  %3586 = vmatprep.subr.mxu0 0.0
  %3587 = vmatpush2.msra.mxu0 0.0
  %3588 = vmatprep.subr.mxu0 0.0
  %3589 = vmatpush2.msra.mxu0 0.0
  %3590 = vmatprep.subr.mxu0 0.0
  %3591 = vmatpush2.msra.mxu0 0.0
  %3592 = vmatprep.subr.mxu0 0.0
  %3593 = vmatpush2.msra.mxu0 0.0
  %3594 = vmatprep.subr.mxu0 0.0
  %3595 = vmatpush2.msra.mxu0 0.0
  %3596 = vmatprep.subr.mxu0 0.0
  %3597 = vmatpush2.msra.mxu0 0.0
  %3598 = vmatprep.mubr.f32.mxu0 0.0
  %3599 = vmatmul.mubr.f32.gmra.mxu0 %v3115
  %v3600 = vpop.f32.mrf.mxu0
  %v3601 = vadd.f32 %v3113, %v3600
  %v3602 = vpop.f32.mrf.mxu0
  %3603 = vdwg.mxu0
  %3604 = vmatprep.subr.mxu0 0.0
  %3605 = vmatpush1.msra.mxu0 0.0
  %3606 = vmatprep.subr.mxu0 0.0
  %3607 = vmatpush1.msra.mxu0 0.0
  %3608 = vmatprep.subr.mxu0 0.0
  %3609 = vmatpush1.msra.mxu0 0.0
  %3610 = vmatprep.subr.mxu0 0.0
  %3611 = vmatpush1.msra.mxu0 0.0
  %3612 = vmatprep.subr.mxu0 0.0
  %3613 = vmatpush1.msra.mxu0 0.0
  %3614 = vmatprep.subr.mxu0 0.0
  %3615 = vmatpush1.msra.mxu0 0.0
  %3616 = vmatprep.subr.mxu0 0.0
  %3617 = vmatpush1.msra.mxu0 0.0
  %3618 = vmatprep.subr.mxu0 0.0
  %3619 = vmatpush1.msra.mxu0 0.0
  %3620 = vmatprep.subr.mxu0 0.0
  %3621 = vmatpush1.msra.mxu0 0.0
  %3622 = vmatprep.subr.mxu0 0.0
  %3623 = vmatpush1.msra.mxu0 0.0
  %3624 = vmatprep.subr.mxu0 0.0
  %3625 = vmatpush1.msra.mxu0 0.0
  %3626 = vmatprep.subr.mxu0 0.0
  %3627 = vmatpush1.msra.mxu0 0.0
  %3628 = vmatprep.subr.mxu0 0.0
  %3629 = vmatpush1.msra.mxu0 0.0
  %3630 = vmatprep.subr.mxu0 0.0
  %3631 = vmatpush1.msra.mxu0 0.0
  %3632 = vmatprep.subr.mxu0 0.0
  %3633 = vmatpush1.msra.mxu0 %v2585
  %3634 = vmatprep.subr.mxu0 0.0
  %3635 = vmatpush1.msra.mxu0 %v2584
  %3636 = vmatprep.subr.mxu0 0.0
  %3637 = vmatpush2.msra.mxu0 0.0
  %3638 = vmatprep.subr.mxu0 0.0
  %3639 = vmatpush2.msra.mxu0 0.0
  %3640 = vmatprep.subr.mxu0 0.0
  %3641 = vmatpush2.msra.mxu0 0.0
  %3642 = vmatprep.subr.mxu0 0.0
  %3643 = vmatpush2.msra.mxu0 0.0
  %3644 = vmatprep.subr.mxu0 0.0
  %3645 = vmatpush2.msra.mxu0 0.0
  %3646 = vmatprep.subr.mxu0 0.0
  %3647 = vmatpush2.msra.mxu0 0.0
  %3648 = vmatprep.subr.mxu0 0.0
  %3649 = vmatpush2.msra.mxu0 0.0
  %3650 = vmatprep.subr.mxu0 0.0
  %3651 = vmatpush2.msra.mxu0 0.0
  %3652 = vmatprep.subr.mxu0 0.0
  %3653 = vmatpush2.msra.mxu0 0.0
  %3654 = vmatprep.subr.mxu0 0.0
  %3655 = vmatpush2.msra.mxu0 0.0
  %3656 = vmatprep.subr.mxu0 0.0
  %3657 = vmatpush2.msra.mxu0 0.0
  %3658 = vmatprep.subr.mxu0 0.0
  %3659 = vmatpush2.msra.mxu0 0.0
  %3660 = vmatprep.subr.mxu0 0.0
  %3661 = vmatpush2.msra.mxu0 0.0
  %3662 = vmatprep.subr.mxu0 0.0
  %3663 = vmatpush2.msra.mxu0 0.0
  %3664 = vmatprep.subr.mxu0 0.0
  %3665 = vmatpush2.msra.mxu0 0.0
  %3666 = vmatprep.subr.mxu0 0.0
  %3667 = vmatpush2.msra.mxu0 0.0
  %3668 = vmatprep.mubr.f32.mxu0 0.0
  %3669 = vmatmul.mubr.f32.gmra.mxu0 %v2647
  %v3670 = vpop.f32.mrf.mxu0
  %v3671 = vadd.f32 0.0, %v3670
  %v3672 = vpop.f32.mrf.mxu0
  %3673 = vmatprep.mubr.f32.mxu0 0.0
  %3674 = vmatmul.mubr.f32.gmra.mxu0 %v2650
  %v3675 = vpop.f32.mrf.mxu0
  %v3676 = vadd.f32 0.0, %v3675
  %v3677 = vpop.f32.mrf.mxu0
  %3678 = vmatprep.mubr.f32.mxu0 0.0
  %3679 = vmatmul.mubr.f32.gmra.mxu0 %v2653
  %v3680 = vpop.f32.mrf.mxu0
  %v3681 = vadd.f32 0.0, %v3680
  %v3682 = vpop.f32.mrf.mxu0
  %3683 = vmatprep.mubr.f32.mxu0 0.0
  %3684 = vmatmul.mubr.f32.gmra.mxu0 %v2656
  %v3685 = vpop.f32.mrf.mxu0
  %v3686 = vadd.f32 0.0, %v3685
  %v3687 = vpop.f32.mrf.mxu0
  %3688 = vmatprep.mubr.f32.mxu0 0.0
  %3689 = vmatmul.mubr.f32.gmra.mxu0 %v2659
  %v3690 = vpop.f32.mrf.mxu0
  %v3691 = vadd.f32 0.0, %v3690
  %v3692 = vpop.f32.mrf.mxu0
  %3693 = vmatprep.mubr.f32.mxu0 0.0
  %3694 = vmatmul.mubr.f32.gmra.mxu0 %v2662
  %v3695 = vpop.f32.mrf.mxu0
  %v3696 = vadd.f32 0.0, %v3695
  %v3697 = vpop.f32.mrf.mxu0
  %3698 = vmatprep.mubr.f32.mxu0 0.0
  %3699 = vmatmul.mubr.f32.gmra.mxu0 %v2665
  %v3700 = vpop.f32.mrf.mxu0
  %v3701 = vadd.f32 0.0, %v3700
  %v3702 = vpop.f32.mrf.mxu0
  %3703 = vmatprep.mubr.f32.mxu0 0.0
  %3704 = vmatmul.mubr.f32.gmra.mxu0 %v2668
  %v3705 = vpop.f32.mrf.mxu0
  %v3706 = vadd.f32 0.0, %v3705
  %v3707 = vpop.f32.mrf.mxu0
  %3708 = vdwg.mxu0
  %v3709 = vadd.f32 %v2532, %v3671
  %v3710 = vadd.f32 %v2533, %v3676
  %v3711 = vadd.f32 %v2534, %v3681
  %v3712 = vadd.f32 %v2535, %v3686
  %v3713 = vadd.f32 %v2536, %v3691
  %v3714 = vadd.f32 %v2537, %v3696
  %v3715 = vadd.f32 %v2538, %v3701
  %v3716 = vadd.f32 %v2539, %v3706
  %v3717 = vtanh.pop %v3709
  %v3718 = vtanh.pop %v3710
  %v3719 = vtanh.pop %v3711
  %v3720 = vtanh.pop %v3712
  %v3721 = vtanh.pop %v3713
  %v3722 = vtanh.pop %v3714
  %v3723 = vtanh.pop %v3715
  %v3724 = vtanh.pop %v3716
  %3725 = vmatprep.subr.mxu0 0.0
  %3726 = vmatpush1.msra.mxu0 0.0
  %3727 = vmatprep.subr.mxu0 0.0
  %3728 = vmatpush1.msra.mxu0 0.0
  %3729 = vmatprep.subr.mxu0 0.0
  %3730 = vmatpush1.msra.mxu0 0.0
  %3731 = vmatprep.subr.mxu0 0.0
  %3732 = vmatpush1.msra.mxu0 0.0
  %3733 = vmatprep.subr.mxu0 0.0
  %3734 = vmatpush1.msra.mxu0 0.0
  %3735 = vmatprep.subr.mxu0 0.0
  %3736 = vmatpush1.msra.mxu0 0.0
  %3737 = vmatprep.subr.mxu0 0.0
  %3738 = vmatpush1.msra.mxu0 0.0
  %3739 = vmatprep.subr.mxu0 0.0
  %3740 = vmatpush1.msra.mxu0 0.0
  %3741 = vmatprep.subr.mxu0 0.0
  %3742 = vmatpush1.msra.mxu0 %v3724
  %3743 = vmatprep.subr.mxu0 0.0
  %3744 = vmatpush1.msra.mxu0 %v3723
  %3745 = vmatprep.subr.mxu0 0.0
  %3746 = vmatpush1.msra.mxu0 %v3722
  %3747 = vmatprep.subr.mxu0 0.0
  %3748 = vmatpush1.msra.mxu0 %v3721
  %3749 = vmatprep.subr.mxu0 0.0
  %3750 = vmatpush1.msra.mxu0 %v3720
  %3751 = vmatprep.subr.mxu0 0.0
  %3752 = vmatpush1.msra.mxu0 %v3719
  %3753 = vmatprep.subr.mxu0 0.0
  %3754 = vmatpush1.msra.mxu0 %v3718
  %3755 = vmatprep.subr.mxu0 0.0
  %3756 = vmatpush1.msra.mxu0 %v3717
  %3757 = vmatprep.subr.mxu0 0.0
  %3758 = vmatpush2.msra.mxu0 0.0
  %3759 = vmatprep.subr.mxu0 0.0
  %3760 = vmatpush2.msra.mxu0 0.0
  %3761 = vmatprep.subr.mxu0 0.0
  %3762 = vmatpush2.msra.mxu0 0.0
  %3763 = vmatprep.subr.mxu0 0.0
  %3764 = vmatpush2.msra.mxu0 0.0
  %3765 = vmatprep.subr.mxu0 0.0
  %3766 = vmatpush2.msra.mxu0 0.0
  %3767 = vmatprep.subr.mxu0 0.0
  %3768 = vmatpush2.msra.mxu0 0.0
  %3769 = vmatprep.subr.mxu0 0.0
  %3770 = vmatpush2.msra.mxu0 0.0
  %3771 = vmatprep.subr.mxu0 0.0
  %3772 = vmatpush2.msra.mxu0 0.0
  %3773 = vmatprep.subr.mxu0 0.0
  %3774 = vmatpush2.msra.mxu0 0.0
  %3775 = vmatprep.subr.mxu0 0.0
  %3776 = vmatpush2.msra.mxu0 0.0
  %3777 = vmatprep.subr.mxu0 0.0
  %3778 = vmatpush2.msra.mxu0 0.0
  %3779 = vmatprep.subr.mxu0 0.0
  %3780 = vmatpush2.msra.mxu0 0.0
  %3781 = vmatprep.subr.mxu0 0.0
  %3782 = vmatpush2.msra.mxu0 0.0
  %3783 = vmatprep.subr.mxu0 0.0
  %3784 = vmatpush2.msra.mxu0 0.0
  %3785 = vmatprep.subr.mxu0 0.0
  %3786 = vmatpush2.msra.mxu0 0.0
  %3787 = vmatprep.subr.mxu0 0.0
  %3788 = vmatpush2.msra.mxu0 0.0
  %3789 = vmatprep.mubr.f32.mxu0 0.0
  %3790 = vmatmul.mubr.f32.gmra.mxu0 %v2832
  %v3791 = vpop.f32.mrf.mxu0
  %v3792 = vadd.f32 %v2794, %v3791
  %v3793 = vpop.f32.mrf.mxu0
  %3794 = vmatprep.mubr.f32.mxu0 0.0
  %3795 = vmatmul.mubr.f32.gmra.mxu0 %v2835
  %v3796 = vpop.f32.mrf.mxu0
  %v3797 = vadd.f32 %v2799, %v3796
  %v3798 = vpop.f32.mrf.mxu0
  %3799 = vmatprep.mubr.f32.mxu0 0.0
  %3800 = vmatmul.mubr.f32.gmra.mxu0 %v2838
  %v3801 = vpop.f32.mrf.mxu0
  %v3802 = vadd.f32 %v2804, %v3801
  %v3803 = vpop.f32.mrf.mxu0
  %3804 = vmatprep.mubr.f32.mxu0 0.0
  %3805 = vmatmul.mubr.f32.gmra.mxu0 %v2841
  %v3806 = vpop.f32.mrf.mxu0
  %v3807 = vadd.f32 %v2809, %v3806
  %v3808 = vpop.f32.mrf.mxu0
  %3809 = vmatprep.mubr.f32.mxu0 0.0
  %3810 = vmatmul.mubr.f32.gmra.mxu0 %v2844
  %v3811 = vpop.f32.mrf.mxu0
  %v3812 = vadd.f32 %v2814, %v3811
  %v3813 = vpop.f32.mrf.mxu0
  %3814 = vmatprep.mubr.f32.mxu0 0.0
  %3815 = vmatmul.mubr.f32.gmra.mxu0 %v2847
  %v3816 = vpop.f32.mrf.mxu0
  %v3817 = vadd.f32 %v2819, %v3816
  %v3818 = vpop.f32.mrf.mxu0
  %3819 = vmatprep.mubr.f32.mxu0 0.0
  %3820 = vmatmul.mubr.f32.gmra.mxu0 %v2850
  %v3821 = vpop.f32.mrf.mxu0
  %v3822 = vadd.f32 %v2824, %v3821
  %v3823 = vpop.f32.mrf.mxu0
  %3824 = vmatprep.mubr.f32.mxu0 0.0
  %3825 = vmatmul.mubr.f32.gmra.mxu0 %v2853
  %v3826 = vpop.f32.mrf.mxu0
  %v3827 = vadd.f32 %v2829, %v3826
  %v3828 = vpop.f32.mrf.mxu0
  %3829 = vdwg.mxu0
  %v3830 = vtanh.pop %v3792
  %v3831 = vtanh.pop %v3797
  %v3832 = vtanh.pop %v3802
  %v3833 = vtanh.pop %v3807
  %v3834 = vtanh.pop %v3812
  %v3835 = vtanh.pop %v3817
  %v3836 = vtanh.pop %v3822
  %v3837 = vtanh.pop %v3827
  %3838 = vmatprep.subr.mxu0 0.0
  %3839 = vmatpush1.msra.mxu0 0.0
  %3840 = vmatprep.subr.mxu0 0.0
  %3841 = vmatpush1.msra.mxu0 0.0
  %3842 = vmatprep.subr.mxu0 0.0
  %3843 = vmatpush1.msra.mxu0 0.0
  %3844 = vmatprep.subr.mxu0 0.0
  %3845 = vmatpush1.msra.mxu0 0.0
  %3846 = vmatprep.subr.mxu0 0.0
  %3847 = vmatpush1.msra.mxu0 0.0
  %3848 = vmatprep.subr.mxu0 0.0
  %3849 = vmatpush1.msra.mxu0 0.0
  %3850 = vmatprep.subr.mxu0 0.0
  %3851 = vmatpush1.msra.mxu0 0.0
  %3852 = vmatprep.subr.mxu0 0.0
  %3853 = vmatpush1.msra.mxu0 0.0
  %3854 = vmatprep.subr.mxu0 0.0
  %3855 = vmatpush1.msra.mxu0 %v3837
  %3856 = vmatprep.subr.mxu0 0.0
  %3857 = vmatpush1.msra.mxu0 %v3836
  %3858 = vmatprep.subr.mxu0 0.0
  %3859 = vmatpush1.msra.mxu0 %v3835
  %3860 = vmatprep.subr.mxu0 0.0
  %3861 = vmatpush1.msra.mxu0 %v3834
  %3862 = vmatprep.subr.mxu0 0.0
  %3863 = vmatpush1.msra.mxu0 %v3833
  %3864 = vmatprep.subr.mxu0 0.0
  %3865 = vmatpush1.msra.mxu0 %v3832
  %3866 = vmatprep.subr.mxu0 0.0
  %3867 = vmatpush1.msra.mxu0 %v3831
  %3868 = vmatprep.subr.mxu0 0.0
  %3869 = vmatpush1.msra.mxu0 %v3830
  %3870 = vmatprep.subr.mxu0 0.0
  %3871 = vmatpush2.msra.mxu0 0.0
  %3872 = vmatprep.subr.mxu0 0.0
  %3873 = vmatpush2.msra.mxu0 0.0
  %3874 = vmatprep.subr.mxu0 0.0
  %3875 = vmatpush2.msra.mxu0 0.0
  %3876 = vmatprep.subr.mxu0 0.0
  %3877 = vmatpush2.msra.mxu0 0.0
  %3878 = vmatprep.subr.mxu0 0.0
  %3879 = vmatpush2.msra.mxu0 0.0
  %3880 = vmatprep.subr.mxu0 0.0
  %3881 = vmatpush2.msra.mxu0 0.0
  %3882 = vmatprep.subr.mxu0 0.0
  %3883 = vmatpush2.msra.mxu0 0.0
  %3884 = vmatprep.subr.mxu0 0.0
  %3885 = vmatpush2.msra.mxu0 0.0
  %3886 = vmatprep.subr.mxu0 0.0
  %3887 = vmatpush2.msra.mxu0 0.0
  %3888 = vmatprep.subr.mxu0 0.0
  %3889 = vmatpush2.msra.mxu0 0.0
  %3890 = vmatprep.subr.mxu0 0.0
  %3891 = vmatpush2.msra.mxu0 0.0
  %3892 = vmatprep.subr.mxu0 0.0
  %3893 = vmatpush2.msra.mxu0 0.0
  %3894 = vmatprep.subr.mxu0 0.0
  %3895 = vmatpush2.msra.mxu0 0.0
  %3896 = vmatprep.subr.mxu0 0.0
  %3897 = vmatpush2.msra.mxu0 0.0
  %3898 = vmatprep.subr.mxu0 0.0
  %3899 = vmatpush2.msra.mxu0 0.0
  %3900 = vmatprep.subr.mxu0 0.0
  %3901 = vmatpush2.msra.mxu0 0.0
  %3902 = vmatprep.mubr.f32.mxu0 0.0
  %3903 = vmatmul.mubr.f32.gmra.mxu0 %v2969
  %v3904 = vpop.f32.mrf.mxu0
  %v3905 = vadd.f32 %v2540, %v3904
  %v3906 = vpop.f32.mrf.mxu0
  %3907 = vmatprep.mubr.f32.mxu0 0.0
  %3908 = vmatmul.mubr.f32.gmra.mxu0 %v2972
  %v3909 = vpop.f32.mrf.mxu0
  %v3910 = vadd.f32 %v2541, %v3909
  %v3911 = vpop.f32.mrf.mxu0
  %3912 = vmatprep.mubr.f32.mxu0 0.0
  %3913 = vmatmul.mubr.f32.gmra.mxu0 %v2975
  %v3914 = vpop.f32.mrf.mxu0
  %v3915 = vadd.f32 %v2542, %v3914
  %v3916 = vpop.f32.mrf.mxu0
  %3917 = vmatprep.mubr.f32.mxu0 0.0
  %3918 = vmatmul.mubr.f32.gmra.mxu0 %v2978
  %v3919 = vpop.f32.mrf.mxu0
  %v3920 = vadd.f32 %v2543, %v3919
  %v3921 = vpop.f32.mrf.mxu0
  %3922 = vmatprep.mubr.f32.mxu0 0.0
  %3923 = vmatmul.mubr.f32.gmra.mxu0 %v2981
  %v3924 = vpop.f32.mrf.mxu0
  %v3925 = vadd.f32 %v2544, %v3924
  %v3926 = vpop.f32.mrf.mxu0
  %3927 = vmatprep.mubr.f32.mxu0 0.0
  %3928 = vmatmul.mubr.f32.gmra.mxu0 %v2984
  %v3929 = vpop.f32.mrf.mxu0
  %v3930 = vadd.f32 %v2545, %v3929
  %v3931 = vpop.f32.mrf.mxu0
  %3932 = vmatprep.mubr.f32.mxu0 0.0
  %3933 = vmatmul.mubr.f32.gmra.mxu0 %v2987
  %v3934 = vpop.f32.mrf.mxu0
  %v3935 = vadd.f32 %v2546, %v3934
  %v3936 = vpop.f32.mrf.mxu0
  %3937 = vmatprep.mubr.f32.mxu0 0.0
  %3938 = vmatmul.mubr.f32.gmra.mxu0 %v2990
  %v3939 = vpop.f32.mrf.mxu0
  %v3940 = vadd.f32 %v2547, %v3939
  %v3941 = vpop.f32.mrf.mxu0
  %3942 = vdwg.mxu0
  %v3943 = vtanh.pop %v3905
  %v3944 = vtanh.pop %v3910
  %v3945 = vtanh.pop %v3915
  %v3946 = vtanh.pop %v3920
  %v3947 = vtanh.pop %v3925
  %v3948 = vtanh.pop %v3930
  %v3949 = vtanh.pop %v3935
  %v3950 = vtanh.pop %v3940
  %3951 = vmatprep.subr.mxu0 0.0
  %3952 = vmatpush1.msra.mxu0 0.0
  %3953 = vmatprep.subr.mxu0 0.0
  %3954 = vmatpush1.msra.mxu0 0.0
  %3955 = vmatprep.subr.mxu0 0.0
  %3956 = vmatpush1.msra.mxu0 0.0
  %3957 = vmatprep.subr.mxu0 0.0
  %3958 = vmatpush1.msra.mxu0 0.0
  %3959 = vmatprep.subr.mxu0 0.0
  %3960 = vmatpush1.msra.mxu0 0.0
  %3961 = vmatprep.subr.mxu0 0.0
  %3962 = vmatpush1.msra.mxu0 0.0
  %3963 = vmatprep.subr.mxu0 0.0
  %3964 = vmatpush1.msra.mxu0 0.0
  %3965 = vmatprep.subr.mxu0 0.0
  %3966 = vmatpush1.msra.mxu0 0.0
  %3967 = vmatprep.subr.mxu0 0.0
  %3968 = vmatpush1.msra.mxu0 %v3950
  %3969 = vmatprep.subr.mxu0 0.0
  %3970 = vmatpush1.msra.mxu0 %v3949
  %3971 = vmatprep.subr.mxu0 0.0
  %3972 = vmatpush1.msra.mxu0 %v3948
  %3973 = vmatprep.subr.mxu0 0.0
  %3974 = vmatpush1.msra.mxu0 %v3947
  %3975 = vmatprep.subr.mxu0 0.0
  %3976 = vmatpush1.msra.mxu0 %v3946
  %3977 = vmatprep.subr.mxu0 0.0
  %3978 = vmatpush1.msra.mxu0 %v3945
  %3979 = vmatprep.subr.mxu0 0.0
  %3980 = vmatpush1.msra.mxu0 %v3944
  %3981 = vmatprep.subr.mxu0 0.0
  %3982 = vmatpush1.msra.mxu0 %v3943
  %3983 = vmatprep.subr.mxu0 0.0
  %3984 = vmatpush2.msra.mxu0 0.0
  %3985 = vmatprep.subr.mxu0 0.0
  %3986 = vmatpush2.msra.mxu0 0.0
  %3987 = vmatprep.subr.mxu0 0.0
  %3988 = vmatpush2.msra.mxu0 0.0
  %3989 = vmatprep.subr.mxu0 0.0
  %3990 = vmatpush2.msra.mxu0 0.0
  %3991 = vmatprep.subr.mxu0 0.0
  %3992 = vmatpush2.msra.mxu0 0.0
  %3993 = vmatprep.subr.mxu0 0.0
  %3994 = vmatpush2.msra.mxu0 0.0
  %3995 = vmatprep.subr.mxu0 0.0
  %3996 = vmatpush2.msra.mxu0 0.0
  %3997 = vmatprep.subr.mxu0 0.0
  %3998 = vmatpush2.msra.mxu0 0.0
  %3999 = vmatprep.subr.mxu0 0.0
  %4000 = vmatpush2.msra.mxu0 0.0
  %4001 = vmatprep.subr.mxu0 0.0
  %4002 = vmatpush2.msra.mxu0 0.0
  %4003 = vmatprep.subr.mxu0 0.0
  %4004 = vmatpush2.msra.mxu0 0.0
  %4005 = vmatprep.subr.mxu0 0.0
  %4006 = vmatpush2.msra.mxu0 0.0
  %4007 = vmatprep.subr.mxu0 0.0
  %4008 = vmatpush2.msra.mxu0 0.0
  %4009 = vmatprep.subr.mxu0 0.0
  %4010 = vmatpush2.msra.mxu0 0.0
  %4011 = vmatprep.subr.mxu0 0.0
  %4012 = vmatpush2.msra.mxu0 0.0
  %4013 = vmatprep.subr.mxu0 0.0
  %4014 = vmatpush2.msra.mxu0 0.0
  %4015 = vmatprep.mubr.f32.mxu0 0.0
  %4016 = vmatmul.mubr.f32.gmra.mxu0 %v3115
  %v4017 = vpop.f32.mrf.mxu0
  %v4018 = vadd.f32 %v3113, %v4017
  %v4019 = vpop.f32.mrf.mxu0
  %4020 = vdwg.mxu0
  %4021 = vmatprep.subr.mxu0 0.0
  %4022 = vmatpush1.msra.mxu0 0.0
  %4023 = vmatprep.subr.mxu0 0.0
  %4024 = vmatpush1.msra.mxu0 0.0
  %4025 = vmatprep.subr.mxu0 0.0
  %4026 = vmatpush1.msra.mxu0 0.0
  %4027 = vmatprep.subr.mxu0 0.0
  %4028 = vmatpush1.msra.mxu0 0.0
  %4029 = vmatprep.subr.mxu0 0.0
  %4030 = vmatpush1.msra.mxu0 0.0
  %4031 = vmatprep.subr.mxu0 0.0
  %4032 = vmatpush1.msra.mxu0 0.0
  %4033 = vmatprep.subr.mxu0 0.0
  %4034 = vmatpush1.msra.mxu0 0.0
  %4035 = vmatprep.subr.mxu0 0.0
  %4036 = vmatpush1.msra.mxu0 0.0
  %4037 = vmatprep.subr.mxu0 0.0
  %4038 = vmatpush1.msra.mxu0 0.0
  %4039 = vmatprep.subr.mxu0 0.0
  %4040 = vmatpush1.msra.mxu0 0.0
  %4041 = vmatprep.subr.mxu0 0.0
  %4042 = vmatpush1.msra.mxu0 0.0
  %4043 = vmatprep.subr.mxu0 0.0
  %4044 = vmatpush1.msra.mxu0 0.0
  %4045 = vmatprep.subr.mxu0 0.0
  %4046 = vmatpush1.msra.mxu0 0.0
  %4047 = vmatprep.subr.mxu0 0.0
  %4048 = vmatpush1.msra.mxu0 0.0
  %4049 = vmatprep.subr.mxu0 0.0
  %4050 = vmatpush1.msra.mxu0 %v2587
  %4051 = vmatprep.subr.mxu0 0.0
  %4052 = vmatpush1.msra.mxu0 %v2586
  %4053 = vmatprep.subr.mxu0 0.0
  %4054 = vmatpush2.msra.mxu0 0.0
  %4055 = vmatprep.subr.mxu0 0.0
  %4056 = vmatpush2.msra.mxu0 0.0
  %4057 = vmatprep.subr.mxu0 0.0
  %4058 = vmatpush2.msra.mxu0 0.0
  %4059 = vmatprep.subr.mxu0 0.0
  %4060 = vmatpush2.msra.mxu0 0.0
  %4061 = vmatprep.subr.mxu0 0.0
  %4062 = vmatpush2.msra.mxu0 0.0
  %4063 = vmatprep.subr.mxu0 0.0
  %4064 = vmatpush2.msra.mxu0 0.0
  %4065 = vmatprep.subr.mxu0 0.0
  %4066 = vmatpush2.msra.mxu0 0.0
  %4067 = vmatprep.subr.mxu0 0.0
  %4068 = vmatpush2.msra.mxu0 0.0
  %4069 = vmatprep.subr.mxu0 0.0
  %4070 = vmatpush2.msra.mxu0 0.0
  %4071 = vmatprep.subr.mxu0 0.0
  %4072 = vmatpush2.msra.mxu0 0.0
  %4073 = vmatprep.subr.mxu0 0.0
  %4074 = vmatpush2.msra.mxu0 0.0
  %4075 = vmatprep.subr.mxu0 0.0
  %4076 = vmatpush2.msra.mxu0 0.0
  %4077 = vmatprep.subr.mxu0 0.0
  %4078 = vmatpush2.msra.mxu0 0.0
  %4079 = vmatprep.subr.mxu0 0.0
  %4080 = vmatpush2.msra.mxu0 0.0
  %4081 = vmatprep.subr.mxu0 0.0
  %4082 = vmatpush2.msra.mxu0 0.0
  %4083 = vmatprep.subr.mxu0 0.0
  %4084 = vmatpush2.msra.mxu0 0.0
  %4085 = vmatprep.mubr.f32.mxu0 0.0
  %4086 = vmatmul.mubr.f32.gmra.mxu0 %v2647
  %v4087 = vpop.f32.mrf.mxu0
  %v4088 = vadd.f32 0.0, %v4087
  %v4089 = vpop.f32.mrf.mxu0
  %4090 = vmatprep.mubr.f32.mxu0 0.0
  %4091 = vmatmul.mubr.f32.gmra.mxu0 %v2650
  %v4092 = vpop.f32.mrf.mxu0
  %v4093 = vadd.f32 0.0, %v4092
  %v4094 = vpop.f32.mrf.mxu0
  %4095 = vmatprep.mubr.f32.mxu0 0.0
  %4096 = vmatmul.mubr.f32.gmra.mxu0 %v2653
  %v4097 = vpop.f32.mrf.mxu0
  %v4098 = vadd.f32 0.0, %v4097
  %v4099 = vpop.f32.mrf.mxu0
  %4100 = vmatprep.mubr.f32.mxu0 0.0
  %4101 = vmatmul.mubr.f32.gmra.mxu0 %v2656
  %v4102 = vpop.f32.mrf.mxu0
  %v4103 = vadd.f32 0.0, %v4102
  %v4104 = vpop.f32.mrf.mxu0
  %4105 = vmatprep.mubr.f32.mxu0 0.0
  %4106 = vmatmul.mubr.f32.gmra.mxu0 %v2659
  %v4107 = vpop.f32.mrf.mxu0
  %v4108 = vadd.f32 0.0, %v4107
  %v4109 = vpop.f32.mrf.mxu0
  %4110 = vmatprep.mubr.f32.mxu0 0.0
  %4111 = vmatmul.mubr.f32.gmra.mxu0 %v2662
  %v4112 = vpop.f32.mrf.mxu0
  %v4113 = vadd.f32 0.0, %v4112
  %v4114 = vpop.f32.mrf.mxu0
  %4115 = vmatprep.mubr.f32.mxu0 0.0
  %4116 = vmatmul.mubr.f32.gmra.mxu0 %v2665
  %v4117 = vpop.f32.mrf.mxu0
  %v4118 = vadd.f32 0.0, %v4117
  %v4119 = vpop.f32.mrf.mxu0
  %4120 = vmatprep.mubr.f32.mxu0 0.0
  %4121 = vmatmul.mubr.f32.gmra.mxu0 %v2668
  %v4122 = vpop.f32.mrf.mxu0
  %v4123 = vadd.f32 0.0, %v4122
  %v4124 = vpop.f32.mrf.mxu0
  %4125 = vdwg.mxu0
  %v4126 = vadd.f32 %v2532, %v4088
  %v4127 = vadd.f32 %v2533, %v4093
  %v4128 = vadd.f32 %v2534, %v4098
  %v4129 = vadd.f32 %v2535, %v4103
  %v4130 = vadd.f32 %v2536, %v4108
  %v4131 = vadd.f32 %v2537, %v4113
  %v4132 = vadd.f32 %v2538, %v4118
  %v4133 = vadd.f32 %v2539, %v4123
  %v4134 = vtanh.pop %v4126
  %v4135 = vtanh.pop %v4127
  %v4136 = vtanh.pop %v4128
  %v4137 = vtanh.pop %v4129
  %v4138 = vtanh.pop %v4130
  %v4139 = vtanh.pop %v4131
  %v4140 = vtanh.pop %v4132
  %v4141 = vtanh.pop %v4133
  %4142 = vmatprep.subr.mxu0 0.0
  %4143 = vmatpush1.msra.mxu0 0.0
  %4144 = vmatprep.subr.mxu0 0.0
  %4145 = vmatpush1.msra.mxu0 0.0
  %4146 = vmatprep.subr.mxu0 0.0
  %4147 = vmatpush1.msra.mxu0 0.0
  %4148 = vmatprep.subr.mxu0 0.0
  %4149 = vmatpush1.msra.mxu0 0.0
  %4150 = vmatprep.subr.mxu0 0.0
  %4151 = vmatpush1.msra.mxu0 0.0
  %4152 = vmatprep.subr.mxu0 0.0
  %4153 = vmatpush1.msra.mxu0 0.0
  %4154 = vmatprep.subr.mxu0 0.0
  %4155 = vmatpush1.msra.mxu0 0.0
  %4156 = vmatprep.subr.mxu0 0.0
  %4157 = vmatpush1.msra.mxu0 0.0
  %4158 = vmatprep.subr.mxu0 0.0
  %4159 = vmatpush1.msra.mxu0 %v4141
  %4160 = vmatprep.subr.mxu0 0.0
  %4161 = vmatpush1.msra.mxu0 %v4140
  %4162 = vmatprep.subr.mxu0 0.0
  %4163 = vmatpush1.msra.mxu0 %v4139
  %4164 = vmatprep.subr.mxu0 0.0
  %4165 = vmatpush1.msra.mxu0 %v4138
  %4166 = vmatprep.subr.mxu0 0.0
  %4167 = vmatpush1.msra.mxu0 %v4137
  %4168 = vmatprep.subr.mxu0 0.0
  %4169 = vmatpush1.msra.mxu0 %v4136
  %4170 = vmatprep.subr.mxu0 0.0
  %4171 = vmatpush1.msra.mxu0 %v4135
  %4172 = vmatprep.subr.mxu0 0.0
  %4173 = vmatpush1.msra.mxu0 %v4134
  %4174 = vmatprep.subr.mxu0 0.0
  %4175 = vmatpush2.msra.mxu0 0.0
  %4176 = vmatprep.subr.mxu0 0.0
  %4177 = vmatpush2.msra.mxu0 0.0
  %4178 = vmatprep.subr.mxu0 0.0
  %4179 = vmatpush2.msra.mxu0 0.0
  %4180 = vmatprep.subr.mxu0 0.0
  %4181 = vmatpush2.msra.mxu0 0.0
  %4182 = vmatprep.subr.mxu0 0.0
  %4183 = vmatpush2.msra.mxu0 0.0
  %4184 = vmatprep.subr.mxu0 0.0
  %4185 = vmatpush2.msra.mxu0 0.0
  %4186 = vmatprep.subr.mxu0 0.0
  %4187 = vmatpush2.msra.mxu0 0.0
  %4188 = vmatprep.subr.mxu0 0.0
  %4189 = vmatpush2.msra.mxu0 0.0
  %4190 = vmatprep.subr.mxu0 0.0
  %4191 = vmatpush2.msra.mxu0 0.0
  %4192 = vmatprep.subr.mxu0 0.0
  %4193 = vmatpush2.msra.mxu0 0.0
  %4194 = vmatprep.subr.mxu0 0.0
  %4195 = vmatpush2.msra.mxu0 0.0
  %4196 = vmatprep.subr.mxu0 0.0
  %4197 = vmatpush2.msra.mxu0 0.0
  %4198 = vmatprep.subr.mxu0 0.0
  %4199 = vmatpush2.msra.mxu0 0.0
  %4200 = vmatprep.subr.mxu0 0.0
  %4201 = vmatpush2.msra.mxu0 0.0
  %4202 = vmatprep.subr.mxu0 0.0
  %4203 = vmatpush2.msra.mxu0 0.0
  %4204 = vmatprep.subr.mxu0 0.0
  %4205 = vmatpush2.msra.mxu0 0.0
  %4206 = vmatprep.mubr.f32.mxu0 0.0
  %4207 = vmatmul.mubr.f32.gmra.mxu0 %v2832
  %v4208 = vpop.f32.mrf.mxu0
  %v4209 = vadd.f32 %v2794, %v4208
  %v4210 = vpop.f32.mrf.mxu0
  %4211 = vmatprep.mubr.f32.mxu0 0.0
  %4212 = vmatmul.mubr.f32.gmra.mxu0 %v2835
  %v4213 = vpop.f32.mrf.mxu0
  %v4214 = vadd.f32 %v2799, %v4213
  %v4215 = vpop.f32.mrf.mxu0
  %4216 = vmatprep.mubr.f32.mxu0 0.0
  %4217 = vmatmul.mubr.f32.gmra.mxu0 %v2838
  %v4218 = vpop.f32.mrf.mxu0
  %v4219 = vadd.f32 %v2804, %v4218
  %v4220 = vpop.f32.mrf.mxu0
  %4221 = vmatprep.mubr.f32.mxu0 0.0
  %4222 = vmatmul.mubr.f32.gmra.mxu0 %v2841
  %v4223 = vpop.f32.mrf.mxu0
  %v4224 = vadd.f32 %v2809, %v4223
  %v4225 = vpop.f32.mrf.mxu0
  %4226 = vmatprep.mubr.f32.mxu0 0.0
  %4227 = vmatmul.mubr.f32.gmra.mxu0 %v2844
  %v4228 = vpop.f32.mrf.mxu0
  %v4229 = vadd.f32 %v2814, %v4228
  %v4230 = vpop.f32.mrf.mxu0
  %4231 = vmatprep.mubr.f32.mxu0 0.0
  %4232 = vmatmul.mubr.f32.gmra.mxu0 %v2847
  %v4233 = vpop.f32.mrf.mxu0
  %v4234 = vadd.f32 %v2819, %v4233
  %v4235 = vpop.f32.mrf.mxu0
  %4236 = vmatprep.mubr.f32.mxu0 0.0
  %4237 = vmatmul.mubr.f32.gmra.mxu0 %v2850
  %v4238 = vpop.f32.mrf.mxu0
  %v4239 = vadd.f32 %v2824, %v4238
  %v4240 = vpop.f32.mrf.mxu0
  %4241 = vmatprep.mubr.f32.mxu0 0.0
  %4242 = vmatmul.mubr.f32.gmra.mxu0 %v2853
  %v4243 = vpop.f32.mrf.mxu0
  %v4244 = vadd.f32 %v2829, %v4243
  %v4245 = vpop.f32.mrf.mxu0
  %4246 = vdwg.mxu0
  %v4247 = vtanh.pop %v4209
  %v4248 = vtanh.pop %v4214
  %v4249 = vtanh.pop %v4219
  %v4250 = vtanh.pop %v4224
  %v4251 = vtanh.pop %v4229
  %v4252 = vtanh.pop %v4234
  %v4253 = vtanh.pop %v4239
  %v4254 = vtanh.pop %v4244
  %4255 = vmatprep.subr.mxu0 0.0
  %4256 = vmatpush1.msra.mxu0 0.0
  %4257 = vmatprep.subr.mxu0 0.0
  %4258 = vmatpush1.msra.mxu0 0.0
  %4259 = vmatprep.subr.mxu0 0.0
  %4260 = vmatpush1.msra.mxu0 0.0
  %4261 = vmatprep.subr.mxu0 0.0
  %4262 = vmatpush1.msra.mxu0 0.0
  %4263 = vmatprep.subr.mxu0 0.0
  %4264 = vmatpush1.msra.mxu0 0.0
  %4265 = vmatprep.subr.mxu0 0.0
  %4266 = vmatpush1.msra.mxu0 0.0
  %4267 = vmatprep.subr.mxu0 0.0
  %4268 = vmatpush1.msra.mxu0 0.0
  %4269 = vmatprep.subr.mxu0 0.0
  %4270 = vmatpush1.msra.mxu0 0.0
  %4271 = vmatprep.subr.mxu0 0.0
  %4272 = vmatpush1.msra.mxu0 %v4254
  %4273 = vmatprep.subr.mxu0 0.0
  %4274 = vmatpush1.msra.mxu0 %v4253
  %4275 = vmatprep.subr.mxu0 0.0
  %4276 = vmatpush1.msra.mxu0 %v4252
  %4277 = vmatprep.subr.mxu0 0.0
  %4278 = vmatpush1.msra.mxu0 %v4251
  %4279 = vmatprep.subr.mxu0 0.0
  %4280 = vmatpush1.msra.mxu0 %v4250
  %4281 = vmatprep.subr.mxu0 0.0
  %4282 = vmatpush1.msra.mxu0 %v4249
  %4283 = vmatprep.subr.mxu0 0.0
  %4284 = vmatpush1.msra.mxu0 %v4248
  %4285 = vmatprep.subr.mxu0 0.0
  %4286 = vmatpush1.msra.mxu0 %v4247
  %4287 = vmatprep.subr.mxu0 0.0
  %4288 = vmatpush2.msra.mxu0 0.0
  %4289 = vmatprep.subr.mxu0 0.0
  %4290 = vmatpush2.msra.mxu0 0.0
  %4291 = vmatprep.subr.mxu0 0.0
  %4292 = vmatpush2.msra.mxu0 0.0
  %4293 = vmatprep.subr.mxu0 0.0
  %4294 = vmatpush2.msra.mxu0 0.0
  %4295 = vmatprep.subr.mxu0 0.0
  %4296 = vmatpush2.msra.mxu0 0.0
  %4297 = vmatprep.subr.mxu0 0.0
  %4298 = vmatpush2.msra.mxu0 0.0
  %4299 = vmatprep.subr.mxu0 0.0
  %4300 = vmatpush2.msra.mxu0 0.0
  %4301 = vmatprep.subr.mxu0 0.0
  %4302 = vmatpush2.msra.mxu0 0.0
  %4303 = vmatprep.subr.mxu0 0.0
  %4304 = vmatpush2.msra.mxu0 0.0
  %4305 = vmatprep.subr.mxu0 0.0
  %4306 = vmatpush2.msra.mxu0 0.0
  %4307 = vmatprep.subr.mxu0 0.0
  %4308 = vmatpush2.msra.mxu0 0.0
  %4309 = vmatprep.subr.mxu0 0.0
  %4310 = vmatpush2.msra.mxu0 0.0
  %4311 = vmatprep.subr.mxu0 0.0
  %4312 = vmatpush2.msra.mxu0 0.0
  %4313 = vmatprep.subr.mxu0 0.0
  %4314 = vmatpush2.msra.mxu0 0.0
  %4315 = vmatprep.subr.mxu0 0.0
  %4316 = vmatpush2.msra.mxu0 0.0
  %4317 = vmatprep.subr.mxu0 0.0
  %4318 = vmatpush2.msra.mxu0 0.0
  %4319 = vmatprep.mubr.f32.mxu0 0.0
  %4320 = vmatmul.mubr.f32.gmra.mxu0 %v2969
  %v4321 = vpop.f32.mrf.mxu0
  %v4322 = vadd.f32 %v2540, %v4321
  %v4323 = vpop.f32.mrf.mxu0
  %4324 = vmatprep.mubr.f32.mxu0 0.0
  %4325 = vmatmul.mubr.f32.gmra.mxu0 %v2972
  %v4326 = vpop.f32.mrf.mxu0
  %v4327 = vadd.f32 %v2541, %v4326
  %v4328 = vpop.f32.mrf.mxu0
  %4329 = vmatprep.mubr.f32.mxu0 0.0
  %4330 = vmatmul.mubr.f32.gmra.mxu0 %v2975
  %v4331 = vpop.f32.mrf.mxu0
  %v4332 = vadd.f32 %v2542, %v4331
  %v4333 = vpop.f32.mrf.mxu0
  %4334 = vmatprep.mubr.f32.mxu0 0.0
  %4335 = vmatmul.mubr.f32.gmra.mxu0 %v2978
  %v4336 = vpop.f32.mrf.mxu0
  %v4337 = vadd.f32 %v2543, %v4336
  %v4338 = vpop.f32.mrf.mxu0
  %4339 = vmatprep.mubr.f32.mxu0 0.0
  %4340 = vmatmul.mubr.f32.gmra.mxu0 %v2981
  %v4341 = vpop.f32.mrf.mxu0
  %v4342 = vadd.f32 %v2544, %v4341
  %v4343 = vpop.f32.mrf.mxu0
  %4344 = vmatprep.mubr.f32.mxu0 0.0
  %4345 = vmatmul.mubr.f32.gmra.mxu0 %v2984
  %v4346 = vpop.f32.mrf.mxu0
  %v4347 = vadd.f32 %v2545, %v4346
  %v4348 = vpop.f32.mrf.mxu0
  %4349 = vmatprep.mubr.f32.mxu0 0.0
  %4350 = vmatmul.mubr.f32.gmra.mxu0 %v2987
  %v4351 = vpop.f32.mrf.mxu0
  %v4352 = vadd.f32 %v2546, %v4351
  %v4353 = vpop.f32.mrf.mxu0
  %4354 = vmatprep.mubr.f32.mxu0 0.0
  %4355 = vmatmul.mubr.f32.gmra.mxu0 %v2990
  %v4356 = vpop.f32.mrf.mxu0
  %v4357 = vadd.f32 %v2547, %v4356
  %v4358 = vpop.f32.mrf.mxu0
  %4359 = vdwg.mxu0
  %v4360 = vtanh.pop %v4322
  %v4361 = vtanh.pop %v4327
  %v4362 = vtanh.pop %v4332
  %v4363 = vtanh.pop %v4337
  %v4364 = vtanh.pop %v4342
  %v4365 = vtanh.pop %v4347
  %v4366 = vtanh.pop %v4352
  %v4367 = vtanh.pop %v4357
  %4368 = vmatprep.subr.mxu0 0.0
  %4369 = vmatpush1.msra.mxu0 0.0
  %4370 = vmatprep.subr.mxu0 0.0
  %4371 = vmatpush1.msra.mxu0 0.0
  %4372 = vmatprep.subr.mxu0 0.0
  %4373 = vmatpush1.msra.mxu0 0.0
  %4374 = vmatprep.subr.mxu0 0.0
  %4375 = vmatpush1.msra.mxu0 0.0
  %4376 = vmatprep.subr.mxu0 0.0
  %4377 = vmatpush1.msra.mxu0 0.0
  %4378 = vmatprep.subr.mxu0 0.0
  %4379 = vmatpush1.msra.mxu0 0.0
  %4380 = vmatprep.subr.mxu0 0.0
  %4381 = vmatpush1.msra.mxu0 0.0
  %4382 = vmatprep.subr.mxu0 0.0
  %4383 = vmatpush1.msra.mxu0 0.0
  %4384 = vmatprep.subr.mxu0 0.0
  %4385 = vmatpush1.msra.mxu0 %v4367
  %4386 = vmatprep.subr.mxu0 0.0
  %4387 = vmatpush1.msra.mxu0 %v4366
  %4388 = vmatprep.subr.mxu0 0.0
  %4389 = vmatpush1.msra.mxu0 %v4365
  %4390 = vmatprep.subr.mxu0 0.0
  %4391 = vmatpush1.msra.mxu0 %v4364
  %4392 = vmatprep.subr.mxu0 0.0
  %4393 = vmatpush1.msra.mxu0 %v4363
  %4394 = vmatprep.subr.mxu0 0.0
  %4395 = vmatpush1.msra.mxu0 %v4362
  %4396 = vmatprep.subr.mxu0 0.0
  %4397 = vmatpush1.msra.mxu0 %v4361
  %4398 = vmatprep.subr.mxu0 0.0
  %4399 = vmatpush1.msra.mxu0 %v4360
  %4400 = vmatprep.subr.mxu0 0.0
  %4401 = vmatpush2.msra.mxu0 0.0
  %4402 = vmatprep.subr.mxu0 0.0
  %4403 = vmatpush2.msra.mxu0 0.0
  %4404 = vmatprep.subr.mxu0 0.0
  %4405 = vmatpush2.msra.mxu0 0.0
  %4406 = vmatprep.subr.mxu0 0.0
  %4407 = vmatpush2.msra.mxu0 0.0
  %4408 = vmatprep.subr.mxu0 0.0
  %4409 = vmatpush2.msra.mxu0 0.0
  %4410 = vmatprep.subr.mxu0 0.0
  %4411 = vmatpush2.msra.mxu0 0.0
  %4412 = vmatprep.subr.mxu0 0.0
  %4413 = vmatpush2.msra.mxu0 0.0
  %4414 = vmatprep.subr.mxu0 0.0
  %4415 = vmatpush2.msra.mxu0 0.0
  %4416 = vmatprep.subr.mxu0 0.0
  %4417 = vmatpush2.msra.mxu0 0.0
  %4418 = vmatprep.subr.mxu0 0.0
  %4419 = vmatpush2.msra.mxu0 0.0
  %4420 = vmatprep.subr.mxu0 0.0
  %4421 = vmatpush2.msra.mxu0 0.0
  %4422 = vmatprep.subr.mxu0 0.0
  %4423 = vmatpush2.msra.mxu0 0.0
  %4424 = vmatprep.subr.mxu0 0.0
  %4425 = vmatpush2.msra.mxu0 0.0
  %4426 = vmatprep.subr.mxu0 0.0
  %4427 = vmatpush2.msra.mxu0 0.0
  %4428 = vmatprep.subr.mxu0 0.0
  %4429 = vmatpush2.msra.mxu0 0.0
  %4430 = vmatprep.subr.mxu0 0.0
  %4431 = vmatpush2.msra.mxu0 0.0
  %4432 = vmatprep.mubr.f32.mxu0 0.0
  %4433 = vmatmul.mubr.f32.gmra.mxu0 %v3115
  %v4434 = vpop.f32.mrf.mxu0
  %v4435 = vadd.f32 %v3113, %v4434
  %v4436 = vpop.f32.mrf.mxu0
  %4437 = vdwg.mxu0
  %4438 = vmatprep.subr.mxu0 0.0
  %4439 = vmatpush1.msra.mxu0 0.0
  %4440 = vmatprep.subr.mxu0 0.0
  %4441 = vmatpush1.msra.mxu0 0.0
  %4442 = vmatprep.subr.mxu0 0.0
  %4443 = vmatpush1.msra.mxu0 0.0
  %4444 = vmatprep.subr.mxu0 0.0
  %4445 = vmatpush1.msra.mxu0 0.0
  %4446 = vmatprep.subr.mxu0 0.0
  %4447 = vmatpush1.msra.mxu0 0.0
  %4448 = vmatprep.subr.mxu0 0.0
  %4449 = vmatpush1.msra.mxu0 0.0
  %4450 = vmatprep.subr.mxu0 0.0
  %4451 = vmatpush1.msra.mxu0 0.0
  %4452 = vmatprep.subr.mxu0 0.0
  %4453 = vmatpush1.msra.mxu0 0.0
  %4454 = vmatprep.subr.mxu0 0.0
  %4455 = vmatpush1.msra.mxu0 0.0
  %4456 = vmatprep.subr.mxu0 0.0
  %4457 = vmatpush1.msra.mxu0 0.0
  %4458 = vmatprep.subr.mxu0 0.0
  %4459 = vmatpush1.msra.mxu0 0.0
  %4460 = vmatprep.subr.mxu0 0.0
  %4461 = vmatpush1.msra.mxu0 0.0
  %4462 = vmatprep.subr.mxu0 0.0
  %4463 = vmatpush1.msra.mxu0 0.0
  %4464 = vmatprep.subr.mxu0 0.0
  %4465 = vmatpush1.msra.mxu0 0.0
  %4466 = vmatprep.subr.mxu0 0.0
  %4467 = vmatpush1.msra.mxu0 %v2589
  %4468 = vmatprep.subr.mxu0 0.0
  %4469 = vmatpush1.msra.mxu0 %v2588
  %4470 = vmatprep.subr.mxu0 0.0
  %4471 = vmatpush2.msra.mxu0 0.0
  %4472 = vmatprep.subr.mxu0 0.0
  %4473 = vmatpush2.msra.mxu0 0.0
  %4474 = vmatprep.subr.mxu0 0.0
  %4475 = vmatpush2.msra.mxu0 0.0
  %4476 = vmatprep.subr.mxu0 0.0
  %4477 = vmatpush2.msra.mxu0 0.0
  %4478 = vmatprep.subr.mxu0 0.0
  %4479 = vmatpush2.msra.mxu0 0.0
  %4480 = vmatprep.subr.mxu0 0.0
  %4481 = vmatpush2.msra.mxu0 0.0
  %4482 = vmatprep.subr.mxu0 0.0
  %4483 = vmatpush2.msra.mxu0 0.0
  %4484 = vmatprep.subr.mxu0 0.0
  %4485 = vmatpush2.msra.mxu0 0.0
  %4486 = vmatprep.subr.mxu0 0.0
  %4487 = vmatpush2.msra.mxu0 0.0
  %4488 = vmatprep.subr.mxu0 0.0
  %4489 = vmatpush2.msra.mxu0 0.0
  %4490 = vmatprep.subr.mxu0 0.0
  %4491 = vmatpush2.msra.mxu0 0.0
  %4492 = vmatprep.subr.mxu0 0.0
  %4493 = vmatpush2.msra.mxu0 0.0
  %4494 = vmatprep.subr.mxu0 0.0
  %4495 = vmatpush2.msra.mxu0 0.0
  %4496 = vmatprep.subr.mxu0 0.0
  %4497 = vmatpush2.msra.mxu0 0.0
  %4498 = vmatprep.subr.mxu0 0.0
  %4499 = vmatpush2.msra.mxu0 0.0
  %4500 = vmatprep.subr.mxu0 0.0
  %4501 = vmatpush2.msra.mxu0 0.0
  %4502 = vmatprep.mubr.f32.mxu0 0.0
  %4503 = vmatmul.mubr.f32.gmra.mxu0 %v2647
  %v4504 = vpop.f32.mrf.mxu0
  %v4505 = vadd.f32 0.0, %v4504
  %v4506 = vpop.f32.mrf.mxu0
  %4507 = vmatprep.mubr.f32.mxu0 0.0
  %4508 = vmatmul.mubr.f32.gmra.mxu0 %v2650
  %v4509 = vpop.f32.mrf.mxu0
  %v4510 = vadd.f32 0.0, %v4509
  %v4511 = vpop.f32.mrf.mxu0
  %4512 = vmatprep.mubr.f32.mxu0 0.0
  %4513 = vmatmul.mubr.f32.gmra.mxu0 %v2653
  %v4514 = vpop.f32.mrf.mxu0
  %v4515 = vadd.f32 0.0, %v4514
  %v4516 = vpop.f32.mrf.mxu0
  %4517 = vmatprep.mubr.f32.mxu0 0.0
  %4518 = vmatmul.mubr.f32.gmra.mxu0 %v2656
  %v4519 = vpop.f32.mrf.mxu0
  %v4520 = vadd.f32 0.0, %v4519
  %v4521 = vpop.f32.mrf.mxu0
  %4522 = vmatprep.mubr.f32.mxu0 0.0
  %4523 = vmatmul.mubr.f32.gmra.mxu0 %v2659
  %v4524 = vpop.f32.mrf.mxu0
  %v4525 = vadd.f32 0.0, %v4524
  %v4526 = vpop.f32.mrf.mxu0
  %4527 = vmatprep.mubr.f32.mxu0 0.0
  %4528 = vmatmul.mubr.f32.gmra.mxu0 %v2662
  %v4529 = vpop.f32.mrf.mxu0
  %v4530 = vadd.f32 0.0, %v4529
  %v4531 = vpop.f32.mrf.mxu0
  %4532 = vmatprep.mubr.f32.mxu0 0.0
  %4533 = vmatmul.mubr.f32.gmra.mxu0 %v2665
  %v4534 = vpop.f32.mrf.mxu0
  %v4535 = vadd.f32 0.0, %v4534
  %v4536 = vpop.f32.mrf.mxu0
  %4537 = vmatprep.mubr.f32.mxu0 0.0
  %4538 = vmatmul.mubr.f32.gmra.mxu0 %v2668
  %v4539 = vpop.f32.mrf.mxu0
  %v4540 = vadd.f32 0.0, %v4539
  %v4541 = vpop.f32.mrf.mxu0
  %4542 = vdwg.mxu0
  %v4543 = vadd.f32 %v2532, %v4505
  %v4544 = vadd.f32 %v2533, %v4510
  %v4545 = vadd.f32 %v2534, %v4515
  %v4546 = vadd.f32 %v2535, %v4520
  %v4547 = vadd.f32 %v2536, %v4525
  %v4548 = vadd.f32 %v2537, %v4530
  %v4549 = vadd.f32 %v2538, %v4535
  %v4550 = vadd.f32 %v2539, %v4540
  %v4551 = vtanh.pop %v4543
  %v4552 = vtanh.pop %v4544
  %v4553 = vtanh.pop %v4545
  %v4554 = vtanh.pop %v4546
  %v4555 = vtanh.pop %v4547
  %v4556 = vtanh.pop %v4548
  %v4557 = vtanh.pop %v4549
  %v4558 = vtanh.pop %v4550
  %4559 = vmatprep.subr.mxu0 0.0
  %4560 = vmatpush1.msra.mxu0 0.0
  %4561 = vmatprep.subr.mxu0 0.0
  %4562 = vmatpush1.msra.mxu0 0.0
  %4563 = vmatprep.subr.mxu0 0.0
  %4564 = vmatpush1.msra.mxu0 0.0
  %4565 = vmatprep.subr.mxu0 0.0
  %4566 = vmatpush1.msra.mxu0 0.0
  %4567 = vmatprep.subr.mxu0 0.0
  %4568 = vmatpush1.msra.mxu0 0.0
  %4569 = vmatprep.subr.mxu0 0.0
  %4570 = vmatpush1.msra.mxu0 0.0
  %4571 = vmatprep.subr.mxu0 0.0
  %4572 = vmatpush1.msra.mxu0 0.0
  %4573 = vmatprep.subr.mxu0 0.0
  %4574 = vmatpush1.msra.mxu0 0.0
  %4575 = vmatprep.subr.mxu0 0.0
  %4576 = vmatpush1.msra.mxu0 %v4558
  %4577 = vmatprep.subr.mxu0 0.0
  %4578 = vmatpush1.msra.mxu0 %v4557
  %4579 = vmatprep.subr.mxu0 0.0
  %4580 = vmatpush1.msra.mxu0 %v4556
  %4581 = vmatprep.subr.mxu0 0.0
  %4582 = vmatpush1.msra.mxu0 %v4555
  %4583 = vmatprep.subr.mxu0 0.0
  %4584 = vmatpush1.msra.mxu0 %v4554
  %4585 = vmatprep.subr.mxu0 0.0
  %4586 = vmatpush1.msra.mxu0 %v4553
  %4587 = vmatprep.subr.mxu0 0.0
  %4588 = vmatpush1.msra.mxu0 %v4552
  %4589 = vmatprep.subr.mxu0 0.0
  %4590 = vmatpush1.msra.mxu0 %v4551
  %4591 = vmatprep.subr.mxu0 0.0
  %4592 = vmatpush2.msra.mxu0 0.0
  %4593 = vmatprep.subr.mxu0 0.0
  %4594 = vmatpush2.msra.mxu0 0.0
  %4595 = vmatprep.subr.mxu0 0.0
  %4596 = vmatpush2.msra.mxu0 0.0
  %4597 = vmatprep.subr.mxu0 0.0
  %4598 = vmatpush2.msra.mxu0 0.0
  %4599 = vmatprep.subr.mxu0 0.0
  %4600 = vmatpush2.msra.mxu0 0.0
  %4601 = vmatprep.subr.mxu0 0.0
  %4602 = vmatpush2.msra.mxu0 0.0
  %4603 = vmatprep.subr.mxu0 0.0
  %4604 = vmatpush2.msra.mxu0 0.0
  %4605 = vmatprep.subr.mxu0 0.0
  %4606 = vmatpush2.msra.mxu0 0.0
  %4607 = vmatprep.subr.mxu0 0.0
  %4608 = vmatpush2.msra.mxu0 0.0
  %4609 = vmatprep.subr.mxu0 0.0
  %4610 = vmatpush2.msra.mxu0 0.0
  %4611 = vmatprep.subr.mxu0 0.0
  %4612 = vmatpush2.msra.mxu0 0.0
  %4613 = vmatprep.subr.mxu0 0.0
  %4614 = vmatpush2.msra.mxu0 0.0
  %4615 = vmatprep.subr.mxu0 0.0
  %4616 = vmatpush2.msra.mxu0 0.0
  %4617 = vmatprep.subr.mxu0 0.0
  %4618 = vmatpush2.msra.mxu0 0.0
  %4619 = vmatprep.subr.mxu0 0.0
  %4620 = vmatpush2.msra.mxu0 0.0
  %4621 = vmatprep.subr.mxu0 0.0
  %4622 = vmatpush2.msra.mxu0 0.0
  %4623 = vmatprep.mubr.f32.mxu0 0.0
  %4624 = vmatmul.mubr.f32.gmra.mxu0 %v2832
  %v4625 = vpop.f32.mrf.mxu0
  %v4626 = vadd.f32 %v2794, %v4625
  %v4627 = vpop.f32.mrf.mxu0
  %4628 = vmatprep.mubr.f32.mxu0 0.0
  %4629 = vmatmul.mubr.f32.gmra.mxu0 %v2835
  %v4630 = vpop.f32.mrf.mxu0
  %v4631 = vadd.f32 %v2799, %v4630
  %v4632 = vpop.f32.mrf.mxu0
  %4633 = vmatprep.mubr.f32.mxu0 0.0
  %4634 = vmatmul.mubr.f32.gmra.mxu0 %v2838
  %v4635 = vpop.f32.mrf.mxu0
  %v4636 = vadd.f32 %v2804, %v4635
  %v4637 = vpop.f32.mrf.mxu0
  %4638 = vmatprep.mubr.f32.mxu0 0.0
  %4639 = vmatmul.mubr.f32.gmra.mxu0 %v2841
  %v4640 = vpop.f32.mrf.mxu0
  %v4641 = vadd.f32 %v2809, %v4640
  %v4642 = vpop.f32.mrf.mxu0
  %4643 = vmatprep.mubr.f32.mxu0 0.0
  %4644 = vmatmul.mubr.f32.gmra.mxu0 %v2844
  %v4645 = vpop.f32.mrf.mxu0
  %v4646 = vadd.f32 %v2814, %v4645
  %v4647 = vpop.f32.mrf.mxu0
  %4648 = vmatprep.mubr.f32.mxu0 0.0
  %4649 = vmatmul.mubr.f32.gmra.mxu0 %v2847
  %v4650 = vpop.f32.mrf.mxu0
  %v4651 = vadd.f32 %v2819, %v4650
  %v4652 = vpop.f32.mrf.mxu0
  %4653 = vmatprep.mubr.f32.mxu0 0.0
  %4654 = vmatmul.mubr.f32.gmra.mxu0 %v2850
  %v4655 = vpop.f32.mrf.mxu0
  %v4656 = vadd.f32 %v2824, %v4655
  %v4657 = vpop.f32.mrf.mxu0
  %4658 = vmatprep.mubr.f32.mxu0 0.0
  %4659 = vmatmul.mubr.f32.gmra.mxu0 %v2853
  %v4660 = vpop.f32.mrf.mxu0
  %v4661 = vadd.f32 %v2829, %v4660
  %v4662 = vpop.f32.mrf.mxu0
  %4663 = vdwg.mxu0
  %v4664 = vtanh.pop %v4626
  %v4665 = vtanh.pop %v4631
  %v4666 = vtanh.pop %v4636
  %v4667 = vtanh.pop %v4641
  %v4668 = vtanh.pop %v4646
  %v4669 = vtanh.pop %v4651
  %v4670 = vtanh.pop %v4656
  %v4671 = vtanh.pop %v4661
  %4672 = vmatprep.subr.mxu0 0.0
  %4673 = vmatpush1.msra.mxu0 0.0
  %4674 = vmatprep.subr.mxu0 0.0
  %4675 = vmatpush1.msra.mxu0 0.0
  %4676 = vmatprep.subr.mxu0 0.0
  %4677 = vmatpush1.msra.mxu0 0.0
  %4678 = vmatprep.subr.mxu0 0.0
  %4679 = vmatpush1.msra.mxu0 0.0
  %4680 = vmatprep.subr.mxu0 0.0
  %4681 = vmatpush1.msra.mxu0 0.0
  %4682 = vmatprep.subr.mxu0 0.0
  %4683 = vmatpush1.msra.mxu0 0.0
  %4684 = vmatprep.subr.mxu0 0.0
  %4685 = vmatpush1.msra.mxu0 0.0
  %4686 = vmatprep.subr.mxu0 0.0
  %4687 = vmatpush1.msra.mxu0 0.0
  %4688 = vmatprep.subr.mxu0 0.0
  %4689 = vmatpush1.msra.mxu0 %v4671
  %4690 = vmatprep.subr.mxu0 0.0
  %4691 = vmatpush1.msra.mxu0 %v4670
  %4692 = vmatprep.subr.mxu0 0.0
  %4693 = vmatpush1.msra.mxu0 %v4669
  %4694 = vmatprep.subr.mxu0 0.0
  %4695 = vmatpush1.msra.mxu0 %v4668
  %4696 = vmatprep.subr.mxu0 0.0
  %4697 = vmatpush1.msra.mxu0 %v4667
  %4698 = vmatprep.subr.mxu0 0.0
  %4699 = vmatpush1.msra.mxu0 %v4666
  %4700 = vmatprep.subr.mxu0 0.0
  %4701 = vmatpush1.msra.mxu0 %v4665
  %4702 = vmatprep.subr.mxu0 0.0
  %4703 = vmatpush1.msra.mxu0 %v4664
  %4704 = vmatprep.subr.mxu0 0.0
  %4705 = vmatpush2.msra.mxu0 0.0
  %4706 = vmatprep.subr.mxu0 0.0
  %4707 = vmatpush2.msra.mxu0 0.0
  %4708 = vmatprep.subr.mxu0 0.0
  %4709 = vmatpush2.msra.mxu0 0.0
  %4710 = vmatprep.subr.mxu0 0.0
  %4711 = vmatpush2.msra.mxu0 0.0
  %4712 = vmatprep.subr.mxu0 0.0
  %4713 = vmatpush2.msra.mxu0 0.0
  %4714 = vmatprep.subr.mxu0 0.0
  %4715 = vmatpush2.msra.mxu0 0.0
  %4716 = vmatprep.subr.mxu0 0.0
  %4717 = vmatpush2.msra.mxu0 0.0
  %4718 = vmatprep.subr.mxu0 0.0
  %4719 = vmatpush2.msra.mxu0 0.0
  %4720 = vmatprep.subr.mxu0 0.0
  %4721 = vmatpush2.msra.mxu0 0.0
  %4722 = vmatprep.subr.mxu0 0.0
  %4723 = vmatpush2.msra.mxu0 0.0
  %4724 = vmatprep.subr.mxu0 0.0
  %4725 = vmatpush2.msra.mxu0 0.0
  %4726 = vmatprep.subr.mxu0 0.0
  %4727 = vmatpush2.msra.mxu0 0.0
  %4728 = vmatprep.subr.mxu0 0.0
  %4729 = vmatpush2.msra.mxu0 0.0
  %4730 = vmatprep.subr.mxu0 0.0
  %4731 = vmatpush2.msra.mxu0 0.0
  %4732 = vmatprep.subr.mxu0 0.0
  %4733 = vmatpush2.msra.mxu0 0.0
  %4734 = vmatprep.subr.mxu0 0.0
  %4735 = vmatpush2.msra.mxu0 0.0
  %4736 = vmatprep.mubr.f32.mxu0 0.0
  %4737 = vmatmul.mubr.f32.gmra.mxu0 %v2969
  %v4738 = vpop.f32.mrf.mxu0
  %v4739 = vadd.f32 %v2540, %v4738
  %v4740 = vpop.f32.mrf.mxu0
  %4741 = vmatprep.mubr.f32.mxu0 0.0
  %4742 = vmatmul.mubr.f32.gmra.mxu0 %v2972
  %v4743 = vpop.f32.mrf.mxu0
  %v4744 = vadd.f32 %v2541, %v4743
  %v4745 = vpop.f32.mrf.mxu0
  %4746 = vmatprep.mubr.f32.mxu0 0.0
  %4747 = vmatmul.mubr.f32.gmra.mxu0 %v2975
  %v4748 = vpop.f32.mrf.mxu0
  %v4749 = vadd.f32 %v2542, %v4748
  %v4750 = vpop.f32.mrf.mxu0
  %4751 = vmatprep.mubr.f32.mxu0 0.0
  %4752 = vmatmul.mubr.f32.gmra.mxu0 %v2978
  %v4753 = vpop.f32.mrf.mxu0
  %v4754 = vadd.f32 %v2543, %v4753
  %v4755 = vpop.f32.mrf.mxu0
  %4756 = vmatprep.mubr.f32.mxu0 0.0
  %4757 = vmatmul.mubr.f32.gmra.mxu0 %v2981
  %v4758 = vpop.f32.mrf.mxu0
  %v4759 = vadd.f32 %v2544, %v4758
  %v4760 = vpop.f32.mrf.mxu0
  %4761 = vmatprep.mubr.f32.mxu0 0.0
  %4762 = vmatmul.mubr.f32.gmra.mxu0 %v2984
  %v4763 = vpop.f32.mrf.mxu0
  %v4764 = vadd.f32 %v2545, %v4763
  %v4765 = vpop.f32.mrf.mxu0
  %4766 = vmatprep.mubr.f32.mxu0 0.0
  %4767 = vmatmul.mubr.f32.gmra.mxu0 %v2987
  %v4768 = vpop.f32.mrf.mxu0
  %v4769 = vadd.f32 %v2546, %v4768
  %v4770 = vpop.f32.mrf.mxu0
  %4771 = vmatprep.mubr.f32.mxu0 0.0
  %4772 = vmatmul.mubr.f32.gmra.mxu0 %v2990
  %v4773 = vpop.f32.mrf.mxu0
  %v4774 = vadd.f32 %v2547, %v4773
  %v4775 = vpop.f32.mrf.mxu0
  %4776 = vdwg.mxu0
  %v4777 = vtanh.pop %v4739
  %v4778 = vtanh.pop %v4744
  %v4779 = vtanh.pop %v4749
  %v4780 = vtanh.pop %v4754
  %v4781 = vtanh.pop %v4759
  %v4782 = vtanh.pop %v4764
  %v4783 = vtanh.pop %v4769
  %v4784 = vtanh.pop %v4774
  %4785 = vmatprep.subr.mxu0 0.0
  %4786 = vmatpush1.msra.mxu0 0.0
  %4787 = vmatprep.subr.mxu0 0.0
  %4788 = vmatpush1.msra.mxu0 0.0
  %4789 = vmatprep.subr.mxu0 0.0
  %4790 = vmatpush1.msra.mxu0 0.0
  %4791 = vmatprep.subr.mxu0 0.0
  %4792 = vmatpush1.msra.mxu0 0.0
  %4793 = vmatprep.subr.mxu0 0.0
  %4794 = vmatpush1.msra.mxu0 0.0
  %4795 = vmatprep.subr.mxu0 0.0
  %4796 = vmatpush1.msra.mxu0 0.0
  %4797 = vmatprep.subr.mxu0 0.0
  %4798 = vmatpush1.msra.mxu0 0.0
  %4799 = vmatprep.subr.mxu0 0.0
  %4800 = vmatpush1.msra.mxu0 0.0
  %4801 = vmatprep.subr.mxu0 0.0
  %4802 = vmatpush1.msra.mxu0 %v4784
  %4803 = vmatprep.subr.mxu0 0.0
  %4804 = vmatpush1.msra.mxu0 %v4783
  %4805 = vmatprep.subr.mxu0 0.0
  %4806 = vmatpush1.msra.mxu0 %v4782
  %4807 = vmatprep.subr.mxu0 0.0
  %4808 = vmatpush1.msra.mxu0 %v4781
  %4809 = vmatprep.subr.mxu0 0.0
  %4810 = vmatpush1.msra.mxu0 %v4780
  %4811 = vmatprep.subr.mxu0 0.0
  %4812 = vmatpush1.msra.mxu0 %v4779
  %4813 = vmatprep.subr.mxu0 0.0
  %4814 = vmatpush1.msra.mxu0 %v4778
  %4815 = vmatprep.subr.mxu0 0.0
  %4816 = vmatpush1.msra.mxu0 %v4777
  %4817 = vmatprep.subr.mxu0 0.0
  %4818 = vmatpush2.msra.mxu0 0.0
  %4819 = vmatprep.subr.mxu0 0.0
  %4820 = vmatpush2.msra.mxu0 0.0
  %4821 = vmatprep.subr.mxu0 0.0
  %4822 = vmatpush2.msra.mxu0 0.0
  %4823 = vmatprep.subr.mxu0 0.0
  %4824 = vmatpush2.msra.mxu0 0.0
  %4825 = vmatprep.subr.mxu0 0.0
  %4826 = vmatpush2.msra.mxu0 0.0
  %4827 = vmatprep.subr.mxu0 0.0
  %4828 = vmatpush2.msra.mxu0 0.0
  %4829 = vmatprep.subr.mxu0 0.0
  %4830 = vmatpush2.msra.mxu0 0.0
  %4831 = vmatprep.subr.mxu0 0.0
  %4832 = vmatpush2.msra.mxu0 0.0
  %4833 = vmatprep.subr.mxu0 0.0
  %4834 = vmatpush2.msra.mxu0 0.0
  %4835 = vmatprep.subr.mxu0 0.0
  %4836 = vmatpush2.msra.mxu0 0.0
  %4837 = vmatprep.subr.mxu0 0.0
  %4838 = vmatpush2.msra.mxu0 0.0
  %4839 = vmatprep.subr.mxu0 0.0
  %4840 = vmatpush2.msra.mxu0 0.0
  %4841 = vmatprep.subr.mxu0 0.0
  %4842 = vmatpush2.msra.mxu0 0.0
  %4843 = vmatprep.subr.mxu0 0.0
  %4844 = vmatpush2.msra.mxu0 0.0
  %4845 = vmatprep.subr.mxu0 0.0
  %4846 = vmatpush2.msra.mxu0 0.0
  %4847 = vmatprep.subr.mxu0 0.0
  %4848 = vmatpush2.msra.mxu0 0.0
  %4849 = vmatprep.mubr.f32.mxu0 0.0
  %4850 = vmatmul.mubr.f32.gmra.mxu0 %v3115
  %v4851 = vpop.f32.mrf.mxu0
  %v4852 = vadd.f32 %v3113, %v4851
  %v4853 = vpop.f32.mrf.mxu0
  %4854 = vdwg.mxu0
  %4855 = vmatprep.subr.mxu0 0.0
  %4856 = vmatpush1.msra.mxu0 0.0
  %4857 = vmatprep.subr.mxu0 0.0
  %4858 = vmatpush1.msra.mxu0 0.0
  %4859 = vmatprep.subr.mxu0 0.0
  %4860 = vmatpush1.msra.mxu0 0.0
  %4861 = vmatprep.subr.mxu0 0.0
  %4862 = vmatpush1.msra.mxu0 0.0
  %4863 = vmatprep.subr.mxu0 0.0
  %4864 = vmatpush1.msra.mxu0 0.0
  %4865 = vmatprep.subr.mxu0 0.0
  %4866 = vmatpush1.msra.mxu0 0.0
  %4867 = vmatprep.subr.mxu0 0.0
  %4868 = vmatpush1.msra.mxu0 0.0
  %4869 = vmatprep.subr.mxu0 0.0
  %4870 = vmatpush1.msra.mxu0 0.0
  %4871 = vmatprep.subr.mxu0 0.0
  %4872 = vmatpush1.msra.mxu0 0.0
  %4873 = vmatprep.subr.mxu0 0.0
  %4874 = vmatpush1.msra.mxu0 0.0
  %4875 = vmatprep.subr.mxu0 0.0
  %4876 = vmatpush1.msra.mxu0 0.0
  %4877 = vmatprep.subr.mxu0 0.0
  %4878 = vmatpush1.msra.mxu0 0.0
  %4879 = vmatprep.subr.mxu0 0.0
  %4880 = vmatpush1.msra.mxu0 0.0
  %4881 = vmatprep.subr.mxu0 0.0
  %4882 = vmatpush1.msra.mxu0 0.0
  %4883 = vmatprep.subr.mxu0 0.0
  %4884 = vmatpush1.msra.mxu0 %v2591
  %4885 = vmatprep.subr.mxu0 0.0
  %4886 = vmatpush1.msra.mxu0 %v2590
  %4887 = vmatprep.subr.mxu0 0.0
  %4888 = vmatpush2.msra.mxu0 0.0
  %4889 = vmatprep.subr.mxu0 0.0
  %4890 = vmatpush2.msra.mxu0 0.0
  %4891 = vmatprep.subr.mxu0 0.0
  %4892 = vmatpush2.msra.mxu0 0.0
  %4893 = vmatprep.subr.mxu0 0.0
  %4894 = vmatpush2.msra.mxu0 0.0
  %4895 = vmatprep.subr.mxu0 0.0
  %4896 = vmatpush2.msra.mxu0 0.0
  %4897 = vmatprep.subr.mxu0 0.0
  %4898 = vmatpush2.msra.mxu0 0.0
  %4899 = vmatprep.subr.mxu0 0.0
  %4900 = vmatpush2.msra.mxu0 0.0
  %4901 = vmatprep.subr.mxu0 0.0
  %4902 = vmatpush2.msra.mxu0 0.0
  %4903 = vmatprep.subr.mxu0 0.0
  %4904 = vmatpush2.msra.mxu0 0.0
  %4905 = vmatprep.subr.mxu0 0.0
  %4906 = vmatpush2.msra.mxu0 0.0
  %4907 = vmatprep.subr.mxu0 0.0
  %4908 = vmatpush2.msra.mxu0 0.0
  %4909 = vmatprep.subr.mxu0 0.0
  %4910 = vmatpush2.msra.mxu0 0.0
  %4911 = vmatprep.subr.mxu0 0.0
  %4912 = vmatpush2.msra.mxu0 0.0
  %4913 = vmatprep.subr.mxu0 0.0
  %4914 = vmatpush2.msra.mxu0 0.0
  %4915 = vmatprep.subr.mxu0 0.0
  %4916 = vmatpush2.msra.mxu0 0.0
  %4917 = vmatprep.subr.mxu0 0.0
  %4918 = vmatpush2.msra.mxu0 0.0
  %4919 = vmatprep.mubr.f32.mxu0 0.0
  %4920 = vmatmul.mubr.f32.gmra.mxu0 %v2647
  %v4921 = vpop.f32.mrf.mxu0
  %v4922 = vadd.f32 0.0, %v4921
  %v4923 = vpop.f32.mrf.mxu0
  %4924 = vmatprep.mubr.f32.mxu0 0.0
  %4925 = vmatmul.mubr.f32.gmra.mxu0 %v2650
  %v4926 = vpop.f32.mrf.mxu0
  %v4927 = vadd.f32 0.0, %v4926
  %v4928 = vpop.f32.mrf.mxu0
  %4929 = vmatprep.mubr.f32.mxu0 0.0
  %4930 = vmatmul.mubr.f32.gmra.mxu0 %v2653
  %v4931 = vpop.f32.mrf.mxu0
  %v4932 = vadd.f32 0.0, %v4931
  %v4933 = vpop.f32.mrf.mxu0
  %4934 = vmatprep.mubr.f32.mxu0 0.0
  %4935 = vmatmul.mubr.f32.gmra.mxu0 %v2656
  %v4936 = vpop.f32.mrf.mxu0
  %v4937 = vadd.f32 0.0, %v4936
  %v4938 = vpop.f32.mrf.mxu0
  %4939 = vmatprep.mubr.f32.mxu0 0.0
  %4940 = vmatmul.mubr.f32.gmra.mxu0 %v2659
  %v4941 = vpop.f32.mrf.mxu0
  %v4942 = vadd.f32 0.0, %v4941
  %v4943 = vpop.f32.mrf.mxu0
  %4944 = vmatprep.mubr.f32.mxu0 0.0
  %4945 = vmatmul.mubr.f32.gmra.mxu0 %v2662
  %v4946 = vpop.f32.mrf.mxu0
  %v4947 = vadd.f32 0.0, %v4946
  %v4948 = vpop.f32.mrf.mxu0
  %4949 = vmatprep.mubr.f32.mxu0 0.0
  %4950 = vmatmul.mubr.f32.gmra.mxu0 %v2665
  %v4951 = vpop.f32.mrf.mxu0
  %v4952 = vadd.f32 0.0, %v4951
  %v4953 = vpop.f32.mrf.mxu0
  %4954 = vmatprep.mubr.f32.mxu0 0.0
  %4955 = vmatmul.mubr.f32.gmra.mxu0 %v2668
  %v4956 = vpop.f32.mrf.mxu0
  %v4957 = vadd.f32 0.0, %v4956
  %v4958 = vpop.f32.mrf.mxu0
  %4959 = vdwg.mxu0
  %v4960 = vadd.f32 %v2532, %v4922
  %v4961 = vadd.f32 %v2533, %v4927
  %v4962 = vadd.f32 %v2534, %v4932
  %v4963 = vadd.f32 %v2535, %v4937
  %v4964 = vadd.f32 %v2536, %v4942
  %v4965 = vadd.f32 %v2537, %v4947
  %v4966 = vadd.f32 %v2538, %v4952
  %v4967 = vadd.f32 %v2539, %v4957
  %v4968 = vtanh.pop %v4960
  %v4969 = vtanh.pop %v4961
  %v4970 = vtanh.pop %v4962
  %v4971 = vtanh.pop %v4963
  %v4972 = vtanh.pop %v4964
  %v4973 = vtanh.pop %v4965
  %v4974 = vtanh.pop %v4966
  %v4975 = vtanh.pop %v4967
  %4976 = vmatprep.subr.mxu0 0.0
  %4977 = vmatpush1.msra.mxu0 0.0
  %4978 = vmatprep.subr.mxu0 0.0
  %4979 = vmatpush1.msra.mxu0 0.0
  %4980 = vmatprep.subr.mxu0 0.0
  %4981 = vmatpush1.msra.mxu0 0.0
  %4982 = vmatprep.subr.mxu0 0.0
  %4983 = vmatpush1.msra.mxu0 0.0
  %4984 = vmatprep.subr.mxu0 0.0
  %4985 = vmatpush1.msra.mxu0 0.0
  %4986 = vmatprep.subr.mxu0 0.0
  %4987 = vmatpush1.msra.mxu0 0.0
  %4988 = vmatprep.subr.mxu0 0.0
  %4989 = vmatpush1.msra.mxu0 0.0
  %4990 = vmatprep.subr.mxu0 0.0
  %4991 = vmatpush1.msra.mxu0 0.0
  %4992 = vmatprep.subr.mxu0 0.0
  %4993 = vmatpush1.msra.mxu0 %v4975
  %4994 = vmatprep.subr.mxu0 0.0
  %4995 = vmatpush1.msra.mxu0 %v4974
  %4996 = vmatprep.subr.mxu0 0.0
  %4997 = vmatpush1.msra.mxu0 %v4973
  %4998 = vmatprep.subr.mxu0 0.0
  %4999 = vmatpush1.msra.mxu0 %v4972
  %5000 = vmatprep.subr.mxu0 0.0
  %5001 = vmatpush1.msra.mxu0 %v4971
  %5002 = vmatprep.subr.mxu0 0.0
  %5003 = vmatpush1.msra.mxu0 %v4970
  %5004 = vmatprep.subr.mxu0 0.0
  %5005 = vmatpush1.msra.mxu0 %v4969
  %5006 = vmatprep.subr.mxu0 0.0
  %5007 = vmatpush1.msra.mxu0 %v4968
  %5008 = vmatprep.subr.mxu0 0.0
  %5009 = vmatpush2.msra.mxu0 0.0
  %5010 = vmatprep.subr.mxu0 0.0
  %5011 = vmatpush2.msra.mxu0 0.0
  %5012 = vmatprep.subr.mxu0 0.0
  %5013 = vmatpush2.msra.mxu0 0.0
  %5014 = vmatprep.subr.mxu0 0.0
  %5015 = vmatpush2.msra.mxu0 0.0
  %5016 = vmatprep.subr.mxu0 0.0
  %5017 = vmatpush2.msra.mxu0 0.0
  %5018 = vmatprep.subr.mxu0 0.0
  %5019 = vmatpush2.msra.mxu0 0.0
  %5020 = vmatprep.subr.mxu0 0.0
  %5021 = vmatpush2.msra.mxu0 0.0
  %5022 = vmatprep.subr.mxu0 0.0
  %5023 = vmatpush2.msra.mxu0 0.0
  %5024 = vmatprep.subr.mxu0 0.0
  %5025 = vmatpush2.msra.mxu0 0.0
  %5026 = vmatprep.subr.mxu0 0.0
  %5027 = vmatpush2.msra.mxu0 0.0
  %5028 = vmatprep.subr.mxu0 0.0
  %5029 = vmatpush2.msra.mxu0 0.0
  %5030 = vmatprep.subr.mxu0 0.0
  %5031 = vmatpush2.msra.mxu0 0.0
  %5032 = vmatprep.subr.mxu0 0.0
  %5033 = vmatpush2.msra.mxu0 0.0
  %5034 = vmatprep.subr.mxu0 0.0
  %5035 = vmatpush2.msra.mxu0 0.0
  %5036 = vmatprep.subr.mxu0 0.0
  %5037 = vmatpush2.msra.mxu0 0.0
  %5038 = vmatprep.subr.mxu0 0.0
  %5039 = vmatpush2.msra.mxu0 0.0
  %5040 = vmatprep.mubr.f32.mxu0 0.0
  %5041 = vmatmul.mubr.f32.gmra.mxu0 %v2832
  %v5042 = vpop.f32.mrf.mxu0
  %v5043 = vadd.f32 %v2794, %v5042
  %v5044 = vpop.f32.mrf.mxu0
  %5045 = vmatprep.mubr.f32.mxu0 0.0
  %5046 = vmatmul.mubr.f32.gmra.mxu0 %v2835
  %v5047 = vpop.f32.mrf.mxu0
  %v5048 = vadd.f32 %v2799, %v5047
  %v5049 = vpop.f32.mrf.mxu0
  %5050 = vmatprep.mubr.f32.mxu0 0.0
  %5051 = vmatmul.mubr.f32.gmra.mxu0 %v2838
  %v5052 = vpop.f32.mrf.mxu0
  %v5053 = vadd.f32 %v2804, %v5052
  %v5054 = vpop.f32.mrf.mxu0
  %5055 = vmatprep.mubr.f32.mxu0 0.0
  %5056 = vmatmul.mubr.f32.gmra.mxu0 %v2841
  %v5057 = vpop.f32.mrf.mxu0
  %v5058 = vadd.f32 %v2809, %v5057
  %v5059 = vpop.f32.mrf.mxu0
  %5060 = vmatprep.mubr.f32.mxu0 0.0
  %5061 = vmatmul.mubr.f32.gmra.mxu0 %v2844
  %v5062 = vpop.f32.mrf.mxu0
  %v5063 = vadd.f32 %v2814, %v5062
  %v5064 = vpop.f32.mrf.mxu0
  %5065 = vmatprep.mubr.f32.mxu0 0.0
  %5066 = vmatmul.mubr.f32.gmra.mxu0 %v2847
  %v5067 = vpop.f32.mrf.mxu0
  %v5068 = vadd.f32 %v2819, %v5067
  %v5069 = vpop.f32.mrf.mxu0
  %5070 = vmatprep.mubr.f32.mxu0 0.0
  %5071 = vmatmul.mubr.f32.gmra.mxu0 %v2850
  %v5072 = vpop.f32.mrf.mxu0
  %v5073 = vadd.f32 %v2824, %v5072
  %v5074 = vpop.f32.mrf.mxu0
  %5075 = vmatprep.mubr.f32.mxu0 0.0
  %5076 = vmatmul.mubr.f32.gmra.mxu0 %v2853
  %v5077 = vpop.f32.mrf.mxu0
  %v5078 = vadd.f32 %v2829, %v5077
  %v5079 = vpop.f32.mrf.mxu0
  %5080 = vdwg.mxu0
  %v5081 = vtanh.pop %v5043
  %v5082 = vtanh.pop %v5048
  %v5083 = vtanh.pop %v5053
  %v5084 = vtanh.pop %v5058
  %v5085 = vtanh.pop %v5063
  %v5086 = vtanh.pop %v5068
  %v5087 = vtanh.pop %v5073
  %v5088 = vtanh.pop %v5078
  %5089 = vmatprep.subr.mxu0 0.0
  %5090 = vmatpush1.msra.mxu0 0.0
  %5091 = vmatprep.subr.mxu0 0.0
  %5092 = vmatpush1.msra.mxu0 0.0
  %5093 = vmatprep.subr.mxu0 0.0
  %5094 = vmatpush1.msra.mxu0 0.0
  %5095 = vmatprep.subr.mxu0 0.0
  %5096 = vmatpush1.msra.mxu0 0.0
  %5097 = vmatprep.subr.mxu0 0.0
  %5098 = vmatpush1.msra.mxu0 0.0
  %5099 = vmatprep.subr.mxu0 0.0
  %5100 = vmatpush1.msra.mxu0 0.0
  %5101 = vmatprep.subr.mxu0 0.0
  %5102 = vmatpush1.msra.mxu0 0.0
  %5103 = vmatprep.subr.mxu0 0.0
  %5104 = vmatpush1.msra.mxu0 0.0
  %5105 = vmatprep.subr.mxu0 0.0
  %5106 = vmatpush1.msra.mxu0 %v5088
  %5107 = vmatprep.subr.mxu0 0.0
  %5108 = vmatpush1.msra.mxu0 %v5087
  %5109 = vmatprep.subr.mxu0 0.0
  %5110 = vmatpush1.msra.mxu0 %v5086
  %5111 = vmatprep.subr.mxu0 0.0
  %5112 = vmatpush1.msra.mxu0 %v5085
  %5113 = vmatprep.subr.mxu0 0.0
  %5114 = vmatpush1.msra.mxu0 %v5084
  %5115 = vmatprep.subr.mxu0 0.0
  %5116 = vmatpush1.msra.mxu0 %v5083
  %5117 = vmatprep.subr.mxu0 0.0
  %5118 = vmatpush1.msra.mxu0 %v5082
  %5119 = vmatprep.subr.mxu0 0.0
  %5120 = vmatpush1.msra.mxu0 %v5081
  %5121 = vmatprep.subr.mxu0 0.0
  %5122 = vmatpush2.msra.mxu0 0.0
  %5123 = vmatprep.subr.mxu0 0.0
  %5124 = vmatpush2.msra.mxu0 0.0
  %5125 = vmatprep.subr.mxu0 0.0
  %5126 = vmatpush2.msra.mxu0 0.0
  %5127 = vmatprep.subr.mxu0 0.0
  %5128 = vmatpush2.msra.mxu0 0.0
  %5129 = vmatprep.subr.mxu0 0.0
  %5130 = vmatpush2.msra.mxu0 0.0
  %5131 = vmatprep.subr.mxu0 0.0
  %5132 = vmatpush2.msra.mxu0 0.0
  %5133 = vmatprep.subr.mxu0 0.0
  %5134 = vmatpush2.msra.mxu0 0.0
  %5135 = vmatprep.subr.mxu0 0.0
  %5136 = vmatpush2.msra.mxu0 0.0
  %5137 = vmatprep.subr.mxu0 0.0
  %5138 = vmatpush2.msra.mxu0 0.0
  %5139 = vmatprep.subr.mxu0 0.0
  %5140 = vmatpush2.msra.mxu0 0.0
  %5141 = vmatprep.subr.mxu0 0.0
  %5142 = vmatpush2.msra.mxu0 0.0
  %5143 = vmatprep.subr.mxu0 0.0
  %5144 = vmatpush2.msra.mxu0 0.0
  %5145 = vmatprep.subr.mxu0 0.0
  %5146 = vmatpush2.msra.mxu0 0.0
  %5147 = vmatprep.subr.mxu0 0.0
  %5148 = vmatpush2.msra.mxu0 0.0
  %5149 = vmatprep.subr.mxu0 0.0
  %5150 = vmatpush2.msra.mxu0 0.0
  %5151 = vmatprep.subr.mxu0 0.0
  %5152 = vmatpush2.msra.mxu0 0.0
  %5153 = vmatprep.mubr.f32.mxu0 0.0
  %5154 = vmatmul.mubr.f32.gmra.mxu0 %v2969
  %v5155 = vpop.f32.mrf.mxu0
  %v5156 = vadd.f32 %v2540, %v5155
  %v5157 = vpop.f32.mrf.mxu0
  %5158 = vmatprep.mubr.f32.mxu0 0.0
  %5159 = vmatmul.mubr.f32.gmra.mxu0 %v2972
  %v5160 = vpop.f32.mrf.mxu0
  %v5161 = vadd.f32 %v2541, %v5160
  %v5162 = vpop.f32.mrf.mxu0
  %5163 = vmatprep.mubr.f32.mxu0 0.0
  %5164 = vmatmul.mubr.f32.gmra.mxu0 %v2975
  %v5165 = vpop.f32.mrf.mxu0
  %v5166 = vadd.f32 %v2542, %v5165
  %v5167 = vpop.f32.mrf.mxu0
  %5168 = vmatprep.mubr.f32.mxu0 0.0
  %5169 = vmatmul.mubr.f32.gmra.mxu0 %v2978
  %v5170 = vpop.f32.mrf.mxu0
  %v5171 = vadd.f32 %v2543, %v5170
  %v5172 = vpop.f32.mrf.mxu0
  %5173 = vmatprep.mubr.f32.mxu0 0.0
  %5174 = vmatmul.mubr.f32.gmra.mxu0 %v2981
  %v5175 = vpop.f32.mrf.mxu0
  %v5176 = vadd.f32 %v2544, %v5175
  %v5177 = vpop.f32.mrf.mxu0
  %5178 = vmatprep.mubr.f32.mxu0 0.0
  %5179 = vmatmul.mubr.f32.gmra.mxu0 %v2984
  %v5180 = vpop.f32.mrf.mxu0
  %v5181 = vadd.f32 %v2545, %v5180
  %v5182 = vpop.f32.mrf.mxu0
  %5183 = vmatprep.mubr.f32.mxu0 0.0
  %5184 = vmatmul.mubr.f32.gmra.mxu0 %v2987
  %v5185 = vpop.f32.mrf.mxu0
  %v5186 = vadd.f32 %v2546, %v5185
  %v5187 = vpop.f32.mrf.mxu0
  %5188 = vmatprep.mubr.f32.mxu0 0.0
  %5189 = vmatmul.mubr.f32.gmra.mxu0 %v2990
  %v5190 = vpop.f32.mrf.mxu0
  %v5191 = vadd.f32 %v2547, %v5190
  %v5192 = vpop.f32.mrf.mxu0
  %5193 = vdwg.mxu0
  %v5194 = vtanh.pop %v5156
  %v5195 = vtanh.pop %v5161
  %v5196 = vtanh.pop %v5166
  %v5197 = vtanh.pop %v5171
  %v5198 = vtanh.pop %v5176
  %v5199 = vtanh.pop %v5181
  %v5200 = vtanh.pop %v5186
  %v5201 = vtanh.pop %v5191
  %5202 = vmatprep.subr.mxu0 0.0
  %5203 = vmatpush1.msra.mxu0 0.0
  %5204 = vmatprep.subr.mxu0 0.0
  %5205 = vmatpush1.msra.mxu0 0.0
  %5206 = vmatprep.subr.mxu0 0.0
  %5207 = vmatpush1.msra.mxu0 0.0
  %5208 = vmatprep.subr.mxu0 0.0
  %5209 = vmatpush1.msra.mxu0 0.0
  %5210 = vmatprep.subr.mxu0 0.0
  %5211 = vmatpush1.msra.mxu0 0.0
  %5212 = vmatprep.subr.mxu0 0.0
  %5213 = vmatpush1.msra.mxu0 0.0
  %5214 = vmatprep.subr.mxu0 0.0
  %5215 = vmatpush1.msra.mxu0 0.0
  %5216 = vmatprep.subr.mxu0 0.0
  %5217 = vmatpush1.msra.mxu0 0.0
  %5218 = vmatprep.subr.mxu0 0.0
  %5219 = vmatpush1.msra.mxu0 %v5201
  %5220 = vmatprep.subr.mxu0 0.0
  %5221 = vmatpush1.msra.mxu0 %v5200
  %5222 = vmatprep.subr.mxu0 0.0
  %5223 = vmatpush1.msra.mxu0 %v5199
  %5224 = vmatprep.subr.mxu0 0.0
  %5225 = vmatpush1.msra.mxu0 %v5198
  %5226 = vmatprep.subr.mxu0 0.0
  %5227 = vmatpush1.msra.mxu0 %v5197
  %5228 = vmatprep.subr.mxu0 0.0
  %5229 = vmatpush1.msra.mxu0 %v5196
  %5230 = vmatprep.subr.mxu0 0.0
  %5231 = vmatpush1.msra.mxu0 %v5195
  %5232 = vmatprep.subr.mxu0 0.0
  %5233 = vmatpush1.msra.mxu0 %v5194
  %5234 = vmatprep.subr.mxu0 0.0
  %5235 = vmatpush2.msra.mxu0 0.0
  %5236 = vmatprep.subr.mxu0 0.0
  %5237 = vmatpush2.msra.mxu0 0.0
  %5238 = vmatprep.subr.mxu0 0.0
  %5239 = vmatpush2.msra.mxu0 0.0
  %5240 = vmatprep.subr.mxu0 0.0
  %5241 = vmatpush2.msra.mxu0 0.0
  %5242 = vmatprep.subr.mxu0 0.0
  %5243 = vmatpush2.msra.mxu0 0.0
  %5244 = vmatprep.subr.mxu0 0.0
  %5245 = vmatpush2.msra.mxu0 0.0
  %5246 = vmatprep.subr.mxu0 0.0
  %5247 = vmatpush2.msra.mxu0 0.0
  %5248 = vmatprep.subr.mxu0 0.0
  %5249 = vmatpush2.msra.mxu0 0.0
  %5250 = vmatprep.subr.mxu0 0.0
  %5251 = vmatpush2.msra.mxu0 0.0
  %5252 = vmatprep.subr.mxu0 0.0
  %5253 = vmatpush2.msra.mxu0 0.0
  %5254 = vmatprep.subr.mxu0 0.0
  %5255 = vmatpush2.msra.mxu0 0.0
  %5256 = vmatprep.subr.mxu0 0.0
  %5257 = vmatpush2.msra.mxu0 0.0
  %5258 = vmatprep.subr.mxu0 0.0
  %5259 = vmatpush2.msra.mxu0 0.0
  %5260 = vmatprep.subr.mxu0 0.0
  %5261 = vmatpush2.msra.mxu0 0.0
  %5262 = vmatprep.subr.mxu0 0.0
  %5263 = vmatpush2.msra.mxu0 0.0
  %5264 = vmatprep.subr.mxu0 0.0
  %5265 = vmatpush2.msra.mxu0 0.0
  %5266 = vmatprep.mubr.f32.mxu0 0.0
  %5267 = vmatmul.mubr.f32.gmra.mxu0 %v3115
  %v5268 = vpop.f32.mrf.mxu0
  %v5269 = vadd.f32 %v3113, %v5268
  %v5270 = vpop.f32.mrf.mxu0
  %5271 = vdwg.mxu0
  %5272 = vmatprep.subr.mxu0 0.0
  %5273 = vmatpush1.msra.mxu0 0.0
  %5274 = vmatprep.subr.mxu0 0.0
  %5275 = vmatpush1.msra.mxu0 0.0
  %5276 = vmatprep.subr.mxu0 0.0
  %5277 = vmatpush1.msra.mxu0 0.0
  %5278 = vmatprep.subr.mxu0 0.0
  %5279 = vmatpush1.msra.mxu0 0.0
  %5280 = vmatprep.subr.mxu0 0.0
  %5281 = vmatpush1.msra.mxu0 0.0
  %5282 = vmatprep.subr.mxu0 0.0
  %5283 = vmatpush1.msra.mxu0 0.0
  %5284 = vmatprep.subr.mxu0 0.0
  %5285 = vmatpush1.msra.mxu0 0.0
  %5286 = vmatprep.subr.mxu0 0.0
  %5287 = vmatpush1.msra.mxu0 0.0
  %5288 = vmatprep.subr.mxu0 0.0
  %5289 = vmatpush1.msra.mxu0 0.0
  %5290 = vmatprep.subr.mxu0 0.0
  %5291 = vmatpush1.msra.mxu0 0.0
  %5292 = vmatprep.subr.mxu0 0.0
  %5293 = vmatpush1.msra.mxu0 0.0
  %5294 = vmatprep.subr.mxu0 0.0
  %5295 = vmatpush1.msra.mxu0 0.0
  %5296 = vmatprep.subr.mxu0 0.0
  %5297 = vmatpush1.msra.mxu0 0.0
  %5298 = vmatprep.subr.mxu0 0.0
  %5299 = vmatpush1.msra.mxu0 0.0
  %5300 = vmatprep.subr.mxu0 0.0
  %5301 = vmatpush1.msra.mxu0 %v2593
  %5302 = vmatprep.subr.mxu0 0.0
  %5303 = vmatpush1.msra.mxu0 %v2592
  %5304 = vmatprep.subr.mxu0 0.0
  %5305 = vmatpush2.msra.mxu0 0.0
  %5306 = vmatprep.subr.mxu0 0.0
  %5307 = vmatpush2.msra.mxu0 0.0
  %5308 = vmatprep.subr.mxu0 0.0
  %5309 = vmatpush2.msra.mxu0 0.0
  %5310 = vmatprep.subr.mxu0 0.0
  %5311 = vmatpush2.msra.mxu0 0.0
  %5312 = vmatprep.subr.mxu0 0.0
  %5313 = vmatpush2.msra.mxu0 0.0
  %5314 = vmatprep.subr.mxu0 0.0
  %5315 = vmatpush2.msra.mxu0 0.0
  %5316 = vmatprep.subr.mxu0 0.0
  %5317 = vmatpush2.msra.mxu0 0.0
  %5318 = vmatprep.subr.mxu0 0.0
  %5319 = vmatpush2.msra.mxu0 0.0
  %5320 = vmatprep.subr.mxu0 0.0
  %5321 = vmatpush2.msra.mxu0 0.0
  %5322 = vmatprep.subr.mxu0 0.0
  %5323 = vmatpush2.msra.mxu0 0.0
  %5324 = vmatprep.subr.mxu0 0.0
  %5325 = vmatpush2.msra.mxu0 0.0
  %5326 = vmatprep.subr.mxu0 0.0
  %5327 = vmatpush2.msra.mxu0 0.0
  %5328 = vmatprep.subr.mxu0 0.0
  %5329 = vmatpush2.msra.mxu0 0.0
  %5330 = vmatprep.subr.mxu0 0.0
  %5331 = vmatpush2.msra.mxu0 0.0
  %5332 = vmatprep.subr.mxu0 0.0
  %5333 = vmatpush2.msra.mxu0 0.0
  %5334 = vmatprep.subr.mxu0 0.0
  %5335 = vmatpush2.msra.mxu0 0.0
  %5336 = vmatprep.mubr.f32.mxu0 0.0
  %5337 = vmatmul.mubr.f32.gmra.mxu0 %v2647
  %v5338 = vpop.f32.mrf.mxu0
  %v5339 = vadd.f32 0.0, %v5338
  %v5340 = vpop.f32.mrf.mxu0
  %5341 = vmatprep.mubr.f32.mxu0 0.0
  %5342 = vmatmul.mubr.f32.gmra.mxu0 %v2650
  %v5343 = vpop.f32.mrf.mxu0
  %v5344 = vadd.f32 0.0, %v5343
  %v5345 = vpop.f32.mrf.mxu0
  %5346 = vmatprep.mubr.f32.mxu0 0.0
  %5347 = vmatmul.mubr.f32.gmra.mxu0 %v2653
  %v5348 = vpop.f32.mrf.mxu0
  %v5349 = vadd.f32 0.0, %v5348
  %v5350 = vpop.f32.mrf.mxu0
  %5351 = vmatprep.mubr.f32.mxu0 0.0
  %5352 = vmatmul.mubr.f32.gmra.mxu0 %v2656
  %v5353 = vpop.f32.mrf.mxu0
  %v5354 = vadd.f32 0.0, %v5353
  %v5355 = vpop.f32.mrf.mxu0
  %5356 = vmatprep.mubr.f32.mxu0 0.0
  %5357 = vmatmul.mubr.f32.gmra.mxu0 %v2659
  %v5358 = vpop.f32.mrf.mxu0
  %v5359 = vadd.f32 0.0, %v5358
  %v5360 = vpop.f32.mrf.mxu0
  %5361 = vmatprep.mubr.f32.mxu0 0.0
  %5362 = vmatmul.mubr.f32.gmra.mxu0 %v2662
  %v5363 = vpop.f32.mrf.mxu0
  %v5364 = vadd.f32 0.0, %v5363
  %v5365 = vpop.f32.mrf.mxu0
  %5366 = vmatprep.mubr.f32.mxu0 0.0
  %5367 = vmatmul.mubr.f32.gmra.mxu0 %v2665
  %v5368 = vpop.f32.mrf.mxu0
  %v5369 = vadd.f32 0.0, %v5368
  %v5370 = vpop.f32.mrf.mxu0
  %5371 = vmatprep.mubr.f32.mxu0 0.0
  %5372 = vmatmul.mubr.f32.gmra.mxu0 %v2668
  %v5373 = vpop.f32.mrf.mxu0
  %v5374 = vadd.f32 0.0, %v5373
  %v5375 = vpop.f32.mrf.mxu0
  %5376 = vdwg.mxu0
  %v5377 = vadd.f32 %v2532, %v5339
  %v5378 = vadd.f32 %v2533, %v5344
  %v5379 = vadd.f32 %v2534, %v5349
  %v5380 = vadd.f32 %v2535, %v5354
  %v5381 = vadd.f32 %v2536, %v5359
  %v5382 = vadd.f32 %v2537, %v5364
  %v5383 = vadd.f32 %v2538, %v5369
  %v5384 = vadd.f32 %v2539, %v5374
  %v5385 = vtanh.pop %v5377
  %v5386 = vtanh.pop %v5378
  %v5387 = vtanh.pop %v5379
  %v5388 = vtanh.pop %v5380
  %v5389 = vtanh.pop %v5381
  %v5390 = vtanh.pop %v5382
  %v5391 = vtanh.pop %v5383
  %v5392 = vtanh.pop %v5384
  %5393 = vmatprep.subr.mxu0 0.0
  %5394 = vmatpush1.msra.mxu0 0.0
  %5395 = vmatprep.subr.mxu0 0.0
  %5396 = vmatpush1.msra.mxu0 0.0
  %5397 = vmatprep.subr.mxu0 0.0
  %5398 = vmatpush1.msra.mxu0 0.0
  %5399 = vmatprep.subr.mxu0 0.0
  %5400 = vmatpush1.msra.mxu0 0.0
  %5401 = vmatprep.subr.mxu0 0.0
  %5402 = vmatpush1.msra.mxu0 0.0
  %5403 = vmatprep.subr.mxu0 0.0
  %5404 = vmatpush1.msra.mxu0 0.0
  %5405 = vmatprep.subr.mxu0 0.0
  %5406 = vmatpush1.msra.mxu0 0.0
  %5407 = vmatprep.subr.mxu0 0.0
  %5408 = vmatpush1.msra.mxu0 0.0
  %5409 = vmatprep.subr.mxu0 0.0
  %5410 = vmatpush1.msra.mxu0 %v5392
  %5411 = vmatprep.subr.mxu0 0.0
  %5412 = vmatpush1.msra.mxu0 %v5391
  %5413 = vmatprep.subr.mxu0 0.0
  %5414 = vmatpush1.msra.mxu0 %v5390
  %5415 = vmatprep.subr.mxu0 0.0
  %5416 = vmatpush1.msra.mxu0 %v5389
  %5417 = vmatprep.subr.mxu0 0.0
  %5418 = vmatpush1.msra.mxu0 %v5388
  %5419 = vmatprep.subr.mxu0 0.0
  %5420 = vmatpush1.msra.mxu0 %v5387
  %5421 = vmatprep.subr.mxu0 0.0
  %5422 = vmatpush1.msra.mxu0 %v5386
  %5423 = vmatprep.subr.mxu0 0.0
  %5424 = vmatpush1.msra.mxu0 %v5385
  %5425 = vmatprep.subr.mxu0 0.0
  %5426 = vmatpush2.msra.mxu0 0.0
  %5427 = vmatprep.subr.mxu0 0.0
  %5428 = vmatpush2.msra.mxu0 0.0
  %5429 = vmatprep.subr.mxu0 0.0
  %5430 = vmatpush2.msra.mxu0 0.0
  %5431 = vmatprep.subr.mxu0 0.0
  %5432 = vmatpush2.msra.mxu0 0.0
  %5433 = vmatprep.subr.mxu0 0.0
  %5434 = vmatpush2.msra.mxu0 0.0
  %5435 = vmatprep.subr.mxu0 0.0
  %5436 = vmatpush2.msra.mxu0 0.0
  %5437 = vmatprep.subr.mxu0 0.0
  %5438 = vmatpush2.msra.mxu0 0.0
  %5439 = vmatprep.subr.mxu0 0.0
  %5440 = vmatpush2.msra.mxu0 0.0
  %5441 = vmatprep.subr.mxu0 0.0
  %5442 = vmatpush2.msra.mxu0 0.0
  %5443 = vmatprep.subr.mxu0 0.0
  %5444 = vmatpush2.msra.mxu0 0.0
  %5445 = vmatprep.subr.mxu0 0.0
  %5446 = vmatpush2.msra.mxu0 0.0
  %5447 = vmatprep.subr.mxu0 0.0
  %5448 = vmatpush2.msra.mxu0 0.0
  %5449 = vmatprep.subr.mxu0 0.0
  %5450 = vmatpush2.msra.mxu0 0.0
  %5451 = vmatprep.subr.mxu0 0.0
  %5452 = vmatpush2.msra.mxu0 0.0
  %5453 = vmatprep.subr.mxu0 0.0
  %5454 = vmatpush2.msra.mxu0 0.0
  %5455 = vmatprep.subr.mxu0 0.0
  %5456 = vmatpush2.msra.mxu0 0.0
  %5457 = vmatprep.mubr.f32.mxu0 0.0
  %5458 = vmatmul.mubr.f32.gmra.mxu0 %v2832
  %v5459 = vpop.f32.mrf.mxu0
  %v5460 = vadd.f32 %v2794, %v5459
  %v5461 = vpop.f32.mrf.mxu0
  %5462 = vmatprep.mubr.f32.mxu0 0.0
  %5463 = vmatmul.mubr.f32.gmra.mxu0 %v2835
  %v5464 = vpop.f32.mrf.mxu0
  %v5465 = vadd.f32 %v2799, %v5464
  %v5466 = vpop.f32.mrf.mxu0
  %5467 = vmatprep.mubr.f32.mxu0 0.0
  %5468 = vmatmul.mubr.f32.gmra.mxu0 %v2838
  %v5469 = vpop.f32.mrf.mxu0
  %v5470 = vadd.f32 %v2804, %v5469
  %v5471 = vpop.f32.mrf.mxu0
  %5472 = vmatprep.mubr.f32.mxu0 0.0
  %5473 = vmatmul.mubr.f32.gmra.mxu0 %v2841
  %v5474 = vpop.f32.mrf.mxu0
  %v5475 = vadd.f32 %v2809, %v5474
  %v5476 = vpop.f32.mrf.mxu0
  %5477 = vmatprep.mubr.f32.mxu0 0.0
  %5478 = vmatmul.mubr.f32.gmra.mxu0 %v2844
  %v5479 = vpop.f32.mrf.mxu0
  %v5480 = vadd.f32 %v2814, %v5479
  %v5481 = vpop.f32.mrf.mxu0
  %5482 = vmatprep.mubr.f32.mxu0 0.0
  %5483 = vmatmul.mubr.f32.gmra.mxu0 %v2847
  %v5484 = vpop.f32.mrf.mxu0
  %v5485 = vadd.f32 %v2819, %v5484
  %v5486 = vpop.f32.mrf.mxu0
  %5487 = vmatprep.mubr.f32.mxu0 0.0
  %5488 = vmatmul.mubr.f32.gmra.mxu0 %v2850
  %v5489 = vpop.f32.mrf.mxu0
  %v5490 = vadd.f32 %v2824, %v5489
  %v5491 = vpop.f32.mrf.mxu0
  %5492 = vmatprep.mubr.f32.mxu0 0.0
  %5493 = vmatmul.mubr.f32.gmra.mxu0 %v2853
  %v5494 = vpop.f32.mrf.mxu0
  %v5495 = vadd.f32 %v2829, %v5494
  %v5496 = vpop.f32.mrf.mxu0
  %5497 = vdwg.mxu0
  %v5498 = vtanh.pop %v5460
  %v5499 = vtanh.pop %v5465
  %v5500 = vtanh.pop %v5470
  %v5501 = vtanh.pop %v5475
  %v5502 = vtanh.pop %v5480
  %v5503 = vtanh.pop %v5485
  %v5504 = vtanh.pop %v5490
  %v5505 = vtanh.pop %v5495
  %5506 = vmatprep.subr.mxu0 0.0
  %5507 = vmatpush1.msra.mxu0 0.0
  %5508 = vmatprep.subr.mxu0 0.0
  %5509 = vmatpush1.msra.mxu0 0.0
  %5510 = vmatprep.subr.mxu0 0.0
  %5511 = vmatpush1.msra.mxu0 0.0
  %5512 = vmatprep.subr.mxu0 0.0
  %5513 = vmatpush1.msra.mxu0 0.0
  %5514 = vmatprep.subr.mxu0 0.0
  %5515 = vmatpush1.msra.mxu0 0.0
  %5516 = vmatprep.subr.mxu0 0.0
  %5517 = vmatpush1.msra.mxu0 0.0
  %5518 = vmatprep.subr.mxu0 0.0
  %5519 = vmatpush1.msra.mxu0 0.0
  %5520 = vmatprep.subr.mxu0 0.0
  %5521 = vmatpush1.msra.mxu0 0.0
  %5522 = vmatprep.subr.mxu0 0.0
  %5523 = vmatpush1.msra.mxu0 %v5505
  %5524 = vmatprep.subr.mxu0 0.0
  %5525 = vmatpush1.msra.mxu0 %v5504
  %5526 = vmatprep.subr.mxu0 0.0
  %5527 = vmatpush1.msra.mxu0 %v5503
  %5528 = vmatprep.subr.mxu0 0.0
  %5529 = vmatpush1.msra.mxu0 %v5502
  %5530 = vmatprep.subr.mxu0 0.0
  %5531 = vmatpush1.msra.mxu0 %v5501
  %5532 = vmatprep.subr.mxu0 0.0
  %5533 = vmatpush1.msra.mxu0 %v5500
  %5534 = vmatprep.subr.mxu0 0.0
  %5535 = vmatpush1.msra.mxu0 %v5499
  %5536 = vmatprep.subr.mxu0 0.0
  %5537 = vmatpush1.msra.mxu0 %v5498
  %5538 = vmatprep.subr.mxu0 0.0
  %5539 = vmatpush2.msra.mxu0 0.0
  %5540 = vmatprep.subr.mxu0 0.0
  %5541 = vmatpush2.msra.mxu0 0.0
  %5542 = vmatprep.subr.mxu0 0.0
  %5543 = vmatpush2.msra.mxu0 0.0
  %5544 = vmatprep.subr.mxu0 0.0
  %5545 = vmatpush2.msra.mxu0 0.0
  %5546 = vmatprep.subr.mxu0 0.0
  %5547 = vmatpush2.msra.mxu0 0.0
  %5548 = vmatprep.subr.mxu0 0.0
  %5549 = vmatpush2.msra.mxu0 0.0
  %5550 = vmatprep.subr.mxu0 0.0
  %5551 = vmatpush2.msra.mxu0 0.0
  %5552 = vmatprep.subr.mxu0 0.0
  %5553 = vmatpush2.msra.mxu0 0.0
  %5554 = vmatprep.subr.mxu0 0.0
  %5555 = vmatpush2.msra.mxu0 0.0
  %5556 = vmatprep.subr.mxu0 0.0
  %5557 = vmatpush2.msra.mxu0 0.0
  %5558 = vmatprep.subr.mxu0 0.0
  %5559 = vmatpush2.msra.mxu0 0.0
  %5560 = vmatprep.subr.mxu0 0.0
  %5561 = vmatpush2.msra.mxu0 0.0
  %5562 = vmatprep.subr.mxu0 0.0
  %5563 = vmatpush2.msra.mxu0 0.0
  %5564 = vmatprep.subr.mxu0 0.0
  %5565 = vmatpush2.msra.mxu0 0.0
  %5566 = vmatprep.subr.mxu0 0.0
  %5567 = vmatpush2.msra.mxu0 0.0
  %5568 = vmatprep.subr.mxu0 0.0
  %5569 = vmatpush2.msra.mxu0 0.0
  %5570 = vmatprep.mubr.f32.mxu0 0.0
  %5571 = vmatmul.mubr.f32.gmra.mxu0 %v2969
  %v5572 = vpop.f32.mrf.mxu0
  %v5573 = vadd.f32 %v2540, %v5572
  %v5574 = vpop.f32.mrf.mxu0
  %5575 = vmatprep.mubr.f32.mxu0 0.0
  %5576 = vmatmul.mubr.f32.gmra.mxu0 %v2972
  %v5577 = vpop.f32.mrf.mxu0
  %v5578 = vadd.f32 %v2541, %v5577
  %v5579 = vpop.f32.mrf.mxu0
  %5580 = vmatprep.mubr.f32.mxu0 0.0
  %5581 = vmatmul.mubr.f32.gmra.mxu0 %v2975
  %v5582 = vpop.f32.mrf.mxu0
  %v5583 = vadd.f32 %v2542, %v5582
  %v5584 = vpop.f32.mrf.mxu0
  %5585 = vmatprep.mubr.f32.mxu0 0.0
  %5586 = vmatmul.mubr.f32.gmra.mxu0 %v2978
  %v5587 = vpop.f32.mrf.mxu0
  %v5588 = vadd.f32 %v2543, %v5587
  %v5589 = vpop.f32.mrf.mxu0
  %5590 = vmatprep.mubr.f32.mxu0 0.0
  %5591 = vmatmul.mubr.f32.gmra.mxu0 %v2981
  %v5592 = vpop.f32.mrf.mxu0
  %v5593 = vadd.f32 %v2544, %v5592
  %v5594 = vpop.f32.mrf.mxu0
  %5595 = vmatprep.mubr.f32.mxu0 0.0
  %5596 = vmatmul.mubr.f32.gmra.mxu0 %v2984
  %v5597 = vpop.f32.mrf.mxu0
  %v5598 = vadd.f32 %v2545, %v5597
  %v5599 = vpop.f32.mrf.mxu0
  %5600 = vmatprep.mubr.f32.mxu0 0.0
  %5601 = vmatmul.mubr.f32.gmra.mxu0 %v2987
  %v5602 = vpop.f32.mrf.mxu0
  %v5603 = vadd.f32 %v2546, %v5602
  %v5604 = vpop.f32.mrf.mxu0
  %5605 = vmatprep.mubr.f32.mxu0 0.0
  %5606 = vmatmul.mubr.f32.gmra.mxu0 %v2990
  %v5607 = vpop.f32.mrf.mxu0
  %v5608 = vadd.f32 %v2547, %v5607
  %v5609 = vpop.f32.mrf.mxu0
  %5610 = vdwg.mxu0
  %v5611 = vtanh.pop %v5573
  %v5612 = vtanh.pop %v5578
  %v5613 = vtanh.pop %v5583
  %v5614 = vtanh.pop %v5588
  %v5615 = vtanh.pop %v5593
  %v5616 = vtanh.pop %v5598
  %v5617 = vtanh.pop %v5603
  %v5618 = vtanh.pop %v5608
  %5619 = vmatprep.subr.mxu0 0.0
  %5620 = vmatpush1.msra.mxu0 0.0
  %5621 = vmatprep.subr.mxu0 0.0
  %5622 = vmatpush1.msra.mxu0 0.0
  %5623 = vmatprep.subr.mxu0 0.0
  %5624 = vmatpush1.msra.mxu0 0.0
  %5625 = vmatprep.subr.mxu0 0.0
  %5626 = vmatpush1.msra.mxu0 0.0
  %5627 = vmatprep.subr.mxu0 0.0
  %5628 = vmatpush1.msra.mxu0 0.0
  %5629 = vmatprep.subr.mxu0 0.0
  %5630 = vmatpush1.msra.mxu0 0.0
  %5631 = vmatprep.subr.mxu0 0.0
  %5632 = vmatpush1.msra.mxu0 0.0
  %5633 = vmatprep.subr.mxu0 0.0
  %5634 = vmatpush1.msra.mxu0 0.0
  %5635 = vmatprep.subr.mxu0 0.0
  %5636 = vmatpush1.msra.mxu0 %v5618
  %5637 = vmatprep.subr.mxu0 0.0
  %5638 = vmatpush1.msra.mxu0 %v5617
  %5639 = vmatprep.subr.mxu0 0.0
  %5640 = vmatpush1.msra.mxu0 %v5616
  %5641 = vmatprep.subr.mxu0 0.0
  %5642 = vmatpush1.msra.mxu0 %v5615
  %5643 = vmatprep.subr.mxu0 0.0
  %5644 = vmatpush1.msra.mxu0 %v5614
  %5645 = vmatprep.subr.mxu0 0.0
  %5646 = vmatpush1.msra.mxu0 %v5613
  %5647 = vmatprep.subr.mxu0 0.0
  %5648 = vmatpush1.msra.mxu0 %v5612
  %5649 = vmatprep.subr.mxu0 0.0
  %5650 = vmatpush1.msra.mxu0 %v5611
  %5651 = vmatprep.subr.mxu0 0.0
  %5652 = vmatpush2.msra.mxu0 0.0
  %5653 = vmatprep.subr.mxu0 0.0
  %5654 = vmatpush2.msra.mxu0 0.0
  %5655 = vmatprep.subr.mxu0 0.0
  %5656 = vmatpush2.msra.mxu0 0.0
  %5657 = vmatprep.subr.mxu0 0.0
  %5658 = vmatpush2.msra.mxu0 0.0
  %5659 = vmatprep.subr.mxu0 0.0
  %5660 = vmatpush2.msra.mxu0 0.0
  %5661 = vmatprep.subr.mxu0 0.0
  %5662 = vmatpush2.msra.mxu0 0.0
  %5663 = vmatprep.subr.mxu0 0.0
  %5664 = vmatpush2.msra.mxu0 0.0
  %5665 = vmatprep.subr.mxu0 0.0
  %5666 = vmatpush2.msra.mxu0 0.0
  %5667 = vmatprep.subr.mxu0 0.0
  %5668 = vmatpush2.msra.mxu0 0.0
  %5669 = vmatprep.subr.mxu0 0.0
  %5670 = vmatpush2.msra.mxu0 0.0
  %5671 = vmatprep.subr.mxu0 0.0
  %5672 = vmatpush2.msra.mxu0 0.0
  %5673 = vmatprep.subr.mxu0 0.0
  %5674 = vmatpush2.msra.mxu0 0.0
  %5675 = vmatprep.subr.mxu0 0.0
  %5676 = vmatpush2.msra.mxu0 0.0
  %5677 = vmatprep.subr.mxu0 0.0
  %5678 = vmatpush2.msra.mxu0 0.0
  %5679 = vmatprep.subr.mxu0 0.0
  %5680 = vmatpush2.msra.mxu0 0.0
  %5681 = vmatprep.subr.mxu0 0.0
  %5682 = vmatpush2.msra.mxu0 0.0
  %5683 = vmatprep.mubr.f32.mxu0 0.0
  %5684 = vmatmul.mubr.f32.gmra.mxu0 %v3115
  %v5685 = vpop.f32.mrf.mxu0
  %v5686 = vadd.f32 %v3113, %v5685
  %v5687 = vpop.f32.mrf.mxu0
  %5688 = vdwg.mxu0
  %5689 = vmatprep.subr.mxu0 0.0
  %5690 = vmatpush1.msra.mxu0 0.0
  %5691 = vmatprep.subr.mxu0 0.0
  %5692 = vmatpush1.msra.mxu0 0.0
  %5693 = vmatprep.subr.mxu0 0.0
  %5694 = vmatpush1.msra.mxu0 0.0
  %5695 = vmatprep.subr.mxu0 0.0
  %5696 = vmatpush1.msra.mxu0 0.0
  %5697 = vmatprep.subr.mxu0 0.0
  %5698 = vmatpush1.msra.mxu0 0.0
  %5699 = vmatprep.subr.mxu0 0.0
  %5700 = vmatpush1.msra.mxu0 0.0
  %5701 = vmatprep.subr.mxu0 0.0
  %5702 = vmatpush1.msra.mxu0 0.0
  %5703 = vmatprep.subr.mxu0 0.0
  %5704 = vmatpush1.msra.mxu0 0.0
  %5705 = vmatprep.subr.mxu0 0.0
  %5706 = vmatpush1.msra.mxu0 0.0
  %5707 = vmatprep.subr.mxu0 0.0
  %5708 = vmatpush1.msra.mxu0 0.0
  %5709 = vmatprep.subr.mxu0 0.0
  %5710 = vmatpush1.msra.mxu0 0.0
  %5711 = vmatprep.subr.mxu0 0.0
  %5712 = vmatpush1.msra.mxu0 0.0
  %5713 = vmatprep.subr.mxu0 0.0
  %5714 = vmatpush1.msra.mxu0 0.0
  %5715 = vmatprep.subr.mxu0 0.0
  %5716 = vmatpush1.msra.mxu0 0.0
  %5717 = vmatprep.subr.mxu0 0.0
  %5718 = vmatpush1.msra.mxu0 %v2595
  %5719 = vmatprep.subr.mxu0 0.0
  %5720 = vmatpush1.msra.mxu0 %v2594
  %5721 = vmatprep.subr.mxu0 0.0
  %5722 = vmatpush2.msra.mxu0 0.0
  %5723 = vmatprep.subr.mxu0 0.0
  %5724 = vmatpush2.msra.mxu0 0.0
  %5725 = vmatprep.subr.mxu0 0.0
  %5726 = vmatpush2.msra.mxu0 0.0
  %5727 = vmatprep.subr.mxu0 0.0
  %5728 = vmatpush2.msra.mxu0 0.0
  %5729 = vmatprep.subr.mxu0 0.0
  %5730 = vmatpush2.msra.mxu0 0.0
  %5731 = vmatprep.subr.mxu0 0.0
  %5732 = vmatpush2.msra.mxu0 0.0
  %5733 = vmatprep.subr.mxu0 0.0
  %5734 = vmatpush2.msra.mxu0 0.0
  %5735 = vmatprep.subr.mxu0 0.0
  %5736 = vmatpush2.msra.mxu0 0.0
  %5737 = vmatprep.subr.mxu0 0.0
  %5738 = vmatpush2.msra.mxu0 0.0
  %5739 = vmatprep.subr.mxu0 0.0
  %5740 = vmatpush2.msra.mxu0 0.0
  %5741 = vmatprep.subr.mxu0 0.0
  %5742 = vmatpush2.msra.mxu0 0.0
  %5743 = vmatprep.subr.mxu0 0.0
  %5744 = vmatpush2.msra.mxu0 0.0
  %5745 = vmatprep.subr.mxu0 0.0
  %5746 = vmatpush2.msra.mxu0 0.0
  %5747 = vmatprep.subr.mxu0 0.0
  %5748 = vmatpush2.msra.mxu0 0.0
  %5749 = vmatprep.subr.mxu0 0.0
  %5750 = vmatpush2.msra.mxu0 0.0
  %5751 = vmatprep.subr.mxu0 0.0
  %5752 = vmatpush2.msra.mxu0 0.0
  %5753 = vmatprep.mubr.f32.mxu0 0.0
  %5754 = vmatmul.mubr.f32.gmra.mxu0 %v2647
  %v5755 = vpop.f32.mrf.mxu0
  %v5756 = vadd.f32 0.0, %v5755
  %v5757 = vpop.f32.mrf.mxu0
  %5758 = vmatprep.mubr.f32.mxu0 0.0
  %5759 = vmatmul.mubr.f32.gmra.mxu0 %v2650
  %v5760 = vpop.f32.mrf.mxu0
  %v5761 = vadd.f32 0.0, %v5760
  %v5762 = vpop.f32.mrf.mxu0
  %5763 = vmatprep.mubr.f32.mxu0 0.0
  %5764 = vmatmul.mubr.f32.gmra.mxu0 %v2653
  %v5765 = vpop.f32.mrf.mxu0
  %v5766 = vadd.f32 0.0, %v5765
  %v5767 = vpop.f32.mrf.mxu0
  %5768 = vmatprep.mubr.f32.mxu0 0.0
  %5769 = vmatmul.mubr.f32.gmra.mxu0 %v2656
  %v5770 = vpop.f32.mrf.mxu0
  %v5771 = vadd.f32 0.0, %v5770
  %v5772 = vpop.f32.mrf.mxu0
  %5773 = vmatprep.mubr.f32.mxu0 0.0
  %5774 = vmatmul.mubr.f32.gmra.mxu0 %v2659
  %v5775 = vpop.f32.mrf.mxu0
  %v5776 = vadd.f32 0.0, %v5775
  %v5777 = vpop.f32.mrf.mxu0
  %5778 = vmatprep.mubr.f32.mxu0 0.0
  %5779 = vmatmul.mubr.f32.gmra.mxu0 %v2662
  %v5780 = vpop.f32.mrf.mxu0
  %v5781 = vadd.f32 0.0, %v5780
  %v5782 = vpop.f32.mrf.mxu0
  %5783 = vmatprep.mubr.f32.mxu0 0.0
  %5784 = vmatmul.mubr.f32.gmra.mxu0 %v2665
  %v5785 = vpop.f32.mrf.mxu0
  %v5786 = vadd.f32 0.0, %v5785
  %v5787 = vpop.f32.mrf.mxu0
  %5788 = vmatprep.mubr.f32.mxu0 0.0
  %5789 = vmatmul.mubr.f32.gmra.mxu0 %v2668
  %v5790 = vpop.f32.mrf.mxu0
  %v5791 = vadd.f32 0.0, %v5790
  %v5792 = vpop.f32.mrf.mxu0
  %5793 = vdwg.mxu0
  %v5794 = vadd.f32 %v2532, %v5756
  %v5795 = vadd.f32 %v2533, %v5761
  %v5796 = vadd.f32 %v2534, %v5766
  %v5797 = vadd.f32 %v2535, %v5771
  %v5798 = vadd.f32 %v2536, %v5776
  %v5799 = vadd.f32 %v2537, %v5781
  %v5800 = vadd.f32 %v2538, %v5786
  %v5801 = vadd.f32 %v2539, %v5791
  %v5802 = vtanh.pop %v5794
  %v5803 = vtanh.pop %v5795
  %v5804 = vtanh.pop %v5796
  %v5805 = vtanh.pop %v5797
  %v5806 = vtanh.pop %v5798
  %v5807 = vtanh.pop %v5799
  %v5808 = vtanh.pop %v5800
  %v5809 = vtanh.pop %v5801
  %5810 = vmatprep.subr.mxu0 0.0
  %5811 = vmatpush1.msra.mxu0 0.0
  %5812 = vmatprep.subr.mxu0 0.0
  %5813 = vmatpush1.msra.mxu0 0.0
  %5814 = vmatprep.subr.mxu0 0.0
  %5815 = vmatpush1.msra.mxu0 0.0
  %5816 = vmatprep.subr.mxu0 0.0
  %5817 = vmatpush1.msra.mxu0 0.0
  %5818 = vmatprep.subr.mxu0 0.0
  %5819 = vmatpush1.msra.mxu0 0.0
  %5820 = vmatprep.subr.mxu0 0.0
  %5821 = vmatpush1.msra.mxu0 0.0
  %5822 = vmatprep.subr.mxu0 0.0
  %5823 = vmatpush1.msra.mxu0 0.0
  %5824 = vmatprep.subr.mxu0 0.0
  %5825 = vmatpush1.msra.mxu0 0.0
  %5826 = vmatprep.subr.mxu0 0.0
  %5827 = vmatpush1.msra.mxu0 %v5809
  %5828 = vmatprep.subr.mxu0 0.0
  %5829 = vmatpush1.msra.mxu0 %v5808
  %5830 = vmatprep.subr.mxu0 0.0
  %5831 = vmatpush1.msra.mxu0 %v5807
  %5832 = vmatprep.subr.mxu0 0.0
  %5833 = vmatpush1.msra.mxu0 %v5806
  %5834 = vmatprep.subr.mxu0 0.0
  %5835 = vmatpush1.msra.mxu0 %v5805
  %5836 = vmatprep.subr.mxu0 0.0
  %5837 = vmatpush1.msra.mxu0 %v5804
  %5838 = vmatprep.subr.mxu0 0.0
  %5839 = vmatpush1.msra.mxu0 %v5803
  %5840 = vmatprep.subr.mxu0 0.0
  %5841 = vmatpush1.msra.mxu0 %v5802
  %5842 = vmatprep.subr.mxu0 0.0
  %5843 = vmatpush2.msra.mxu0 0.0
  %5844 = vmatprep.subr.mxu0 0.0
  %5845 = vmatpush2.msra.mxu0 0.0
  %5846 = vmatprep.subr.mxu0 0.0
  %5847 = vmatpush2.msra.mxu0 0.0
  %5848 = vmatprep.subr.mxu0 0.0
  %5849 = vmatpush2.msra.mxu0 0.0
  %5850 = vmatprep.subr.mxu0 0.0
  %5851 = vmatpush2.msra.mxu0 0.0
  %5852 = vmatprep.subr.mxu0 0.0
  %5853 = vmatpush2.msra.mxu0 0.0
  %5854 = vmatprep.subr.mxu0 0.0
  %5855 = vmatpush2.msra.mxu0 0.0
  %5856 = vmatprep.subr.mxu0 0.0
  %5857 = vmatpush2.msra.mxu0 0.0
  %5858 = vmatprep.subr.mxu0 0.0
  %5859 = vmatpush2.msra.mxu0 0.0
  %5860 = vmatprep.subr.mxu0 0.0
  %5861 = vmatpush2.msra.mxu0 0.0
  %5862 = vmatprep.subr.mxu0 0.0
  %5863 = vmatpush2.msra.mxu0 0.0
  %5864 = vmatprep.subr.mxu0 0.0
  %5865 = vmatpush2.msra.mxu0 0.0
  %5866 = vmatprep.subr.mxu0 0.0
  %5867 = vmatpush2.msra.mxu0 0.0
  %5868 = vmatprep.subr.mxu0 0.0
  %5869 = vmatpush2.msra.mxu0 0.0
  %5870 = vmatprep.subr.mxu0 0.0
  %5871 = vmatpush2.msra.mxu0 0.0
  %5872 = vmatprep.subr.mxu0 0.0
  %5873 = vmatpush2.msra.mxu0 0.0
  %5874 = vmatprep.mubr.f32.mxu0 0.0
  %5875 = vmatmul.mubr.f32.gmra.mxu0 %v2832
  %v5876 = vpop.f32.mrf.mxu0
  %v5877 = vadd.f32 %v2794, %v5876
  %v5878 = vpop.f32.mrf.mxu0
  %5879 = vmatprep.mubr.f32.mxu0 0.0
  %5880 = vmatmul.mubr.f32.gmra.mxu0 %v2835
  %v5881 = vpop.f32.mrf.mxu0
  %v5882 = vadd.f32 %v2799, %v5881
  %v5883 = vpop.f32.mrf.mxu0
  %5884 = vmatprep.mubr.f32.mxu0 0.0
  %5885 = vmatmul.mubr.f32.gmra.mxu0 %v2838
  %v5886 = vpop.f32.mrf.mxu0
  %v5887 = vadd.f32 %v2804, %v5886
  %v5888 = vpop.f32.mrf.mxu0
  %5889 = vmatprep.mubr.f32.mxu0 0.0
  %5890 = vmatmul.mubr.f32.gmra.mxu0 %v2841
  %v5891 = vpop.f32.mrf.mxu0
  %v5892 = vadd.f32 %v2809, %v5891
  %v5893 = vpop.f32.mrf.mxu0
  %5894 = vmatprep.mubr.f32.mxu0 0.0
  %5895 = vmatmul.mubr.f32.gmra.mxu0 %v2844
  %v5896 = vpop.f32.mrf.mxu0
  %v5897 = vadd.f32 %v2814, %v5896
  %v5898 = vpop.f32.mrf.mxu0
  %5899 = vmatprep.mubr.f32.mxu0 0.0
  %5900 = vmatmul.mubr.f32.gmra.mxu0 %v2847
  %v5901 = vpop.f32.mrf.mxu0
  %v5902 = vadd.f32 %v2819, %v5901
  %v5903 = vpop.f32.mrf.mxu0
  %5904 = vmatprep.mubr.f32.mxu0 0.0
  %5905 = vmatmul.mubr.f32.gmra.mxu0 %v2850
  %v5906 = vpop.f32.mrf.mxu0
  %v5907 = vadd.f32 %v2824, %v5906
  %v5908 = vpop.f32.mrf.mxu0
  %5909 = vmatprep.mubr.f32.mxu0 0.0
  %5910 = vmatmul.mubr.f32.gmra.mxu0 %v2853
  %v5911 = vpop.f32.mrf.mxu0
  %v5912 = vadd.f32 %v2829, %v5911
  %v5913 = vpop.f32.mrf.mxu0
  %5914 = vdwg.mxu0
  %v5915 = vtanh.pop %v5877
  %v5916 = vtanh.pop %v5882
  %v5917 = vtanh.pop %v5887
  %v5918 = vtanh.pop %v5892
  %v5919 = vtanh.pop %v5897
  %v5920 = vtanh.pop %v5902
  %v5921 = vtanh.pop %v5907
  %v5922 = vtanh.pop %v5912
  %5923 = vmatprep.subr.mxu0 0.0
  %5924 = vmatpush1.msra.mxu0 0.0
  %5925 = vmatprep.subr.mxu0 0.0
  %5926 = vmatpush1.msra.mxu0 0.0
  %5927 = vmatprep.subr.mxu0 0.0
  %5928 = vmatpush1.msra.mxu0 0.0
  %5929 = vmatprep.subr.mxu0 0.0
  %5930 = vmatpush1.msra.mxu0 0.0
  %5931 = vmatprep.subr.mxu0 0.0
  %5932 = vmatpush1.msra.mxu0 0.0
  %5933 = vmatprep.subr.mxu0 0.0
  %5934 = vmatpush1.msra.mxu0 0.0
  %5935 = vmatprep.subr.mxu0 0.0
  %5936 = vmatpush1.msra.mxu0 0.0
  %5937 = vmatprep.subr.mxu0 0.0
  %5938 = vmatpush1.msra.mxu0 0.0
  %5939 = vmatprep.subr.mxu0 0.0
  %5940 = vmatpush1.msra.mxu0 %v5922
  %5941 = vmatprep.subr.mxu0 0.0
  %5942 = vmatpush1.msra.mxu0 %v5921
  %5943 = vmatprep.subr.mxu0 0.0
  %5944 = vmatpush1.msra.mxu0 %v5920
  %5945 = vmatprep.subr.mxu0 0.0
  %5946 = vmatpush1.msra.mxu0 %v5919
  %5947 = vmatprep.subr.mxu0 0.0
  %5948 = vmatpush1.msra.mxu0 %v5918
  %5949 = vmatprep.subr.mxu0 0.0
  %5950 = vmatpush1.msra.mxu0 %v5917
  %5951 = vmatprep.subr.mxu0 0.0
  %5952 = vmatpush1.msra.mxu0 %v5916
  %5953 = vmatprep.subr.mxu0 0.0
  %5954 = vmatpush1.msra.mxu0 %v5915
  %5955 = vmatprep.subr.mxu0 0.0
  %5956 = vmatpush2.msra.mxu0 0.0
  %5957 = vmatprep.subr.mxu0 0.0
  %5958 = vmatpush2.msra.mxu0 0.0
  %5959 = vmatprep.subr.mxu0 0.0
  %5960 = vmatpush2.msra.mxu0 0.0
  %5961 = vmatprep.subr.mxu0 0.0
  %5962 = vmatpush2.msra.mxu0 0.0
  %5963 = vmatprep.subr.mxu0 0.0
  %5964 = vmatpush2.msra.mxu0 0.0
  %5965 = vmatprep.subr.mxu0 0.0
  %5966 = vmatpush2.msra.mxu0 0.0
  %5967 = vmatprep.subr.mxu0 0.0
  %5968 = vmatpush2.msra.mxu0 0.0
  %5969 = vmatprep.subr.mxu0 0.0
  %5970 = vmatpush2.msra.mxu0 0.0
  %5971 = vmatprep.subr.mxu0 0.0
  %5972 = vmatpush2.msra.mxu0 0.0
  %5973 = vmatprep.subr.mxu0 0.0
  %5974 = vmatpush2.msra.mxu0 0.0
  %5975 = vmatprep.subr.mxu0 0.0
  %5976 = vmatpush2.msra.mxu0 0.0
  %5977 = vmatprep.subr.mxu0 0.0
  %5978 = vmatpush2.msra.mxu0 0.0
  %5979 = vmatprep.subr.mxu0 0.0
  %5980 = vmatpush2.msra.mxu0 0.0
  %5981 = vmatprep.subr.mxu0 0.0
  %5982 = vmatpush2.msra.mxu0 0.0
  %5983 = vmatprep.subr.mxu0 0.0
  %5984 = vmatpush2.msra.mxu0 0.0
  %5985 = vmatprep.subr.mxu0 0.0
  %5986 = vmatpush2.msra.mxu0 0.0
  %5987 = vmatprep.mubr.f32.mxu0 0.0
  %5988 = vmatmul.mubr.f32.gmra.mxu0 %v2969
  %v5989 = vpop.f32.mrf.mxu0
  %v5990 = vadd.f32 %v2540, %v5989
  %v5991 = vpop.f32.mrf.mxu0
  %5992 = vmatprep.mubr.f32.mxu0 0.0
  %5993 = vmatmul.mubr.f32.gmra.mxu0 %v2972
  %v5994 = vpop.f32.mrf.mxu0
  %v5995 = vadd.f32 %v2541, %v5994
  %v5996 = vpop.f32.mrf.mxu0
  %5997 = vmatprep.mubr.f32.mxu0 0.0
  %5998 = vmatmul.mubr.f32.gmra.mxu0 %v2975
  %v5999 = vpop.f32.mrf.mxu0
  %v6000 = vadd.f32 %v2542, %v5999
  %v6001 = vpop.f32.mrf.mxu0
  %6002 = vmatprep.mubr.f32.mxu0 0.0
  %6003 = vmatmul.mubr.f32.gmra.mxu0 %v2978
  %v6004 = vpop.f32.mrf.mxu0
  %v6005 = vadd.f32 %v2543, %v6004
  %v6006 = vpop.f32.mrf.mxu0
  %6007 = vmatprep.mubr.f32.mxu0 0.0
  %6008 = vmatmul.mubr.f32.gmra.mxu0 %v2981
  %v6009 = vpop.f32.mrf.mxu0
  %v6010 = vadd.f32 %v2544, %v6009
  %v6011 = vpop.f32.mrf.mxu0
  %6012 = vmatprep.mubr.f32.mxu0 0.0
  %6013 = vmatmul.mubr.f32.gmra.mxu0 %v2984
  %v6014 = vpop.f32.mrf.mxu0
  %v6015 = vadd.f32 %v2545, %v6014
  %v6016 = vpop.f32.mrf.mxu0
  %6017 = vmatprep.mubr.f32.mxu0 0.0
  %6018 = vmatmul.mubr.f32.gmra.mxu0 %v2987
  %v6019 = vpop.f32.mrf.mxu0
  %v6020 = vadd.f32 %v2546, %v6019
  %v6021 = vpop.f32.mrf.mxu0
  %6022 = vmatprep.mubr.f32.mxu0 0.0
  %6023 = vmatmul.mubr.f32.gmra.mxu0 %v2990
  %v6024 = vpop.f32.mrf.mxu0
  %v6025 = vadd.f32 %v2547, %v6024
  %v6026 = vpop.f32.mrf.mxu0
  %6027 = vdwg.mxu0
  %v6028 = vtanh.pop %v5990
  %v6029 = vtanh.pop %v5995
  %v6030 = vtanh.pop %v6000
  %v6031 = vtanh.pop %v6005
  %v6032 = vtanh.pop %v6010
  %v6033 = vtanh.pop %v6015
  %v6034 = vtanh.pop %v6020
  %v6035 = vtanh.pop %v6025
  %6036 = vmatprep.subr.mxu0 0.0
  %6037 = vmatpush1.msra.mxu0 0.0
  %6038 = vmatprep.subr.mxu0 0.0
  %6039 = vmatpush1.msra.mxu0 0.0
  %6040 = vmatprep.subr.mxu0 0.0
  %6041 = vmatpush1.msra.mxu0 0.0
  %6042 = vmatprep.subr.mxu0 0.0
  %6043 = vmatpush1.msra.mxu0 0.0
  %6044 = vmatprep.subr.mxu0 0.0
  %6045 = vmatpush1.msra.mxu0 0.0
  %6046 = vmatprep.subr.mxu0 0.0
  %6047 = vmatpush1.msra.mxu0 0.0
  %6048 = vmatprep.subr.mxu0 0.0
  %6049 = vmatpush1.msra.mxu0 0.0
  %6050 = vmatprep.subr.mxu0 0.0
  %6051 = vmatpush1.msra.mxu0 0.0
  %6052 = vmatprep.subr.mxu0 0.0
  %6053 = vmatpush1.msra.mxu0 %v6035
  %6054 = vmatprep.subr.mxu0 0.0
  %6055 = vmatpush1.msra.mxu0 %v6034
  %6056 = vmatprep.subr.mxu0 0.0
  %6057 = vmatpush1.msra.mxu0 %v6033
  %6058 = vmatprep.subr.mxu0 0.0
  %6059 = vmatpush1.msra.mxu0 %v6032
  %6060 = vmatprep.subr.mxu0 0.0
  %6061 = vmatpush1.msra.mxu0 %v6031
  %6062 = vmatprep.subr.mxu0 0.0
  %6063 = vmatpush1.msra.mxu0 %v6030
  %6064 = vmatprep.subr.mxu0 0.0
  %6065 = vmatpush1.msra.mxu0 %v6029
  %6066 = vmatprep.subr.mxu0 0.0
  %6067 = vmatpush1.msra.mxu0 %v6028
  %6068 = vmatprep.subr.mxu0 0.0
  %6069 = vmatpush2.msra.mxu0 0.0
  %6070 = vmatprep.subr.mxu0 0.0
  %6071 = vmatpush2.msra.mxu0 0.0
  %6072 = vmatprep.subr.mxu0 0.0
  %6073 = vmatpush2.msra.mxu0 0.0
  %6074 = vmatprep.subr.mxu0 0.0
  %6075 = vmatpush2.msra.mxu0 0.0
  %6076 = vmatprep.subr.mxu0 0.0
  %6077 = vmatpush2.msra.mxu0 0.0
  %6078 = vmatprep.subr.mxu0 0.0
  %6079 = vmatpush2.msra.mxu0 0.0
  %6080 = vmatprep.subr.mxu0 0.0
  %6081 = vmatpush2.msra.mxu0 0.0
  %6082 = vmatprep.subr.mxu0 0.0
  %6083 = vmatpush2.msra.mxu0 0.0
  %6084 = vmatprep.subr.mxu0 0.0
  %6085 = vmatpush2.msra.mxu0 0.0
  %6086 = vmatprep.subr.mxu0 0.0
  %6087 = vmatpush2.msra.mxu0 0.0
  %6088 = vmatprep.subr.mxu0 0.0
  %6089 = vmatpush2.msra.mxu0 0.0
  %6090 = vmatprep.subr.mxu0 0.0
  %6091 = vmatpush2.msra.mxu0 0.0
  %6092 = vmatprep.subr.mxu0 0.0
  %6093 = vmatpush2.msra.mxu0 0.0
  %6094 = vmatprep.subr.mxu0 0.0
  %6095 = vmatpush2.msra.mxu0 0.0
  %6096 = vmatprep.subr.mxu0 0.0
  %6097 = vmatpush2.msra.mxu0 0.0
  %6098 = vmatprep.subr.mxu0 0.0
  %6099 = vmatpush2.msra.mxu0 0.0
  %6100 = vmatprep.mubr.f32.mxu0 0.0
  %6101 = vmatmul.mubr.f32.gmra.mxu0 %v3115
  %v6102 = vpop.f32.mrf.mxu0
  %v6103 = vadd.f32 %v3113, %v6102
  %v6104 = vpop.f32.mrf.mxu0
  %6105 = vdwg.mxu0
  %6106 = vmatprep.subr.mxu0 0.0
  %6107 = vmatpush1.msra.mxu0 0.0
  %6108 = vmatprep.subr.mxu0 0.0
  %6109 = vmatpush1.msra.mxu0 0.0
  %6110 = vmatprep.subr.mxu0 0.0
  %6111 = vmatpush1.msra.mxu0 0.0
  %6112 = vmatprep.subr.mxu0 0.0
  %6113 = vmatpush1.msra.mxu0 0.0
  %6114 = vmatprep.subr.mxu0 0.0
  %6115 = vmatpush1.msra.mxu0 0.0
  %6116 = vmatprep.subr.mxu0 0.0
  %6117 = vmatpush1.msra.mxu0 0.0
  %6118 = vmatprep.subr.mxu0 0.0
  %6119 = vmatpush1.msra.mxu0 0.0
  %6120 = vmatprep.subr.mxu0 0.0
  %6121 = vmatpush1.msra.mxu0 0.0
  %6122 = vmatprep.subr.mxu0 0.0
  %6123 = vmatpush1.msra.mxu0 0.0
  %6124 = vmatprep.subr.mxu0 0.0
  %6125 = vmatpush1.msra.mxu0 0.0
  %6126 = vmatprep.subr.mxu0 0.0
  %6127 = vmatpush1.msra.mxu0 0.0
  %6128 = vmatprep.subr.mxu0 0.0
  %6129 = vmatpush1.msra.mxu0 0.0
  %6130 = vmatprep.subr.mxu0 0.0
  %6131 = vmatpush1.msra.mxu0 0.0
  %6132 = vmatprep.subr.mxu0 0.0
  %6133 = vmatpush1.msra.mxu0 0.0
  %6134 = vmatprep.subr.mxu0 0.0
  %6135 = vmatpush1.msra.mxu0 %v2597
  %6136 = vmatprep.subr.mxu0 0.0
  %6137 = vmatpush1.msra.mxu0 %v2596
  %6138 = vmatprep.subr.mxu0 0.0
  %6139 = vmatpush2.msra.mxu0 0.0
  %6140 = vmatprep.subr.mxu0 0.0
  %6141 = vmatpush2.msra.mxu0 0.0
  %6142 = vmatprep.subr.mxu0 0.0
  %6143 = vmatpush2.msra.mxu0 0.0
  %6144 = vmatprep.subr.mxu0 0.0
  %6145 = vmatpush2.msra.mxu0 0.0
  %6146 = vmatprep.subr.mxu0 0.0
  %6147 = vmatpush2.msra.mxu0 0.0
  %6148 = vmatprep.subr.mxu0 0.0
  %6149 = vmatpush2.msra.mxu0 0.0
  %6150 = vmatprep.subr.mxu0 0.0
  %6151 = vmatpush2.msra.mxu0 0.0
  %6152 = vmatprep.subr.mxu0 0.0
  %6153 = vmatpush2.msra.mxu0 0.0
  %6154 = vmatprep.subr.mxu0 0.0
  %6155 = vmatpush2.msra.mxu0 0.0
  %6156 = vmatprep.subr.mxu0 0.0
  %6157 = vmatpush2.msra.mxu0 0.0
  %6158 = vmatprep.subr.mxu0 0.0
  %6159 = vmatpush2.msra.mxu0 0.0
  %6160 = vmatprep.subr.mxu0 0.0
  %6161 = vmatpush2.msra.mxu0 0.0
  %6162 = vmatprep.subr.mxu0 0.0
  %6163 = vmatpush2.msra.mxu0 0.0
  %6164 = vmatprep.subr.mxu0 0.0
  %6165 = vmatpush2.msra.mxu0 0.0
  %6166 = vmatprep.subr.mxu0 0.0
  %6167 = vmatpush2.msra.mxu0 0.0
  %6168 = vmatprep.subr.mxu0 0.0
  %6169 = vmatpush2.msra.mxu0 0.0
  %6170 = vmatprep.mubr.f32.mxu0 0.0
  %6171 = vmatmul.mubr.f32.gmra.mxu0 %v2647
  %v6172 = vpop.f32.mrf.mxu0
  %v6173 = vadd.f32 0.0, %v6172
  %v6174 = vpop.f32.mrf.mxu0
  %6175 = vmatprep.mubr.f32.mxu0 0.0
  %6176 = vmatmul.mubr.f32.gmra.mxu0 %v2650
  %v6177 = vpop.f32.mrf.mxu0
  %v6178 = vadd.f32 0.0, %v6177
  %v6179 = vpop.f32.mrf.mxu0
  %6180 = vmatprep.mubr.f32.mxu0 0.0
  %6181 = vmatmul.mubr.f32.gmra.mxu0 %v2653
  %v6182 = vpop.f32.mrf.mxu0
  %v6183 = vadd.f32 0.0, %v6182
  %v6184 = vpop.f32.mrf.mxu0
  %6185 = vmatprep.mubr.f32.mxu0 0.0
  %6186 = vmatmul.mubr.f32.gmra.mxu0 %v2656
  %v6187 = vpop.f32.mrf.mxu0
  %v6188 = vadd.f32 0.0, %v6187
  %v6189 = vpop.f32.mrf.mxu0
  %6190 = vmatprep.mubr.f32.mxu0 0.0
  %6191 = vmatmul.mubr.f32.gmra.mxu0 %v2659
  %v6192 = vpop.f32.mrf.mxu0
  %v6193 = vadd.f32 0.0, %v6192
  %v6194 = vpop.f32.mrf.mxu0
  %6195 = vmatprep.mubr.f32.mxu0 0.0
  %6196 = vmatmul.mubr.f32.gmra.mxu0 %v2662
  %v6197 = vpop.f32.mrf.mxu0
  %v6198 = vadd.f32 0.0, %v6197
  %v6199 = vpop.f32.mrf.mxu0
  %6200 = vmatprep.mubr.f32.mxu0 0.0
  %6201 = vmatmul.mubr.f32.gmra.mxu0 %v2665
  %v6202 = vpop.f32.mrf.mxu0
  %v6203 = vadd.f32 0.0, %v6202
  %v6204 = vpop.f32.mrf.mxu0
  %6205 = vmatprep.mubr.f32.mxu0 0.0
  %6206 = vmatmul.mubr.f32.gmra.mxu0 %v2668
  %v6207 = vpop.f32.mrf.mxu0
  %v6208 = vadd.f32 0.0, %v6207
  %v6209 = vpop.f32.mrf.mxu0
  %6210 = vdwg.mxu0
  %v6211 = vadd.f32 %v2532, %v6173
  %v6212 = vadd.f32 %v2533, %v6178
  %v6213 = vadd.f32 %v2534, %v6183
  %v6214 = vadd.f32 %v2535, %v6188
  %v6215 = vadd.f32 %v2536, %v6193
  %v6216 = vadd.f32 %v2537, %v6198
  %v6217 = vadd.f32 %v2538, %v6203
  %v6218 = vadd.f32 %v2539, %v6208
  %v6219 = vtanh.pop %v6211
  %v6220 = vtanh.pop %v6212
  %v6221 = vtanh.pop %v6213
  %v6222 = vtanh.pop %v6214
  %v6223 = vtanh.pop %v6215
  %v6224 = vtanh.pop %v6216
  %v6225 = vtanh.pop %v6217
  %v6226 = vtanh.pop %v6218
  %6227 = vmatprep.subr.mxu0 0.0
  %6228 = vmatpush1.msra.mxu0 0.0
  %6229 = vmatprep.subr.mxu0 0.0
  %6230 = vmatpush1.msra.mxu0 0.0
  %6231 = vmatprep.subr.mxu0 0.0
  %6232 = vmatpush1.msra.mxu0 0.0
  %6233 = vmatprep.subr.mxu0 0.0
  %6234 = vmatpush1.msra.mxu0 0.0
  %6235 = vmatprep.subr.mxu0 0.0
  %6236 = vmatpush1.msra.mxu0 0.0
  %6237 = vmatprep.subr.mxu0 0.0
  %6238 = vmatpush1.msra.mxu0 0.0
  %6239 = vmatprep.subr.mxu0 0.0
  %6240 = vmatpush1.msra.mxu0 0.0
  %6241 = vmatprep.subr.mxu0 0.0
  %6242 = vmatpush1.msra.mxu0 0.0
  %6243 = vmatprep.subr.mxu0 0.0
  %6244 = vmatpush1.msra.mxu0 %v6226
  %6245 = vmatprep.subr.mxu0 0.0
  %6246 = vmatpush1.msra.mxu0 %v6225
  %6247 = vmatprep.subr.mxu0 0.0
  %6248 = vmatpush1.msra.mxu0 %v6224
  %6249 = vmatprep.subr.mxu0 0.0
  %6250 = vmatpush1.msra.mxu0 %v6223
  %6251 = vmatprep.subr.mxu0 0.0
  %6252 = vmatpush1.msra.mxu0 %v6222
  %6253 = vmatprep.subr.mxu0 0.0
  %6254 = vmatpush1.msra.mxu0 %v6221
  %6255 = vmatprep.subr.mxu0 0.0
  %6256 = vmatpush1.msra.mxu0 %v6220
  %6257 = vmatprep.subr.mxu0 0.0
  %6258 = vmatpush1.msra.mxu0 %v6219
  %6259 = vmatprep.subr.mxu0 0.0
  %6260 = vmatpush2.msra.mxu0 0.0
  %6261 = vmatprep.subr.mxu0 0.0
  %6262 = vmatpush2.msra.mxu0 0.0
  %6263 = vmatprep.subr.mxu0 0.0
  %6264 = vmatpush2.msra.mxu0 0.0
  %6265 = vmatprep.subr.mxu0 0.0
  %6266 = vmatpush2.msra.mxu0 0.0
  %6267 = vmatprep.subr.mxu0 0.0
  %6268 = vmatpush2.msra.mxu0 0.0
  %6269 = vmatprep.subr.mxu0 0.0
  %6270 = vmatpush2.msra.mxu0 0.0
  %6271 = vmatprep.subr.mxu0 0.0
  %6272 = vmatpush2.msra.mxu0 0.0
  %6273 = vmatprep.subr.mxu0 0.0
  %6274 = vmatpush2.msra.mxu0 0.0
  %6275 = vmatprep.subr.mxu0 0.0
  %6276 = vmatpush2.msra.mxu0 0.0
  %6277 = vmatprep.subr.mxu0 0.0
  %6278 = vmatpush2.msra.mxu0 0.0
  %6279 = vmatprep.subr.mxu0 0.0
  %6280 = vmatpush2.msra.mxu0 0.0
  %6281 = vmatprep.subr.mxu0 0.0
  %6282 = vmatpush2.msra.mxu0 0.0
  %6283 = vmatprep.subr.mxu0 0.0
  %6284 = vmatpush2.msra.mxu0 0.0
  %6285 = vmatprep.subr.mxu0 0.0
  %6286 = vmatpush2.msra.mxu0 0.0
  %6287 = vmatprep.subr.mxu0 0.0
  %6288 = vmatpush2.msra.mxu0 0.0
  %6289 = vmatprep.subr.mxu0 0.0
  %6290 = vmatpush2.msra.mxu0 0.0
  %6291 = vmatprep.mubr.f32.mxu0 0.0
  %6292 = vmatmul.mubr.f32.gmra.mxu0 %v2832
  %v6293 = vpop.f32.mrf.mxu0
  %v6294 = vadd.f32 %v2794, %v6293
  %v6295 = vpop.f32.mrf.mxu0
  %6296 = vmatprep.mubr.f32.mxu0 0.0
  %6297 = vmatmul.mubr.f32.gmra.mxu0 %v2835
  %v6298 = vpop.f32.mrf.mxu0
  %v6299 = vadd.f32 %v2799, %v6298
  %v6300 = vpop.f32.mrf.mxu0
  %6301 = vmatprep.mubr.f32.mxu0 0.0
  %6302 = vmatmul.mubr.f32.gmra.mxu0 %v2838
  %v6303 = vpop.f32.mrf.mxu0
  %v6304 = vadd.f32 %v2804, %v6303
  %v6305 = vpop.f32.mrf.mxu0
  %6306 = vmatprep.mubr.f32.mxu0 0.0
  %6307 = vmatmul.mubr.f32.gmra.mxu0 %v2841
  %v6308 = vpop.f32.mrf.mxu0
  %v6309 = vadd.f32 %v2809, %v6308
  %v6310 = vpop.f32.mrf.mxu0
  %6311 = vmatprep.mubr.f32.mxu0 0.0
  %6312 = vmatmul.mubr.f32.gmra.mxu0 %v2844
  %v6313 = vpop.f32.mrf.mxu0
  %v6314 = vadd.f32 %v2814, %v6313
  %v6315 = vpop.f32.mrf.mxu0
  %6316 = vmatprep.mubr.f32.mxu0 0.0
  %6317 = vmatmul.mubr.f32.gmra.mxu0 %v2847
  %v6318 = vpop.f32.mrf.mxu0
  %v6319 = vadd.f32 %v2819, %v6318
  %v6320 = vpop.f32.mrf.mxu0
  %6321 = vmatprep.mubr.f32.mxu0 0.0
  %6322 = vmatmul.mubr.f32.gmra.mxu0 %v2850
  %v6323 = vpop.f32.mrf.mxu0
  %v6324 = vadd.f32 %v2824, %v6323
  %v6325 = vpop.f32.mrf.mxu0
  %6326 = vmatprep.mubr.f32.mxu0 0.0
  %6327 = vmatmul.mubr.f32.gmra.mxu0 %v2853
  %v6328 = vpop.f32.mrf.mxu0
  %v6329 = vadd.f32 %v2829, %v6328
  %v6330 = vpop.f32.mrf.mxu0
  %6331 = vdwg.mxu0
  %v6332 = vtanh.pop %v6294
  %v6333 = vtanh.pop %v6299
  %v6334 = vtanh.pop %v6304
  %v6335 = vtanh.pop %v6309
  %v6336 = vtanh.pop %v6314
  %v6337 = vtanh.pop %v6319
  %v6338 = vtanh.pop %v6324
  %v6339 = vtanh.pop %v6329
  %6340 = vmatprep.subr.mxu0 0.0
  %6341 = vmatpush1.msra.mxu0 0.0
  %6342 = vmatprep.subr.mxu0 0.0
  %6343 = vmatpush1.msra.mxu0 0.0
  %6344 = vmatprep.subr.mxu0 0.0
  %6345 = vmatpush1.msra.mxu0 0.0
  %6346 = vmatprep.subr.mxu0 0.0
  %6347 = vmatpush1.msra.mxu0 0.0
  %6348 = vmatprep.subr.mxu0 0.0
  %6349 = vmatpush1.msra.mxu0 0.0
  %6350 = vmatprep.subr.mxu0 0.0
  %6351 = vmatpush1.msra.mxu0 0.0
  %6352 = vmatprep.subr.mxu0 0.0
  %6353 = vmatpush1.msra.mxu0 0.0
  %6354 = vmatprep.subr.mxu0 0.0
  %6355 = vmatpush1.msra.mxu0 0.0
  %6356 = vmatprep.subr.mxu0 0.0
  %6357 = vmatpush1.msra.mxu0 %v6339
  %6358 = vmatprep.subr.mxu0 0.0
  %6359 = vmatpush1.msra.mxu0 %v6338
  %6360 = vmatprep.subr.mxu0 0.0
  %6361 = vmatpush1.msra.mxu0 %v6337
  %6362 = vmatprep.subr.mxu0 0.0
  %6363 = vmatpush1.msra.mxu0 %v6336
  %6364 = vmatprep.subr.mxu0 0.0
  %6365 = vmatpush1.msra.mxu0 %v6335
  %6366 = vmatprep.subr.mxu0 0.0
  %6367 = vmatpush1.msra.mxu0 %v6334
  %6368 = vmatprep.subr.mxu0 0.0
  %6369 = vmatpush1.msra.mxu0 %v6333
  %6370 = vmatprep.subr.mxu0 0.0
  %6371 = vmatpush1.msra.mxu0 %v6332
  %6372 = vmatprep.subr.mxu0 0.0
  %6373 = vmatpush2.msra.mxu0 0.0
  %6374 = vmatprep.subr.mxu0 0.0
  %6375 = vmatpush2.msra.mxu0 0.0
  %6376 = vmatprep.subr.mxu0 0.0
  %6377 = vmatpush2.msra.mxu0 0.0
  %6378 = vmatprep.subr.mxu0 0.0
  %6379 = vmatpush2.msra.mxu0 0.0
  %6380 = vmatprep.subr.mxu0 0.0
  %6381 = vmatpush2.msra.mxu0 0.0
  %6382 = vmatprep.subr.mxu0 0.0
  %6383 = vmatpush2.msra.mxu0 0.0
  %6384 = vmatprep.subr.mxu0 0.0
  %6385 = vmatpush2.msra.mxu0 0.0
  %6386 = vmatprep.subr.mxu0 0.0
  %6387 = vmatpush2.msra.mxu0 0.0
  %6388 = vmatprep.subr.mxu0 0.0
  %6389 = vmatpush2.msra.mxu0 0.0
  %6390 = vmatprep.subr.mxu0 0.0
  %6391 = vmatpush2.msra.mxu0 0.0
  %6392 = vmatprep.subr.mxu0 0.0
  %6393 = vmatpush2.msra.mxu0 0.0
  %6394 = vmatprep.subr.mxu0 0.0
  %6395 = vmatpush2.msra.mxu0 0.0
  %6396 = vmatprep.subr.mxu0 0.0
  %6397 = vmatpush2.msra.mxu0 0.0
  %6398 = vmatprep.subr.mxu0 0.0
  %6399 = vmatpush2.msra.mxu0 0.0
  %6400 = vmatprep.subr.mxu0 0.0
  %6401 = vmatpush2.msra.mxu0 0.0
  %6402 = vmatprep.subr.mxu0 0.0
  %6403 = vmatpush2.msra.mxu0 0.0
  %6404 = vmatprep.mubr.f32.mxu0 0.0
  %6405 = vmatmul.mubr.f32.gmra.mxu0 %v2969
  %v6406 = vpop.f32.mrf.mxu0
  %v6407 = vadd.f32 %v2540, %v6406
  %v6408 = vpop.f32.mrf.mxu0
  %6409 = vmatprep.mubr.f32.mxu0 0.0
  %6410 = vmatmul.mubr.f32.gmra.mxu0 %v2972
  %v6411 = vpop.f32.mrf.mxu0
  %v6412 = vadd.f32 %v2541, %v6411
  %v6413 = vpop.f32.mrf.mxu0
  %6414 = vmatprep.mubr.f32.mxu0 0.0
  %6415 = vmatmul.mubr.f32.gmra.mxu0 %v2975
  %v6416 = vpop.f32.mrf.mxu0
  %v6417 = vadd.f32 %v2542, %v6416
  %v6418 = vpop.f32.mrf.mxu0
  %6419 = vmatprep.mubr.f32.mxu0 0.0
  %6420 = vmatmul.mubr.f32.gmra.mxu0 %v2978
  %v6421 = vpop.f32.mrf.mxu0
  %v6422 = vadd.f32 %v2543, %v6421
  %v6423 = vpop.f32.mrf.mxu0
  %6424 = vmatprep.mubr.f32.mxu0 0.0
  %6425 = vmatmul.mubr.f32.gmra.mxu0 %v2981
  %v6426 = vpop.f32.mrf.mxu0
  %v6427 = vadd.f32 %v2544, %v6426
  %v6428 = vpop.f32.mrf.mxu0
  %6429 = vmatprep.mubr.f32.mxu0 0.0
  %6430 = vmatmul.mubr.f32.gmra.mxu0 %v2984
  %v6431 = vpop.f32.mrf.mxu0
  %v6432 = vadd.f32 %v2545, %v6431
  %v6433 = vpop.f32.mrf.mxu0
  %6434 = vmatprep.mubr.f32.mxu0 0.0
  %6435 = vmatmul.mubr.f32.gmra.mxu0 %v2987
  %v6436 = vpop.f32.mrf.mxu0
  %v6437 = vadd.f32 %v2546, %v6436
  %v6438 = vpop.f32.mrf.mxu0
  %6439 = vmatprep.mubr.f32.mxu0 0.0
  %6440 = vmatmul.mubr.f32.gmra.mxu0 %v2990
  %v6441 = vpop.f32.mrf.mxu0
  %v6442 = vadd.f32 %v2547, %v6441
  %v6443 = vpop.f32.mrf.mxu0
  %6444 = vdwg.mxu0
  %v6445 = vtanh.pop %v6407
  %v6446 = vtanh.pop %v6412
  %v6447 = vtanh.pop %v6417
  %v6448 = vtanh.pop %v6422
  %v6449 = vtanh.pop %v6427
  %v6450 = vtanh.pop %v6432
  %v6451 = vtanh.pop %v6437
  %v6452 = vtanh.pop %v6442
  %6453 = vmatprep.subr.mxu0 0.0
  %6454 = vmatpush1.msra.mxu0 0.0
  %6455 = vmatprep.subr.mxu0 0.0
  %6456 = vmatpush1.msra.mxu0 0.0
  %6457 = vmatprep.subr.mxu0 0.0
  %6458 = vmatpush1.msra.mxu0 0.0
  %6459 = vmatprep.subr.mxu0 0.0
  %6460 = vmatpush1.msra.mxu0 0.0
  %6461 = vmatprep.subr.mxu0 0.0
  %6462 = vmatpush1.msra.mxu0 0.0
  %6463 = vmatprep.subr.mxu0 0.0
  %6464 = vmatpush1.msra.mxu0 0.0
  %6465 = vmatprep.subr.mxu0 0.0
  %6466 = vmatpush1.msra.mxu0 0.0
  %6467 = vmatprep.subr.mxu0 0.0
  %6468 = vmatpush1.msra.mxu0 0.0
  %6469 = vmatprep.subr.mxu0 0.0
  %6470 = vmatpush1.msra.mxu0 %v6452
  %6471 = vmatprep.subr.mxu0 0.0
  %6472 = vmatpush1.msra.mxu0 %v6451
  %6473 = vmatprep.subr.mxu0 0.0
  %6474 = vmatpush1.msra.mxu0 %v6450
  %6475 = vmatprep.subr.mxu0 0.0
  %6476 = vmatpush1.msra.mxu0 %v6449
  %6477 = vmatprep.subr.mxu0 0.0
  %6478 = vmatpush1.msra.mxu0 %v6448
  %6479 = vmatprep.subr.mxu0 0.0
  %6480 = vmatpush1.msra.mxu0 %v6447
  %6481 = vmatprep.subr.mxu0 0.0
  %6482 = vmatpush1.msra.mxu0 %v6446
  %6483 = vmatprep.subr.mxu0 0.0
  %6484 = vmatpush1.msra.mxu0 %v6445
  %6485 = vmatprep.subr.mxu0 0.0
  %6486 = vmatpush2.msra.mxu0 0.0
  %6487 = vmatprep.subr.mxu0 0.0
  %6488 = vmatpush2.msra.mxu0 0.0
  %6489 = vmatprep.subr.mxu0 0.0
  %6490 = vmatpush2.msra.mxu0 0.0
  %6491 = vmatprep.subr.mxu0 0.0
  %6492 = vmatpush2.msra.mxu0 0.0
  %6493 = vmatprep.subr.mxu0 0.0
  %6494 = vmatpush2.msra.mxu0 0.0
  %6495 = vmatprep.subr.mxu0 0.0
  %6496 = vmatpush2.msra.mxu0 0.0
  %6497 = vmatprep.subr.mxu0 0.0
  %6498 = vmatpush2.msra.mxu0 0.0
  %6499 = vmatprep.subr.mxu0 0.0
  %6500 = vmatpush2.msra.mxu0 0.0
  %6501 = vmatprep.subr.mxu0 0.0
  %6502 = vmatpush2.msra.mxu0 0.0
  %6503 = vmatprep.subr.mxu0 0.0
  %6504 = vmatpush2.msra.mxu0 0.0
  %6505 = vmatprep.subr.mxu0 0.0
  %6506 = vmatpush2.msra.mxu0 0.0
  %6507 = vmatprep.subr.mxu0 0.0
  %6508 = vmatpush2.msra.mxu0 0.0
  %6509 = vmatprep.subr.mxu0 0.0
  %6510 = vmatpush2.msra.mxu0 0.0
  %6511 = vmatprep.subr.mxu0 0.0
  %6512 = vmatpush2.msra.mxu0 0.0
  %6513 = vmatprep.subr.mxu0 0.0
  %6514 = vmatpush2.msra.mxu0 0.0
  %6515 = vmatprep.subr.mxu0 0.0
  %6516 = vmatpush2.msra.mxu0 0.0
  %6517 = vmatprep.mubr.f32.mxu0 0.0
  %6518 = vmatmul.mubr.f32.gmra.mxu0 %v3115
  %v6519 = vpop.f32.mrf.mxu0
  %v6520 = vadd.f32 %v3113, %v6519
  %v6521 = vpop.f32.mrf.mxu0
  %6522 = vdwg.mxu0
  %6523 = vmatprep.subr.mxu0 0.0
  %6524 = vmatpush1.msra.mxu0 0.0
  %6525 = vmatprep.subr.mxu0 0.0
  %6526 = vmatpush1.msra.mxu0 0.0
  %6527 = vmatprep.subr.mxu0 0.0
  %6528 = vmatpush1.msra.mxu0 0.0
  %6529 = vmatprep.subr.mxu0 0.0
  %6530 = vmatpush1.msra.mxu0 0.0
  %6531 = vmatprep.subr.mxu0 0.0
  %6532 = vmatpush1.msra.mxu0 0.0
  %6533 = vmatprep.subr.mxu0 0.0
  %6534 = vmatpush1.msra.mxu0 0.0
  %6535 = vmatprep.subr.mxu0 0.0
  %6536 = vmatpush1.msra.mxu0 0.0
  %6537 = vmatprep.subr.mxu0 0.0
  %6538 = vmatpush1.msra.mxu0 0.0
  %6539 = vmatprep.subr.mxu0 0.0
  %6540 = vmatpush1.msra.mxu0 0.0
  %6541 = vmatprep.subr.mxu0 0.0
  %6542 = vmatpush1.msra.mxu0 0.0
  %6543 = vmatprep.subr.mxu0 0.0
  %6544 = vmatpush1.msra.mxu0 0.0
  %6545 = vmatprep.subr.mxu0 0.0
  %6546 = vmatpush1.msra.mxu0 0.0
  %6547 = vmatprep.subr.mxu0 0.0
  %6548 = vmatpush1.msra.mxu0 0.0
  %6549 = vmatprep.subr.mxu0 0.0
  %6550 = vmatpush1.msra.mxu0 0.0
  %6551 = vmatprep.subr.mxu0 0.0
  %6552 = vmatpush1.msra.mxu0 %v2599
  %6553 = vmatprep.subr.mxu0 0.0
  %6554 = vmatpush1.msra.mxu0 %v2598
  %6555 = vmatprep.subr.mxu0 0.0
  %6556 = vmatpush2.msra.mxu0 0.0
  %6557 = vmatprep.subr.mxu0 0.0
  %6558 = vmatpush2.msra.mxu0 0.0
  %6559 = vmatprep.subr.mxu0 0.0
  %6560 = vmatpush2.msra.mxu0 0.0
  %6561 = vmatprep.subr.mxu0 0.0
  %6562 = vmatpush2.msra.mxu0 0.0
  %6563 = vmatprep.subr.mxu0 0.0
  %6564 = vmatpush2.msra.mxu0 0.0
  %6565 = vmatprep.subr.mxu0 0.0
  %6566 = vmatpush2.msra.mxu0 0.0
  %6567 = vmatprep.subr.mxu0 0.0
  %6568 = vmatpush2.msra.mxu0 0.0
  %6569 = vmatprep.subr.mxu0 0.0
  %6570 = vmatpush2.msra.mxu0 0.0
  %6571 = vmatprep.subr.mxu0 0.0
  %6572 = vmatpush2.msra.mxu0 0.0
  %6573 = vmatprep.subr.mxu0 0.0
  %6574 = vmatpush2.msra.mxu0 0.0
  %6575 = vmatprep.subr.mxu0 0.0
  %6576 = vmatpush2.msra.mxu0 0.0
  %6577 = vmatprep.subr.mxu0 0.0
  %6578 = vmatpush2.msra.mxu0 0.0
  %6579 = vmatprep.subr.mxu0 0.0
  %6580 = vmatpush2.msra.mxu0 0.0
  %6581 = vmatprep.subr.mxu0 0.0
  %6582 = vmatpush2.msra.mxu0 0.0
  %6583 = vmatprep.subr.mxu0 0.0
  %6584 = vmatpush2.msra.mxu0 0.0
  %6585 = vmatprep.subr.mxu0 0.0
  %6586 = vmatpush2.msra.mxu0 0.0
  %6587 = vmatprep.mubr.f32.mxu0 0.0
  %6588 = vmatmul.mubr.f32.gmra.mxu0 %v2647
  %v6589 = vpop.f32.mrf.mxu0
  %v6590 = vadd.f32 0.0, %v6589
  %v6591 = vpop.f32.mrf.mxu0
  %6592 = vmatprep.mubr.f32.mxu0 0.0
  %6593 = vmatmul.mubr.f32.gmra.mxu0 %v2650
  %v6594 = vpop.f32.mrf.mxu0
  %v6595 = vadd.f32 0.0, %v6594
  %v6596 = vpop.f32.mrf.mxu0
  %6597 = vmatprep.mubr.f32.mxu0 0.0
  %6598 = vmatmul.mubr.f32.gmra.mxu0 %v2653
  %v6599 = vpop.f32.mrf.mxu0
  %v6600 = vadd.f32 0.0, %v6599
  %v6601 = vpop.f32.mrf.mxu0
  %6602 = vmatprep.mubr.f32.mxu0 0.0
  %6603 = vmatmul.mubr.f32.gmra.mxu0 %v2656
  %v6604 = vpop.f32.mrf.mxu0
  %v6605 = vadd.f32 0.0, %v6604
  %v6606 = vpop.f32.mrf.mxu0
  %6607 = vmatprep.mubr.f32.mxu0 0.0
  %6608 = vmatmul.mubr.f32.gmra.mxu0 %v2659
  %v6609 = vpop.f32.mrf.mxu0
  %v6610 = vadd.f32 0.0, %v6609
  %v6611 = vpop.f32.mrf.mxu0
  %6612 = vmatprep.mubr.f32.mxu0 0.0
  %6613 = vmatmul.mubr.f32.gmra.mxu0 %v2662
  %v6614 = vpop.f32.mrf.mxu0
  %v6615 = vadd.f32 0.0, %v6614
  %v6616 = vpop.f32.mrf.mxu0
  %6617 = vmatprep.mubr.f32.mxu0 0.0
  %6618 = vmatmul.mubr.f32.gmra.mxu0 %v2665
  %v6619 = vpop.f32.mrf.mxu0
  %v6620 = vadd.f32 0.0, %v6619
  %v6621 = vpop.f32.mrf.mxu0
  %6622 = vmatprep.mubr.f32.mxu0 0.0
  %6623 = vmatmul.mubr.f32.gmra.mxu0 %v2668
  %v6624 = vpop.f32.mrf.mxu0
  %v6625 = vadd.f32 0.0, %v6624
  %v6626 = vpop.f32.mrf.mxu0
  %6627 = vdwg.mxu0
  %v6628 = vadd.f32 %v2532, %v6590
  %v6629 = vadd.f32 %v2533, %v6595
  %v6630 = vadd.f32 %v2534, %v6600
  %v6631 = vadd.f32 %v2535, %v6605
  %v6632 = vadd.f32 %v2536, %v6610
  %v6633 = vadd.f32 %v2537, %v6615
  %v6634 = vadd.f32 %v2538, %v6620
  %v6635 = vadd.f32 %v2539, %v6625
  %v6636 = vtanh.pop %v6628
  %v6637 = vtanh.pop %v6629
  %v6638 = vtanh.pop %v6630
  %v6639 = vtanh.pop %v6631
  %v6640 = vtanh.pop %v6632
  %v6641 = vtanh.pop %v6633
  %v6642 = vtanh.pop %v6634
  %v6643 = vtanh.pop %v6635
  %6644 = vmatprep.subr.mxu0 0.0
  %6645 = vmatpush1.msra.mxu0 0.0
  %6646 = vmatprep.subr.mxu0 0.0
  %6647 = vmatpush1.msra.mxu0 0.0
  %6648 = vmatprep.subr.mxu0 0.0
  %6649 = vmatpush1.msra.mxu0 0.0
  %6650 = vmatprep.subr.mxu0 0.0
  %6651 = vmatpush1.msra.mxu0 0.0
  %6652 = vmatprep.subr.mxu0 0.0
  %6653 = vmatpush1.msra.mxu0 0.0
  %6654 = vmatprep.subr.mxu0 0.0
  %6655 = vmatpush1.msra.mxu0 0.0
  %6656 = vmatprep.subr.mxu0 0.0
  %6657 = vmatpush1.msra.mxu0 0.0
  %6658 = vmatprep.subr.mxu0 0.0
  %6659 = vmatpush1.msra.mxu0 0.0
  %6660 = vmatprep.subr.mxu0 0.0
  %6661 = vmatpush1.msra.mxu0 %v6643
  %6662 = vmatprep.subr.mxu0 0.0
  %6663 = vmatpush1.msra.mxu0 %v6642
  %6664 = vmatprep.subr.mxu0 0.0
  %6665 = vmatpush1.msra.mxu0 %v6641
  %6666 = vmatprep.subr.mxu0 0.0
  %6667 = vmatpush1.msra.mxu0 %v6640
  %6668 = vmatprep.subr.mxu0 0.0
  %6669 = vmatpush1.msra.mxu0 %v6639
  %6670 = vmatprep.subr.mxu0 0.0
  %6671 = vmatpush1.msra.mxu0 %v6638
  %6672 = vmatprep.subr.mxu0 0.0
  %6673 = vmatpush1.msra.mxu0 %v6637
  %6674 = vmatprep.subr.mxu0 0.0
  %6675 = vmatpush1.msra.mxu0 %v6636
  %6676 = vmatprep.subr.mxu0 0.0
  %6677 = vmatpush2.msra.mxu0 0.0
  %6678 = vmatprep.subr.mxu0 0.0
  %6679 = vmatpush2.msra.mxu0 0.0
  %6680 = vmatprep.subr.mxu0 0.0
  %6681 = vmatpush2.msra.mxu0 0.0
  %6682 = vmatprep.subr.mxu0 0.0
  %6683 = vmatpush2.msra.mxu0 0.0
  %6684 = vmatprep.subr.mxu0 0.0
  %6685 = vmatpush2.msra.mxu0 0.0
  %6686 = vmatprep.subr.mxu0 0.0
  %6687 = vmatpush2.msra.mxu0 0.0
  %6688 = vmatprep.subr.mxu0 0.0
  %6689 = vmatpush2.msra.mxu0 0.0
  %6690 = vmatprep.subr.mxu0 0.0
  %6691 = vmatpush2.msra.mxu0 0.0
  %6692 = vmatprep.subr.mxu0 0.0
  %6693 = vmatpush2.msra.mxu0 0.0
  %6694 = vmatprep.subr.mxu0 0.0
  %6695 = vmatpush2.msra.mxu0 0.0
  %6696 = vmatprep.subr.mxu0 0.0
  %6697 = vmatpush2.msra.mxu0 0.0
  %6698 = vmatprep.subr.mxu0 0.0
  %6699 = vmatpush2.msra.mxu0 0.0
  %6700 = vmatprep.subr.mxu0 0.0
  %6701 = vmatpush2.msra.mxu0 0.0
  %6702 = vmatprep.subr.mxu0 0.0
  %6703 = vmatpush2.msra.mxu0 0.0
  %6704 = vmatprep.subr.mxu0 0.0
  %6705 = vmatpush2.msra.mxu0 0.0
  %6706 = vmatprep.subr.mxu0 0.0
  %6707 = vmatpush2.msra.mxu0 0.0
  %6708 = vmatprep.mubr.f32.mxu0 0.0
  %6709 = vmatmul.mubr.f32.gmra.mxu0 %v2832
  %v6710 = vpop.f32.mrf.mxu0
  %v6711 = vadd.f32 %v2794, %v6710
  %v6712 = vpop.f32.mrf.mxu0
  %6713 = vmatprep.mubr.f32.mxu0 0.0
  %6714 = vmatmul.mubr.f32.gmra.mxu0 %v2835
  %v6715 = vpop.f32.mrf.mxu0
  %v6716 = vadd.f32 %v2799, %v6715
  %v6717 = vpop.f32.mrf.mxu0
  %6718 = vmatprep.mubr.f32.mxu0 0.0
  %6719 = vmatmul.mubr.f32.gmra.mxu0 %v2838
  %v6720 = vpop.f32.mrf.mxu0
  %v6721 = vadd.f32 %v2804, %v6720
  %v6722 = vpop.f32.mrf.mxu0
  %6723 = vmatprep.mubr.f32.mxu0 0.0
  %6724 = vmatmul.mubr.f32.gmra.mxu0 %v2841
  %v6725 = vpop.f32.mrf.mxu0
  %v6726 = vadd.f32 %v2809, %v6725
  %v6727 = vpop.f32.mrf.mxu0
  %6728 = vmatprep.mubr.f32.mxu0 0.0
  %6729 = vmatmul.mubr.f32.gmra.mxu0 %v2844
  %v6730 = vpop.f32.mrf.mxu0
  %v6731 = vadd.f32 %v2814, %v6730
  %v6732 = vpop.f32.mrf.mxu0
  %6733 = vmatprep.mubr.f32.mxu0 0.0
  %6734 = vmatmul.mubr.f32.gmra.mxu0 %v2847
  %v6735 = vpop.f32.mrf.mxu0
  %v6736 = vadd.f32 %v2819, %v6735
  %v6737 = vpop.f32.mrf.mxu0
  %6738 = vmatprep.mubr.f32.mxu0 0.0
  %6739 = vmatmul.mubr.f32.gmra.mxu0 %v2850
  %v6740 = vpop.f32.mrf.mxu0
  %v6741 = vadd.f32 %v2824, %v6740
  %v6742 = vpop.f32.mrf.mxu0
  %6743 = vmatprep.mubr.f32.mxu0 0.0
  %6744 = vmatmul.mubr.f32.gmra.mxu0 %v2853
  %v6745 = vpop.f32.mrf.mxu0
  %v6746 = vadd.f32 %v2829, %v6745
  %v6747 = vpop.f32.mrf.mxu0
  %6748 = vdwg.mxu0
  %v6749 = vtanh.pop %v6711
  %v6750 = vtanh.pop %v6716
  %v6751 = vtanh.pop %v6721
  %v6752 = vtanh.pop %v6726
  %v6753 = vtanh.pop %v6731
  %v6754 = vtanh.pop %v6736
  %v6755 = vtanh.pop %v6741
  %v6756 = vtanh.pop %v6746
  %6757 = vmatprep.subr.mxu0 0.0
  %6758 = vmatpush1.msra.mxu0 0.0
  %6759 = vmatprep.subr.mxu0 0.0
  %6760 = vmatpush1.msra.mxu0 0.0
  %6761 = vmatprep.subr.mxu0 0.0
  %6762 = vmatpush1.msra.mxu0 0.0
  %6763 = vmatprep.subr.mxu0 0.0
  %6764 = vmatpush1.msra.mxu0 0.0
  %6765 = vmatprep.subr.mxu0 0.0
  %6766 = vmatpush1.msra.mxu0 0.0
  %6767 = vmatprep.subr.mxu0 0.0
  %6768 = vmatpush1.msra.mxu0 0.0
  %6769 = vmatprep.subr.mxu0 0.0
  %6770 = vmatpush1.msra.mxu0 0.0
  %6771 = vmatprep.subr.mxu0 0.0
  %6772 = vmatpush1.msra.mxu0 0.0
  %6773 = vmatprep.subr.mxu0 0.0
  %6774 = vmatpush1.msra.mxu0 %v6756
  %6775 = vmatprep.subr.mxu0 0.0
  %6776 = vmatpush1.msra.mxu0 %v6755
  %6777 = vmatprep.subr.mxu0 0.0
  %6778 = vmatpush1.msra.mxu0 %v6754
  %6779 = vmatprep.subr.mxu0 0.0
  %6780 = vmatpush1.msra.mxu0 %v6753
  %6781 = vmatprep.subr.mxu0 0.0
  %6782 = vmatpush1.msra.mxu0 %v6752
  %6783 = vmatprep.subr.mxu0 0.0
  %6784 = vmatpush1.msra.mxu0 %v6751
  %6785 = vmatprep.subr.mxu0 0.0
  %6786 = vmatpush1.msra.mxu0 %v6750
  %6787 = vmatprep.subr.mxu0 0.0
  %6788 = vmatpush1.msra.mxu0 %v6749
  %6789 = vmatprep.subr.mxu0 0.0
  %6790 = vmatpush2.msra.mxu0 0.0
  %6791 = vmatprep.subr.mxu0 0.0
  %6792 = vmatpush2.msra.mxu0 0.0
  %6793 = vmatprep.subr.mxu0 0.0
  %6794 = vmatpush2.msra.mxu0 0.0
  %6795 = vmatprep.subr.mxu0 0.0
  %6796 = vmatpush2.msra.mxu0 0.0
  %6797 = vmatprep.subr.mxu0 0.0
  %6798 = vmatpush2.msra.mxu0 0.0
  %6799 = vmatprep.subr.mxu0 0.0
  %6800 = vmatpush2.msra.mxu0 0.0
  %6801 = vmatprep.subr.mxu0 0.0
  %6802 = vmatpush2.msra.mxu0 0.0
  %6803 = vmatprep.subr.mxu0 0.0
  %6804 = vmatpush2.msra.mxu0 0.0
  %6805 = vmatprep.subr.mxu0 0.0
  %6806 = vmatpush2.msra.mxu0 0.0
  %6807 = vmatprep.subr.mxu0 0.0
  %6808 = vmatpush2.msra.mxu0 0.0
  %6809 = vmatprep.subr.mxu0 0.0
  %6810 = vmatpush2.msra.mxu0 0.0
  %6811 = vmatprep.subr.mxu0 0.0
  %6812 = vmatpush2.msra.mxu0 0.0
  %6813 = vmatprep.subr.mxu0 0.0
  %6814 = vmatpush2.msra.mxu0 0.0
  %6815 = vmatprep.subr.mxu0 0.0
  %6816 = vmatpush2.msra.mxu0 0.0
  %6817 = vmatprep.subr.mxu0 0.0
  %6818 = vmatpush2.msra.mxu0 0.0
  %6819 = vmatprep.subr.mxu0 0.0
  %6820 = vmatpush2.msra.mxu0 0.0
  %6821 = vmatprep.mubr.f32.mxu0 0.0
  %6822 = vmatmul.mubr.f32.gmra.mxu0 %v2969
  %v6823 = vpop.f32.mrf.mxu0
  %v6824 = vadd.f32 %v2540, %v6823
  %v6825 = vpop.f32.mrf.mxu0
  %6826 = vmatprep.mubr.f32.mxu0 0.0
  %6827 = vmatmul.mubr.f32.gmra.mxu0 %v2972
  %v6828 = vpop.f32.mrf.mxu0
  %v6829 = vadd.f32 %v2541, %v6828
  %v6830 = vpop.f32.mrf.mxu0
  %6831 = vmatprep.mubr.f32.mxu0 0.0
  %6832 = vmatmul.mubr.f32.gmra.mxu0 %v2975
  %v6833 = vpop.f32.mrf.mxu0
  %v6834 = vadd.f32 %v2542, %v6833
  %v6835 = vpop.f32.mrf.mxu0
  %6836 = vmatprep.mubr.f32.mxu0 0.0
  %6837 = vmatmul.mubr.f32.gmra.mxu0 %v2978
  %v6838 = vpop.f32.mrf.mxu0
  %v6839 = vadd.f32 %v2543, %v6838
  %v6840 = vpop.f32.mrf.mxu0
  %6841 = vmatprep.mubr.f32.mxu0 0.0
  %6842 = vmatmul.mubr.f32.gmra.mxu0 %v2981
  %v6843 = vpop.f32.mrf.mxu0
  %v6844 = vadd.f32 %v2544, %v6843
  %v6845 = vpop.f32.mrf.mxu0
  %6846 = vmatprep.mubr.f32.mxu0 0.0
  %6847 = vmatmul.mubr.f32.gmra.mxu0 %v2984
  %v6848 = vpop.f32.mrf.mxu0
  %v6849 = vadd.f32 %v2545, %v6848
  %v6850 = vpop.f32.mrf.mxu0
  %6851 = vmatprep.mubr.f32.mxu0 0.0
  %6852 = vmatmul.mubr.f32.gmra.mxu0 %v2987
  %v6853 = vpop.f32.mrf.mxu0
  %v6854 = vadd.f32 %v2546, %v6853
  %v6855 = vpop.f32.mrf.mxu0
  %6856 = vmatprep.mubr.f32.mxu0 0.0
  %6857 = vmatmul.mubr.f32.gmra.mxu0 %v2990
  %v6858 = vpop.f32.mrf.mxu0
  %v6859 = vadd.f32 %v2547, %v6858
  %v6860 = vpop.f32.mrf.mxu0
  %6861 = vdwg.mxu0
  %v6862 = vtanh.pop %v6824
  %v6863 = vtanh.pop %v6829
  %v6864 = vtanh.pop %v6834
  %v6865 = vtanh.pop %v6839
  %v6866 = vtanh.pop %v6844
  %v6867 = vtanh.pop %v6849
  %v6868 = vtanh.pop %v6854
  %v6869 = vtanh.pop %v6859
  %6870 = vmatprep.subr.mxu0 0.0
  %6871 = vmatpush1.msra.mxu0 0.0
  %6872 = vmatprep.subr.mxu0 0.0
  %6873 = vmatpush1.msra.mxu0 0.0
  %6874 = vmatprep.subr.mxu0 0.0
  %6875 = vmatpush1.msra.mxu0 0.0
  %6876 = vmatprep.subr.mxu0 0.0
  %6877 = vmatpush1.msra.mxu0 0.0
  %6878 = vmatprep.subr.mxu0 0.0
  %6879 = vmatpush1.msra.mxu0 0.0
  %6880 = vmatprep.subr.mxu0 0.0
  %6881 = vmatpush1.msra.mxu0 0.0
  %6882 = vmatprep.subr.mxu0 0.0
  %6883 = vmatpush1.msra.mxu0 0.0
  %6884 = vmatprep.subr.mxu0 0.0
  %6885 = vmatpush1.msra.mxu0 0.0
  %6886 = vmatprep.subr.mxu0 0.0
  %6887 = vmatpush1.msra.mxu0 %v6869
  %6888 = vmatprep.subr.mxu0 0.0
  %6889 = vmatpush1.msra.mxu0 %v6868
  %6890 = vmatprep.subr.mxu0 0.0
  %6891 = vmatpush1.msra.mxu0 %v6867
  %6892 = vmatprep.subr.mxu0 0.0
  %6893 = vmatpush1.msra.mxu0 %v6866
  %6894 = vmatprep.subr.mxu0 0.0
  %6895 = vmatpush1.msra.mxu0 %v6865
  %6896 = vmatprep.subr.mxu0 0.0
  %6897 = vmatpush1.msra.mxu0 %v6864
  %6898 = vmatprep.subr.mxu0 0.0
  %6899 = vmatpush1.msra.mxu0 %v6863
  %6900 = vmatprep.subr.mxu0 0.0
  %6901 = vmatpush1.msra.mxu0 %v6862
  %6902 = vmatprep.subr.mxu0 0.0
  %6903 = vmatpush2.msra.mxu0 0.0
  %6904 = vmatprep.subr.mxu0 0.0
  %6905 = vmatpush2.msra.mxu0 0.0
  %6906 = vmatprep.subr.mxu0 0.0
  %6907 = vmatpush2.msra.mxu0 0.0
  %6908 = vmatprep.subr.mxu0 0.0
  %6909 = vmatpush2.msra.mxu0 0.0
  %6910 = vmatprep.subr.mxu0 0.0
  %6911 = vmatpush2.msra.mxu0 0.0
  %6912 = vmatprep.subr.mxu0 0.0
  %6913 = vmatpush2.msra.mxu0 0.0
  %6914 = vmatprep.subr.mxu0 0.0
  %6915 = vmatpush2.msra.mxu0 0.0
  %6916 = vmatprep.subr.mxu0 0.0
  %6917 = vmatpush2.msra.mxu0 0.0
  %6918 = vmatprep.subr.mxu0 0.0
  %6919 = vmatpush2.msra.mxu0 0.0
  %6920 = vmatprep.subr.mxu0 0.0
  %6921 = vmatpush2.msra.mxu0 0.0
  %6922 = vmatprep.subr.mxu0 0.0
  %6923 = vmatpush2.msra.mxu0 0.0
  %6924 = vmatprep.subr.mxu0 0.0
  %6925 = vmatpush2.msra.mxu0 0.0
  %6926 = vmatprep.subr.mxu0 0.0
  %6927 = vmatpush2.msra.mxu0 0.0
  %6928 = vmatprep.subr.mxu0 0.0
  %6929 = vmatpush2.msra.mxu0 0.0
  %6930 = vmatprep.subr.mxu0 0.0
  %6931 = vmatpush2.msra.mxu0 0.0
  %6932 = vmatprep.subr.mxu0 0.0
  %6933 = vmatpush2.msra.mxu0 0.0
  %6934 = vmatprep.mubr.f32.mxu0 0.0
  %6935 = vmatmul.mubr.f32.gmra.mxu0 %v3115
  %v6936 = vpop.f32.mrf.mxu0
  %v6937 = vadd.f32 %v3113, %v6936
  %v6938 = vpop.f32.mrf.mxu0
  %6939 = vdwg.mxu0
  %6940 = vmatprep.subr.mxu0 0.0
  %6941 = vmatpush1.msra.mxu0 0.0
  %6942 = vmatprep.subr.mxu0 0.0
  %6943 = vmatpush1.msra.mxu0 0.0
  %6944 = vmatprep.subr.mxu0 0.0
  %6945 = vmatpush1.msra.mxu0 0.0
  %6946 = vmatprep.subr.mxu0 0.0
  %6947 = vmatpush1.msra.mxu0 0.0
  %6948 = vmatprep.subr.mxu0 0.0
  %6949 = vmatpush1.msra.mxu0 0.0
  %6950 = vmatprep.subr.mxu0 0.0
  %6951 = vmatpush1.msra.mxu0 0.0
  %6952 = vmatprep.subr.mxu0 0.0
  %6953 = vmatpush1.msra.mxu0 0.0
  %6954 = vmatprep.subr.mxu0 0.0
  %6955 = vmatpush1.msra.mxu0 0.0
  %6956 = vmatprep.subr.mxu0 0.0
  %6957 = vmatpush1.msra.mxu0 0.0
  %6958 = vmatprep.subr.mxu0 0.0
  %6959 = vmatpush1.msra.mxu0 0.0
  %6960 = vmatprep.subr.mxu0 0.0
  %6961 = vmatpush1.msra.mxu0 0.0
  %6962 = vmatprep.subr.mxu0 0.0
  %6963 = vmatpush1.msra.mxu0 0.0
  %6964 = vmatprep.subr.mxu0 0.0
  %6965 = vmatpush1.msra.mxu0 0.0
  %6966 = vmatprep.subr.mxu0 0.0
  %6967 = vmatpush1.msra.mxu0 0.0
  %6968 = vmatprep.subr.mxu0 0.0
  %6969 = vmatpush1.msra.mxu0 %v2601
  %6970 = vmatprep.subr.mxu0 0.0
  %6971 = vmatpush1.msra.mxu0 %v2600
  %6972 = vmatprep.subr.mxu0 0.0
  %6973 = vmatpush2.msra.mxu0 0.0
  %6974 = vmatprep.subr.mxu0 0.0
  %6975 = vmatpush2.msra.mxu0 0.0
  %6976 = vmatprep.subr.mxu0 0.0
  %6977 = vmatpush2.msra.mxu0 0.0
  %6978 = vmatprep.subr.mxu0 0.0
  %6979 = vmatpush2.msra.mxu0 0.0
  %6980 = vmatprep.subr.mxu0 0.0
  %6981 = vmatpush2.msra.mxu0 0.0
  %6982 = vmatprep.subr.mxu0 0.0
  %6983 = vmatpush2.msra.mxu0 0.0
  %6984 = vmatprep.subr.mxu0 0.0
  %6985 = vmatpush2.msra.mxu0 0.0
  %6986 = vmatprep.subr.mxu0 0.0
  %6987 = vmatpush2.msra.mxu0 0.0
  %6988 = vmatprep.subr.mxu0 0.0
  %6989 = vmatpush2.msra.mxu0 0.0
  %6990 = vmatprep.subr.mxu0 0.0
  %6991 = vmatpush2.msra.mxu0 0.0
  %6992 = vmatprep.subr.mxu0 0.0
  %6993 = vmatpush2.msra.mxu0 0.0
  %6994 = vmatprep.subr.mxu0 0.0
  %6995 = vmatpush2.msra.mxu0 0.0
  %6996 = vmatprep.subr.mxu0 0.0
  %6997 = vmatpush2.msra.mxu0 0.0
  %6998 = vmatprep.subr.mxu0 0.0
  %6999 = vmatpush2.msra.mxu0 0.0
  %7000 = vmatprep.subr.mxu0 0.0
  %7001 = vmatpush2.msra.mxu0 0.0
  %7002 = vmatprep.subr.mxu0 0.0
  %7003 = vmatpush2.msra.mxu0 0.0
  %7004 = vmatprep.mubr.f32.mxu0 0.0
  %7005 = vmatmul.mubr.f32.gmra.mxu0 %v2647
  %v7006 = vpop.f32.mrf.mxu0
  %v7007 = vadd.f32 0.0, %v7006
  %v7008 = vpop.f32.mrf.mxu0
  %7009 = vmatprep.mubr.f32.mxu0 0.0
  %7010 = vmatmul.mubr.f32.gmra.mxu0 %v2650
  %v7011 = vpop.f32.mrf.mxu0
  %v7012 = vadd.f32 0.0, %v7011
  %v7013 = vpop.f32.mrf.mxu0
  %7014 = vmatprep.mubr.f32.mxu0 0.0
  %7015 = vmatmul.mubr.f32.gmra.mxu0 %v2653
  %v7016 = vpop.f32.mrf.mxu0
  %v7017 = vadd.f32 0.0, %v7016
  %v7018 = vpop.f32.mrf.mxu0
  %7019 = vmatprep.mubr.f32.mxu0 0.0
  %7020 = vmatmul.mubr.f32.gmra.mxu0 %v2656
  %v7021 = vpop.f32.mrf.mxu0
  %v7022 = vadd.f32 0.0, %v7021
  %v7023 = vpop.f32.mrf.mxu0
  %7024 = vmatprep.mubr.f32.mxu0 0.0
  %7025 = vmatmul.mubr.f32.gmra.mxu0 %v2659
  %v7026 = vpop.f32.mrf.mxu0
  %v7027 = vadd.f32 0.0, %v7026
  %v7028 = vpop.f32.mrf.mxu0
  %7029 = vmatprep.mubr.f32.mxu0 0.0
  %7030 = vmatmul.mubr.f32.gmra.mxu0 %v2662
  %v7031 = vpop.f32.mrf.mxu0
  %v7032 = vadd.f32 0.0, %v7031
  %v7033 = vpop.f32.mrf.mxu0
  %7034 = vmatprep.mubr.f32.mxu0 0.0
  %7035 = vmatmul.mubr.f32.gmra.mxu0 %v2665
  %v7036 = vpop.f32.mrf.mxu0
  %v7037 = vadd.f32 0.0, %v7036
  %v7038 = vpop.f32.mrf.mxu0
  %7039 = vmatprep.mubr.f32.mxu0 0.0
  %7040 = vmatmul.mubr.f32.gmra.mxu0 %v2668
  %v7041 = vpop.f32.mrf.mxu0
  %v7042 = vadd.f32 0.0, %v7041
  %v7043 = vpop.f32.mrf.mxu0
  %7044 = vdwg.mxu0
  %v7045 = vadd.f32 %v2532, %v7007
  %v7046 = vadd.f32 %v2533, %v7012
  %v7047 = vadd.f32 %v2534, %v7017
  %v7048 = vadd.f32 %v2535, %v7022
  %v7049 = vadd.f32 %v2536, %v7027
  %v7050 = vadd.f32 %v2537, %v7032
  %v7051 = vadd.f32 %v2538, %v7037
  %v7052 = vadd.f32 %v2539, %v7042
  %v7053 = vtanh.pop %v7045
  %v7054 = vtanh.pop %v7046
  %v7055 = vtanh.pop %v7047
  %v7056 = vtanh.pop %v7048
  %v7057 = vtanh.pop %v7049
  %v7058 = vtanh.pop %v7050
  %v7059 = vtanh.pop %v7051
  %v7060 = vtanh.pop %v7052
  %7061 = vmatprep.subr.mxu0 0.0
  %7062 = vmatpush1.msra.mxu0 0.0
  %7063 = vmatprep.subr.mxu0 0.0
  %7064 = vmatpush1.msra.mxu0 0.0
  %7065 = vmatprep.subr.mxu0 0.0
  %7066 = vmatpush1.msra.mxu0 0.0
  %7067 = vmatprep.subr.mxu0 0.0
  %7068 = vmatpush1.msra.mxu0 0.0
  %7069 = vmatprep.subr.mxu0 0.0
  %7070 = vmatpush1.msra.mxu0 0.0
  %7071 = vmatprep.subr.mxu0 0.0
  %7072 = vmatpush1.msra.mxu0 0.0
  %7073 = vmatprep.subr.mxu0 0.0
  %7074 = vmatpush1.msra.mxu0 0.0
  %7075 = vmatprep.subr.mxu0 0.0
  %7076 = vmatpush1.msra.mxu0 0.0
  %7077 = vmatprep.subr.mxu0 0.0
  %7078 = vmatpush1.msra.mxu0 %v7060
  %7079 = vmatprep.subr.mxu0 0.0
  %7080 = vmatpush1.msra.mxu0 %v7059
  %7081 = vmatprep.subr.mxu0 0.0
  %7082 = vmatpush1.msra.mxu0 %v7058
  %7083 = vmatprep.subr.mxu0 0.0
  %7084 = vmatpush1.msra.mxu0 %v7057
  %7085 = vmatprep.subr.mxu0 0.0
  %7086 = vmatpush1.msra.mxu0 %v7056
  %7087 = vmatprep.subr.mxu0 0.0
  %7088 = vmatpush1.msra.mxu0 %v7055
  %7089 = vmatprep.subr.mxu0 0.0
  %7090 = vmatpush1.msra.mxu0 %v7054
  %7091 = vmatprep.subr.mxu0 0.0
  %7092 = vmatpush1.msra.mxu0 %v7053
  %7093 = vmatprep.subr.mxu0 0.0
  %7094 = vmatpush2.msra.mxu0 0.0
  %7095 = vmatprep.subr.mxu0 0.0
  %7096 = vmatpush2.msra.mxu0 0.0
  %7097 = vmatprep.subr.mxu0 0.0
  %7098 = vmatpush2.msra.mxu0 0.0
  %7099 = vmatprep.subr.mxu0 0.0
  %7100 = vmatpush2.msra.mxu0 0.0
  %7101 = vmatprep.subr.mxu0 0.0
  %7102 = vmatpush2.msra.mxu0 0.0
  %7103 = vmatprep.subr.mxu0 0.0
  %7104 = vmatpush2.msra.mxu0 0.0
  %7105 = vmatprep.subr.mxu0 0.0
  %7106 = vmatpush2.msra.mxu0 0.0
  %7107 = vmatprep.subr.mxu0 0.0
  %7108 = vmatpush2.msra.mxu0 0.0
  %7109 = vmatprep.subr.mxu0 0.0
  %7110 = vmatpush2.msra.mxu0 0.0
  %7111 = vmatprep.subr.mxu0 0.0
  %7112 = vmatpush2.msra.mxu0 0.0
  %7113 = vmatprep.subr.mxu0 0.0
  %7114 = vmatpush2.msra.mxu0 0.0
  %7115 = vmatprep.subr.mxu0 0.0
  %7116 = vmatpush2.msra.mxu0 0.0
  %7117 = vmatprep.subr.mxu0 0.0
  %7118 = vmatpush2.msra.mxu0 0.0
  %7119 = vmatprep.subr.mxu0 0.0
  %7120 = vmatpush2.msra.mxu0 0.0
  %7121 = vmatprep.subr.mxu0 0.0
  %7122 = vmatpush2.msra.mxu0 0.0
  %7123 = vmatprep.subr.mxu0 0.0
  %7124 = vmatpush2.msra.mxu0 0.0
  %7125 = vmatprep.mubr.f32.mxu0 0.0
  %7126 = vmatmul.mubr.f32.gmra.mxu0 %v2832
  %v7127 = vpop.f32.mrf.mxu0
  %v7128 = vadd.f32 %v2794, %v7127
  %v7129 = vpop.f32.mrf.mxu0
  %7130 = vmatprep.mubr.f32.mxu0 0.0
  %7131 = vmatmul.mubr.f32.gmra.mxu0 %v2835
  %v7132 = vpop.f32.mrf.mxu0
  %v7133 = vadd.f32 %v2799, %v7132
  %v7134 = vpop.f32.mrf.mxu0
  %7135 = vmatprep.mubr.f32.mxu0 0.0
  %7136 = vmatmul.mubr.f32.gmra.mxu0 %v2838
  %v7137 = vpop.f32.mrf.mxu0
  %v7138 = vadd.f32 %v2804, %v7137
  %v7139 = vpop.f32.mrf.mxu0
  %7140 = vmatprep.mubr.f32.mxu0 0.0
  %7141 = vmatmul.mubr.f32.gmra.mxu0 %v2841
  %v7142 = vpop.f32.mrf.mxu0
  %v7143 = vadd.f32 %v2809, %v7142
  %v7144 = vpop.f32.mrf.mxu0
  %7145 = vmatprep.mubr.f32.mxu0 0.0
  %7146 = vmatmul.mubr.f32.gmra.mxu0 %v2844
  %v7147 = vpop.f32.mrf.mxu0
  %v7148 = vadd.f32 %v2814, %v7147
  %v7149 = vpop.f32.mrf.mxu0
  %7150 = vmatprep.mubr.f32.mxu0 0.0
  %7151 = vmatmul.mubr.f32.gmra.mxu0 %v2847
  %v7152 = vpop.f32.mrf.mxu0
  %v7153 = vadd.f32 %v2819, %v7152
  %v7154 = vpop.f32.mrf.mxu0
  %7155 = vmatprep.mubr.f32.mxu0 0.0
  %7156 = vmatmul.mubr.f32.gmra.mxu0 %v2850
  %v7157 = vpop.f32.mrf.mxu0
  %v7158 = vadd.f32 %v2824, %v7157
  %v7159 = vpop.f32.mrf.mxu0
  %7160 = vmatprep.mubr.f32.mxu0 0.0
  %7161 = vmatmul.mubr.f32.gmra.mxu0 %v2853
  %v7162 = vpop.f32.mrf.mxu0
  %v7163 = vadd.f32 %v2829, %v7162
  %v7164 = vpop.f32.mrf.mxu0
  %7165 = vdwg.mxu0
  %v7166 = vtanh.pop %v7128
  %v7167 = vtanh.pop %v7133
  %v7168 = vtanh.pop %v7138
  %v7169 = vtanh.pop %v7143
  %v7170 = vtanh.pop %v7148
  %v7171 = vtanh.pop %v7153
  %v7172 = vtanh.pop %v7158
  %v7173 = vtanh.pop %v7163
  %7174 = vmatprep.subr.mxu0 0.0
  %7175 = vmatpush1.msra.mxu0 0.0
  %7176 = vmatprep.subr.mxu0 0.0
  %7177 = vmatpush1.msra.mxu0 0.0
  %7178 = vmatprep.subr.mxu0 0.0
  %7179 = vmatpush1.msra.mxu0 0.0
  %7180 = vmatprep.subr.mxu0 0.0
  %7181 = vmatpush1.msra.mxu0 0.0
  %7182 = vmatprep.subr.mxu0 0.0
  %7183 = vmatpush1.msra.mxu0 0.0
  %7184 = vmatprep.subr.mxu0 0.0
  %7185 = vmatpush1.msra.mxu0 0.0
  %7186 = vmatprep.subr.mxu0 0.0
  %7187 = vmatpush1.msra.mxu0 0.0
  %7188 = vmatprep.subr.mxu0 0.0
  %7189 = vmatpush1.msra.mxu0 0.0
  %7190 = vmatprep.subr.mxu0 0.0
  %7191 = vmatpush1.msra.mxu0 %v7173
  %7192 = vmatprep.subr.mxu0 0.0
  %7193 = vmatpush1.msra.mxu0 %v7172
  %7194 = vmatprep.subr.mxu0 0.0
  %7195 = vmatpush1.msra.mxu0 %v7171
  %7196 = vmatprep.subr.mxu0 0.0
  %7197 = vmatpush1.msra.mxu0 %v7170
  %7198 = vmatprep.subr.mxu0 0.0
  %7199 = vmatpush1.msra.mxu0 %v7169
  %7200 = vmatprep.subr.mxu0 0.0
  %7201 = vmatpush1.msra.mxu0 %v7168
  %7202 = vmatprep.subr.mxu0 0.0
  %7203 = vmatpush1.msra.mxu0 %v7167
  %7204 = vmatprep.subr.mxu0 0.0
  %7205 = vmatpush1.msra.mxu0 %v7166
  %7206 = vmatprep.subr.mxu0 0.0
  %7207 = vmatpush2.msra.mxu0 0.0
  %7208 = vmatprep.subr.mxu0 0.0
  %7209 = vmatpush2.msra.mxu0 0.0
  %7210 = vmatprep.subr.mxu0 0.0
  %7211 = vmatpush2.msra.mxu0 0.0
  %7212 = vmatprep.subr.mxu0 0.0
  %7213 = vmatpush2.msra.mxu0 0.0
  %7214 = vmatprep.subr.mxu0 0.0
  %7215 = vmatpush2.msra.mxu0 0.0
  %7216 = vmatprep.subr.mxu0 0.0
  %7217 = vmatpush2.msra.mxu0 0.0
  %7218 = vmatprep.subr.mxu0 0.0
  %7219 = vmatpush2.msra.mxu0 0.0
  %7220 = vmatprep.subr.mxu0 0.0
  %7221 = vmatpush2.msra.mxu0 0.0
  %7222 = vmatprep.subr.mxu0 0.0
  %7223 = vmatpush2.msra.mxu0 0.0
  %7224 = vmatprep.subr.mxu0 0.0
  %7225 = vmatpush2.msra.mxu0 0.0
  %7226 = vmatprep.subr.mxu0 0.0
  %7227 = vmatpush2.msra.mxu0 0.0
  %7228 = vmatprep.subr.mxu0 0.0
  %7229 = vmatpush2.msra.mxu0 0.0
  %7230 = vmatprep.subr.mxu0 0.0
  %7231 = vmatpush2.msra.mxu0 0.0
  %7232 = vmatprep.subr.mxu0 0.0
  %7233 = vmatpush2.msra.mxu0 0.0
  %7234 = vmatprep.subr.mxu0 0.0
  %7235 = vmatpush2.msra.mxu0 0.0
  %7236 = vmatprep.subr.mxu0 0.0
  %7237 = vmatpush2.msra.mxu0 0.0
  %7238 = vmatprep.mubr.f32.mxu0 0.0
  %7239 = vmatmul.mubr.f32.gmra.mxu0 %v2969
  %v7240 = vpop.f32.mrf.mxu0
  %v7241 = vadd.f32 %v2540, %v7240
  %v7242 = vpop.f32.mrf.mxu0
  %7243 = vmatprep.mubr.f32.mxu0 0.0
  %7244 = vmatmul.mubr.f32.gmra.mxu0 %v2972
  %v7245 = vpop.f32.mrf.mxu0
  %v7246 = vadd.f32 %v2541, %v7245
  %v7247 = vpop.f32.mrf.mxu0
  %7248 = vmatprep.mubr.f32.mxu0 0.0
  %7249 = vmatmul.mubr.f32.gmra.mxu0 %v2975
  %v7250 = vpop.f32.mrf.mxu0
  %v7251 = vadd.f32 %v2542, %v7250
  %v7252 = vpop.f32.mrf.mxu0
  %7253 = vmatprep.mubr.f32.mxu0 0.0
  %7254 = vmatmul.mubr.f32.gmra.mxu0 %v2978
  %v7255 = vpop.f32.mrf.mxu0
  %v7256 = vadd.f32 %v2543, %v7255
  %v7257 = vpop.f32.mrf.mxu0
  %7258 = vmatprep.mubr.f32.mxu0 0.0
  %7259 = vmatmul.mubr.f32.gmra.mxu0 %v2981
  %v7260 = vpop.f32.mrf.mxu0
  %v7261 = vadd.f32 %v2544, %v7260
  %v7262 = vpop.f32.mrf.mxu0
  %7263 = vmatprep.mubr.f32.mxu0 0.0
  %7264 = vmatmul.mubr.f32.gmra.mxu0 %v2984
  %v7265 = vpop.f32.mrf.mxu0
  %v7266 = vadd.f32 %v2545, %v7265
  %v7267 = vpop.f32.mrf.mxu0
  %7268 = vmatprep.mubr.f32.mxu0 0.0
  %7269 = vmatmul.mubr.f32.gmra.mxu0 %v2987
  %v7270 = vpop.f32.mrf.mxu0
  %v7271 = vadd.f32 %v2546, %v7270
  %v7272 = vpop.f32.mrf.mxu0
  %7273 = vmatprep.mubr.f32.mxu0 0.0
  %7274 = vmatmul.mubr.f32.gmra.mxu0 %v2990
  %v7275 = vpop.f32.mrf.mxu0
  %v7276 = vadd.f32 %v2547, %v7275
  %v7277 = vpop.f32.mrf.mxu0
  %7278 = vdwg.mxu0
  %v7279 = vtanh.pop %v7241
  %v7280 = vtanh.pop %v7246
  %v7281 = vtanh.pop %v7251
  %v7282 = vtanh.pop %v7256
  %v7283 = vtanh.pop %v7261
  %v7284 = vtanh.pop %v7266
  %v7285 = vtanh.pop %v7271
  %v7286 = vtanh.pop %v7276
  %7287 = vmatprep.subr.mxu0 0.0
  %7288 = vmatpush1.msra.mxu0 0.0
  %7289 = vmatprep.subr.mxu0 0.0
  %7290 = vmatpush1.msra.mxu0 0.0
  %7291 = vmatprep.subr.mxu0 0.0
  %7292 = vmatpush1.msra.mxu0 0.0
  %7293 = vmatprep.subr.mxu0 0.0
  %7294 = vmatpush1.msra.mxu0 0.0
  %7295 = vmatprep.subr.mxu0 0.0
  %7296 = vmatpush1.msra.mxu0 0.0
  %7297 = vmatprep.subr.mxu0 0.0
  %7298 = vmatpush1.msra.mxu0 0.0
  %7299 = vmatprep.subr.mxu0 0.0
  %7300 = vmatpush1.msra.mxu0 0.0
  %7301 = vmatprep.subr.mxu0 0.0
  %7302 = vmatpush1.msra.mxu0 0.0
  %7303 = vmatprep.subr.mxu0 0.0
  %7304 = vmatpush1.msra.mxu0 %v7286
  %7305 = vmatprep.subr.mxu0 0.0
  %7306 = vmatpush1.msra.mxu0 %v7285
  %7307 = vmatprep.subr.mxu0 0.0
  %7308 = vmatpush1.msra.mxu0 %v7284
  %7309 = vmatprep.subr.mxu0 0.0
  %7310 = vmatpush1.msra.mxu0 %v7283
  %7311 = vmatprep.subr.mxu0 0.0
  %7312 = vmatpush1.msra.mxu0 %v7282
  %7313 = vmatprep.subr.mxu0 0.0
  %7314 = vmatpush1.msra.mxu0 %v7281
  %7315 = vmatprep.subr.mxu0 0.0
  %7316 = vmatpush1.msra.mxu0 %v7280
  %7317 = vmatprep.subr.mxu0 0.0
  %7318 = vmatpush1.msra.mxu0 %v7279
  %7319 = vmatprep.subr.mxu0 0.0
  %7320 = vmatpush2.msra.mxu0 0.0
  %7321 = vmatprep.subr.mxu0 0.0
  %7322 = vmatpush2.msra.mxu0 0.0
  %7323 = vmatprep.subr.mxu0 0.0
  %7324 = vmatpush2.msra.mxu0 0.0
  %7325 = vmatprep.subr.mxu0 0.0
  %7326 = vmatpush2.msra.mxu0 0.0
  %7327 = vmatprep.subr.mxu0 0.0
  %7328 = vmatpush2.msra.mxu0 0.0
  %7329 = vmatprep.subr.mxu0 0.0
  %7330 = vmatpush2.msra.mxu0 0.0
  %7331 = vmatprep.subr.mxu0 0.0
  %7332 = vmatpush2.msra.mxu0 0.0
  %7333 = vmatprep.subr.mxu0 0.0
  %7334 = vmatpush2.msra.mxu0 0.0
  %7335 = vmatprep.subr.mxu0 0.0
  %7336 = vmatpush2.msra.mxu0 0.0
  %7337 = vmatprep.subr.mxu0 0.0
  %7338 = vmatpush2.msra.mxu0 0.0
  %7339 = vmatprep.subr.mxu0 0.0
  %7340 = vmatpush2.msra.mxu0 0.0
  %7341 = vmatprep.subr.mxu0 0.0
  %7342 = vmatpush2.msra.mxu0 0.0
  %7343 = vmatprep.subr.mxu0 0.0
  %7344 = vmatpush2.msra.mxu0 0.0
  %7345 = vmatprep.subr.mxu0 0.0
  %7346 = vmatpush2.msra.mxu0 0.0
  %7347 = vmatprep.subr.mxu0 0.0
  %7348 = vmatpush2.msra.mxu0 0.0
  %7349 = vmatprep.subr.mxu0 0.0
  %7350 = vmatpush2.msra.mxu0 0.0
  %7351 = vmatprep.mubr.f32.mxu0 0.0
  %7352 = vmatmul.mubr.f32.gmra.mxu0 %v3115
  %v7353 = vpop.f32.mrf.mxu0
  %v7354 = vadd.f32 %v3113, %v7353
  %v7355 = vpop.f32.mrf.mxu0
  %7356 = vdwg.mxu0
  %7357 = vmatprep.subr.mxu0 0.0
  %7358 = vmatpush1.msra.mxu0 0.0
  %7359 = vmatprep.subr.mxu0 0.0
  %7360 = vmatpush1.msra.mxu0 0.0
  %7361 = vmatprep.subr.mxu0 0.0
  %7362 = vmatpush1.msra.mxu0 0.0
  %7363 = vmatprep.subr.mxu0 0.0
  %7364 = vmatpush1.msra.mxu0 0.0
  %7365 = vmatprep.subr.mxu0 0.0
  %7366 = vmatpush1.msra.mxu0 0.0
  %7367 = vmatprep.subr.mxu0 0.0
  %7368 = vmatpush1.msra.mxu0 0.0
  %7369 = vmatprep.subr.mxu0 0.0
  %7370 = vmatpush1.msra.mxu0 0.0
  %7371 = vmatprep.subr.mxu0 0.0
  %7372 = vmatpush1.msra.mxu0 0.0
  %7373 = vmatprep.subr.mxu0 0.0
  %7374 = vmatpush1.msra.mxu0 0.0
  %7375 = vmatprep.subr.mxu0 0.0
  %7376 = vmatpush1.msra.mxu0 0.0
  %7377 = vmatprep.subr.mxu0 0.0
  %7378 = vmatpush1.msra.mxu0 0.0
  %7379 = vmatprep.subr.mxu0 0.0
  %7380 = vmatpush1.msra.mxu0 0.0
  %7381 = vmatprep.subr.mxu0 0.0
  %7382 = vmatpush1.msra.mxu0 0.0
  %7383 = vmatprep.subr.mxu0 0.0
  %7384 = vmatpush1.msra.mxu0 0.0
  %7385 = vmatprep.subr.mxu0 0.0
  %7386 = vmatpush1.msra.mxu0 %v2603
  %7387 = vmatprep.subr.mxu0 0.0
  %7388 = vmatpush1.msra.mxu0 %v2602
  %7389 = vmatprep.subr.mxu0 0.0
  %7390 = vmatpush2.msra.mxu0 0.0
  %7391 = vmatprep.subr.mxu0 0.0
  %7392 = vmatpush2.msra.mxu0 0.0
  %7393 = vmatprep.subr.mxu0 0.0
  %7394 = vmatpush2.msra.mxu0 0.0
  %7395 = vmatprep.subr.mxu0 0.0
  %7396 = vmatpush2.msra.mxu0 0.0
  %7397 = vmatprep.subr.mxu0 0.0
  %7398 = vmatpush2.msra.mxu0 0.0
  %7399 = vmatprep.subr.mxu0 0.0
  %7400 = vmatpush2.msra.mxu0 0.0
  %7401 = vmatprep.subr.mxu0 0.0
  %7402 = vmatpush2.msra.mxu0 0.0
  %7403 = vmatprep.subr.mxu0 0.0
  %7404 = vmatpush2.msra.mxu0 0.0
  %7405 = vmatprep.subr.mxu0 0.0
  %7406 = vmatpush2.msra.mxu0 0.0
  %7407 = vmatprep.subr.mxu0 0.0
  %7408 = vmatpush2.msra.mxu0 0.0
  %7409 = vmatprep.subr.mxu0 0.0
  %7410 = vmatpush2.msra.mxu0 0.0
  %7411 = vmatprep.subr.mxu0 0.0
  %7412 = vmatpush2.msra.mxu0 0.0
  %7413 = vmatprep.subr.mxu0 0.0
  %7414 = vmatpush2.msra.mxu0 0.0
  %7415 = vmatprep.subr.mxu0 0.0
  %7416 = vmatpush2.msra.mxu0 0.0
  %7417 = vmatprep.subr.mxu0 0.0
  %7418 = vmatpush2.msra.mxu0 0.0
  %7419 = vmatprep.subr.mxu0 0.0
  %7420 = vmatpush2.msra.mxu0 0.0
  %7421 = vmatprep.mubr.f32.mxu0 0.0
  %7422 = vmatmul.mubr.f32.gmra.mxu0 %v2647
  %v7423 = vpop.f32.mrf.mxu0
  %v7424 = vadd.f32 0.0, %v7423
  %v7425 = vpop.f32.mrf.mxu0
  %7426 = vmatprep.mubr.f32.mxu0 0.0
  %7427 = vmatmul.mubr.f32.gmra.mxu0 %v2650
  %v7428 = vpop.f32.mrf.mxu0
  %v7429 = vadd.f32 0.0, %v7428
  %v7430 = vpop.f32.mrf.mxu0
  %7431 = vmatprep.mubr.f32.mxu0 0.0
  %7432 = vmatmul.mubr.f32.gmra.mxu0 %v2653
  %v7433 = vpop.f32.mrf.mxu0
  %v7434 = vadd.f32 0.0, %v7433
  %v7435 = vpop.f32.mrf.mxu0
  %7436 = vmatprep.mubr.f32.mxu0 0.0
  %7437 = vmatmul.mubr.f32.gmra.mxu0 %v2656
  %v7438 = vpop.f32.mrf.mxu0
  %v7439 = vadd.f32 0.0, %v7438
  %v7440 = vpop.f32.mrf.mxu0
  %7441 = vmatprep.mubr.f32.mxu0 0.0
  %7442 = vmatmul.mubr.f32.gmra.mxu0 %v2659
  %v7443 = vpop.f32.mrf.mxu0
  %v7444 = vadd.f32 0.0, %v7443
  %v7445 = vpop.f32.mrf.mxu0
  %7446 = vmatprep.mubr.f32.mxu0 0.0
  %7447 = vmatmul.mubr.f32.gmra.mxu0 %v2662
  %v7448 = vpop.f32.mrf.mxu0
  %v7449 = vadd.f32 0.0, %v7448
  %v7450 = vpop.f32.mrf.mxu0
  %7451 = vmatprep.mubr.f32.mxu0 0.0
  %7452 = vmatmul.mubr.f32.gmra.mxu0 %v2665
  %v7453 = vpop.f32.mrf.mxu0
  %v7454 = vadd.f32 0.0, %v7453
  %v7455 = vpop.f32.mrf.mxu0
  %7456 = vmatprep.mubr.f32.mxu0 0.0
  %7457 = vmatmul.mubr.f32.gmra.mxu0 %v2668
  %v7458 = vpop.f32.mrf.mxu0
  %v7459 = vadd.f32 0.0, %v7458
  %v7460 = vpop.f32.mrf.mxu0
  %7461 = vdwg.mxu0
  %v7462 = vadd.f32 %v2532, %v7424
  %v7463 = vadd.f32 %v2533, %v7429
  %v7464 = vadd.f32 %v2534, %v7434
  %v7465 = vadd.f32 %v2535, %v7439
  %v7466 = vadd.f32 %v2536, %v7444
  %v7467 = vadd.f32 %v2537, %v7449
  %v7468 = vadd.f32 %v2538, %v7454
  %v7469 = vadd.f32 %v2539, %v7459
  %v7470 = vtanh.pop %v7462
  %v7471 = vtanh.pop %v7463
  %v7472 = vtanh.pop %v7464
  %v7473 = vtanh.pop %v7465
  %v7474 = vtanh.pop %v7466
  %v7475 = vtanh.pop %v7467
  %v7476 = vtanh.pop %v7468
  %v7477 = vtanh.pop %v7469
  %7478 = vmatprep.subr.mxu0 0.0
  %7479 = vmatpush1.msra.mxu0 0.0
  %7480 = vmatprep.subr.mxu0 0.0
  %7481 = vmatpush1.msra.mxu0 0.0
  %7482 = vmatprep.subr.mxu0 0.0
  %7483 = vmatpush1.msra.mxu0 0.0
  %7484 = vmatprep.subr.mxu0 0.0
  %7485 = vmatpush1.msra.mxu0 0.0
  %7486 = vmatprep.subr.mxu0 0.0
  %7487 = vmatpush1.msra.mxu0 0.0
  %7488 = vmatprep.subr.mxu0 0.0
  %7489 = vmatpush1.msra.mxu0 0.0
  %7490 = vmatprep.subr.mxu0 0.0
  %7491 = vmatpush1.msra.mxu0 0.0
  %7492 = vmatprep.subr.mxu0 0.0
  %7493 = vmatpush1.msra.mxu0 0.0
  %7494 = vmatprep.subr.mxu0 0.0
  %7495 = vmatpush1.msra.mxu0 %v7477
  %7496 = vmatprep.subr.mxu0 0.0
  %7497 = vmatpush1.msra.mxu0 %v7476
  %7498 = vmatprep.subr.mxu0 0.0
  %7499 = vmatpush1.msra.mxu0 %v7475
  %7500 = vmatprep.subr.mxu0 0.0
  %7501 = vmatpush1.msra.mxu0 %v7474
  %7502 = vmatprep.subr.mxu0 0.0
  %7503 = vmatpush1.msra.mxu0 %v7473
  %7504 = vmatprep.subr.mxu0 0.0
  %7505 = vmatpush1.msra.mxu0 %v7472
  %7506 = vmatprep.subr.mxu0 0.0
  %7507 = vmatpush1.msra.mxu0 %v7471
  %7508 = vmatprep.subr.mxu0 0.0
  %7509 = vmatpush1.msra.mxu0 %v7470
  %7510 = vmatprep.subr.mxu0 0.0
  %7511 = vmatpush2.msra.mxu0 0.0
  %7512 = vmatprep.subr.mxu0 0.0
  %7513 = vmatpush2.msra.mxu0 0.0
  %7514 = vmatprep.subr.mxu0 0.0
  %7515 = vmatpush2.msra.mxu0 0.0
  %7516 = vmatprep.subr.mxu0 0.0
  %7517 = vmatpush2.msra.mxu0 0.0
  %7518 = vmatprep.subr.mxu0 0.0
  %7519 = vmatpush2.msra.mxu0 0.0
  %7520 = vmatprep.subr.mxu0 0.0
  %7521 = vmatpush2.msra.mxu0 0.0
  %7522 = vmatprep.subr.mxu0 0.0
  %7523 = vmatpush2.msra.mxu0 0.0
  %7524 = vmatprep.subr.mxu0 0.0
  %7525 = vmatpush2.msra.mxu0 0.0
  %7526 = vmatprep.subr.mxu0 0.0
  %7527 = vmatpush2.msra.mxu0 0.0
  %7528 = vmatprep.subr.mxu0 0.0
  %7529 = vmatpush2.msra.mxu0 0.0
  %7530 = vmatprep.subr.mxu0 0.0
  %7531 = vmatpush2.msra.mxu0 0.0
  %7532 = vmatprep.subr.mxu0 0.0
  %7533 = vmatpush2.msra.mxu0 0.0
  %7534 = vmatprep.subr.mxu0 0.0
  %7535 = vmatpush2.msra.mxu0 0.0
  %7536 = vmatprep.subr.mxu0 0.0
  %7537 = vmatpush2.msra.mxu0 0.0
  %7538 = vmatprep.subr.mxu0 0.0
  %7539 = vmatpush2.msra.mxu0 0.0
  %7540 = vmatprep.subr.mxu0 0.0
  %7541 = vmatpush2.msra.mxu0 0.0
  %7542 = vmatprep.mubr.f32.mxu0 0.0
  %7543 = vmatmul.mubr.f32.gmra.mxu0 %v2832
  %v7544 = vpop.f32.mrf.mxu0
  %v7545 = vadd.f32 %v2794, %v7544
  %v7546 = vpop.f32.mrf.mxu0
  %7547 = vmatprep.mubr.f32.mxu0 0.0
  %7548 = vmatmul.mubr.f32.gmra.mxu0 %v2835
  %v7549 = vpop.f32.mrf.mxu0
  %v7550 = vadd.f32 %v2799, %v7549
  %v7551 = vpop.f32.mrf.mxu0
  %7552 = vmatprep.mubr.f32.mxu0 0.0
  %7553 = vmatmul.mubr.f32.gmra.mxu0 %v2838
  %v7554 = vpop.f32.mrf.mxu0
  %v7555 = vadd.f32 %v2804, %v7554
  %v7556 = vpop.f32.mrf.mxu0
  %7557 = vmatprep.mubr.f32.mxu0 0.0
  %7558 = vmatmul.mubr.f32.gmra.mxu0 %v2841
  %v7559 = vpop.f32.mrf.mxu0
  %v7560 = vadd.f32 %v2809, %v7559
  %v7561 = vpop.f32.mrf.mxu0
  %7562 = vmatprep.mubr.f32.mxu0 0.0
  %7563 = vmatmul.mubr.f32.gmra.mxu0 %v2844
  %v7564 = vpop.f32.mrf.mxu0
  %v7565 = vadd.f32 %v2814, %v7564
  %v7566 = vpop.f32.mrf.mxu0
  %7567 = vmatprep.mubr.f32.mxu0 0.0
  %7568 = vmatmul.mubr.f32.gmra.mxu0 %v2847
  %v7569 = vpop.f32.mrf.mxu0
  %v7570 = vadd.f32 %v2819, %v7569
  %v7571 = vpop.f32.mrf.mxu0
  %7572 = vmatprep.mubr.f32.mxu0 0.0
  %7573 = vmatmul.mubr.f32.gmra.mxu0 %v2850
  %v7574 = vpop.f32.mrf.mxu0
  %v7575 = vadd.f32 %v2824, %v7574
  %v7576 = vpop.f32.mrf.mxu0
  %7577 = vmatprep.mubr.f32.mxu0 0.0
  %7578 = vmatmul.mubr.f32.gmra.mxu0 %v2853
  %v7579 = vpop.f32.mrf.mxu0
  %v7580 = vadd.f32 %v2829, %v7579
  %v7581 = vpop.f32.mrf.mxu0
  %7582 = vdwg.mxu0
  %v7583 = vtanh.pop %v7545
  %v7584 = vtanh.pop %v7550
  %v7585 = vtanh.pop %v7555
  %v7586 = vtanh.pop %v7560
  %v7587 = vtanh.pop %v7565
  %v7588 = vtanh.pop %v7570
  %v7589 = vtanh.pop %v7575
  %v7590 = vtanh.pop %v7580
  %7591 = vmatprep.subr.mxu0 0.0
  %7592 = vmatpush1.msra.mxu0 0.0
  %7593 = vmatprep.subr.mxu0 0.0
  %7594 = vmatpush1.msra.mxu0 0.0
  %7595 = vmatprep.subr.mxu0 0.0
  %7596 = vmatpush1.msra.mxu0 0.0
  %7597 = vmatprep.subr.mxu0 0.0
  %7598 = vmatpush1.msra.mxu0 0.0
  %7599 = vmatprep.subr.mxu0 0.0
  %7600 = vmatpush1.msra.mxu0 0.0
  %7601 = vmatprep.subr.mxu0 0.0
  %7602 = vmatpush1.msra.mxu0 0.0
  %7603 = vmatprep.subr.mxu0 0.0
  %7604 = vmatpush1.msra.mxu0 0.0
  %7605 = vmatprep.subr.mxu0 0.0
  %7606 = vmatpush1.msra.mxu0 0.0
  %7607 = vmatprep.subr.mxu0 0.0
  %7608 = vmatpush1.msra.mxu0 %v7590
  %7609 = vmatprep.subr.mxu0 0.0
  %7610 = vmatpush1.msra.mxu0 %v7589
  %7611 = vmatprep.subr.mxu0 0.0
  %7612 = vmatpush1.msra.mxu0 %v7588
  %7613 = vmatprep.subr.mxu0 0.0
  %7614 = vmatpush1.msra.mxu0 %v7587
  %7615 = vmatprep.subr.mxu0 0.0
  %7616 = vmatpush1.msra.mxu0 %v7586
  %7617 = vmatprep.subr.mxu0 0.0
  %7618 = vmatpush1.msra.mxu0 %v7585
  %7619 = vmatprep.subr.mxu0 0.0
  %7620 = vmatpush1.msra.mxu0 %v7584
  %7621 = vmatprep.subr.mxu0 0.0
  %7622 = vmatpush1.msra.mxu0 %v7583
  %7623 = vmatprep.subr.mxu0 0.0
  %7624 = vmatpush2.msra.mxu0 0.0
  %7625 = vmatprep.subr.mxu0 0.0
  %7626 = vmatpush2.msra.mxu0 0.0
  %7627 = vmatprep.subr.mxu0 0.0
  %7628 = vmatpush2.msra.mxu0 0.0
  %7629 = vmatprep.subr.mxu0 0.0
  %7630 = vmatpush2.msra.mxu0 0.0
  %7631 = vmatprep.subr.mxu0 0.0
  %7632 = vmatpush2.msra.mxu0 0.0
  %7633 = vmatprep.subr.mxu0 0.0
  %7634 = vmatpush2.msra.mxu0 0.0
  %7635 = vmatprep.subr.mxu0 0.0
  %7636 = vmatpush2.msra.mxu0 0.0
  %7637 = vmatprep.subr.mxu0 0.0
  %7638 = vmatpush2.msra.mxu0 0.0
  %7639 = vmatprep.subr.mxu0 0.0
  %7640 = vmatpush2.msra.mxu0 0.0
  %7641 = vmatprep.subr.mxu0 0.0
  %7642 = vmatpush2.msra.mxu0 0.0
  %7643 = vmatprep.subr.mxu0 0.0
  %7644 = vmatpush2.msra.mxu0 0.0
  %7645 = vmatprep.subr.mxu0 0.0
  %7646 = vmatpush2.msra.mxu0 0.0
  %7647 = vmatprep.subr.mxu0 0.0
  %7648 = vmatpush2.msra.mxu0 0.0
  %7649 = vmatprep.subr.mxu0 0.0
  %7650 = vmatpush2.msra.mxu0 0.0
  %7651 = vmatprep.subr.mxu0 0.0
  %7652 = vmatpush2.msra.mxu0 0.0
  %7653 = vmatprep.subr.mxu0 0.0
  %7654 = vmatpush2.msra.mxu0 0.0
  %7655 = vmatprep.mubr.f32.mxu0 0.0
  %7656 = vmatmul.mubr.f32.gmra.mxu0 %v2969
  %v7657 = vpop.f32.mrf.mxu0
  %v7658 = vadd.f32 %v2540, %v7657
  %v7659 = vpop.f32.mrf.mxu0
  %7660 = vmatprep.mubr.f32.mxu0 0.0
  %7661 = vmatmul.mubr.f32.gmra.mxu0 %v2972
  %v7662 = vpop.f32.mrf.mxu0
  %v7663 = vadd.f32 %v2541, %v7662
  %v7664 = vpop.f32.mrf.mxu0
  %7665 = vmatprep.mubr.f32.mxu0 0.0
  %7666 = vmatmul.mubr.f32.gmra.mxu0 %v2975
  %v7667 = vpop.f32.mrf.mxu0
  %v7668 = vadd.f32 %v2542, %v7667
  %v7669 = vpop.f32.mrf.mxu0
  %7670 = vmatprep.mubr.f32.mxu0 0.0
  %7671 = vmatmul.mubr.f32.gmra.mxu0 %v2978
  %v7672 = vpop.f32.mrf.mxu0
  %v7673 = vadd.f32 %v2543, %v7672
  %v7674 = vpop.f32.mrf.mxu0
  %7675 = vmatprep.mubr.f32.mxu0 0.0
  %7676 = vmatmul.mubr.f32.gmra.mxu0 %v2981
  %v7677 = vpop.f32.mrf.mxu0
  %v7678 = vadd.f32 %v2544, %v7677
  %v7679 = vpop.f32.mrf.mxu0
  %7680 = vmatprep.mubr.f32.mxu0 0.0
  %7681 = vmatmul.mubr.f32.gmra.mxu0 %v2984
  %v7682 = vpop.f32.mrf.mxu0
  %v7683 = vadd.f32 %v2545, %v7682
  %v7684 = vpop.f32.mrf.mxu0
  %7685 = vmatprep.mubr.f32.mxu0 0.0
  %7686 = vmatmul.mubr.f32.gmra.mxu0 %v2987
  %v7687 = vpop.f32.mrf.mxu0
  %v7688 = vadd.f32 %v2546, %v7687
  %v7689 = vpop.f32.mrf.mxu0
  %7690 = vmatprep.mubr.f32.mxu0 0.0
  %7691 = vmatmul.mubr.f32.gmra.mxu0 %v2990
  %v7692 = vpop.f32.mrf.mxu0
  %v7693 = vadd.f32 %v2547, %v7692
  %v7694 = vpop.f32.mrf.mxu0
  %7695 = vdwg.mxu0
  %v7696 = vtanh.pop %v7658
  %v7697 = vtanh.pop %v7663
  %v7698 = vtanh.pop %v7668
  %v7699 = vtanh.pop %v7673
  %v7700 = vtanh.pop %v7678
  %v7701 = vtanh.pop %v7683
  %v7702 = vtanh.pop %v7688
  %v7703 = vtanh.pop %v7693
  %7704 = vmatprep.subr.mxu0 0.0
  %7705 = vmatpush1.msra.mxu0 0.0
  %7706 = vmatprep.subr.mxu0 0.0
  %7707 = vmatpush1.msra.mxu0 0.0
  %7708 = vmatprep.subr.mxu0 0.0
  %7709 = vmatpush1.msra.mxu0 0.0
  %7710 = vmatprep.subr.mxu0 0.0
  %7711 = vmatpush1.msra.mxu0 0.0
  %7712 = vmatprep.subr.mxu0 0.0
  %7713 = vmatpush1.msra.mxu0 0.0
  %7714 = vmatprep.subr.mxu0 0.0
  %7715 = vmatpush1.msra.mxu0 0.0
  %7716 = vmatprep.subr.mxu0 0.0
  %7717 = vmatpush1.msra.mxu0 0.0
  %7718 = vmatprep.subr.mxu0 0.0
  %7719 = vmatpush1.msra.mxu0 0.0
  %7720 = vmatprep.subr.mxu0 0.0
  %7721 = vmatpush1.msra.mxu0 %v7703
  %7722 = vmatprep.subr.mxu0 0.0
  %7723 = vmatpush1.msra.mxu0 %v7702
  %7724 = vmatprep.subr.mxu0 0.0
  %7725 = vmatpush1.msra.mxu0 %v7701
  %7726 = vmatprep.subr.mxu0 0.0
  %7727 = vmatpush1.msra.mxu0 %v7700
  %7728 = vmatprep.subr.mxu0 0.0
  %7729 = vmatpush1.msra.mxu0 %v7699
  %7730 = vmatprep.subr.mxu0 0.0
  %7731 = vmatpush1.msra.mxu0 %v7698
  %7732 = vmatprep.subr.mxu0 0.0
  %7733 = vmatpush1.msra.mxu0 %v7697
  %7734 = vmatprep.subr.mxu0 0.0
  %7735 = vmatpush1.msra.mxu0 %v7696
  %7736 = vmatprep.subr.mxu0 0.0
  %7737 = vmatpush2.msra.mxu0 0.0
  %7738 = vmatprep.subr.mxu0 0.0
  %7739 = vmatpush2.msra.mxu0 0.0
  %7740 = vmatprep.subr.mxu0 0.0
  %7741 = vmatpush2.msra.mxu0 0.0
  %7742 = vmatprep.subr.mxu0 0.0
  %7743 = vmatpush2.msra.mxu0 0.0
  %7744 = vmatprep.subr.mxu0 0.0
  %7745 = vmatpush2.msra.mxu0 0.0
  %7746 = vmatprep.subr.mxu0 0.0
  %7747 = vmatpush2.msra.mxu0 0.0
  %7748 = vmatprep.subr.mxu0 0.0
  %7749 = vmatpush2.msra.mxu0 0.0
  %7750 = vmatprep.subr.mxu0 0.0
  %7751 = vmatpush2.msra.mxu0 0.0
  %7752 = vmatprep.subr.mxu0 0.0
  %7753 = vmatpush2.msra.mxu0 0.0
  %7754 = vmatprep.subr.mxu0 0.0
  %7755 = vmatpush2.msra.mxu0 0.0
  %7756 = vmatprep.subr.mxu0 0.0
  %7757 = vmatpush2.msra.mxu0 0.0
  %7758 = vmatprep.subr.mxu0 0.0
  %7759 = vmatpush2.msra.mxu0 0.0
  %7760 = vmatprep.subr.mxu0 0.0
  %7761 = vmatpush2.msra.mxu0 0.0
  %7762 = vmatprep.subr.mxu0 0.0
  %7763 = vmatpush2.msra.mxu0 0.0
  %7764 = vmatprep.subr.mxu0 0.0
  %7765 = vmatpush2.msra.mxu0 0.0
  %7766 = vmatprep.subr.mxu0 0.0
  %7767 = vmatpush2.msra.mxu0 0.0
  %7768 = vmatprep.mubr.f32.mxu0 0.0
  %7769 = vmatmul.mubr.f32.gmra.mxu0 %v3115
  %v7770 = vpop.f32.mrf.mxu0
  %v7771 = vadd.f32 %v3113, %v7770
  %v7772 = vpop.f32.mrf.mxu0
  %7773 = vdwg.mxu0
  %7774 = vmatprep.subr.mxu0 0.0
  %7775 = vmatpush1.msra.mxu0 0.0
  %7776 = vmatprep.subr.mxu0 0.0
  %7777 = vmatpush1.msra.mxu0 0.0
  %7778 = vmatprep.subr.mxu0 0.0
  %7779 = vmatpush1.msra.mxu0 0.0
  %7780 = vmatprep.subr.mxu0 0.0
  %7781 = vmatpush1.msra.mxu0 0.0
  %7782 = vmatprep.subr.mxu0 0.0
  %7783 = vmatpush1.msra.mxu0 0.0
  %7784 = vmatprep.subr.mxu0 0.0
  %7785 = vmatpush1.msra.mxu0 0.0
  %7786 = vmatprep.subr.mxu0 0.0
  %7787 = vmatpush1.msra.mxu0 0.0
  %7788 = vmatprep.subr.mxu0 0.0
  %7789 = vmatpush1.msra.mxu0 0.0
  %7790 = vmatprep.subr.mxu0 0.0
  %7791 = vmatpush1.msra.mxu0 0.0
  %7792 = vmatprep.subr.mxu0 0.0
  %7793 = vmatpush1.msra.mxu0 0.0
  %7794 = vmatprep.subr.mxu0 0.0
  %7795 = vmatpush1.msra.mxu0 0.0
  %7796 = vmatprep.subr.mxu0 0.0
  %7797 = vmatpush1.msra.mxu0 0.0
  %7798 = vmatprep.subr.mxu0 0.0
  %7799 = vmatpush1.msra.mxu0 0.0
  %7800 = vmatprep.subr.mxu0 0.0
  %7801 = vmatpush1.msra.mxu0 0.0
  %7802 = vmatprep.subr.mxu0 0.0
  %7803 = vmatpush1.msra.mxu0 %v2605
  %7804 = vmatprep.subr.mxu0 0.0
  %7805 = vmatpush1.msra.mxu0 %v2604
  %7806 = vmatprep.subr.mxu0 0.0
  %7807 = vmatpush2.msra.mxu0 0.0
  %7808 = vmatprep.subr.mxu0 0.0
  %7809 = vmatpush2.msra.mxu0 0.0
  %7810 = vmatprep.subr.mxu0 0.0
  %7811 = vmatpush2.msra.mxu0 0.0
  %7812 = vmatprep.subr.mxu0 0.0
  %7813 = vmatpush2.msra.mxu0 0.0
  %7814 = vmatprep.subr.mxu0 0.0
  %7815 = vmatpush2.msra.mxu0 0.0
  %7816 = vmatprep.subr.mxu0 0.0
  %7817 = vmatpush2.msra.mxu0 0.0
  %7818 = vmatprep.subr.mxu0 0.0
  %7819 = vmatpush2.msra.mxu0 0.0
  %7820 = vmatprep.subr.mxu0 0.0
  %7821 = vmatpush2.msra.mxu0 0.0
  %7822 = vmatprep.subr.mxu0 0.0
  %7823 = vmatpush2.msra.mxu0 0.0
  %7824 = vmatprep.subr.mxu0 0.0
  %7825 = vmatpush2.msra.mxu0 0.0
  %7826 = vmatprep.subr.mxu0 0.0
  %7827 = vmatpush2.msra.mxu0 0.0
  %7828 = vmatprep.subr.mxu0 0.0
  %7829 = vmatpush2.msra.mxu0 0.0
  %7830 = vmatprep.subr.mxu0 0.0
  %7831 = vmatpush2.msra.mxu0 0.0
  %7832 = vmatprep.subr.mxu0 0.0
  %7833 = vmatpush2.msra.mxu0 0.0
  %7834 = vmatprep.subr.mxu0 0.0
  %7835 = vmatpush2.msra.mxu0 0.0
  %7836 = vmatprep.subr.mxu0 0.0
  %7837 = vmatpush2.msra.mxu0 0.0
  %7838 = vmatprep.mubr.f32.mxu0 0.0
  %7839 = vmatmul.mubr.f32.gmra.mxu0 %v2647
  %v7840 = vpop.f32.mrf.mxu0
  %v7841 = vadd.f32 0.0, %v7840
  %v7842 = vpop.f32.mrf.mxu0
  %7843 = vmatprep.mubr.f32.mxu0 0.0
  %7844 = vmatmul.mubr.f32.gmra.mxu0 %v2650
  %v7845 = vpop.f32.mrf.mxu0
  %v7846 = vadd.f32 0.0, %v7845
  %v7847 = vpop.f32.mrf.mxu0
  %7848 = vmatprep.mubr.f32.mxu0 0.0
  %7849 = vmatmul.mubr.f32.gmra.mxu0 %v2653
  %v7850 = vpop.f32.mrf.mxu0
  %v7851 = vadd.f32 0.0, %v7850
  %v7852 = vpop.f32.mrf.mxu0
  %7853 = vmatprep.mubr.f32.mxu0 0.0
  %7854 = vmatmul.mubr.f32.gmra.mxu0 %v2656
  %v7855 = vpop.f32.mrf.mxu0
  %v7856 = vadd.f32 0.0, %v7855
  %v7857 = vpop.f32.mrf.mxu0
  %7858 = vmatprep.mubr.f32.mxu0 0.0
  %7859 = vmatmul.mubr.f32.gmra.mxu0 %v2659
  %v7860 = vpop.f32.mrf.mxu0
  %v7861 = vadd.f32 0.0, %v7860
  %v7862 = vpop.f32.mrf.mxu0
  %7863 = vmatprep.mubr.f32.mxu0 0.0
  %7864 = vmatmul.mubr.f32.gmra.mxu0 %v2662
  %v7865 = vpop.f32.mrf.mxu0
  %v7866 = vadd.f32 0.0, %v7865
  %v7867 = vpop.f32.mrf.mxu0
  %7868 = vmatprep.mubr.f32.mxu0 0.0
  %7869 = vmatmul.mubr.f32.gmra.mxu0 %v2665
  %v7870 = vpop.f32.mrf.mxu0
  %v7871 = vadd.f32 0.0, %v7870
  %v7872 = vpop.f32.mrf.mxu0
  %7873 = vmatprep.mubr.f32.mxu0 0.0
  %7874 = vmatmul.mubr.f32.gmra.mxu0 %v2668
  %v7875 = vpop.f32.mrf.mxu0
  %v7876 = vadd.f32 0.0, %v7875
  %v7877 = vpop.f32.mrf.mxu0
  %7878 = vdwg.mxu0
  %v7879 = vadd.f32 %v2532, %v7841
  %v7880 = vadd.f32 %v2533, %v7846
  %v7881 = vadd.f32 %v2534, %v7851
  %v7882 = vadd.f32 %v2535, %v7856
  %v7883 = vadd.f32 %v2536, %v7861
  %v7884 = vadd.f32 %v2537, %v7866
  %v7885 = vadd.f32 %v2538, %v7871
  %v7886 = vadd.f32 %v2539, %v7876
  %v7887 = vtanh.pop %v7879
  %v7888 = vtanh.pop %v7880
  %v7889 = vtanh.pop %v7881
  %v7890 = vtanh.pop %v7882
  %v7891 = vtanh.pop %v7883
  %v7892 = vtanh.pop %v7884
  %v7893 = vtanh.pop %v7885
  %v7894 = vtanh.pop %v7886
  %7895 = vmatprep.subr.mxu0 0.0
  %7896 = vmatpush1.msra.mxu0 0.0
  %7897 = vmatprep.subr.mxu0 0.0
  %7898 = vmatpush1.msra.mxu0 0.0
  %7899 = vmatprep.subr.mxu0 0.0
  %7900 = vmatpush1.msra.mxu0 0.0
  %7901 = vmatprep.subr.mxu0 0.0
  %7902 = vmatpush1.msra.mxu0 0.0
  %7903 = vmatprep.subr.mxu0 0.0
  %7904 = vmatpush1.msra.mxu0 0.0
  %7905 = vmatprep.subr.mxu0 0.0
  %7906 = vmatpush1.msra.mxu0 0.0
  %7907 = vmatprep.subr.mxu0 0.0
  %7908 = vmatpush1.msra.mxu0 0.0
  %7909 = vmatprep.subr.mxu0 0.0
  %7910 = vmatpush1.msra.mxu0 0.0
  %7911 = vmatprep.subr.mxu0 0.0
  %7912 = vmatpush1.msra.mxu0 %v7894
  %7913 = vmatprep.subr.mxu0 0.0
  %7914 = vmatpush1.msra.mxu0 %v7893
  %7915 = vmatprep.subr.mxu0 0.0
  %7916 = vmatpush1.msra.mxu0 %v7892
  %7917 = vmatprep.subr.mxu0 0.0
  %7918 = vmatpush1.msra.mxu0 %v7891
  %7919 = vmatprep.subr.mxu0 0.0
  %7920 = vmatpush1.msra.mxu0 %v7890
  %7921 = vmatprep.subr.mxu0 0.0
  %7922 = vmatpush1.msra.mxu0 %v7889
  %7923 = vmatprep.subr.mxu0 0.0
  %7924 = vmatpush1.msra.mxu0 %v7888
  %7925 = vmatprep.subr.mxu0 0.0
  %7926 = vmatpush1.msra.mxu0 %v7887
  %7927 = vmatprep.subr.mxu0 0.0
  %7928 = vmatpush2.msra.mxu0 0.0
  %7929 = vmatprep.subr.mxu0 0.0
  %7930 = vmatpush2.msra.mxu0 0.0
  %7931 = vmatprep.subr.mxu0 0.0
  %7932 = vmatpush2.msra.mxu0 0.0
  %7933 = vmatprep.subr.mxu0 0.0
  %7934 = vmatpush2.msra.mxu0 0.0
  %7935 = vmatprep.subr.mxu0 0.0
  %7936 = vmatpush2.msra.mxu0 0.0
  %7937 = vmatprep.subr.mxu0 0.0
  %7938 = vmatpush2.msra.mxu0 0.0
  %7939 = vmatprep.subr.mxu0 0.0
  %7940 = vmatpush2.msra.mxu0 0.0
  %7941 = vmatprep.subr.mxu0 0.0
  %7942 = vmatpush2.msra.mxu0 0.0
  %7943 = vmatprep.subr.mxu0 0.0
  %7944 = vmatpush2.msra.mxu0 0.0
  %7945 = vmatprep.subr.mxu0 0.0
  %7946 = vmatpush2.msra.mxu0 0.0
  %7947 = vmatprep.subr.mxu0 0.0
  %7948 = vmatpush2.msra.mxu0 0.0
  %7949 = vmatprep.subr.mxu0 0.0
  %7950 = vmatpush2.msra.mxu0 0.0
  %7951 = vmatprep.subr.mxu0 0.0
  %7952 = vmatpush2.msra.mxu0 0.0
  %7953 = vmatprep.subr.mxu0 0.0
  %7954 = vmatpush2.msra.mxu0 0.0
  %7955 = vmatprep.subr.mxu0 0.0
  %7956 = vmatpush2.msra.mxu0 0.0
  %7957 = vmatprep.subr.mxu0 0.0
  %7958 = vmatpush2.msra.mxu0 0.0
  %7959 = vmatprep.mubr.f32.mxu0 0.0
  %7960 = vmatmul.mubr.f32.gmra.mxu0 %v2832
  %v7961 = vpop.f32.mrf.mxu0
  %v7962 = vadd.f32 %v2794, %v7961
  %v7963 = vpop.f32.mrf.mxu0
  %7964 = vmatprep.mubr.f32.mxu0 0.0
  %7965 = vmatmul.mubr.f32.gmra.mxu0 %v2835
  %v7966 = vpop.f32.mrf.mxu0
  %v7967 = vadd.f32 %v2799, %v7966
  %v7968 = vpop.f32.mrf.mxu0
  %7969 = vmatprep.mubr.f32.mxu0 0.0
  %7970 = vmatmul.mubr.f32.gmra.mxu0 %v2838
  %v7971 = vpop.f32.mrf.mxu0
  %v7972 = vadd.f32 %v2804, %v7971
  %v7973 = vpop.f32.mrf.mxu0
  %7974 = vmatprep.mubr.f32.mxu0 0.0
  %7975 = vmatmul.mubr.f32.gmra.mxu0 %v2841
  %v7976 = vpop.f32.mrf.mxu0
  %v7977 = vadd.f32 %v2809, %v7976
  %v7978 = vpop.f32.mrf.mxu0
  %7979 = vmatprep.mubr.f32.mxu0 0.0
  %7980 = vmatmul.mubr.f32.gmra.mxu0 %v2844
  %v7981 = vpop.f32.mrf.mxu0
  %v7982 = vadd.f32 %v2814, %v7981
  %v7983 = vpop.f32.mrf.mxu0
  %7984 = vmatprep.mubr.f32.mxu0 0.0
  %7985 = vmatmul.mubr.f32.gmra.mxu0 %v2847
  %v7986 = vpop.f32.mrf.mxu0
  %v7987 = vadd.f32 %v2819, %v7986
  %v7988 = vpop.f32.mrf.mxu0
  %7989 = vmatprep.mubr.f32.mxu0 0.0
  %7990 = vmatmul.mubr.f32.gmra.mxu0 %v2850
  %v7991 = vpop.f32.mrf.mxu0
  %v7992 = vadd.f32 %v2824, %v7991
  %v7993 = vpop.f32.mrf.mxu0
  %7994 = vmatprep.mubr.f32.mxu0 0.0
  %7995 = vmatmul.mubr.f32.gmra.mxu0 %v2853
  %v7996 = vpop.f32.mrf.mxu0
  %v7997 = vadd.f32 %v2829, %v7996
  %v7998 = vpop.f32.mrf.mxu0
  %7999 = vdwg.mxu0
  %v8000 = vtanh.pop %v7962
  %v8001 = vtanh.pop %v7967
  %v8002 = vtanh.pop %v7972
  %v8003 = vtanh.pop %v7977
  %v8004 = vtanh.pop %v7982
  %v8005 = vtanh.pop %v7987
  %v8006 = vtanh.pop %v7992
  %v8007 = vtanh.pop %v7997
  %8008 = vmatprep.subr.mxu0 0.0
  %8009 = vmatpush1.msra.mxu0 0.0
  %8010 = vmatprep.subr.mxu0 0.0
  %8011 = vmatpush1.msra.mxu0 0.0
  %8012 = vmatprep.subr.mxu0 0.0
  %8013 = vmatpush1.msra.mxu0 0.0
  %8014 = vmatprep.subr.mxu0 0.0
  %8015 = vmatpush1.msra.mxu0 0.0
  %8016 = vmatprep.subr.mxu0 0.0
  %8017 = vmatpush1.msra.mxu0 0.0
  %8018 = vmatprep.subr.mxu0 0.0
  %8019 = vmatpush1.msra.mxu0 0.0
  %8020 = vmatprep.subr.mxu0 0.0
  %8021 = vmatpush1.msra.mxu0 0.0
  %8022 = vmatprep.subr.mxu0 0.0
  %8023 = vmatpush1.msra.mxu0 0.0
  %8024 = vmatprep.subr.mxu0 0.0
  %8025 = vmatpush1.msra.mxu0 %v8007
  %8026 = vmatprep.subr.mxu0 0.0
  %8027 = vmatpush1.msra.mxu0 %v8006
  %8028 = vmatprep.subr.mxu0 0.0
  %8029 = vmatpush1.msra.mxu0 %v8005
  %8030 = vmatprep.subr.mxu0 0.0
  %8031 = vmatpush1.msra.mxu0 %v8004
  %8032 = vmatprep.subr.mxu0 0.0
  %8033 = vmatpush1.msra.mxu0 %v8003
  %8034 = vmatprep.subr.mxu0 0.0
  %8035 = vmatpush1.msra.mxu0 %v8002
  %8036 = vmatprep.subr.mxu0 0.0
  %8037 = vmatpush1.msra.mxu0 %v8001
  %8038 = vmatprep.subr.mxu0 0.0
  %8039 = vmatpush1.msra.mxu0 %v8000
  %8040 = vmatprep.subr.mxu0 0.0
  %8041 = vmatpush2.msra.mxu0 0.0
  %8042 = vmatprep.subr.mxu0 0.0
  %8043 = vmatpush2.msra.mxu0 0.0
  %8044 = vmatprep.subr.mxu0 0.0
  %8045 = vmatpush2.msra.mxu0 0.0
  %8046 = vmatprep.subr.mxu0 0.0
  %8047 = vmatpush2.msra.mxu0 0.0
  %8048 = vmatprep.subr.mxu0 0.0
  %8049 = vmatpush2.msra.mxu0 0.0
  %8050 = vmatprep.subr.mxu0 0.0
  %8051 = vmatpush2.msra.mxu0 0.0
  %8052 = vmatprep.subr.mxu0 0.0
  %8053 = vmatpush2.msra.mxu0 0.0
  %8054 = vmatprep.subr.mxu0 0.0
  %8055 = vmatpush2.msra.mxu0 0.0
  %8056 = vmatprep.subr.mxu0 0.0
  %8057 = vmatpush2.msra.mxu0 0.0
  %8058 = vmatprep.subr.mxu0 0.0
  %8059 = vmatpush2.msra.mxu0 0.0
  %8060 = vmatprep.subr.mxu0 0.0
  %8061 = vmatpush2.msra.mxu0 0.0
  %8062 = vmatprep.subr.mxu0 0.0
  %8063 = vmatpush2.msra.mxu0 0.0
  %8064 = vmatprep.subr.mxu0 0.0
  %8065 = vmatpush2.msra.mxu0 0.0
  %8066 = vmatprep.subr.mxu0 0.0
  %8067 = vmatpush2.msra.mxu0 0.0
  %8068 = vmatprep.subr.mxu0 0.0
  %8069 = vmatpush2.msra.mxu0 0.0
  %8070 = vmatprep.subr.mxu0 0.0
  %8071 = vmatpush2.msra.mxu0 0.0
  %8072 = vmatprep.mubr.f32.mxu0 0.0
  %8073 = vmatmul.mubr.f32.gmra.mxu0 %v2969
  %v8074 = vpop.f32.mrf.mxu0
  %v8075 = vadd.f32 %v2540, %v8074
  %v8076 = vpop.f32.mrf.mxu0
  %8077 = vmatprep.mubr.f32.mxu0 0.0
  %8078 = vmatmul.mubr.f32.gmra.mxu0 %v2972
  %v8079 = vpop.f32.mrf.mxu0
  %v8080 = vadd.f32 %v2541, %v8079
  %v8081 = vpop.f32.mrf.mxu0
  %8082 = vmatprep.mubr.f32.mxu0 0.0
  %8083 = vmatmul.mubr.f32.gmra.mxu0 %v2975
  %v8084 = vpop.f32.mrf.mxu0
  %v8085 = vadd.f32 %v2542, %v8084
  %v8086 = vpop.f32.mrf.mxu0
  %8087 = vmatprep.mubr.f32.mxu0 0.0
  %8088 = vmatmul.mubr.f32.gmra.mxu0 %v2978
  %v8089 = vpop.f32.mrf.mxu0
  %v8090 = vadd.f32 %v2543, %v8089
  %v8091 = vpop.f32.mrf.mxu0
  %8092 = vmatprep.mubr.f32.mxu0 0.0
  %8093 = vmatmul.mubr.f32.gmra.mxu0 %v2981
  %v8094 = vpop.f32.mrf.mxu0
  %v8095 = vadd.f32 %v2544, %v8094
  %v8096 = vpop.f32.mrf.mxu0
  %8097 = vmatprep.mubr.f32.mxu0 0.0
  %8098 = vmatmul.mubr.f32.gmra.mxu0 %v2984
  %v8099 = vpop.f32.mrf.mxu0
  %v8100 = vadd.f32 %v2545, %v8099
  %v8101 = vpop.f32.mrf.mxu0
  %8102 = vmatprep.mubr.f32.mxu0 0.0
  %8103 = vmatmul.mubr.f32.gmra.mxu0 %v2987
  %v8104 = vpop.f32.mrf.mxu0
  %v8105 = vadd.f32 %v2546, %v8104
  %v8106 = vpop.f32.mrf.mxu0
  %8107 = vmatprep.mubr.f32.mxu0 0.0
  %8108 = vmatmul.mubr.f32.gmra.mxu0 %v2990
  %v8109 = vpop.f32.mrf.mxu0
  %v8110 = vadd.f32 %v2547, %v8109
  %v8111 = vpop.f32.mrf.mxu0
  %8112 = vdwg.mxu0
  %v8113 = vtanh.pop %v8075
  %v8114 = vtanh.pop %v8080
  %v8115 = vtanh.pop %v8085
  %v8116 = vtanh.pop %v8090
  %v8117 = vtanh.pop %v8095
  %v8118 = vtanh.pop %v8100
  %v8119 = vtanh.pop %v8105
  %v8120 = vtanh.pop %v8110
  %8121 = vmatprep.subr.mxu0 0.0
  %8122 = vmatpush1.msra.mxu0 0.0
  %8123 = vmatprep.subr.mxu0 0.0
  %8124 = vmatpush1.msra.mxu0 0.0
  %8125 = vmatprep.subr.mxu0 0.0
  %8126 = vmatpush1.msra.mxu0 0.0
  %8127 = vmatprep.subr.mxu0 0.0
  %8128 = vmatpush1.msra.mxu0 0.0
  %8129 = vmatprep.subr.mxu0 0.0
  %8130 = vmatpush1.msra.mxu0 0.0
  %8131 = vmatprep.subr.mxu0 0.0
  %8132 = vmatpush1.msra.mxu0 0.0
  %8133 = vmatprep.subr.mxu0 0.0
  %8134 = vmatpush1.msra.mxu0 0.0
  %8135 = vmatprep.subr.mxu0 0.0
  %8136 = vmatpush1.msra.mxu0 0.0
  %8137 = vmatprep.subr.mxu0 0.0
  %8138 = vmatpush1.msra.mxu0 %v8120
  %8139 = vmatprep.subr.mxu0 0.0
  %8140 = vmatpush1.msra.mxu0 %v8119
  %8141 = vmatprep.subr.mxu0 0.0
  %8142 = vmatpush1.msra.mxu0 %v8118
  %8143 = vmatprep.subr.mxu0 0.0
  %8144 = vmatpush1.msra.mxu0 %v8117
  %8145 = vmatprep.subr.mxu0 0.0
  %8146 = vmatpush1.msra.mxu0 %v8116
  %8147 = vmatprep.subr.mxu0 0.0
  %8148 = vmatpush1.msra.mxu0 %v8115
  %8149 = vmatprep.subr.mxu0 0.0
  %8150 = vmatpush1.msra.mxu0 %v8114
  %8151 = vmatprep.subr.mxu0 0.0
  %8152 = vmatpush1.msra.mxu0 %v8113
  %8153 = vmatprep.subr.mxu0 0.0
  %8154 = vmatpush2.msra.mxu0 0.0
  %8155 = vmatprep.subr.mxu0 0.0
  %8156 = vmatpush2.msra.mxu0 0.0
  %8157 = vmatprep.subr.mxu0 0.0
  %8158 = vmatpush2.msra.mxu0 0.0
  %8159 = vmatprep.subr.mxu0 0.0
  %8160 = vmatpush2.msra.mxu0 0.0
  %8161 = vmatprep.subr.mxu0 0.0
  %8162 = vmatpush2.msra.mxu0 0.0
  %8163 = vmatprep.subr.mxu0 0.0
  %8164 = vmatpush2.msra.mxu0 0.0
  %8165 = vmatprep.subr.mxu0 0.0
  %8166 = vmatpush2.msra.mxu0 0.0
  %8167 = vmatprep.subr.mxu0 0.0
  %8168 = vmatpush2.msra.mxu0 0.0
  %8169 = vmatprep.subr.mxu0 0.0
  %8170 = vmatpush2.msra.mxu0 0.0
  %8171 = vmatprep.subr.mxu0 0.0
  %8172 = vmatpush2.msra.mxu0 0.0
  %8173 = vmatprep.subr.mxu0 0.0
  %8174 = vmatpush2.msra.mxu0 0.0
  %8175 = vmatprep.subr.mxu0 0.0
  %8176 = vmatpush2.msra.mxu0 0.0
  %8177 = vmatprep.subr.mxu0 0.0
  %8178 = vmatpush2.msra.mxu0 0.0
  %8179 = vmatprep.subr.mxu0 0.0
  %8180 = vmatpush2.msra.mxu0 0.0
  %8181 = vmatprep.subr.mxu0 0.0
  %8182 = vmatpush2.msra.mxu0 0.0
  %8183 = vmatprep.subr.mxu0 0.0
  %8184 = vmatpush2.msra.mxu0 0.0
  %8185 = vmatprep.mubr.f32.mxu0 0.0
  %8186 = vmatmul.mubr.f32.gmra.mxu0 %v3115
  %v8187 = vpop.f32.mrf.mxu0
  %v8188 = vadd.f32 %v3113, %v8187
  %v8189 = vpop.f32.mrf.mxu0
  %8190 = vdwg.mxu0
  %8191 = vmatprep.subr.mxu0 0.0
  %8192 = vmatpush1.msra.mxu0 0.0
  %8193 = vmatprep.subr.mxu0 0.0
  %8194 = vmatpush1.msra.mxu0 0.0
  %8195 = vmatprep.subr.mxu0 0.0
  %8196 = vmatpush1.msra.mxu0 0.0
  %8197 = vmatprep.subr.mxu0 0.0
  %8198 = vmatpush1.msra.mxu0 0.0
  %8199 = vmatprep.subr.mxu0 0.0
  %8200 = vmatpush1.msra.mxu0 0.0
  %8201 = vmatprep.subr.mxu0 0.0
  %8202 = vmatpush1.msra.mxu0 0.0
  %8203 = vmatprep.subr.mxu0 0.0
  %8204 = vmatpush1.msra.mxu0 0.0
  %8205 = vmatprep.subr.mxu0 0.0
  %8206 = vmatpush1.msra.mxu0 0.0
  %8207 = vmatprep.subr.mxu0 0.0
  %8208 = vmatpush1.msra.mxu0 0.0
  %8209 = vmatprep.subr.mxu0 0.0
  %8210 = vmatpush1.msra.mxu0 0.0
  %8211 = vmatprep.subr.mxu0 0.0
  %8212 = vmatpush1.msra.mxu0 0.0
  %8213 = vmatprep.subr.mxu0 0.0
  %8214 = vmatpush1.msra.mxu0 0.0
  %8215 = vmatprep.subr.mxu0 0.0
  %8216 = vmatpush1.msra.mxu0 0.0
  %8217 = vmatprep.subr.mxu0 0.0
  %8218 = vmatpush1.msra.mxu0 0.0
  %8219 = vmatprep.subr.mxu0 0.0
  %8220 = vmatpush1.msra.mxu0 %v2607
  %8221 = vmatprep.subr.mxu0 0.0
  %8222 = vmatpush1.msra.mxu0 %v2606
  %8223 = vmatprep.subr.mxu0 0.0
  %8224 = vmatpush2.msra.mxu0 0.0
  %8225 = vmatprep.subr.mxu0 0.0
  %8226 = vmatpush2.msra.mxu0 0.0
  %8227 = vmatprep.subr.mxu0 0.0
  %8228 = vmatpush2.msra.mxu0 0.0
  %8229 = vmatprep.subr.mxu0 0.0
  %8230 = vmatpush2.msra.mxu0 0.0
  %8231 = vmatprep.subr.mxu0 0.0
  %8232 = vmatpush2.msra.mxu0 0.0
  %8233 = vmatprep.subr.mxu0 0.0
  %8234 = vmatpush2.msra.mxu0 0.0
  %8235 = vmatprep.subr.mxu0 0.0
  %8236 = vmatpush2.msra.mxu0 0.0
  %8237 = vmatprep.subr.mxu0 0.0
  %8238 = vmatpush2.msra.mxu0 0.0
  %8239 = vmatprep.subr.mxu0 0.0
  %8240 = vmatpush2.msra.mxu0 0.0
  %8241 = vmatprep.subr.mxu0 0.0
  %8242 = vmatpush2.msra.mxu0 0.0
  %8243 = vmatprep.subr.mxu0 0.0
  %8244 = vmatpush2.msra.mxu0 0.0
  %8245 = vmatprep.subr.mxu0 0.0
  %8246 = vmatpush2.msra.mxu0 0.0
  %8247 = vmatprep.subr.mxu0 0.0
  %8248 = vmatpush2.msra.mxu0 0.0
  %8249 = vmatprep.subr.mxu0 0.0
  %8250 = vmatpush2.msra.mxu0 0.0
  %8251 = vmatprep.subr.mxu0 0.0
  %8252 = vmatpush2.msra.mxu0 0.0
  %8253 = vmatprep.subr.mxu0 0.0
  %8254 = vmatpush2.msra.mxu0 0.0
  %8255 = vmatprep.mubr.f32.mxu0 0.0
  %8256 = vmatmul.mubr.f32.gmra.mxu0 %v2647
  %v8257 = vpop.f32.mrf.mxu0
  %v8258 = vadd.f32 0.0, %v8257
  %v8259 = vpop.f32.mrf.mxu0
  %8260 = vmatprep.mubr.f32.mxu0 0.0
  %8261 = vmatmul.mubr.f32.gmra.mxu0 %v2650
  %v8262 = vpop.f32.mrf.mxu0
  %v8263 = vadd.f32 0.0, %v8262
  %v8264 = vpop.f32.mrf.mxu0
  %8265 = vmatprep.mubr.f32.mxu0 0.0
  %8266 = vmatmul.mubr.f32.gmra.mxu0 %v2653
  %v8267 = vpop.f32.mrf.mxu0
  %v8268 = vadd.f32 0.0, %v8267
  %v8269 = vpop.f32.mrf.mxu0
  %8270 = vmatprep.mubr.f32.mxu0 0.0
  %8271 = vmatmul.mubr.f32.gmra.mxu0 %v2656
  %v8272 = vpop.f32.mrf.mxu0
  %v8273 = vadd.f32 0.0, %v8272
  %v8274 = vpop.f32.mrf.mxu0
  %8275 = vmatprep.mubr.f32.mxu0 0.0
  %8276 = vmatmul.mubr.f32.gmra.mxu0 %v2659
  %v8277 = vpop.f32.mrf.mxu0
  %v8278 = vadd.f32 0.0, %v8277
  %v8279 = vpop.f32.mrf.mxu0
  %8280 = vmatprep.mubr.f32.mxu0 0.0
  %8281 = vmatmul.mubr.f32.gmra.mxu0 %v2662
  %v8282 = vpop.f32.mrf.mxu0
  %v8283 = vadd.f32 0.0, %v8282
  %v8284 = vpop.f32.mrf.mxu0
  %8285 = vmatprep.mubr.f32.mxu0 0.0
  %8286 = vmatmul.mubr.f32.gmra.mxu0 %v2665
  %v8287 = vpop.f32.mrf.mxu0
  %v8288 = vadd.f32 0.0, %v8287
  %v8289 = vpop.f32.mrf.mxu0
  %8290 = vmatprep.mubr.f32.mxu0 0.0
  %8291 = vmatmul.mubr.f32.gmra.mxu0 %v2668
  %v8292 = vpop.f32.mrf.mxu0
  %v8293 = vadd.f32 0.0, %v8292
  %v8294 = vpop.f32.mrf.mxu0
  %8295 = vdwg.mxu0
  %v8296 = vadd.f32 %v2532, %v8258
  %v8297 = vadd.f32 %v2533, %v8263
  %v8298 = vadd.f32 %v2534, %v8268
  %v8299 = vadd.f32 %v2535, %v8273
  %v8300 = vadd.f32 %v2536, %v8278
  %v8301 = vadd.f32 %v2537, %v8283
  %v8302 = vadd.f32 %v2538, %v8288
  %v8303 = vadd.f32 %v2539, %v8293
  %v8304 = vtanh.pop %v8296
  %v8305 = vtanh.pop %v8297
  %v8306 = vtanh.pop %v8298
  %v8307 = vtanh.pop %v8299
  %v8308 = vtanh.pop %v8300
  %v8309 = vtanh.pop %v8301
  %v8310 = vtanh.pop %v8302
  %v8311 = vtanh.pop %v8303
  %8312 = vmatprep.subr.mxu0 0.0
  %8313 = vmatpush1.msra.mxu0 0.0
  %8314 = vmatprep.subr.mxu0 0.0
  %8315 = vmatpush1.msra.mxu0 0.0
  %8316 = vmatprep.subr.mxu0 0.0
  %8317 = vmatpush1.msra.mxu0 0.0
  %8318 = vmatprep.subr.mxu0 0.0
  %8319 = vmatpush1.msra.mxu0 0.0
  %8320 = vmatprep.subr.mxu0 0.0
  %8321 = vmatpush1.msra.mxu0 0.0
  %8322 = vmatprep.subr.mxu0 0.0
  %8323 = vmatpush1.msra.mxu0 0.0
  %8324 = vmatprep.subr.mxu0 0.0
  %8325 = vmatpush1.msra.mxu0 0.0
  %8326 = vmatprep.subr.mxu0 0.0
  %8327 = vmatpush1.msra.mxu0 0.0
  %8328 = vmatprep.subr.mxu0 0.0
  %8329 = vmatpush1.msra.mxu0 %v8311
  %8330 = vmatprep.subr.mxu0 0.0
  %8331 = vmatpush1.msra.mxu0 %v8310
  %8332 = vmatprep.subr.mxu0 0.0
  %8333 = vmatpush1.msra.mxu0 %v8309
  %8334 = vmatprep.subr.mxu0 0.0
  %8335 = vmatpush1.msra.mxu0 %v8308
  %8336 = vmatprep.subr.mxu0 0.0
  %8337 = vmatpush1.msra.mxu0 %v8307
  %8338 = vmatprep.subr.mxu0 0.0
  %8339 = vmatpush1.msra.mxu0 %v8306
  %8340 = vmatprep.subr.mxu0 0.0
  %8341 = vmatpush1.msra.mxu0 %v8305
  %8342 = vmatprep.subr.mxu0 0.0
  %8343 = vmatpush1.msra.mxu0 %v8304
  %8344 = vmatprep.subr.mxu0 0.0
  %8345 = vmatpush2.msra.mxu0 0.0
  %8346 = vmatprep.subr.mxu0 0.0
  %8347 = vmatpush2.msra.mxu0 0.0
  %8348 = vmatprep.subr.mxu0 0.0
  %8349 = vmatpush2.msra.mxu0 0.0
  %8350 = vmatprep.subr.mxu0 0.0
  %8351 = vmatpush2.msra.mxu0 0.0
  %8352 = vmatprep.subr.mxu0 0.0
  %8353 = vmatpush2.msra.mxu0 0.0
  %8354 = vmatprep.subr.mxu0 0.0
  %8355 = vmatpush2.msra.mxu0 0.0
  %8356 = vmatprep.subr.mxu0 0.0
  %8357 = vmatpush2.msra.mxu0 0.0
  %8358 = vmatprep.subr.mxu0 0.0
  %8359 = vmatpush2.msra.mxu0 0.0
  %8360 = vmatprep.subr.mxu0 0.0
  %8361 = vmatpush2.msra.mxu0 0.0
  %8362 = vmatprep.subr.mxu0 0.0
  %8363 = vmatpush2.msra.mxu0 0.0
  %8364 = vmatprep.subr.mxu0 0.0
  %8365 = vmatpush2.msra.mxu0 0.0
  %8366 = vmatprep.subr.mxu0 0.0
  %8367 = vmatpush2.msra.mxu0 0.0
  %8368 = vmatprep.subr.mxu0 0.0
  %8369 = vmatpush2.msra.mxu0 0.0
  %8370 = vmatprep.subr.mxu0 0.0
  %8371 = vmatpush2.msra.mxu0 0.0
  %8372 = vmatprep.subr.mxu0 0.0
  %8373 = vmatpush2.msra.mxu0 0.0
  %8374 = vmatprep.subr.mxu0 0.0
  %8375 = vmatpush2.msra.mxu0 0.0
  %8376 = vmatprep.mubr.f32.mxu0 0.0
  %8377 = vmatmul.mubr.f32.gmra.mxu0 %v2832
  %v8378 = vpop.f32.mrf.mxu0
  %v8379 = vadd.f32 %v2794, %v8378
  %v8380 = vpop.f32.mrf.mxu0
  %8381 = vmatprep.mubr.f32.mxu0 0.0
  %8382 = vmatmul.mubr.f32.gmra.mxu0 %v2835
  %v8383 = vpop.f32.mrf.mxu0
  %v8384 = vadd.f32 %v2799, %v8383
  %v8385 = vpop.f32.mrf.mxu0
  %8386 = vmatprep.mubr.f32.mxu0 0.0
  %8387 = vmatmul.mubr.f32.gmra.mxu0 %v2838
  %v8388 = vpop.f32.mrf.mxu0
  %v8389 = vadd.f32 %v2804, %v8388
  %v8390 = vpop.f32.mrf.mxu0
  %8391 = vmatprep.mubr.f32.mxu0 0.0
  %8392 = vmatmul.mubr.f32.gmra.mxu0 %v2841
  %v8393 = vpop.f32.mrf.mxu0
  %v8394 = vadd.f32 %v2809, %v8393
  %v8395 = vpop.f32.mrf.mxu0
  %8396 = vmatprep.mubr.f32.mxu0 0.0
  %8397 = vmatmul.mubr.f32.gmra.mxu0 %v2844
  %v8398 = vpop.f32.mrf.mxu0
  %v8399 = vadd.f32 %v2814, %v8398
  %v8400 = vpop.f32.mrf.mxu0
  %8401 = vmatprep.mubr.f32.mxu0 0.0
  %8402 = vmatmul.mubr.f32.gmra.mxu0 %v2847
  %v8403 = vpop.f32.mrf.mxu0
  %v8404 = vadd.f32 %v2819, %v8403
  %v8405 = vpop.f32.mrf.mxu0
  %8406 = vmatprep.mubr.f32.mxu0 0.0
  %8407 = vmatmul.mubr.f32.gmra.mxu0 %v2850
  %v8408 = vpop.f32.mrf.mxu0
  %v8409 = vadd.f32 %v2824, %v8408
  %v8410 = vpop.f32.mrf.mxu0
  %8411 = vmatprep.mubr.f32.mxu0 0.0
  %8412 = vmatmul.mubr.f32.gmra.mxu0 %v2853
  %v8413 = vpop.f32.mrf.mxu0
  %v8414 = vadd.f32 %v2829, %v8413
  %v8415 = vpop.f32.mrf.mxu0
  %8416 = vdwg.mxu0
  %v8417 = vtanh.pop %v8379
  %v8418 = vtanh.pop %v8384
  %v8419 = vtanh.pop %v8389
  %v8420 = vtanh.pop %v8394
  %v8421 = vtanh.pop %v8399
  %v8422 = vtanh.pop %v8404
  %v8423 = vtanh.pop %v8409
  %v8424 = vtanh.pop %v8414
  %8425 = vmatprep.subr.mxu0 0.0
  %8426 = vmatpush1.msra.mxu0 0.0
  %8427 = vmatprep.subr.mxu0 0.0
  %8428 = vmatpush1.msra.mxu0 0.0
  %8429 = vmatprep.subr.mxu0 0.0
  %8430 = vmatpush1.msra.mxu0 0.0
  %8431 = vmatprep.subr.mxu0 0.0
  %8432 = vmatpush1.msra.mxu0 0.0
  %8433 = vmatprep.subr.mxu0 0.0
  %8434 = vmatpush1.msra.mxu0 0.0
  %8435 = vmatprep.subr.mxu0 0.0
  %8436 = vmatpush1.msra.mxu0 0.0
  %8437 = vmatprep.subr.mxu0 0.0
  %8438 = vmatpush1.msra.mxu0 0.0
  %8439 = vmatprep.subr.mxu0 0.0
  %8440 = vmatpush1.msra.mxu0 0.0
  %8441 = vmatprep.subr.mxu0 0.0
  %8442 = vmatpush1.msra.mxu0 %v8424
  %8443 = vmatprep.subr.mxu0 0.0
  %8444 = vmatpush1.msra.mxu0 %v8423
  %8445 = vmatprep.subr.mxu0 0.0
  %8446 = vmatpush1.msra.mxu0 %v8422
  %8447 = vmatprep.subr.mxu0 0.0
  %8448 = vmatpush1.msra.mxu0 %v8421
  %8449 = vmatprep.subr.mxu0 0.0
  %8450 = vmatpush1.msra.mxu0 %v8420
  %8451 = vmatprep.subr.mxu0 0.0
  %8452 = vmatpush1.msra.mxu0 %v8419
  %8453 = vmatprep.subr.mxu0 0.0
  %8454 = vmatpush1.msra.mxu0 %v8418
  %8455 = vmatprep.subr.mxu0 0.0
  %8456 = vmatpush1.msra.mxu0 %v8417
  %8457 = vmatprep.subr.mxu0 0.0
  %8458 = vmatpush2.msra.mxu0 0.0
  %8459 = vmatprep.subr.mxu0 0.0
  %8460 = vmatpush2.msra.mxu0 0.0
  %8461 = vmatprep.subr.mxu0 0.0
  %8462 = vmatpush2.msra.mxu0 0.0
  %8463 = vmatprep.subr.mxu0 0.0
  %8464 = vmatpush2.msra.mxu0 0.0
  %8465 = vmatprep.subr.mxu0 0.0
  %8466 = vmatpush2.msra.mxu0 0.0
  %8467 = vmatprep.subr.mxu0 0.0
  %8468 = vmatpush2.msra.mxu0 0.0
  %8469 = vmatprep.subr.mxu0 0.0
  %8470 = vmatpush2.msra.mxu0 0.0
  %8471 = vmatprep.subr.mxu0 0.0
  %8472 = vmatpush2.msra.mxu0 0.0
  %8473 = vmatprep.subr.mxu0 0.0
  %8474 = vmatpush2.msra.mxu0 0.0
  %8475 = vmatprep.subr.mxu0 0.0
  %8476 = vmatpush2.msra.mxu0 0.0
  %8477 = vmatprep.subr.mxu0 0.0
  %8478 = vmatpush2.msra.mxu0 0.0
  %8479 = vmatprep.subr.mxu0 0.0
  %8480 = vmatpush2.msra.mxu0 0.0
  %8481 = vmatprep.subr.mxu0 0.0
  %8482 = vmatpush2.msra.mxu0 0.0
  %8483 = vmatprep.subr.mxu0 0.0
  %8484 = vmatpush2.msra.mxu0 0.0
  %8485 = vmatprep.subr.mxu0 0.0
  %8486 = vmatpush2.msra.mxu0 0.0
  %8487 = vmatprep.subr.mxu0 0.0
  %8488 = vmatpush2.msra.mxu0 0.0
  %8489 = vmatprep.mubr.f32.mxu0 0.0
  %8490 = vmatmul.mubr.f32.gmra.mxu0 %v2969
  %v8491 = vpop.f32.mrf.mxu0
  %v8492 = vadd.f32 %v2540, %v8491
  %v8493 = vpop.f32.mrf.mxu0
  %8494 = vmatprep.mubr.f32.mxu0 0.0
  %8495 = vmatmul.mubr.f32.gmra.mxu0 %v2972
  %v8496 = vpop.f32.mrf.mxu0
  %v8497 = vadd.f32 %v2541, %v8496
  %v8498 = vpop.f32.mrf.mxu0
  %8499 = vmatprep.mubr.f32.mxu0 0.0
  %8500 = vmatmul.mubr.f32.gmra.mxu0 %v2975
  %v8501 = vpop.f32.mrf.mxu0
  %v8502 = vadd.f32 %v2542, %v8501
  %v8503 = vpop.f32.mrf.mxu0
  %8504 = vmatprep.mubr.f32.mxu0 0.0
  %8505 = vmatmul.mubr.f32.gmra.mxu0 %v2978
  %v8506 = vpop.f32.mrf.mxu0
  %v8507 = vadd.f32 %v2543, %v8506
  %v8508 = vpop.f32.mrf.mxu0
  %8509 = vmatprep.mubr.f32.mxu0 0.0
  %8510 = vmatmul.mubr.f32.gmra.mxu0 %v2981
  %v8511 = vpop.f32.mrf.mxu0
  %v8512 = vadd.f32 %v2544, %v8511
  %v8513 = vpop.f32.mrf.mxu0
  %8514 = vmatprep.mubr.f32.mxu0 0.0
  %8515 = vmatmul.mubr.f32.gmra.mxu0 %v2984
  %v8516 = vpop.f32.mrf.mxu0
  %v8517 = vadd.f32 %v2545, %v8516
  %v8518 = vpop.f32.mrf.mxu0
  %8519 = vmatprep.mubr.f32.mxu0 0.0
  %8520 = vmatmul.mubr.f32.gmra.mxu0 %v2987
  %v8521 = vpop.f32.mrf.mxu0
  %v8522 = vadd.f32 %v2546, %v8521
  %v8523 = vpop.f32.mrf.mxu0
  %8524 = vmatprep.mubr.f32.mxu0 0.0
  %8525 = vmatmul.mubr.f32.gmra.mxu0 %v2990
  %v8526 = vpop.f32.mrf.mxu0
  %v8527 = vadd.f32 %v2547, %v8526
  %v8528 = vpop.f32.mrf.mxu0
  %8529 = vdwg.mxu0
  %v8530 = vtanh.pop %v8492
  %v8531 = vtanh.pop %v8497
  %v8532 = vtanh.pop %v8502
  %v8533 = vtanh.pop %v8507
  %v8534 = vtanh.pop %v8512
  %v8535 = vtanh.pop %v8517
  %v8536 = vtanh.pop %v8522
  %v8537 = vtanh.pop %v8527
  %8538 = vmatprep.subr.mxu0 0.0
  %8539 = vmatpush1.msra.mxu0 0.0
  %8540 = vmatprep.subr.mxu0 0.0
  %8541 = vmatpush1.msra.mxu0 0.0
  %8542 = vmatprep.subr.mxu0 0.0
  %8543 = vmatpush1.msra.mxu0 0.0
  %8544 = vmatprep.subr.mxu0 0.0
  %8545 = vmatpush1.msra.mxu0 0.0
  %8546 = vmatprep.subr.mxu0 0.0
  %8547 = vmatpush1.msra.mxu0 0.0
  %8548 = vmatprep.subr.mxu0 0.0
  %8549 = vmatpush1.msra.mxu0 0.0
  %8550 = vmatprep.subr.mxu0 0.0
  %8551 = vmatpush1.msra.mxu0 0.0
  %8552 = vmatprep.subr.mxu0 0.0
  %8553 = vmatpush1.msra.mxu0 0.0
  %8554 = vmatprep.subr.mxu0 0.0
  %8555 = vmatpush1.msra.mxu0 %v8537
  %8556 = vmatprep.subr.mxu0 0.0
  %8557 = vmatpush1.msra.mxu0 %v8536
  %8558 = vmatprep.subr.mxu0 0.0
  %8559 = vmatpush1.msra.mxu0 %v8535
  %8560 = vmatprep.subr.mxu0 0.0
  %8561 = vmatpush1.msra.mxu0 %v8534
  %8562 = vmatprep.subr.mxu0 0.0
  %8563 = vmatpush1.msra.mxu0 %v8533
  %8564 = vmatprep.subr.mxu0 0.0
  %8565 = vmatpush1.msra.mxu0 %v8532
  %8566 = vmatprep.subr.mxu0 0.0
  %8567 = vmatpush1.msra.mxu0 %v8531
  %8568 = vmatprep.subr.mxu0 0.0
  %8569 = vmatpush1.msra.mxu0 %v8530
  %8570 = vmatprep.subr.mxu0 0.0
  %8571 = vmatpush2.msra.mxu0 0.0
  %8572 = vmatprep.subr.mxu0 0.0
  %8573 = vmatpush2.msra.mxu0 0.0
  %8574 = vmatprep.subr.mxu0 0.0
  %8575 = vmatpush2.msra.mxu0 0.0
  %8576 = vmatprep.subr.mxu0 0.0
  %8577 = vmatpush2.msra.mxu0 0.0
  %8578 = vmatprep.subr.mxu0 0.0
  %8579 = vmatpush2.msra.mxu0 0.0
  %8580 = vmatprep.subr.mxu0 0.0
  %8581 = vmatpush2.msra.mxu0 0.0
  %8582 = vmatprep.subr.mxu0 0.0
  %8583 = vmatpush2.msra.mxu0 0.0
  %8584 = vmatprep.subr.mxu0 0.0
  %8585 = vmatpush2.msra.mxu0 0.0
  %8586 = vmatprep.subr.mxu0 0.0
  %8587 = vmatpush2.msra.mxu0 0.0
  %8588 = vmatprep.subr.mxu0 0.0
  %8589 = vmatpush2.msra.mxu0 0.0
  %8590 = vmatprep.subr.mxu0 0.0
  %8591 = vmatpush2.msra.mxu0 0.0
  %8592 = vmatprep.subr.mxu0 0.0
  %8593 = vmatpush2.msra.mxu0 0.0
  %8594 = vmatprep.subr.mxu0 0.0
  %8595 = vmatpush2.msra.mxu0 0.0
  %8596 = vmatprep.subr.mxu0 0.0
  %8597 = vmatpush2.msra.mxu0 0.0
  %8598 = vmatprep.subr.mxu0 0.0
  %8599 = vmatpush2.msra.mxu0 0.0
  %8600 = vmatprep.subr.mxu0 0.0
  %8601 = vmatpush2.msra.mxu0 0.0
  %8602 = vmatprep.mubr.f32.mxu0 0.0
  %8603 = vmatmul.mubr.f32.gmra.mxu0 %v3115
  %v8604 = vpop.f32.mrf.mxu0
  %v8605 = vadd.f32 %v3113, %v8604
  %v8606 = vpop.f32.mrf.mxu0
  %8607 = vdwg.mxu0
  %8608 = vmatprep.subr.mxu0 0.0
  %8609 = vmatpush1.msra.mxu0 0.0
  %8610 = vmatprep.subr.mxu0 0.0
  %8611 = vmatpush1.msra.mxu0 0.0
  %8612 = vmatprep.subr.mxu0 0.0
  %8613 = vmatpush1.msra.mxu0 0.0
  %8614 = vmatprep.subr.mxu0 0.0
  %8615 = vmatpush1.msra.mxu0 0.0
  %8616 = vmatprep.subr.mxu0 0.0
  %8617 = vmatpush1.msra.mxu0 0.0
  %8618 = vmatprep.subr.mxu0 0.0
  %8619 = vmatpush1.msra.mxu0 0.0
  %8620 = vmatprep.subr.mxu0 0.0
  %8621 = vmatpush1.msra.mxu0 0.0
  %8622 = vmatprep.subr.mxu0 0.0
  %8623 = vmatpush1.msra.mxu0 0.0
  %8624 = vmatprep.subr.mxu0 0.0
  %8625 = vmatpush1.msra.mxu0 0.0
  %8626 = vmatprep.subr.mxu0 0.0
  %8627 = vmatpush1.msra.mxu0 0.0
  %8628 = vmatprep.subr.mxu0 0.0
  %8629 = vmatpush1.msra.mxu0 0.0
  %8630 = vmatprep.subr.mxu0 0.0
  %8631 = vmatpush1.msra.mxu0 0.0
  %8632 = vmatprep.subr.mxu0 0.0
  %8633 = vmatpush1.msra.mxu0 0.0
  %8634 = vmatprep.subr.mxu0 0.0
  %8635 = vmatpush1.msra.mxu0 0.0
  %8636 = vmatprep.subr.mxu0 0.0
  %8637 = vmatpush1.msra.mxu0 %v2609
  %8638 = vmatprep.subr.mxu0 0.0
  %8639 = vmatpush1.msra.mxu0 %v2608
  %8640 = vmatprep.subr.mxu0 0.0
  %8641 = vmatpush2.msra.mxu0 0.0
  %8642 = vmatprep.subr.mxu0 0.0
  %8643 = vmatpush2.msra.mxu0 0.0
  %8644 = vmatprep.subr.mxu0 0.0
  %8645 = vmatpush2.msra.mxu0 0.0
  %8646 = vmatprep.subr.mxu0 0.0
  %8647 = vmatpush2.msra.mxu0 0.0
  %8648 = vmatprep.subr.mxu0 0.0
  %8649 = vmatpush2.msra.mxu0 0.0
  %8650 = vmatprep.subr.mxu0 0.0
  %8651 = vmatpush2.msra.mxu0 0.0
  %8652 = vmatprep.subr.mxu0 0.0
  %8653 = vmatpush2.msra.mxu0 0.0
  %8654 = vmatprep.subr.mxu0 0.0
  %8655 = vmatpush2.msra.mxu0 0.0
  %8656 = vmatprep.subr.mxu0 0.0
  %8657 = vmatpush2.msra.mxu0 0.0
  %8658 = vmatprep.subr.mxu0 0.0
  %8659 = vmatpush2.msra.mxu0 0.0
  %8660 = vmatprep.subr.mxu0 0.0
  %8661 = vmatpush2.msra.mxu0 0.0
  %8662 = vmatprep.subr.mxu0 0.0
  %8663 = vmatpush2.msra.mxu0 0.0
  %8664 = vmatprep.subr.mxu0 0.0
  %8665 = vmatpush2.msra.mxu0 0.0
  %8666 = vmatprep.subr.mxu0 0.0
  %8667 = vmatpush2.msra.mxu0 0.0
  %8668 = vmatprep.subr.mxu0 0.0
  %8669 = vmatpush2.msra.mxu0 0.0
  %8670 = vmatprep.subr.mxu0 0.0
  %8671 = vmatpush2.msra.mxu0 0.0
  %8672 = vmatprep.mubr.f32.mxu0 0.0
  %8673 = vmatmul.mubr.f32.gmra.mxu0 %v2647
  %v8674 = vpop.f32.mrf.mxu0
  %v8675 = vadd.f32 0.0, %v8674
  %v8676 = vpop.f32.mrf.mxu0
  %8677 = vmatprep.mubr.f32.mxu0 0.0
  %8678 = vmatmul.mubr.f32.gmra.mxu0 %v2650
  %v8679 = vpop.f32.mrf.mxu0
  %v8680 = vadd.f32 0.0, %v8679
  %v8681 = vpop.f32.mrf.mxu0
  %8682 = vmatprep.mubr.f32.mxu0 0.0
  %8683 = vmatmul.mubr.f32.gmra.mxu0 %v2653
  %v8684 = vpop.f32.mrf.mxu0
  %v8685 = vadd.f32 0.0, %v8684
  %v8686 = vpop.f32.mrf.mxu0
  %8687 = vmatprep.mubr.f32.mxu0 0.0
  %8688 = vmatmul.mubr.f32.gmra.mxu0 %v2656
  %v8689 = vpop.f32.mrf.mxu0
  %v8690 = vadd.f32 0.0, %v8689
  %v8691 = vpop.f32.mrf.mxu0
  %8692 = vmatprep.mubr.f32.mxu0 0.0
  %8693 = vmatmul.mubr.f32.gmra.mxu0 %v2659
  %v8694 = vpop.f32.mrf.mxu0
  %v8695 = vadd.f32 0.0, %v8694
  %v8696 = vpop.f32.mrf.mxu0
  %8697 = vmatprep.mubr.f32.mxu0 0.0
  %8698 = vmatmul.mubr.f32.gmra.mxu0 %v2662
  %v8699 = vpop.f32.mrf.mxu0
  %v8700 = vadd.f32 0.0, %v8699
  %v8701 = vpop.f32.mrf.mxu0
  %8702 = vmatprep.mubr.f32.mxu0 0.0
  %8703 = vmatmul.mubr.f32.gmra.mxu0 %v2665
  %v8704 = vpop.f32.mrf.mxu0
  %v8705 = vadd.f32 0.0, %v8704
  %v8706 = vpop.f32.mrf.mxu0
  %8707 = vmatprep.mubr.f32.mxu0 0.0
  %8708 = vmatmul.mubr.f32.gmra.mxu0 %v2668
  %v8709 = vpop.f32.mrf.mxu0
  %v8710 = vadd.f32 0.0, %v8709
  %v8711 = vpop.f32.mrf.mxu0
  %8712 = vdwg.mxu0
  %v8713 = vadd.f32 %v2532, %v8675
  %v8714 = vadd.f32 %v2533, %v8680
  %v8715 = vadd.f32 %v2534, %v8685
  %v8716 = vadd.f32 %v2535, %v8690
  %v8717 = vadd.f32 %v2536, %v8695
  %v8718 = vadd.f32 %v2537, %v8700
  %v8719 = vadd.f32 %v2538, %v8705
  %v8720 = vadd.f32 %v2539, %v8710
  %v8721 = vtanh.pop %v8713
  %v8722 = vtanh.pop %v8714
  %v8723 = vtanh.pop %v8715
  %v8724 = vtanh.pop %v8716
  %v8725 = vtanh.pop %v8717
  %v8726 = vtanh.pop %v8718
  %v8727 = vtanh.pop %v8719
  %v8728 = vtanh.pop %v8720
  %8729 = vmatprep.subr.mxu0 0.0
  %8730 = vmatpush1.msra.mxu0 0.0
  %8731 = vmatprep.subr.mxu0 0.0
  %8732 = vmatpush1.msra.mxu0 0.0
  %8733 = vmatprep.subr.mxu0 0.0
  %8734 = vmatpush1.msra.mxu0 0.0
  %8735 = vmatprep.subr.mxu0 0.0
  %8736 = vmatpush1.msra.mxu0 0.0
  %8737 = vmatprep.subr.mxu0 0.0
  %8738 = vmatpush1.msra.mxu0 0.0
  %8739 = vmatprep.subr.mxu0 0.0
  %8740 = vmatpush1.msra.mxu0 0.0
  %8741 = vmatprep.subr.mxu0 0.0
  %8742 = vmatpush1.msra.mxu0 0.0
  %8743 = vmatprep.subr.mxu0 0.0
  %8744 = vmatpush1.msra.mxu0 0.0
  %8745 = vmatprep.subr.mxu0 0.0
  %8746 = vmatpush1.msra.mxu0 %v8728
  %8747 = vmatprep.subr.mxu0 0.0
  %8748 = vmatpush1.msra.mxu0 %v8727
  %8749 = vmatprep.subr.mxu0 0.0
  %8750 = vmatpush1.msra.mxu0 %v8726
  %8751 = vmatprep.subr.mxu0 0.0
  %8752 = vmatpush1.msra.mxu0 %v8725
  %8753 = vmatprep.subr.mxu0 0.0
  %8754 = vmatpush1.msra.mxu0 %v8724
  %8755 = vmatprep.subr.mxu0 0.0
  %8756 = vmatpush1.msra.mxu0 %v8723
  %8757 = vmatprep.subr.mxu0 0.0
  %8758 = vmatpush1.msra.mxu0 %v8722
  %8759 = vmatprep.subr.mxu0 0.0
  %8760 = vmatpush1.msra.mxu0 %v8721
  %8761 = vmatprep.subr.mxu0 0.0
  %8762 = vmatpush2.msra.mxu0 0.0
  %8763 = vmatprep.subr.mxu0 0.0
  %8764 = vmatpush2.msra.mxu0 0.0
  %8765 = vmatprep.subr.mxu0 0.0
  %8766 = vmatpush2.msra.mxu0 0.0
  %8767 = vmatprep.subr.mxu0 0.0
  %8768 = vmatpush2.msra.mxu0 0.0
  %8769 = vmatprep.subr.mxu0 0.0
  %8770 = vmatpush2.msra.mxu0 0.0
  %8771 = vmatprep.subr.mxu0 0.0
  %8772 = vmatpush2.msra.mxu0 0.0
  %8773 = vmatprep.subr.mxu0 0.0
  %8774 = vmatpush2.msra.mxu0 0.0
  %8775 = vmatprep.subr.mxu0 0.0
  %8776 = vmatpush2.msra.mxu0 0.0
  %8777 = vmatprep.subr.mxu0 0.0
  %8778 = vmatpush2.msra.mxu0 0.0
  %8779 = vmatprep.subr.mxu0 0.0
  %8780 = vmatpush2.msra.mxu0 0.0
  %8781 = vmatprep.subr.mxu0 0.0
  %8782 = vmatpush2.msra.mxu0 0.0
  %8783 = vmatprep.subr.mxu0 0.0
  %8784 = vmatpush2.msra.mxu0 0.0
  %8785 = vmatprep.subr.mxu0 0.0
  %8786 = vmatpush2.msra.mxu0 0.0
  %8787 = vmatprep.subr.mxu0 0.0
  %8788 = vmatpush2.msra.mxu0 0.0
  %8789 = vmatprep.subr.mxu0 0.0
  %8790 = vmatpush2.msra.mxu0 0.0
  %8791 = vmatprep.subr.mxu0 0.0
  %8792 = vmatpush2.msra.mxu0 0.0
  %8793 = vmatprep.mubr.f32.mxu0 0.0
  %8794 = vmatmul.mubr.f32.gmra.mxu0 %v2832
  %v8795 = vpop.f32.mrf.mxu0
  %v8796 = vadd.f32 %v2794, %v8795
  %v8797 = vpop.f32.mrf.mxu0
  %8798 = vmatprep.mubr.f32.mxu0 0.0
  %8799 = vmatmul.mubr.f32.gmra.mxu0 %v2835
  %v8800 = vpop.f32.mrf.mxu0
  %v8801 = vadd.f32 %v2799, %v8800
  %v8802 = vpop.f32.mrf.mxu0
  %8803 = vmatprep.mubr.f32.mxu0 0.0
  %8804 = vmatmul.mubr.f32.gmra.mxu0 %v2838
  %v8805 = vpop.f32.mrf.mxu0
  %v8806 = vadd.f32 %v2804, %v8805
  %v8807 = vpop.f32.mrf.mxu0
  %8808 = vmatprep.mubr.f32.mxu0 0.0
  %8809 = vmatmul.mubr.f32.gmra.mxu0 %v2841
  %v8810 = vpop.f32.mrf.mxu0
  %v8811 = vadd.f32 %v2809, %v8810
  %v8812 = vpop.f32.mrf.mxu0
  %8813 = vmatprep.mubr.f32.mxu0 0.0
  %8814 = vmatmul.mubr.f32.gmra.mxu0 %v2844
  %v8815 = vpop.f32.mrf.mxu0
  %v8816 = vadd.f32 %v2814, %v8815
  %v8817 = vpop.f32.mrf.mxu0
  %8818 = vmatprep.mubr.f32.mxu0 0.0
  %8819 = vmatmul.mubr.f32.gmra.mxu0 %v2847
  %v8820 = vpop.f32.mrf.mxu0
  %v8821 = vadd.f32 %v2819, %v8820
  %v8822 = vpop.f32.mrf.mxu0
  %8823 = vmatprep.mubr.f32.mxu0 0.0
  %8824 = vmatmul.mubr.f32.gmra.mxu0 %v2850
  %v8825 = vpop.f32.mrf.mxu0
  %v8826 = vadd.f32 %v2824, %v8825
  %v8827 = vpop.f32.mrf.mxu0
  %8828 = vmatprep.mubr.f32.mxu0 0.0
  %8829 = vmatmul.mubr.f32.gmra.mxu0 %v2853
  %v8830 = vpop.f32.mrf.mxu0
  %v8831 = vadd.f32 %v2829, %v8830
  %v8832 = vpop.f32.mrf.mxu0
  %8833 = vdwg.mxu0
  %v8834 = vtanh.pop %v8796
  %v8835 = vtanh.pop %v8801
  %v8836 = vtanh.pop %v8806
  %v8837 = vtanh.pop %v8811
  %v8838 = vtanh.pop %v8816
  %v8839 = vtanh.pop %v8821
  %v8840 = vtanh.pop %v8826
  %v8841 = vtanh.pop %v8831
  %8842 = vmatprep.subr.mxu0 0.0
  %8843 = vmatpush1.msra.mxu0 0.0
  %8844 = vmatprep.subr.mxu0 0.0
  %8845 = vmatpush1.msra.mxu0 0.0
  %8846 = vmatprep.subr.mxu0 0.0
  %8847 = vmatpush1.msra.mxu0 0.0
  %8848 = vmatprep.subr.mxu0 0.0
  %8849 = vmatpush1.msra.mxu0 0.0
  %8850 = vmatprep.subr.mxu0 0.0
  %8851 = vmatpush1.msra.mxu0 0.0
  %8852 = vmatprep.subr.mxu0 0.0
  %8853 = vmatpush1.msra.mxu0 0.0
  %8854 = vmatprep.subr.mxu0 0.0
  %8855 = vmatpush1.msra.mxu0 0.0
  %8856 = vmatprep.subr.mxu0 0.0
  %8857 = vmatpush1.msra.mxu0 0.0
  %8858 = vmatprep.subr.mxu0 0.0
  %8859 = vmatpush1.msra.mxu0 %v8841
  %8860 = vmatprep.subr.mxu0 0.0
  %8861 = vmatpush1.msra.mxu0 %v8840
  %8862 = vmatprep.subr.mxu0 0.0
  %8863 = vmatpush1.msra.mxu0 %v8839
  %8864 = vmatprep.subr.mxu0 0.0
  %8865 = vmatpush1.msra.mxu0 %v8838
  %8866 = vmatprep.subr.mxu0 0.0
  %8867 = vmatpush1.msra.mxu0 %v8837
  %8868 = vmatprep.subr.mxu0 0.0
  %8869 = vmatpush1.msra.mxu0 %v8836
  %8870 = vmatprep.subr.mxu0 0.0
  %8871 = vmatpush1.msra.mxu0 %v8835
  %8872 = vmatprep.subr.mxu0 0.0
  %8873 = vmatpush1.msra.mxu0 %v8834
  %8874 = vmatprep.subr.mxu0 0.0
  %8875 = vmatpush2.msra.mxu0 0.0
  %8876 = vmatprep.subr.mxu0 0.0
  %8877 = vmatpush2.msra.mxu0 0.0
  %8878 = vmatprep.subr.mxu0 0.0
  %8879 = vmatpush2.msra.mxu0 0.0
  %8880 = vmatprep.subr.mxu0 0.0
  %8881 = vmatpush2.msra.mxu0 0.0
  %8882 = vmatprep.subr.mxu0 0.0
  %8883 = vmatpush2.msra.mxu0 0.0
  %8884 = vmatprep.subr.mxu0 0.0
  %8885 = vmatpush2.msra.mxu0 0.0
  %8886 = vmatprep.subr.mxu0 0.0
  %8887 = vmatpush2.msra.mxu0 0.0
  %8888 = vmatprep.subr.mxu0 0.0
  %8889 = vmatpush2.msra.mxu0 0.0
  %8890 = vmatprep.subr.mxu0 0.0
  %8891 = vmatpush2.msra.mxu0 0.0
  %8892 = vmatprep.subr.mxu0 0.0
  %8893 = vmatpush2.msra.mxu0 0.0
  %8894 = vmatprep.subr.mxu0 0.0
  %8895 = vmatpush2.msra.mxu0 0.0
  %8896 = vmatprep.subr.mxu0 0.0
  %8897 = vmatpush2.msra.mxu0 0.0
  %8898 = vmatprep.subr.mxu0 0.0
  %8899 = vmatpush2.msra.mxu0 0.0
  %8900 = vmatprep.subr.mxu0 0.0
  %8901 = vmatpush2.msra.mxu0 0.0
  %8902 = vmatprep.subr.mxu0 0.0
  %8903 = vmatpush2.msra.mxu0 0.0
  %8904 = vmatprep.subr.mxu0 0.0
  %8905 = vmatpush2.msra.mxu0 0.0
  %8906 = vmatprep.mubr.f32.mxu0 0.0
  %8907 = vmatmul.mubr.f32.gmra.mxu0 %v2969
  %v8908 = vpop.f32.mrf.mxu0
  %v8909 = vadd.f32 %v2540, %v8908
  %v8910 = vpop.f32.mrf.mxu0
  %8911 = vmatprep.mubr.f32.mxu0 0.0
  %8912 = vmatmul.mubr.f32.gmra.mxu0 %v2972
  %v8913 = vpop.f32.mrf.mxu0
  %v8914 = vadd.f32 %v2541, %v8913
  %v8915 = vpop.f32.mrf.mxu0
  %8916 = vmatprep.mubr.f32.mxu0 0.0
  %8917 = vmatmul.mubr.f32.gmra.mxu0 %v2975
  %v8918 = vpop.f32.mrf.mxu0
  %v8919 = vadd.f32 %v2542, %v8918
  %v8920 = vpop.f32.mrf.mxu0
  %8921 = vmatprep.mubr.f32.mxu0 0.0
  %8922 = vmatmul.mubr.f32.gmra.mxu0 %v2978
  %v8923 = vpop.f32.mrf.mxu0
  %v8924 = vadd.f32 %v2543, %v8923
  %v8925 = vpop.f32.mrf.mxu0
  %8926 = vmatprep.mubr.f32.mxu0 0.0
  %8927 = vmatmul.mubr.f32.gmra.mxu0 %v2981
  %v8928 = vpop.f32.mrf.mxu0
  %v8929 = vadd.f32 %v2544, %v8928
  %v8930 = vpop.f32.mrf.mxu0
  %8931 = vmatprep.mubr.f32.mxu0 0.0
  %8932 = vmatmul.mubr.f32.gmra.mxu0 %v2984
  %v8933 = vpop.f32.mrf.mxu0
  %v8934 = vadd.f32 %v2545, %v8933
  %v8935 = vpop.f32.mrf.mxu0
  %8936 = vmatprep.mubr.f32.mxu0 0.0
  %8937 = vmatmul.mubr.f32.gmra.mxu0 %v2987
  %v8938 = vpop.f32.mrf.mxu0
  %v8939 = vadd.f32 %v2546, %v8938
  %v8940 = vpop.f32.mrf.mxu0
  %8941 = vmatprep.mubr.f32.mxu0 0.0
  %8942 = vmatmul.mubr.f32.gmra.mxu0 %v2990
  %v8943 = vpop.f32.mrf.mxu0
  %v8944 = vadd.f32 %v2547, %v8943
  %v8945 = vpop.f32.mrf.mxu0
  %8946 = vdwg.mxu0
  %v8947 = vtanh.pop %v8909
  %v8948 = vtanh.pop %v8914
  %v8949 = vtanh.pop %v8919
  %v8950 = vtanh.pop %v8924
  %v8951 = vtanh.pop %v8929
  %v8952 = vtanh.pop %v8934
  %v8953 = vtanh.pop %v8939
  %v8954 = vtanh.pop %v8944
  %8955 = vmatprep.subr.mxu0 0.0
  %8956 = vmatpush1.msra.mxu0 0.0
  %8957 = vmatprep.subr.mxu0 0.0
  %8958 = vmatpush1.msra.mxu0 0.0
  %8959 = vmatprep.subr.mxu0 0.0
  %8960 = vmatpush1.msra.mxu0 0.0
  %8961 = vmatprep.subr.mxu0 0.0
  %8962 = vmatpush1.msra.mxu0 0.0
  %8963 = vmatprep.subr.mxu0 0.0
  %8964 = vmatpush1.msra.mxu0 0.0
  %8965 = vmatprep.subr.mxu0 0.0
  %8966 = vmatpush1.msra.mxu0 0.0
  %8967 = vmatprep.subr.mxu0 0.0
  %8968 = vmatpush1.msra.mxu0 0.0
  %8969 = vmatprep.subr.mxu0 0.0
  %8970 = vmatpush1.msra.mxu0 0.0
  %8971 = vmatprep.subr.mxu0 0.0
  %8972 = vmatpush1.msra.mxu0 %v8954
  %8973 = vmatprep.subr.mxu0 0.0
  %8974 = vmatpush1.msra.mxu0 %v8953
  %8975 = vmatprep.subr.mxu0 0.0
  %8976 = vmatpush1.msra.mxu0 %v8952
  %8977 = vmatprep.subr.mxu0 0.0
  %8978 = vmatpush1.msra.mxu0 %v8951
  %8979 = vmatprep.subr.mxu0 0.0
  %8980 = vmatpush1.msra.mxu0 %v8950
  %8981 = vmatprep.subr.mxu0 0.0
  %8982 = vmatpush1.msra.mxu0 %v8949
  %8983 = vmatprep.subr.mxu0 0.0
  %8984 = vmatpush1.msra.mxu0 %v8948
  %8985 = vmatprep.subr.mxu0 0.0
  %8986 = vmatpush1.msra.mxu0 %v8947
  %8987 = vmatprep.subr.mxu0 0.0
  %8988 = vmatpush2.msra.mxu0 0.0
  %8989 = vmatprep.subr.mxu0 0.0
  %8990 = vmatpush2.msra.mxu0 0.0
  %8991 = vmatprep.subr.mxu0 0.0
  %8992 = vmatpush2.msra.mxu0 0.0
  %8993 = vmatprep.subr.mxu0 0.0
  %8994 = vmatpush2.msra.mxu0 0.0
  %8995 = vmatprep.subr.mxu0 0.0
  %8996 = vmatpush2.msra.mxu0 0.0
  %8997 = vmatprep.subr.mxu0 0.0
  %8998 = vmatpush2.msra.mxu0 0.0
  %8999 = vmatprep.subr.mxu0 0.0
  %9000 = vmatpush2.msra.mxu0 0.0
  %9001 = vmatprep.subr.mxu0 0.0
  %9002 = vmatpush2.msra.mxu0 0.0
  %9003 = vmatprep.subr.mxu0 0.0
  %9004 = vmatpush2.msra.mxu0 0.0
  %9005 = vmatprep.subr.mxu0 0.0
  %9006 = vmatpush2.msra.mxu0 0.0
  %9007 = vmatprep.subr.mxu0 0.0
  %9008 = vmatpush2.msra.mxu0 0.0
  %9009 = vmatprep.subr.mxu0 0.0
  %9010 = vmatpush2.msra.mxu0 0.0
  %9011 = vmatprep.subr.mxu0 0.0
  %9012 = vmatpush2.msra.mxu0 0.0
  %9013 = vmatprep.subr.mxu0 0.0
  %9014 = vmatpush2.msra.mxu0 0.0
  %9015 = vmatprep.subr.mxu0 0.0
  %9016 = vmatpush2.msra.mxu0 0.0
  %9017 = vmatprep.subr.mxu0 0.0
  %9018 = vmatpush2.msra.mxu0 0.0
  %9019 = vmatprep.mubr.f32.mxu0 0.0
  %9020 = vmatmul.mubr.f32.gmra.mxu0 %v3115
  %v9021 = vpop.f32.mrf.mxu0
  %v9022 = vadd.f32 %v3113, %v9021
  %v9023 = vpop.f32.mrf.mxu0
  %9024 = vdwg.mxu0
  %9025 = vmatprep.subr.mxu0 0.0
  %9026 = vmatpush1.msra.mxu0 0.0
  %9027 = vmatprep.subr.mxu0 0.0
  %9028 = vmatpush1.msra.mxu0 0.0
  %9029 = vmatprep.subr.mxu0 0.0
  %9030 = vmatpush1.msra.mxu0 0.0
  %9031 = vmatprep.subr.mxu0 0.0
  %9032 = vmatpush1.msra.mxu0 0.0
  %9033 = vmatprep.subr.mxu0 0.0
  %9034 = vmatpush1.msra.mxu0 0.0
  %9035 = vmatprep.subr.mxu0 0.0
  %9036 = vmatpush1.msra.mxu0 0.0
  %9037 = vmatprep.subr.mxu0 0.0
  %9038 = vmatpush1.msra.mxu0 0.0
  %9039 = vmatprep.subr.mxu0 0.0
  %9040 = vmatpush1.msra.mxu0 0.0
  %9041 = vmatprep.subr.mxu0 0.0
  %9042 = vmatpush1.msra.mxu0 0.0
  %9043 = vmatprep.subr.mxu0 0.0
  %9044 = vmatpush1.msra.mxu0 0.0
  %9045 = vmatprep.subr.mxu0 0.0
  %9046 = vmatpush1.msra.mxu0 0.0
  %9047 = vmatprep.subr.mxu0 0.0
  %9048 = vmatpush1.msra.mxu0 0.0
  %9049 = vmatprep.subr.mxu0 0.0
  %9050 = vmatpush1.msra.mxu0 0.0
  %9051 = vmatprep.subr.mxu0 0.0
  %9052 = vmatpush1.msra.mxu0 0.0
  %9053 = vmatprep.subr.mxu0 0.0
  %9054 = vmatpush1.msra.mxu0 %v2611
  %9055 = vmatprep.subr.mxu0 0.0
  %9056 = vmatpush1.msra.mxu0 %v2610
  %9057 = vmatprep.subr.mxu0 0.0
  %9058 = vmatpush2.msra.mxu0 0.0
  %9059 = vmatprep.subr.mxu0 0.0
  %9060 = vmatpush2.msra.mxu0 0.0
  %9061 = vmatprep.subr.mxu0 0.0
  %9062 = vmatpush2.msra.mxu0 0.0
  %9063 = vmatprep.subr.mxu0 0.0
  %9064 = vmatpush2.msra.mxu0 0.0
  %9065 = vmatprep.subr.mxu0 0.0
  %9066 = vmatpush2.msra.mxu0 0.0
  %9067 = vmatprep.subr.mxu0 0.0
  %9068 = vmatpush2.msra.mxu0 0.0
  %9069 = vmatprep.subr.mxu0 0.0
  %9070 = vmatpush2.msra.mxu0 0.0
  %9071 = vmatprep.subr.mxu0 0.0
  %9072 = vmatpush2.msra.mxu0 0.0
  %9073 = vmatprep.subr.mxu0 0.0
  %9074 = vmatpush2.msra.mxu0 0.0
  %9075 = vmatprep.subr.mxu0 0.0
  %9076 = vmatpush2.msra.mxu0 0.0
  %9077 = vmatprep.subr.mxu0 0.0
  %9078 = vmatpush2.msra.mxu0 0.0
  %9079 = vmatprep.subr.mxu0 0.0
  %9080 = vmatpush2.msra.mxu0 0.0
  %9081 = vmatprep.subr.mxu0 0.0
  %9082 = vmatpush2.msra.mxu0 0.0
  %9083 = vmatprep.subr.mxu0 0.0
  %9084 = vmatpush2.msra.mxu0 0.0
  %9085 = vmatprep.subr.mxu0 0.0
  %9086 = vmatpush2.msra.mxu0 0.0
  %9087 = vmatprep.subr.mxu0 0.0
  %9088 = vmatpush2.msra.mxu0 0.0
  %9089 = vmatprep.mubr.f32.mxu0 0.0
  %9090 = vmatmul.mubr.f32.gmra.mxu0 %v2647
  %v9091 = vpop.f32.mrf.mxu0
  %v9092 = vadd.f32 0.0, %v9091
  %v9093 = vpop.f32.mrf.mxu0
  %9094 = vmatprep.mubr.f32.mxu0 0.0
  %9095 = vmatmul.mubr.f32.gmra.mxu0 %v2650
  %v9096 = vpop.f32.mrf.mxu0
  %v9097 = vadd.f32 0.0, %v9096
  %v9098 = vpop.f32.mrf.mxu0
  %9099 = vmatprep.mubr.f32.mxu0 0.0
  %9100 = vmatmul.mubr.f32.gmra.mxu0 %v2653
  %v9101 = vpop.f32.mrf.mxu0
  %v9102 = vadd.f32 0.0, %v9101
  %v9103 = vpop.f32.mrf.mxu0
  %9104 = vmatprep.mubr.f32.mxu0 0.0
  %9105 = vmatmul.mubr.f32.gmra.mxu0 %v2656
  %v9106 = vpop.f32.mrf.mxu0
  %v9107 = vadd.f32 0.0, %v9106
  %v9108 = vpop.f32.mrf.mxu0
  %9109 = vmatprep.mubr.f32.mxu0 0.0
  %9110 = vmatmul.mubr.f32.gmra.mxu0 %v2659
  %v9111 = vpop.f32.mrf.mxu0
  %v9112 = vadd.f32 0.0, %v9111
  %v9113 = vpop.f32.mrf.mxu0
  %9114 = vmatprep.mubr.f32.mxu0 0.0
  %9115 = vmatmul.mubr.f32.gmra.mxu0 %v2662
  %v9116 = vpop.f32.mrf.mxu0
  %v9117 = vadd.f32 0.0, %v9116
  %v9118 = vpop.f32.mrf.mxu0
  %9119 = vmatprep.mubr.f32.mxu0 0.0
  %9120 = vmatmul.mubr.f32.gmra.mxu0 %v2665
  %v9121 = vpop.f32.mrf.mxu0
  %v9122 = vadd.f32 0.0, %v9121
  %v9123 = vpop.f32.mrf.mxu0
  %9124 = vmatprep.mubr.f32.mxu0 0.0
  %9125 = vmatmul.mubr.f32.gmra.mxu0 %v2668
  %v9126 = vpop.f32.mrf.mxu0
  %v9127 = vadd.f32 0.0, %v9126
  %v9128 = vpop.f32.mrf.mxu0
  %9129 = vdwg.mxu0
  %v9130 = vadd.f32 %v2532, %v9092
  %v9131 = vadd.f32 %v2533, %v9097
  %v9132 = vadd.f32 %v2534, %v9102
  %v9133 = vadd.f32 %v2535, %v9107
  %v9134 = vadd.f32 %v2536, %v9112
  %v9135 = vadd.f32 %v2537, %v9117
  %v9136 = vadd.f32 %v2538, %v9122
  %v9137 = vadd.f32 %v2539, %v9127
  %v9138 = vtanh.pop %v9130
  %v9139 = vtanh.pop %v9131
  %v9140 = vtanh.pop %v9132
  %v9141 = vtanh.pop %v9133
  %v9142 = vtanh.pop %v9134
  %v9143 = vtanh.pop %v9135
  %v9144 = vtanh.pop %v9136
  %v9145 = vtanh.pop %v9137
  %9146 = vmatprep.subr.mxu0 0.0
  %9147 = vmatpush1.msra.mxu0 0.0
  %9148 = vmatprep.subr.mxu0 0.0
  %9149 = vmatpush1.msra.mxu0 0.0
  %9150 = vmatprep.subr.mxu0 0.0
  %9151 = vmatpush1.msra.mxu0 0.0
  %9152 = vmatprep.subr.mxu0 0.0
  %9153 = vmatpush1.msra.mxu0 0.0
  %9154 = vmatprep.subr.mxu0 0.0
  %9155 = vmatpush1.msra.mxu0 0.0
  %9156 = vmatprep.subr.mxu0 0.0
  %9157 = vmatpush1.msra.mxu0 0.0
  %9158 = vmatprep.subr.mxu0 0.0
  %9159 = vmatpush1.msra.mxu0 0.0
  %9160 = vmatprep.subr.mxu0 0.0
  %9161 = vmatpush1.msra.mxu0 0.0
  %9162 = vmatprep.subr.mxu0 0.0
  %9163 = vmatpush1.msra.mxu0 %v9145
  %9164 = vmatprep.subr.mxu0 0.0
  %9165 = vmatpush1.msra.mxu0 %v9144
  %9166 = vmatprep.subr.mxu0 0.0
  %9167 = vmatpush1.msra.mxu0 %v9143
  %9168 = vmatprep.subr.mxu0 0.0
  %9169 = vmatpush1.msra.mxu0 %v9142
  %9170 = vmatprep.subr.mxu0 0.0
  %9171 = vmatpush1.msra.mxu0 %v9141
  %9172 = vmatprep.subr.mxu0 0.0
  %9173 = vmatpush1.msra.mxu0 %v9140
  %9174 = vmatprep.subr.mxu0 0.0
  %9175 = vmatpush1.msra.mxu0 %v9139
  %9176 = vmatprep.subr.mxu0 0.0
  %9177 = vmatpush1.msra.mxu0 %v9138
  %9178 = vmatprep.subr.mxu0 0.0
  %9179 = vmatpush2.msra.mxu0 0.0
  %9180 = vmatprep.subr.mxu0 0.0
  %9181 = vmatpush2.msra.mxu0 0.0
  %9182 = vmatprep.subr.mxu0 0.0
  %9183 = vmatpush2.msra.mxu0 0.0
  %9184 = vmatprep.subr.mxu0 0.0
  %9185 = vmatpush2.msra.mxu0 0.0
  %9186 = vmatprep.subr.mxu0 0.0
  %9187 = vmatpush2.msra.mxu0 0.0
  %9188 = vmatprep.subr.mxu0 0.0
  %9189 = vmatpush2.msra.mxu0 0.0
  %9190 = vmatprep.subr.mxu0 0.0
  %9191 = vmatpush2.msra.mxu0 0.0
  %9192 = vmatprep.subr.mxu0 0.0
  %9193 = vmatpush2.msra.mxu0 0.0
  %9194 = vmatprep.subr.mxu0 0.0
  %9195 = vmatpush2.msra.mxu0 0.0
  %9196 = vmatprep.subr.mxu0 0.0
  %9197 = vmatpush2.msra.mxu0 0.0
  %9198 = vmatprep.subr.mxu0 0.0
  %9199 = vmatpush2.msra.mxu0 0.0
  %9200 = vmatprep.subr.mxu0 0.0
  %9201 = vmatpush2.msra.mxu0 0.0
  %9202 = vmatprep.subr.mxu0 0.0
  %9203 = vmatpush2.msra.mxu0 0.0
  %9204 = vmatprep.subr.mxu0 0.0
  %9205 = vmatpush2.msra.mxu0 0.0
  %9206 = vmatprep.subr.mxu0 0.0
  %9207 = vmatpush2.msra.mxu0 0.0
  %9208 = vmatprep.subr.mxu0 0.0
  %9209 = vmatpush2.msra.mxu0 0.0
  %9210 = vmatprep.mubr.f32.mxu0 0.0
  %9211 = vmatmul.mubr.f32.gmra.mxu0 %v2832
  %v9212 = vpop.f32.mrf.mxu0
  %v9213 = vadd.f32 %v2794, %v9212
  %v9214 = vpop.f32.mrf.mxu0
  %9215 = vmatprep.mubr.f32.mxu0 0.0
  %9216 = vmatmul.mubr.f32.gmra.mxu0 %v2835
  %v9217 = vpop.f32.mrf.mxu0
  %v9218 = vadd.f32 %v2799, %v9217
  %v9219 = vpop.f32.mrf.mxu0
  %9220 = vmatprep.mubr.f32.mxu0 0.0
  %9221 = vmatmul.mubr.f32.gmra.mxu0 %v2838
  %v9222 = vpop.f32.mrf.mxu0
  %v9223 = vadd.f32 %v2804, %v9222
  %v9224 = vpop.f32.mrf.mxu0
  %9225 = vmatprep.mubr.f32.mxu0 0.0
  %9226 = vmatmul.mubr.f32.gmra.mxu0 %v2841
  %v9227 = vpop.f32.mrf.mxu0
  %v9228 = vadd.f32 %v2809, %v9227
  %v9229 = vpop.f32.mrf.mxu0
  %9230 = vmatprep.mubr.f32.mxu0 0.0
  %9231 = vmatmul.mubr.f32.gmra.mxu0 %v2844
  %v9232 = vpop.f32.mrf.mxu0
  %v9233 = vadd.f32 %v2814, %v9232
  %v9234 = vpop.f32.mrf.mxu0
  %9235 = vmatprep.mubr.f32.mxu0 0.0
  %9236 = vmatmul.mubr.f32.gmra.mxu0 %v2847
  %v9237 = vpop.f32.mrf.mxu0
  %v9238 = vadd.f32 %v2819, %v9237
  %v9239 = vpop.f32.mrf.mxu0
  %9240 = vmatprep.mubr.f32.mxu0 0.0
  %9241 = vmatmul.mubr.f32.gmra.mxu0 %v2850
  %v9242 = vpop.f32.mrf.mxu0
  %v9243 = vadd.f32 %v2824, %v9242
  %v9244 = vpop.f32.mrf.mxu0
  %9245 = vmatprep.mubr.f32.mxu0 0.0
  %9246 = vmatmul.mubr.f32.gmra.mxu0 %v2853
  %v9247 = vpop.f32.mrf.mxu0
  %v9248 = vadd.f32 %v2829, %v9247
  %v9249 = vpop.f32.mrf.mxu0
  %9250 = vdwg.mxu0
  %v9251 = vtanh.pop %v9213
  %v9252 = vtanh.pop %v9218
  %v9253 = vtanh.pop %v9223
  %v9254 = vtanh.pop %v9228
  %v9255 = vtanh.pop %v9233
  %v9256 = vtanh.pop %v9238
  %v9257 = vtanh.pop %v9243
  %v9258 = vtanh.pop %v9248
  %9259 = vmatprep.subr.mxu0 0.0
  %9260 = vmatpush1.msra.mxu0 0.0
  %9261 = vmatprep.subr.mxu0 0.0
  %9262 = vmatpush1.msra.mxu0 0.0
  %9263 = vmatprep.subr.mxu0 0.0
  %9264 = vmatpush1.msra.mxu0 0.0
  %9265 = vmatprep.subr.mxu0 0.0
  %9266 = vmatpush1.msra.mxu0 0.0
  %9267 = vmatprep.subr.mxu0 0.0
  %9268 = vmatpush1.msra.mxu0 0.0
  %9269 = vmatprep.subr.mxu0 0.0
  %9270 = vmatpush1.msra.mxu0 0.0
  %9271 = vmatprep.subr.mxu0 0.0
  %9272 = vmatpush1.msra.mxu0 0.0
  %9273 = vmatprep.subr.mxu0 0.0
  %9274 = vmatpush1.msra.mxu0 0.0
  %9275 = vmatprep.subr.mxu0 0.0
  %9276 = vmatpush1.msra.mxu0 %v9258
  %9277 = vmatprep.subr.mxu0 0.0
  %9278 = vmatpush1.msra.mxu0 %v9257
  %9279 = vmatprep.subr.mxu0 0.0
  %9280 = vmatpush1.msra.mxu0 %v9256
  %9281 = vmatprep.subr.mxu0 0.0
  %9282 = vmatpush1.msra.mxu0 %v9255
  %9283 = vmatprep.subr.mxu0 0.0
  %9284 = vmatpush1.msra.mxu0 %v9254
  %9285 = vmatprep.subr.mxu0 0.0
  %9286 = vmatpush1.msra.mxu0 %v9253
  %9287 = vmatprep.subr.mxu0 0.0
  %9288 = vmatpush1.msra.mxu0 %v9252
  %9289 = vmatprep.subr.mxu0 0.0
  %9290 = vmatpush1.msra.mxu0 %v9251
  %9291 = vmatprep.subr.mxu0 0.0
  %9292 = vmatpush2.msra.mxu0 0.0
  %9293 = vmatprep.subr.mxu0 0.0
  %9294 = vmatpush2.msra.mxu0 0.0
  %9295 = vmatprep.subr.mxu0 0.0
  %9296 = vmatpush2.msra.mxu0 0.0
  %9297 = vmatprep.subr.mxu0 0.0
  %9298 = vmatpush2.msra.mxu0 0.0
  %9299 = vmatprep.subr.mxu0 0.0
  %9300 = vmatpush2.msra.mxu0 0.0
  %9301 = vmatprep.subr.mxu0 0.0
  %9302 = vmatpush2.msra.mxu0 0.0
  %9303 = vmatprep.subr.mxu0 0.0
  %9304 = vmatpush2.msra.mxu0 0.0
  %9305 = vmatprep.subr.mxu0 0.0
  %9306 = vmatpush2.msra.mxu0 0.0
  %9307 = vmatprep.subr.mxu0 0.0
  %9308 = vmatpush2.msra.mxu0 0.0
  %9309 = vmatprep.subr.mxu0 0.0
  %9310 = vmatpush2.msra.mxu0 0.0
  %9311 = vmatprep.subr.mxu0 0.0
  %9312 = vmatpush2.msra.mxu0 0.0
  %9313 = vmatprep.subr.mxu0 0.0
  %9314 = vmatpush2.msra.mxu0 0.0
  %9315 = vmatprep.subr.mxu0 0.0
  %9316 = vmatpush2.msra.mxu0 0.0
  %9317 = vmatprep.subr.mxu0 0.0
  %9318 = vmatpush2.msra.mxu0 0.0
  %9319 = vmatprep.subr.mxu0 0.0
  %9320 = vmatpush2.msra.mxu0 0.0
  %9321 = vmatprep.subr.mxu0 0.0
  %9322 = vmatpush2.msra.mxu0 0.0
  %9323 = vmatprep.mubr.f32.mxu0 0.0
  %9324 = vmatmul.mubr.f32.gmra.mxu0 %v2969
  %v9325 = vpop.f32.mrf.mxu0
  %v9326 = vadd.f32 %v2540, %v9325
  %v9327 = vpop.f32.mrf.mxu0
  %9328 = vmatprep.mubr.f32.mxu0 0.0
  %9329 = vmatmul.mubr.f32.gmra.mxu0 %v2972
  %v9330 = vpop.f32.mrf.mxu0
  %v9331 = vadd.f32 %v2541, %v9330
  %v9332 = vpop.f32.mrf.mxu0
  %9333 = vmatprep.mubr.f32.mxu0 0.0
  %9334 = vmatmul.mubr.f32.gmra.mxu0 %v2975
  %v9335 = vpop.f32.mrf.mxu0
  %v9336 = vadd.f32 %v2542, %v9335
  %v9337 = vpop.f32.mrf.mxu0
  %9338 = vmatprep.mubr.f32.mxu0 0.0
  %9339 = vmatmul.mubr.f32.gmra.mxu0 %v2978
  %v9340 = vpop.f32.mrf.mxu0
  %v9341 = vadd.f32 %v2543, %v9340
  %v9342 = vpop.f32.mrf.mxu0
  %9343 = vmatprep.mubr.f32.mxu0 0.0
  %9344 = vmatmul.mubr.f32.gmra.mxu0 %v2981
  %v9345 = vpop.f32.mrf.mxu0
  %v9346 = vadd.f32 %v2544, %v9345
  %v9347 = vpop.f32.mrf.mxu0
  %9348 = vmatprep.mubr.f32.mxu0 0.0
  %9349 = vmatmul.mubr.f32.gmra.mxu0 %v2984
  %v9350 = vpop.f32.mrf.mxu0
  %v9351 = vadd.f32 %v2545, %v9350
  %v9352 = vpop.f32.mrf.mxu0
  %9353 = vmatprep.mubr.f32.mxu0 0.0
  %9354 = vmatmul.mubr.f32.gmra.mxu0 %v2987
  %v9355 = vpop.f32.mrf.mxu0
  %v9356 = vadd.f32 %v2546, %v9355
  %v9357 = vpop.f32.mrf.mxu0
  %9358 = vmatprep.mubr.f32.mxu0 0.0
  %9359 = vmatmul.mubr.f32.gmra.mxu0 %v2990
  %v9360 = vpop.f32.mrf.mxu0
  %v9361 = vadd.f32 %v2547, %v9360
  %v9362 = vpop.f32.mrf.mxu0
  %9363 = vdwg.mxu0
  %v9364 = vtanh.pop %v9326
  %v9365 = vtanh.pop %v9331
  %v9366 = vtanh.pop %v9336
  %v9367 = vtanh.pop %v9341
  %v9368 = vtanh.pop %v9346
  %v9369 = vtanh.pop %v9351
  %v9370 = vtanh.pop %v9356
  %v9371 = vtanh.pop %v9361
  %9372 = vmatprep.subr.mxu0 0.0
  %9373 = vmatpush1.msra.mxu0 0.0
  %9374 = vmatprep.subr.mxu0 0.0
  %9375 = vmatpush1.msra.mxu0 0.0
  %9376 = vmatprep.subr.mxu0 0.0
  %9377 = vmatpush1.msra.mxu0 0.0
  %9378 = vmatprep.subr.mxu0 0.0
  %9379 = vmatpush1.msra.mxu0 0.0
  %9380 = vmatprep.subr.mxu0 0.0
  %9381 = vmatpush1.msra.mxu0 0.0
  %9382 = vmatprep.subr.mxu0 0.0
  %9383 = vmatpush1.msra.mxu0 0.0
  %9384 = vmatprep.subr.mxu0 0.0
  %9385 = vmatpush1.msra.mxu0 0.0
  %9386 = vmatprep.subr.mxu0 0.0
  %9387 = vmatpush1.msra.mxu0 0.0
  %9388 = vmatprep.subr.mxu0 0.0
  %9389 = vmatpush1.msra.mxu0 %v9371
  %9390 = vmatprep.subr.mxu0 0.0
  %9391 = vmatpush1.msra.mxu0 %v9370
  %9392 = vmatprep.subr.mxu0 0.0
  %9393 = vmatpush1.msra.mxu0 %v9369
  %9394 = vmatprep.subr.mxu0 0.0
  %9395 = vmatpush1.msra.mxu0 %v9368
  %9396 = vmatprep.subr.mxu0 0.0
  %9397 = vmatpush1.msra.mxu0 %v9367
  %9398 = vmatprep.subr.mxu0 0.0
  %9399 = vmatpush1.msra.mxu0 %v9366
  %9400 = vmatprep.subr.mxu0 0.0
  %9401 = vmatpush1.msra.mxu0 %v9365
  %9402 = vmatprep.subr.mxu0 0.0
  %9403 = vmatpush1.msra.mxu0 %v9364
  %9404 = vmatprep.subr.mxu0 0.0
  %9405 = vmatpush2.msra.mxu0 0.0
  %9406 = vmatprep.subr.mxu0 0.0
  %9407 = vmatpush2.msra.mxu0 0.0
  %9408 = vmatprep.subr.mxu0 0.0
  %9409 = vmatpush2.msra.mxu0 0.0
  %9410 = vmatprep.subr.mxu0 0.0
  %9411 = vmatpush2.msra.mxu0 0.0
  %9412 = vmatprep.subr.mxu0 0.0
  %9413 = vmatpush2.msra.mxu0 0.0
  %9414 = vmatprep.subr.mxu0 0.0
  %9415 = vmatpush2.msra.mxu0 0.0
  %9416 = vmatprep.subr.mxu0 0.0
  %9417 = vmatpush2.msra.mxu0 0.0
  %9418 = vmatprep.subr.mxu0 0.0
  %9419 = vmatpush2.msra.mxu0 0.0
  %9420 = vmatprep.subr.mxu0 0.0
  %9421 = vmatpush2.msra.mxu0 0.0
  %9422 = vmatprep.subr.mxu0 0.0
  %9423 = vmatpush2.msra.mxu0 0.0
  %9424 = vmatprep.subr.mxu0 0.0
  %9425 = vmatpush2.msra.mxu0 0.0
  %9426 = vmatprep.subr.mxu0 0.0
  %9427 = vmatpush2.msra.mxu0 0.0
  %9428 = vmatprep.subr.mxu0 0.0
  %9429 = vmatpush2.msra.mxu0 0.0
  %9430 = vmatprep.subr.mxu0 0.0
  %9431 = vmatpush2.msra.mxu0 0.0
  %9432 = vmatprep.subr.mxu0 0.0
  %9433 = vmatpush2.msra.mxu0 0.0
  %9434 = vmatprep.subr.mxu0 0.0
  %9435 = vmatpush2.msra.mxu0 0.0
  %9436 = vmatprep.mubr.f32.mxu0 0.0
  %9437 = vmatmul.mubr.f32.gmra.mxu0 %v3115
  %v9438 = vpop.f32.mrf.mxu0
  %v9439 = vadd.f32 %v3113, %v9438
  %v9440 = vpop.f32.mrf.mxu0
  %9441 = vdwg.mxu0
  %v9443 = vrot.slane %v3601, 7
  %v9446 = vrot.slane %v4018, 6
  %v9449 = vrot.slane %v4435, 5
  %v9452 = vrot.slane %v4852, 4
  %v9455 = vrot.slane %v5269, 3
  %v9458 = vrot.slane %v5686, 2
  %v9461 = vrot.slane %v6103, 1
  %v9464 = vrot.slane %v6937, 7
  %v9467 = vrot.slane %v7354, 6
  %v9470 = vrot.slane %v7771, 5
  %v9473 = vrot.slane %v8188, 4
  %v9476 = vrot.slane %v8605, 3
  %v9479 = vrot.slane %v9022, 2
  %v9482 = vrot.slane %v9439, 1
  %vm9484 = vcmask 1040384
  %v9485 = vsel %vm9484, %v3184, %v9443
  %vm9486 = vcmask 1041408
  %v9487 = vsel %vm9486, %v9485, %v9446
  %vm9488 = vcmask 1042432
  %v9489 = vsel %vm9488, %v9487, %v9449
  %vm9490 = vcmask 1043456
  %v9491 = vsel %vm9490, %v9489, %v9452
  %vm9492 = vcmask 1044480
  %v9493 = vsel %vm9492, %v9491, %v9455
  %vm9494 = vcmask 1045504
  %v9495 = vsel %vm9494, %v9493, %v9458
  %vm9496 = vcmask 1046528
  %v9497 = vsel %vm9496, %v9495, %v9461
  %v9498 = vsel %vm9484, %v6520, %v9464
  %v9499 = vsel %vm9486, %v9498, %v9467
  %v9500 = vsel %vm9488, %v9499, %v9470
  %v9501 = vsel %vm9490, %v9500, %v9473
  %v9502 = vsel %vm9492, %v9501, %v9476
  %v9503 = vsel %vm9494, %v9502, %v9479
  %v9504 = vsel %vm9496, %v9503, %v9482
  %9505 = vst [vmem:[%s19] sm:$0xff] %v9497
  %9506 = vst [vmem:[%s19 + $0x8] sm:$0xff] %v9504
  // Predicated region
  $region78: #{critic_forward.1} parent=0 // pred_check
    _
  $region79: #{critic_forward.1} parent=0 // pred_check_branch
    %9508 = sbr.rel (0) target = $region81
  $region80: #{critic_forward.1} parent=0 // pred_region
    _
  $region81: #{critic_forward.1} parent=0 // pred_fallthru
    _
  // Predicated region
  $region82: #{critic_forward.1} parent=0 // pred_check
    _
  $region83: #{critic_forward.1} parent=0 // pred_check_branch
    %9510 = sbr.rel (0) target = $region85
  $region84: #{critic_forward.1} parent=0 // pred_region
    _
  $region85: #{critic_forward.1} parent=0 // pred_fallthru
    _

</llo_original>
